<compile_context>
chip_gen: v7x
topology: tpu7x:2x2x1
jax: 0.10.0
libtpu: 0.0.40
codegen_flags: <defaults>
</compile_context>

<pallas_src>
import functools

import jax
import jax.numpy as jnp
from jax import lax
from jax.experimental import pallas as pl
from jax.experimental.pallas import tpu as pltpu

RNN_HIDDEN = 128
NUM_LAYERS = 2


# ---------------------------------------------------------------------------
# Fused kernel: 2-layer GRU + projection + concat, single invocation.
# ---------------------------------------------------------------------------
def rpe_fused_kernel(pe_ref, x_ref, h_ref,
                     wih0_ref, bih0_ref,
                     wc0_ref, bih1_ref, bhh0_ref,
                     whh1_ref, bhh1_ref,
                     wproj_ref, bproj_ref,
                     out_ref, hT_ref,
                     h1_buf):
    """
    pe_ref   : (T, P)  f32   batch-invariant GRU input (tiled pe_0 + offset slice)
    x_ref    : (B, T, P) f32 original input, native batch-first layout
    h_ref    : (2, B, H) f32 initial hidden state per layer
    wih0_ref : (P, 3H) f32   layer-0 input weights (pre-transposed)
    wc0_ref  : (H, 6H) bf16  [W_ih1 | W_hh0]  (wavefront-merged per-step weights)
    whh1_ref : (H, 3H) bf16
    wproj_ref: (H, P)  bf16
    b*_ref   : (1, .)  f32
    out_ref  : (B, T, 2P) f32  [x | proj(gru(pe))]
    hT_ref   : (2, B, H) f32 final hidden state
    h1_buf   : (B, T, H) f32 VMEM scratch for lane-dense per-step h1 stores
    """
    B, T, P = x_ref.shape
    H = whh1_ref.shape[0]
    H3 = 3 * H
    f32, bf16 = jnp.float32, jnp.bfloat16

    # ------------- hoisted work (off the recurrent serial chain) -----------
    # Layer-0 input gates: pe is identical across the batch -> one (T,P)@(P,3H)
    # MXU matmul covers every timestep; b_ih0 folded in.
    gi0 = jnp.dot(pe_ref[...], wih0_ref[...],
                  preferred_element_type=f32) + bih0_ref[...]          # (T, 3H)
    # Pre-broadcast ONCE (JAX does not CSE broadcast_in_dim; doing it per step
    # would emit T sublane-broadcasts).
    gi0_b = jnp.broadcast_to(gi0[:, None, :], (T, B, H3))              # (T, B, 3H)

    # Per-step biases, broadcast once.
    bhh0 = jnp.broadcast_to(bhh0_ref[...], (B, H3))
    bih1 = jnp.broadcast_to(bih1_ref[...], (B, H3))
    bhh1 = jnp.broadcast_to(bhh1_ref[...], (B, H3))

    h0 = h_ref[0]                                                      # (B, H) f32
    h1 = h_ref[1]

    def gru_cell(gi, gh, h_prev):
        # PyTorch gate order (r, z, n): r and z are contiguous -> ONE fused
        # sigmoid over the [r|z] slice (halves EUP pushes per cell).
        rz = jax.nn.sigmoid(gi[:, :2 * H] + gh[:, :2 * H])
        r, z = rz[:, :H], rz[:, H:]
        n = jnp.tanh(gi[:, 2 * H:] + r * gh[:, 2 * H:])
        return (1.0 - z) * n + z * h_prev

    # Prime the wavefront: recurrent gate pre-activations for step 0.
    # (wc0's second half is W_hh0.)
    gh0 = jnp.dot(h0.astype(bf16), wc0_ref[:, H3:],
                  preferred_element_type=f32) + bhh0
    gh1 = jnp.dot(h1.astype(bf16), whh1_ref[...],
                  preferred_element_type=f32) + bhh1

    # Fully unrolled recurrence (T static & small).  Per step, only 2 bf16 MXU
    # matmuls sit on the serial chain:
    #   h0 @ [W_ih1 | W_hh0]  -> gi1(t)  and  gh0(t+1)   (shared-operand merge)
    #   h1 @ W_hh1            -> gh1(t+1)
    # The output projection is hoisted out of the loop; the only per-step store
    # is a lane-dense 128-wide write of h1 into VMEM scratch.
    # TODO(synk): for production T, switch to a T-chunked grid (h0/h1 + gh0/gh1
    # in persistent VMEM scratch, weights with constant index_map, a batch-tile
    # 'parallel' axis for v7x's 2nd TensorCore, vmem_limit_bytes set explicitly
    # for v5e/v7x).
    for t in range(T):
        # ---- layer 0
        h0 = gru_cell(gi0_b[t], gh0, h0)
        c0 = jnp.dot(h0.astype(bf16), wc0_ref[...], preferred_element_type=f32)
        gi1 = c0[:, :H3] + bih1
        if t + 1 < T:
            gh0 = c0[:, H3:] + bhh0
        # ---- layer 1 (eval mode: nn.GRU inter-layer dropout disabled)
        h1 = gru_cell(gi1, gh1, h1)
        if t + 1 < T:
            gh1 = jnp.dot(h1.astype(bf16), whh1_ref[...],
                          preferred_element_type=f32) + bhh1
        h1_buf[:, t, :] = h1                       # (B, H): unmasked 128-lane store

    # ------------- hoisted projection + single bulk output store -----------
    h1_all = h1_buf[...].reshape(B * T, H)
    proj = jnp.dot(h1_all.astype(bf16), wproj_ref[...],
                   preferred_element_type=f32)
    proj = proj + jnp.broadcast_to(bproj_ref[...], (B * T, P))
    # One concat (single lane shift) + one full-extent store; no per-step
    # masked 64-lane stores.
    out_ref[...] = jnp.concatenate([x_ref[...], proj.reshape(B, T, P)], axis=-1)

    hT_ref[0] = h0
    hT_ref[1] = h1


# ---------------------------------------------------------------------------
# pallas_call glue
# ---------------------------------------------------------------------------
def rpe_fused(pe_seq, x, h0, params):
    B, T, P = x.shape
    H = RNN_HIDDEN
    H3, H6 = 3 * H, 6 * H
    bf16 = jnp.bfloat16

    # Wavefront-merged + bf16 MXU operands (params themselves stay f32,
    # mirroring the PyTorch module's state dict).
    wc0 = jnp.concatenate([params["w_ih1"], params["w_hh0"]], axis=1).astype(bf16)
    whh1 = params["w_hh1"].astype(bf16)
    wproj = params["w_proj"].astype(bf16)

    flops = 2 * (T * P * H3                       # hoisted layer-0 input gates
                 + B * H * (H6 + H3)              # wavefront priming
                 + T * B * H * (H6 + H3)          # per-step recurrent matmuls
                 + B * T * H * P)                 # hoisted output projection
    transcendentals = T * B * 2 * H3
    bytes_accessed = (4 * (T * P + B * T * P + 2 * B * H          # pe, x, h
                           + B * T * 2 * P + 2 * B * H            # out, hT
                           + P * H3 + 4 * H3 + 2 * P)             # f32 w/biases
                      + 2 * (H * H6 + H * H3 + H * P))            # bf16 weights
    cost = pl.CostEstimate(flops=flops, transcendentals=transcendentals,
                           bytes_accessed=bytes_accessed)

    vmem = pl.BlockSpec(memory_space=pltpu.MemorySpace.VMEM)
    out, hT = pl.pallas_call(
        rpe_fused_kernel,
        out_shape=(jax.ShapeDtypeStruct((B, T, 2 * P), jnp.float32),
                   jax.ShapeDtypeStruct((NUM_LAYERS, B, H), jnp.float32)),
        in_specs=[vmem] * 12,
        out_specs=(vmem, vmem),
        scratch_shapes=[pltpu.VMEM((B, T, H), jnp.float32)],
        cost_estimate=cost,
    )(pe_seq, x, h0,
      params["w_ih0"], params["b_ih0"],
      wc0, params["b_ih1"], params["b_hh0"],
      whh1, params["b_hh1"],
      wproj, params["b_proj"])
    return out, hT


# ---------------------------------------------------------------------------
# Module: parameter init + forward
# ---------------------------------------------------------------------------
def init_params(key, positional_embedding_size, num_channels):
    P, H = positional_embedding_size, RNN_HIDDEN
    ks = jax.random.split(key, 16)
    u = lambda k, shape, scale: jax.random.uniform(k, shape, jnp.float32,
                                                   -scale, scale)
    s = 1.0 / jnp.sqrt(H)
    # NOTE: num_channels intentionally NOT stored here (must stay a static int).
    return {
        "pe_0": jax.random.normal(ks[0], (1, num_channels, P), jnp.float32),
        # GRU layer 0 (input size P); weights pre-transposed, gate order (r,z,n)
        "w_ih0": u(ks[1], (P, 3 * H), s),
        "w_hh0": u(ks[2], (H, 3 * H), s),
        "b_ih0": u(ks[3], (1, 3 * H), s),
        "b_hh0": u(ks[4], (1, 3 * H), s),
        # GRU layer 1 (input size H)
        "w_ih1": u(ks[5], (H, 3 * H), s),
        "w_hh1": u(ks[6], (H, 3 * H), s),
        "b_ih1": u(ks[7], (1, 3 * H), s),
        "b_hh1": u(ks[8], (1, 3 * H), s),
        # proj: Linear(H -> P)
        "w_proj": u(ks[9], (H, P), s),
        "b_proj": u(ks[10], (1, P), s),
    }


def _pe_sequence(params, T, num_channels, i):
    """Batch-invariant pe slice (T, P); offsets/counts are static Python ints."""
    offset = i % num_channels
    # cdiv(T+offset, C): identical slice content to PyTorch's T//C + 1 wherever
    # the PyTorch module is well-defined (pe_0 tiling is periodic in C), and
    # avoids the short-slice edge case.
    num_events = -(-(T + offset) // num_channels)
    pe_full = jnp.tile(params["pe_0"][0], (num_events, 1))
    return pe_full[offset:offset + T]


@functools.partial(jax.jit, static_argnames=("num_channels", "i"))
def forward(params, x, *, num_channels, i=0, h=None):
    """Equivalent of RecurrentPositionalEmbedding.forward (eval mode).

    x: (B, T, P) float32.  Returns (cat(x, pe_out): (B, T, 2P), h: (2, B, H)).
    No wrapper transposes: the kernel works in the native (B, T, .) layout.
    """
    B, T, P = x.shape
    C = int(num_channels)
    H = RNN_HIDDEN
    pe_seq = _pe_sequence(params, T, C, i)                 # (T, P)
    if h is None:
        h = jnp.zeros((NUM_LAYERS, B, H), jnp.float32)
    return rpe_fused(pe_seq, x.astype(jnp.float32), h, params)


# ---------------------------------------------------------------------------
# Pure-JAX references for verification
# ---------------------------------------------------------------------------
def _gru_cell_ref(gi, gh, h_prev, H):
    r = jax.nn.sigmoid(gi[:, :H] + gh[:, :H])
    z = jax.nn.sigmoid(gi[:, H:2 * H] + gh[:, H:2 * H])
    n = jnp.tanh(gi[:, 2 * H:] + r * gh[:, 2 * H:])
    return (1.0 - z) * n + z * h_prev


def _ref_gru_layer(x_tbd, h0, w_ih, w_hh, b_ih, b_hh):
    H = h0.shape[-1]

    def step(h_prev, x_t):
        gi = x_t @ w_ih + b_ih
        gh = h_prev @ w_hh + b_hh
        h_new = _gru_cell_ref(gi, gh, h_prev, H)
        return h_new, h_new

    hT, outs = lax.scan(step, h0, x_tbd)
    return outs, hT


def _ref_forward_f32(params, x, *, num_channels, i=0, h=None):
    """Full-f32 reference (PyTorch eval-mode parity)."""
    B, T, P = x.shape
    H = RNN_HIDDEN
    pe = _pe_sequence(params, T, num_channels, i)          # (T, P)
    pe_t = jnp.broadcast_to(pe[:, None, :], (T, B, P))
    if h is None:
        h = jnp.zeros((NUM_LAYERS, B, H), jnp.float32)
    o0, hf0 = _ref_gru_layer(pe_t, h[0], params["w_ih0"], params["w_hh0"],
                             params["b_ih0"], params["b_hh0"])
    o1, hf1 = _ref_gru_layer(o0, h[1], params["w_ih1"], params["w_hh1"],
                             params["b_ih1"], params["b_hh1"])
    proj = o1.reshape(T * B, H) @ params["w_proj"] + params["b_proj"]
    pe_out = jnp.transpose(proj.reshape(T, B, P), (1, 0, 2))
    return jnp.concatenate([x, pe_out], axis=2), jnp.stack([hf0, hf1], axis=0)


def _bdot(a, b):
    return jnp.dot(a.astype(jnp.bfloat16), b.astype(jnp.bfloat16),
                   preferred_element_type=jnp.float32)


def _ref_forward_mixed(params, x, *, num_channels, i=0, h=None):
    """Mirrors the kernel's precision exactly: f32 layer-0 input gates, bf16
    operands (f32 accumulate) for every hidden-state matmul, f32 gate math."""
    B, T, P = x.shape
    H = RNN_HIDDEN
    pe = _pe_sequence(params, T, num_channels, i)
    if h is None:
        h = jnp.zeros((NUM_LAYERS, B, H), jnp.float32)
    gi0_all = pe @ params["w_ih0"] + params["b_ih0"]
    h0, h1 = h[0], h[1]
    h1_seq = []
    for t in range(T):
        gi0 = jnp.broadcast_to(gi0_all[t:t + 1], (B, 3 * H))
        gh0 = _bdot(h0, params["w_hh0"]) + params["b_hh0"]
        h0 = _gru_cell_ref(gi0, gh0, h0, H)
        gi1 = _bdot(h0, params["w_ih1"]) + params["b_ih1"]
        gh1 = _bdot(h1, params["w_hh1"]) + params["b_hh1"]
        h1 = _gru_cell_ref(gi1, gh1, h1, H)
        h1_seq.append(h1)
    h1_all = jnp.stack(h1_seq, axis=1)                     # (B, T, H)
    proj = _bdot(h1_all.reshape(B * T, H), params["w_proj"]) + params["b_proj"]
    out = jnp.concatenate([x, proj.reshape(B, T, P)], axis=-1)
    return out, jnp.stack([h0, h1], axis=0)


# ---------------------------------------------------------------------------
if __name__ == "__main__":
    positional_embedding_size = 32
    num_channels = 4
    batch_size, num_tokens = 2, 8

    key = jax.random.PRNGKey(0)
    k_param, k_x1, k_x2 = jax.random.split(key, 3)
    params = init_params(k_param, positional_embedding_size, num_channels)
    x1 = jax.random.normal(
        k_x1, (batch_size, num_tokens, positional_embedding_size), jnp.float32)
    x2 = jax.random.normal(
        k_x2, (batch_size, num_tokens, positional_embedding_size), jnp.float32)

    # Call 1: h=None ; Call 2: carries the hidden state (nonzero-h path).
    out1, hs1 = forward(params, x1, num_channels=num_channels, i=1)
    out2, hs2 = forward(params, x2, num_channels=num_channels, i=5, h=hs1)
    jax.block_until_ready((out1, hs1, out2, hs2))

    assert out1.shape == (batch_size, num_tokens, 2 * positional_embedding_size)
    assert hs1.shape == (NUM_LAYERS, batch_size, RNN_HIDDEN)

    # 1) Tight check: kernel math vs an identical-precision pure-JAX reference
    #    (validates the wavefront/hoisting restructuring exactly).
    m_out1, m_h1 = _ref_forward_mixed(params, x1, num_channels=num_channels, i=1)
    m_out2, m_h2 = _ref_forward_mixed(params, x2, num_channels=num_channels,
                                      i=5, h=hs1)
    for got, want in ((out1, m_out1), (hs1, m_h1), (out2, m_out2), (hs2, m_h2)):
        err = float(jnp.max(jnp.abs(got - want)))
        assert jnp.allclose(got, want, atol=1e-4, rtol=1e-4), err

    # 2) Parity check vs the full-f32 (PyTorch eval-mode) reference; the looser
    #    tolerance only accounts for bf16 MXU operands on the recurrent matmuls.
    f_out1, f_h1 = _ref_forward_f32(params, x1, num_channels=num_channels, i=1)
    f_out2, f_h2 = _ref_forward_f32(params, x2, num_channels=num_channels,
                                    i=5, h=f_h1)
    for got, want in ((out1, f_out1), (hs1, f_h1), (out2, f_out2), (hs2, f_h2)):
        err = float(jnp.max(jnp.abs(got - want)))
        assert jnp.allclose(got, want, atol=5e-2, rtol=5e-2), err

    print("KERNEL_OK")
</pallas_src>

<mosaic_0001>
module attributes {stable_mosaic.version = 11 : i64} {
  func.func @rpe_fused_kernel(%arg0: memref<8x32xf32, #tpu.memory_space<vmem>>, %arg1: memref<2x8x32xf32, #tpu.memory_space<vmem>>, %arg2: memref<2x2x128xf32, #tpu.memory_space<vmem>>, %arg3: memref<32x384xf32, #tpu.memory_space<vmem>>, %arg4: memref<1x384xf32, #tpu.memory_space<vmem>>, %arg5: memref<128x768xbf16, #tpu.memory_space<vmem>>, %arg6: memref<1x384xf32, #tpu.memory_space<vmem>>, %arg7: memref<1x384xf32, #tpu.memory_space<vmem>>, %arg8: memref<128x384xbf16, #tpu.memory_space<vmem>>, %arg9: memref<1x384xf32, #tpu.memory_space<vmem>>, %arg10: memref<128x32xbf16, #tpu.memory_space<vmem>>, %arg11: memref<1x32xf32, #tpu.memory_space<vmem>>, %arg12: memref<2x8x64xf32, #tpu.memory_space<vmem>>, %arg13: memref<2x2x128xf32, #tpu.memory_space<vmem>>, %arg14: memref<2x8x128xf32, #tpu.memory_space<vmem>>) attributes {dimension_semantics = [], scalar_prefetch = 0 : i64, scratch_operands = 1 : i64, tpu.core_type = #tpu.core_type<tc>} {
    %c0 = arith.constant 0 : index
    %c0_0 = arith.constant 0 : index
    %0 = vector.load %arg0[%c0, %c0_0] : memref<8x32xf32, #tpu.memory_space<vmem>>, vector<8x32xf32>
    %c0_1 = arith.constant 0 : index
    %c0_2 = arith.constant 0 : index
    %1 = vector.load %arg3[%c0_1, %c0_2] : memref<32x384xf32, #tpu.memory_space<vmem>>, vector<32x384xf32>
    %cst = arith.constant dense<0.000000e+00> : vector<8x384xf32>
    %2 = tpu.matmul %0, %1, %cst {dimension_numbers = #tpu.dot_dimension_numbers<[1], [0], [0], [1], [0, 0, 1, 1], [], []>} : vector<8x32xf32>, vector<32x384xf32>, vector<8x384xf32> -> vector<8x384xf32>
    %c0_3 = arith.constant 0 : index
    %c0_4 = arith.constant 0 : index
    %3 = vector.load %arg4[%c0_3, %c0_4] : memref<1x384xf32, #tpu.memory_space<vmem>>, vector<1x384xf32>
    %4 = vector.broadcast %3 : vector<1x384xf32> to vector<8x384xf32>
    %5 = arith.addf %2, %4 : vector<8x384xf32>
    %6 = vector.shape_cast %5 : vector<8x384xf32> to vector<8x1x384xf32>
    %7 = vector.shape_cast %6 : vector<8x1x384xf32> to vector<8x1x384xf32>
    %8 = vector.broadcast %7 : vector<8x1x384xf32> to vector<8x2x384xf32>
    %c0_5 = arith.constant 0 : index
    %c0_6 = arith.constant 0 : index
    %9 = vector.load %arg7[%c0_5, %c0_6] : memref<1x384xf32, #tpu.memory_space<vmem>>, vector<1x384xf32>
    %10 = vector.shape_cast %9 : vector<1x384xf32> to vector<1x384xf32>
    %11 = vector.broadcast %10 : vector<1x384xf32> to vector<2x384xf32>
    %c0_7 = arith.constant 0 : index
    %c0_8 = arith.constant 0 : index
    %12 = vector.load %arg6[%c0_7, %c0_8] : memref<1x384xf32, #tpu.memory_space<vmem>>, vector<1x384xf32>
    %13 = vector.shape_cast %12 : vector<1x384xf32> to vector<1x384xf32>
    %14 = vector.broadcast %13 : vector<1x384xf32> to vector<2x384xf32>
    %c0_9 = arith.constant 0 : index
    %c0_10 = arith.constant 0 : index
    %15 = vector.load %arg9[%c0_9, %c0_10] : memref<1x384xf32, #tpu.memory_space<vmem>>, vector<1x384xf32>
    %16 = vector.shape_cast %15 : vector<1x384xf32> to vector<1x384xf32>
    %17 = vector.broadcast %16 : vector<1x384xf32> to vector<2x384xf32>
    %c0_11 = arith.constant 0 : index
    %c0_12 = arith.constant 0 : index
    %c0_13 = arith.constant 0 : index
    %18 = vector.load %arg2[%c0_11, %c0_12, %c0_13] : memref<2x2x128xf32, #tpu.memory_space<vmem>>, vector<1x2x128xf32>
    %19 = vector.shape_cast %18 : vector<1x2x128xf32> to vector<2x128xf32>
    %c1 = arith.constant 1 : index
    %c0_14 = arith.constant 0 : index
    %c0_15 = arith.constant 0 : index
    %20 = vector.load %arg2[%c1, %c0_14, %c0_15] : memref<2x2x128xf32, #tpu.memory_space<vmem>>, vector<1x2x128xf32>
    %21 = vector.shape_cast %20 : vector<1x2x128xf32> to vector<2x128xf32>
    %22 = arith.truncf %19 : vector<2x128xf32> to vector<2x128xbf16>
    %c0_16 = arith.constant 0 : index
    %c384 = arith.constant 384 : index
    %23 = vector.load %arg5[%c0_16, %c384] : memref<128x768xbf16, #tpu.memory_space<vmem>>, vector<128x384xbf16>
    %cst_17 = arith.constant dense<0.000000e+00> : vector<2x384xf32>
    %24 = tpu.matmul %22, %23, %cst_17 {dimension_numbers = #tpu.dot_dimension_numbers<[1], [0], [0], [1], [0, 0, 1, 1], [], []>} : vector<2x128xbf16>, vector<128x384xbf16>, vector<2x384xf32> -> vector<2x384xf32>
    %25 = arith.addf %24, %11 : vector<2x384xf32>
    %26 = arith.truncf %21 : vector<2x128xf32> to vector<2x128xbf16>
    %c0_18 = arith.constant 0 : index
    %c0_19 = arith.constant 0 : index
    %27 = vector.load %arg8[%c0_18, %c0_19] : memref<128x384xbf16, #tpu.memory_space<vmem>>, vector<128x384xbf16>
    %cst_20 = arith.constant dense<0.000000e+00> : vector<2x384xf32>
    %28 = tpu.matmul %26, %27, %cst_20 {dimension_numbers = #tpu.dot_dimension_numbers<[1], [0], [0], [1], [0, 0, 1, 1], [], []>} : vector<2x128xbf16>, vector<128x384xbf16>, vector<2x384xf32> -> vector<2x384xf32>
    %29 = arith.addf %28, %17 : vector<2x384xf32>
    %30 = vector.extract_strided_slice %8 {offsets = [0, 0, 0], sizes = [1, 2, 384], strides = [1, 1, 1]} : vector<8x2x384xf32> to vector<1x2x384xf32>
    %31 = vector.shape_cast %30 : vector<1x2x384xf32> to vector<2x384xf32>
    %32 = vector.extract_strided_slice %31 {offsets = [0, 0], sizes = [2, 256], strides = [1, 1]} : vector<2x384xf32> to vector<2x256xf32>
    %33 = vector.extract_strided_slice %25 {offsets = [0, 0], sizes = [2, 256], strides = [1, 1]} : vector<2x384xf32> to vector<2x256xf32>
    %34 = arith.addf %32, %33 : vector<2x256xf32>
    %35 = arith.negf %34 : vector<2x256xf32>
    %36 = math.exp %35 : vector<2x256xf32>
    %cst_21 = arith.constant 1.000000e+00 : f32
    %37 = vector.broadcast %cst_21 : f32 to vector<2x256xf32>
    %38 = arith.addf %37, %36 : vector<2x256xf32>
    %39 = arith.divf %37, %38 : vector<2x256xf32>
    %40 = vector.extract_strided_slice %39 {offsets = [0, 0], sizes = [2, 128], strides = [1, 1]} : vector<2x256xf32> to vector<2x128xf32>
    %41 = vector.extract_strided_slice %39 {offsets = [0, 128], sizes = [2, 128], strides = [1, 1]} : vector<2x256xf32> to vector<2x128xf32>
    %42 = vector.extract_strided_slice %31 {offsets = [0, 256], sizes = [2, 128], strides = [1, 1]} : vector<2x384xf32> to vector<2x128xf32>
    %43 = vector.extract_strided_slice %25 {offsets = [0, 256], sizes = [2, 128], strides = [1, 1]} : vector<2x384xf32> to vector<2x128xf32>
    %44 = arith.mulf %40, %43 : vector<2x128xf32>
    %45 = arith.addf %42, %44 : vector<2x128xf32>
    %46 = math.tanh %45 : vector<2x128xf32>
    %cst_22 = arith.constant 1.000000e+00 : f32
    %47 = vector.broadcast %cst_22 : f32 to vector<2x128xf32>
    %48 = arith.subf %47, %41 : vector<2x128xf32>
    %49 = arith.mulf %48, %46 : vector<2x128xf32>
    %50 = arith.mulf %41, %19 : vector<2x128xf32>
    %51 = arith.addf %49, %50 : vector<2x128xf32>
    %52 = arith.truncf %51 : vector<2x128xf32> to vector<2x128xbf16>
    %c0_23 = arith.constant 0 : index
    %c0_24 = arith.constant 0 : index
    %53 = vector.load %arg5[%c0_23, %c0_24] : memref<128x768xbf16, #tpu.memory_space<vmem>>, vector<128x768xbf16>
    %cst_25 = arith.constant dense<0.000000e+00> : vector<2x768xf32>
    %54 = tpu.matmul %52, %53, %cst_25 {dimension_numbers = #tpu.dot_dimension_numbers<[1], [0], [0], [1], [0, 0, 1, 1], [], []>} : vector<2x128xbf16>, vector<128x768xbf16>, vector<2x768xf32> -> vector<2x768xf32>
    %55 = vector.extract_strided_slice %54 {offsets = [0, 0], sizes = [2, 384], strides = [1, 1]} : vector<2x768xf32> to vector<2x384xf32>
    %56 = arith.addf %55, %14 : vector<2x384xf32>
    %57 = vector.extract_strided_slice %54 {offsets = [0, 384], sizes = [2, 384], strides = [1, 1]} : vector<2x768xf32> to vector<2x384xf32>
    %58 = arith.addf %57, %11 : vector<2x384xf32>
    %59 = vector.extract_strided_slice %56 {offsets = [0, 0], sizes = [2, 256], strides = [1, 1]} : vector<2x384xf32> to vector<2x256xf32>
    %60 = vector.extract_strided_slice %29 {offsets = [0, 0], sizes = [2, 256], strides = [1, 1]} : vector<2x384xf32> to vector<2x256xf32>
    %61 = arith.addf %59, %60 : vector<2x256xf32>
    %62 = arith.negf %61 : vector<2x256xf32>
    %63 = math.exp %62 : vector<2x256xf32>
    %cst_26 = arith.constant 1.000000e+00 : f32
    %64 = vector.broadcast %cst_26 : f32 to vector<2x256xf32>
    %65 = arith.addf %64, %63 : vector<2x256xf32>
    %66 = arith.divf %64, %65 : vector<2x256xf32>
    %67 = vector.extract_strided_slice %66 {offsets = [0, 0], sizes = [2, 128], strides = [1, 1]} : vector<2x256xf32> to vector<2x128xf32>
    %68 = vector.extract_strided_slice %66 {offsets = [0, 128], sizes = [2, 128], strides = [1, 1]} : vector<2x256xf32> to vector<2x128xf32>
    %69 = vector.extract_strided_slice %56 {offsets = [0, 256], sizes = [2, 128], strides = [1, 1]} : vector<2x384xf32> to vector<2x128xf32>
    %70 = vector.extract_strided_slice %29 {offsets = [0, 256], sizes = [2, 128], strides = [1, 1]} : vector<2x384xf32> to vector<2x128xf32>
    %71 = arith.mulf %67, %70 : vector<2x128xf32>
    %72 = arith.addf %69, %71 : vector<2x128xf32>
    %73 = math.tanh %72 : vector<2x128xf32>
    %cst_27 = arith.constant 1.000000e+00 : f32
    %74 = vector.broadcast %cst_27 : f32 to vector<2x128xf32>
    %75 = arith.subf %74, %68 : vector<2x128xf32>
    %76 = arith.mulf %75, %73 : vector<2x128xf32>
    %77 = arith.mulf %68, %21 : vector<2x128xf32>
    %78 = arith.addf %76, %77 : vector<2x128xf32>
    %79 = arith.truncf %78 : vector<2x128xf32> to vector<2x128xbf16>
    %c0_28 = arith.constant 0 : index
    %c0_29 = arith.constant 0 : index
    %80 = vector.load %arg8[%c0_28, %c0_29] : memref<128x384xbf16, #tpu.memory_space<vmem>>, vector<128x384xbf16>
    %cst_30 = arith.constant dense<0.000000e+00> : vector<2x384xf32>
    %81 = tpu.matmul %79, %80, %cst_30 {dimension_numbers = #tpu.dot_dimension_numbers<[1], [0], [0], [1], [0, 0, 1, 1], [], []>} : vector<2x128xbf16>, vector<128x384xbf16>, vector<2x384xf32> -> vector<2x384xf32>
    %82 = arith.addf %81, %17 : vector<2x384xf32>
    %c0_31 = arith.constant 0 : index
    %c0_32 = arith.constant 0 : index
    %c0_33 = arith.constant 0 : index
    %83 = vector.load %arg14[%c0_31, %c0_32, %c0_33] : memref<2x8x128xf32, #tpu.memory_space<vmem>>, vector<2x1x128xf32>
    %84 = vector.shape_cast %83 : vector<2x1x128xf32> to vector<2x128xf32>
    %85 = vector.shape_cast %78 : vector<2x128xf32> to vector<2x1x128xf32>
    tpu.vector_store %arg14[%c0_31, %c0_32, %c0_33], %85 {strides = array<i32>} : memref<2x8x128xf32, #tpu.memory_space<vmem>>, vector<2x1x128xf32>,
    %86 = vector.extract_strided_slice %8 {offsets = [1, 0, 0], sizes = [1, 2, 384], strides = [1, 1, 1]} : vector<8x2x384xf32> to vector<1x2x384xf32>
    %87 = vector.shape_cast %86 : vector<1x2x384xf32> to vector<2x384xf32>
    %88 = vector.extract_strided_slice %87 {offsets = [0, 0], sizes = [2, 256], strides = [1, 1]} : vector<2x384xf32> to vector<2x256xf32>
    %89 = vector.extract_strided_slice %58 {offsets = [0, 0], sizes = [2, 256], strides = [1, 1]} : vector<2x384xf32> to vector<2x256xf32>
    %90 = arith.addf %88, %89 : vector<2x256xf32>
    %91 = arith.negf %90 : vector<2x256xf32>
    %92 = math.exp %91 : vector<2x256xf32>
    %cst_34 = arith.constant 1.000000e+00 : f32
    %93 = vector.broadcast %cst_34 : f32 to vector<2x256xf32>
    %94 = arith.addf %93, %92 : vector<2x256xf32>
    %95 = arith.divf %93, %94 : vector<2x256xf32>
    %96 = vector.extract_strided_slice %95 {offsets = [0, 0], sizes = [2, 128], strides = [1, 1]} : vector<2x256xf32> to vector<2x128xf32>
    %97 = vector.extract_strided_slice %95 {offsets = [0, 128], sizes = [2, 128], strides = [1, 1]} : vector<2x256xf32> to vector<2x128xf32>
    %98 = vector.extract_strided_slice %87 {offsets = [0, 256], sizes = [2, 128], strides = [1, 1]} : vector<2x384xf32> to vector<2x128xf32>
    %99 = vector.extract_strided_slice %58 {offsets = [0, 256], sizes = [2, 128], strides = [1, 1]} : vector<2x384xf32> to vector<2x128xf32>
    %100 = arith.mulf %96, %99 : vector<2x128xf32>
    %101 = arith.addf %98, %100 : vector<2x128xf32>
    %102 = math.tanh %101 : vector<2x128xf32>
    %cst_35 = arith.constant 1.000000e+00 : f32
    %103 = vector.broadcast %cst_35 : f32 to vector<2x128xf32>
    %104 = arith.subf %103, %97 : vector<2x128xf32>
    %105 = arith.mulf %104, %102 : vector<2x128xf32>
    %106 = arith.mulf %97, %51 : vector<2x128xf32>
    %107 = arith.addf %105, %106 : vector<2x128xf32>
    %108 = arith.truncf %107 : vector<2x128xf32> to vector<2x128xbf16>
    %c0_36 = arith.constant 0 : index
    %c0_37 = arith.constant 0 : index
    %109 = vector.load %arg5[%c0_36, %c0_37] : memref<128x768xbf16, #tpu.memory_space<vmem>>, vector<128x768xbf16>
    %cst_38 = arith.constant dense<0.000000e+00> : vector<2x768xf32>
    %110 = tpu.matmul %108, %109, %cst_38 {dimension_numbers = #tpu.dot_dimension_numbers<[1], [0], [0], [1], [0, 0, 1, 1], [], []>} : vector<2x128xbf16>, vector<128x768xbf16>, vector<2x768xf32> -> vector<2x768xf32>
    %111 = vector.extract_strided_slice %110 {offsets = [0, 0], sizes = [2, 384], strides = [1, 1]} : vector<2x768xf32> to vector<2x384xf32>
    %112 = arith.addf %111, %14 : vector<2x384xf32>
    %113 = vector.extract_strided_slice %110 {offsets = [0, 384], sizes = [2, 384], strides = [1, 1]} : vector<2x768xf32> to vector<2x384xf32>
    %114 = arith.addf %113, %11 : vector<2x384xf32>
    %115 = vector.extract_strided_slice %112 {offsets = [0, 0], sizes = [2, 256], strides = [1, 1]} : vector<2x384xf32> to vector<2x256xf32>
    %116 = vector.extract_strided_slice %82 {offsets = [0, 0], sizes = [2, 256], strides = [1, 1]} : vector<2x384xf32> to vector<2x256xf32>
    %117 = arith.addf %115, %116 : vector<2x256xf32>
    %118 = arith.negf %117 : vector<2x256xf32>
    %119 = math.exp %118 : vector<2x256xf32>
    %cst_39 = arith.constant 1.000000e+00 : f32
    %120 = vector.broadcast %cst_39 : f32 to vector<2x256xf32>
    %121 = arith.addf %120, %119 : vector<2x256xf32>
    %122 = arith.divf %120, %121 : vector<2x256xf32>
    %123 = vector.extract_strided_slice %122 {offsets = [0, 0], sizes = [2, 128], strides = [1, 1]} : vector<2x256xf32> to vector<2x128xf32>
    %124 = vector.extract_strided_slice %122 {offsets = [0, 128], sizes = [2, 128], strides = [1, 1]} : vector<2x256xf32> to vector<2x128xf32>
    %125 = vector.extract_strided_slice %112 {offsets = [0, 256], sizes = [2, 128], strides = [1, 1]} : vector<2x384xf32> to vector<2x128xf32>
    %126 = vector.extract_strided_slice %82 {offsets = [0, 256], sizes = [2, 128], strides = [1, 1]} : vector<2x384xf32> to vector<2x128xf32>
    %127 = arith.mulf %123, %126 : vector<2x128xf32>
    %128 = arith.addf %125, %127 : vector<2x128xf32>
    %129 = math.tanh %128 : vector<2x128xf32>
    %cst_40 = arith.constant 1.000000e+00 : f32
    %130 = vector.broadcast %cst_40 : f32 to vector<2x128xf32>
    %131 = arith.subf %130, %124 : vector<2x128xf32>
    %132 = arith.mulf %131, %129 : vector<2x128xf32>
    %133 = arith.mulf %124, %78 : vector<2x128xf32>
    %134 = arith.addf %132, %133 : vector<2x128xf32>
    %135 = arith.truncf %134 : vector<2x128xf32> to vector<2x128xbf16>
    %c0_41 = arith.constant 0 : index
    %c0_42 = arith.constant 0 : index
    %136 = vector.load %arg8[%c0_41, %c0_42] : memref<128x384xbf16, #tpu.memory_space<vmem>>, vector<128x384xbf16>
    %cst_43 = arith.constant dense<0.000000e+00> : vector<2x384xf32>
    %137 = tpu.matmul %135, %136, %cst_43 {dimension_numbers = #tpu.dot_dimension_numbers<[1], [0], [0], [1], [0, 0, 1, 1], [], []>} : vector<2x128xbf16>, vector<128x384xbf16>, vector<2x384xf32> -> vector<2x384xf32>
    %138 = arith.addf %137, %17 : vector<2x384xf32>
    %c0_44 = arith.constant 0 : index
    %c1_45 = arith.constant 1 : index
    %c0_46 = arith.constant 0 : index
    %139 = vector.load %arg14[%c0_44, %c1_45, %c0_46] : memref<2x8x128xf32, #tpu.memory_space<vmem>>, vector<2x1x128xf32>
    %140 = vector.shape_cast %139 : vector<2x1x128xf32> to vector<2x128xf32>
    %141 = vector.shape_cast %134 : vector<2x128xf32> to vector<2x1x128xf32>
    tpu.vector_store %arg14[%c0_44, %c1_45, %c0_46], %141 {strides = array<i32>} : memref<2x8x128xf32, #tpu.memory_space<vmem>>, vector<2x1x128xf32>,
    %142 = vector.extract_strided_slice %8 {offsets = [2, 0, 0], sizes = [1, 2, 384], strides = [1, 1, 1]} : vector<8x2x384xf32> to vector<1x2x384xf32>
    %143 = vector.shape_cast %142 : vector<1x2x384xf32> to vector<2x384xf32>
    %144 = vector.extract_strided_slice %143 {offsets = [0, 0], sizes = [2, 256], strides = [1, 1]} : vector<2x384xf32> to vector<2x256xf32>
    %145 = vector.extract_strided_slice %114 {offsets = [0, 0], sizes = [2, 256], strides = [1, 1]} : vector<2x384xf32> to vector<2x256xf32>
    %146 = arith.addf %144, %145 : vector<2x256xf32>
    %147 = arith.negf %146 : vector<2x256xf32>
    %148 = math.exp %147 : vector<2x256xf32>
    %cst_47 = arith.constant 1.000000e+00 : f32
    %149 = vector.broadcast %cst_47 : f32 to vector<2x256xf32>
    %150 = arith.addf %149, %148 : vector<2x256xf32>
    %151 = arith.divf %149, %150 : vector<2x256xf32>
    %152 = vector.extract_strided_slice %151 {offsets = [0, 0], sizes = [2, 128], strides = [1, 1]} : vector<2x256xf32> to vector<2x128xf32>
    %153 = vector.extract_strided_slice %151 {offsets = [0, 128], sizes = [2, 128], strides = [1, 1]} : vector<2x256xf32> to vector<2x128xf32>
    %154 = vector.extract_strided_slice %143 {offsets = [0, 256], sizes = [2, 128], strides = [1, 1]} : vector<2x384xf32> to vector<2x128xf32>
    %155 = vector.extract_strided_slice %114 {offsets = [0, 256], sizes = [2, 128], strides = [1, 1]} : vector<2x384xf32> to vector<2x128xf32>
    %156 = arith.mulf %152, %155 : vector<2x128xf32>
    %157 = arith.addf %154, %156 : vector<2x128xf32>
    %158 = math.tanh %157 : vector<2x128xf32>
    %cst_48 = arith.constant 1.000000e+00 : f32
    %159 = vector.broadcast %cst_48 : f32 to vector<2x128xf32>
    %160 = arith.subf %159, %153 : vector<2x128xf32>
    %161 = arith.mulf %160, %158 : vector<2x128xf32>
    %162 = arith.mulf %153, %107 : vector<2x128xf32>
    %163 = arith.addf %161, %162 : vector<2x128xf32>
    %164 = arith.truncf %163 : vector<2x128xf32> to vector<2x128xbf16>
    %c0_49 = arith.constant 0 : index
    %c0_50 = arith.constant 0 : index
    %165 = vector.load %arg5[%c0_49, %c0_50] : memref<128x768xbf16, #tpu.memory_space<vmem>>, vector<128x768xbf16>
    %cst_51 = arith.constant dense<0.000000e+00> : vector<2x768xf32>
    %166 = tpu.matmul %164, %165, %cst_51 {dimension_numbers = #tpu.dot_dimension_numbers<[1], [0], [0], [1], [0, 0, 1, 1], [], []>} : vector<2x128xbf16>, vector<128x768xbf16>, vector<2x768xf32> -> vector<2x768xf32>
    %167 = vector.extract_strided_slice %166 {offsets = [0, 0], sizes = [2, 384], strides = [1, 1]} : vector<2x768xf32> to vector<2x384xf32>
    %168 = arith.addf %167, %14 : vector<2x384xf32>
    %169 = vector.extract_strided_slice %166 {offsets = [0, 384], sizes = [2, 384], strides = [1, 1]} : vector<2x768xf32> to vector<2x384xf32>
    %170 = arith.addf %169, %11 : vector<2x384xf32>
    %171 = vector.extract_strided_slice %168 {offsets = [0, 0], sizes = [2, 256], strides = [1, 1]} : vector<2x384xf32> to vector<2x256xf32>
    %172 = vector.extract_strided_slice %138 {offsets = [0, 0], sizes = [2, 256], strides = [1, 1]} : vector<2x384xf32> to vector<2x256xf32>
    %173 = arith.addf %171, %172 : vector<2x256xf32>
    %174 = arith.negf %173 : vector<2x256xf32>
    %175 = math.exp %174 : vector<2x256xf32>
    %cst_52 = arith.constant 1.000000e+00 : f32
    %176 = vector.broadcast %cst_52 : f32 to vector<2x256xf32>
    %177 = arith.addf %176, %175 : vector<2x256xf32>
    %178 = arith.divf %176, %177 : vector<2x256xf32>
    %179 = vector.extract_strided_slice %178 {offsets = [0, 0], sizes = [2, 128], strides = [1, 1]} : vector<2x256xf32> to vector<2x128xf32>
    %180 = vector.extract_strided_slice %178 {offsets = [0, 128], sizes = [2, 128], strides = [1, 1]} : vector<2x256xf32> to vector<2x128xf32>
    %181 = vector.extract_strided_slice %168 {offsets = [0, 256], sizes = [2, 128], strides = [1, 1]} : vector<2x384xf32> to vector<2x128xf32>
    %182 = vector.extract_strided_slice %138 {offsets = [0, 256], sizes = [2, 128], strides = [1, 1]} : vector<2x384xf32> to vector<2x128xf32>
    %183 = arith.mulf %179, %182 : vector<2x128xf32>
    %184 = arith.addf %181, %183 : vector<2x128xf32>
    %185 = math.tanh %184 : vector<2x128xf32>
    %cst_53 = arith.constant 1.000000e+00 : f32
    %186 = vector.broadcast %cst_53 : f32 to vector<2x128xf32>
    %187 = arith.subf %186, %180 : vector<2x128xf32>
    %188 = arith.mulf %187, %185 : vector<2x128xf32>
    %189 = arith.mulf %180, %134 : vector<2x128xf32>
    %190 = arith.addf %188, %189 : vector<2x128xf32>
    %191 = arith.truncf %190 : vector<2x128xf32> to vector<2x128xbf16>
    %c0_54 = arith.constant 0 : index
    %c0_55 = arith.constant 0 : index
    %192 = vector.load %arg8[%c0_54, %c0_55] : memref<128x384xbf16, #tpu.memory_space<vmem>>, vector<128x384xbf16>
    %cst_56 = arith.constant dense<0.000000e+00> : vector<2x384xf32>
    %193 = tpu.matmul %191, %192, %cst_56 {dimension_numbers = #tpu.dot_dimension_numbers<[1], [0], [0], [1], [0, 0, 1, 1], [], []>} : vector<2x128xbf16>, vector<128x384xbf16>, vector<2x384xf32> -> vector<2x384xf32>
    %194 = arith.addf %193, %17 : vector<2x384xf32>
    %c0_57 = arith.constant 0 : index
    %c2 = arith.constant 2 : index
    %c0_58 = arith.constant 0 : index
    %195 = vector.load %arg14[%c0_57, %c2, %c0_58] : memref<2x8x128xf32, #tpu.memory_space<vmem>>, vector<2x1x128xf32>
    %196 = vector.shape_cast %195 : vector<2x1x128xf32> to vector<2x128xf32>
    %197 = vector.shape_cast %190 : vector<2x128xf32> to vector<2x1x128xf32>
    tpu.vector_store %arg14[%c0_57, %c2, %c0_58], %197 {strides = array<i32>} : memref<2x8x128xf32, #tpu.memory_space<vmem>>, vector<2x1x128xf32>,
    %198 = vector.extract_strided_slice %8 {offsets = [3, 0, 0], sizes = [1, 2, 384], strides = [1, 1, 1]} : vector<8x2x384xf32> to vector<1x2x384xf32>
    %199 = vector.shape_cast %198 : vector<1x2x384xf32> to vector<2x384xf32>
    %200 = vector.extract_strided_slice %199 {offsets = [0, 0], sizes = [2, 256], strides = [1, 1]} : vector<2x384xf32> to vector<2x256xf32>
    %201 = vector.extract_strided_slice %170 {offsets = [0, 0], sizes = [2, 256], strides = [1, 1]} : vector<2x384xf32> to vector<2x256xf32>
    %202 = arith.addf %200, %201 : vector<2x256xf32>
    %203 = arith.negf %202 : vector<2x256xf32>
    %204 = math.exp %203 : vector<2x256xf32>
    %cst_59 = arith.constant 1.000000e+00 : f32
    %205 = vector.broadcast %cst_59 : f32 to vector<2x256xf32>
    %206 = arith.addf %205, %204 : vector<2x256xf32>
    %207 = arith.divf %205, %206 : vector<2x256xf32>
    %208 = vector.extract_strided_slice %207 {offsets = [0, 0], sizes = [2, 128], strides = [1, 1]} : vector<2x256xf32> to vector<2x128xf32>
    %209 = vector.extract_strided_slice %207 {offsets = [0, 128], sizes = [2, 128], strides = [1, 1]} : vector<2x256xf32> to vector<2x128xf32>
    %210 = vector.extract_strided_slice %199 {offsets = [0, 256], sizes = [2, 128], strides = [1, 1]} : vector<2x384xf32> to vector<2x128xf32>
    %211 = vector.extract_strided_slice %170 {offsets = [0, 256], sizes = [2, 128], strides = [1, 1]} : vector<2x384xf32> to vector<2x128xf32>
    %212 = arith.mulf %208, %211 : vector<2x128xf32>
    %213 = arith.addf %210, %212 : vector<2x128xf32>
    %214 = math.tanh %213 : vector<2x128xf32>
    %cst_60 = arith.constant 1.000000e+00 : f32
    %215 = vector.broadcast %cst_60 : f32 to vector<2x128xf32>
    %216 = arith.subf %215, %209 : vector<2x128xf32>
    %217 = arith.mulf %216, %214 : vector<2x128xf32>
    %218 = arith.mulf %209, %163 : vector<2x128xf32>
    %219 = arith.addf %217, %218 : vector<2x128xf32>
    %220 = arith.truncf %219 : vector<2x128xf32> to vector<2x128xbf16>
    %c0_61 = arith.constant 0 : index
    %c0_62 = arith.constant 0 : index
    %221 = vector.load %arg5[%c0_61, %c0_62] : memref<128x768xbf16, #tpu.memory_space<vmem>>, vector<128x768xbf16>
    %cst_63 = arith.constant dense<0.000000e+00> : vector<2x768xf32>
    %222 = tpu.matmul %220, %221, %cst_63 {dimension_numbers = #tpu.dot_dimension_numbers<[1], [0], [0], [1], [0, 0, 1, 1], [], []>} : vector<2x128xbf16>, vector<128x768xbf16>, vector<2x768xf32> -> vector<2x768xf32>
    %223 = vector.extract_strided_slice %222 {offsets = [0, 0], sizes = [2, 384], strides = [1, 1]} : vector<2x768xf32> to vector<2x384xf32>
    %224 = arith.addf %223, %14 : vector<2x384xf32>
    %225 = vector.extract_strided_slice %222 {offsets = [0, 384], sizes = [2, 384], strides = [1, 1]} : vector<2x768xf32> to vector<2x384xf32>
    %226 = arith.addf %225, %11 : vector<2x384xf32>
    %227 = vector.extract_strided_slice %224 {offsets = [0, 0], sizes = [2, 256], strides = [1, 1]} : vector<2x384xf32> to vector<2x256xf32>
    %228 = vector.extract_strided_slice %194 {offsets = [0, 0], sizes = [2, 256], strides = [1, 1]} : vector<2x384xf32> to vector<2x256xf32>
    %229 = arith.addf %227, %228 : vector<2x256xf32>
    %230 = arith.negf %229 : vector<2x256xf32>
    %231 = math.exp %230 : vector<2x256xf32>
    %cst_64 = arith.constant 1.000000e+00 : f32
    %232 = vector.broadcast %cst_64 : f32 to vector<2x256xf32>
    %233 = arith.addf %232, %231 : vector<2x256xf32>
    %234 = arith.divf %232, %233 : vector<2x256xf32>
    %235 = vector.extract_strided_slice %234 {offsets = [0, 0], sizes = [2, 128], strides = [1, 1]} : vector<2x256xf32> to vector<2x128xf32>
    %236 = vector.extract_strided_slice %234 {offsets = [0, 128], sizes = [2, 128], strides = [1, 1]} : vector<2x256xf32> to vector<2x128xf32>
    %237 = vector.extract_strided_slice %224 {offsets = [0, 256], sizes = [2, 128], strides = [1, 1]} : vector<2x384xf32> to vector<2x128xf32>
    %238 = vector.extract_strided_slice %194 {offsets = [0, 256], sizes = [2, 128], strides = [1, 1]} : vector<2x384xf32> to vector<2x128xf32>
    %239 = arith.mulf %235, %238 : vector<2x128xf32>
    %240 = arith.addf %237, %239 : vector<2x128xf32>
    %241 = math.tanh %240 : vector<2x128xf32>
    %cst_65 = arith.constant 1.000000e+00 : f32
    %242 = vector.broadcast %cst_65 : f32 to vector<2x128xf32>
    %243 = arith.subf %242, %236 : vector<2x128xf32>
    %244 = arith.mulf %243, %241 : vector<2x128xf32>
    %245 = arith.mulf %236, %190 : vector<2x128xf32>
    %246 = arith.addf %244, %245 : vector<2x128xf32>
    %247 = arith.truncf %246 : vector<2x128xf32> to vector<2x128xbf16>
    %c0_66 = arith.constant 0 : index
    %c0_67 = arith.constant 0 : index
    %248 = vector.load %arg8[%c0_66, %c0_67] : memref<128x384xbf16, #tpu.memory_space<vmem>>, vector<128x384xbf16>
    %cst_68 = arith.constant dense<0.000000e+00> : vector<2x384xf32>
    %249 = tpu.matmul %247, %248, %cst_68 {dimension_numbers = #tpu.dot_dimension_numbers<[1], [0], [0], [1], [0, 0, 1, 1], [], []>} : vector<2x128xbf16>, vector<128x384xbf16>, vector<2x384xf32> -> vector<2x384xf32>
    %250 = arith.addf %249, %17 : vector<2x384xf32>
    %c0_69 = arith.constant 0 : index
    %c3 = arith.constant 3 : index
    %c0_70 = arith.constant 0 : index
    %251 = vector.load %arg14[%c0_69, %c3, %c0_70] : memref<2x8x128xf32, #tpu.memory_space<vmem>>, vector<2x1x128xf32>
    %252 = vector.shape_cast %251 : vector<2x1x128xf32> to vector<2x128xf32>
    %253 = vector.shape_cast %246 : vector<2x128xf32> to vector<2x1x128xf32>
    tpu.vector_store %arg14[%c0_69, %c3, %c0_70], %253 {strides = array<i32>} : memref<2x8x128xf32, #tpu.memory_space<vmem>>, vector<2x1x128xf32>,
    %254 = vector.extract_strided_slice %8 {offsets = [4, 0, 0], sizes = [1, 2, 384], strides = [1, 1, 1]} : vector<8x2x384xf32> to vector<1x2x384xf32>
    %255 = vector.shape_cast %254 : vector<1x2x384xf32> to vector<2x384xf32>
    %256 = vector.extract_strided_slice %255 {offsets = [0, 0], sizes = [2, 256], strides = [1, 1]} : vector<2x384xf32> to vector<2x256xf32>
    %257 = vector.extract_strided_slice %226 {offsets = [0, 0], sizes = [2, 256], strides = [1, 1]} : vector<2x384xf32> to vector<2x256xf32>
    %258 = arith.addf %256, %257 : vector<2x256xf32>
    %259 = arith.negf %258 : vector<2x256xf32>
    %260 = math.exp %259 : vector<2x256xf32>
    %cst_71 = arith.constant 1.000000e+00 : f32
    %261 = vector.broadcast %cst_71 : f32 to vector<2x256xf32>
    %262 = arith.addf %261, %260 : vector<2x256xf32>
    %263 = arith.divf %261, %262 : vector<2x256xf32>
    %264 = vector.extract_strided_slice %263 {offsets = [0, 0], sizes = [2, 128], strides = [1, 1]} : vector<2x256xf32> to vector<2x128xf32>
    %265 = vector.extract_strided_slice %263 {offsets = [0, 128], sizes = [2, 128], strides = [1, 1]} : vector<2x256xf32> to vector<2x128xf32>
    %266 = vector.extract_strided_slice %255 {offsets = [0, 256], sizes = [2, 128], strides = [1, 1]} : vector<2x384xf32> to vector<2x128xf32>
    %267 = vector.extract_strided_slice %226 {offsets = [0, 256], sizes = [2, 128], strides = [1, 1]} : vector<2x384xf32> to vector<2x128xf32>
    %268 = arith.mulf %264, %267 : vector<2x128xf32>
    %269 = arith.addf %266, %268 : vector<2x128xf32>
    %270 = math.tanh %269 : vector<2x128xf32>
    %cst_72 = arith.constant 1.000000e+00 : f32
    %271 = vector.broadcast %cst_72 : f32 to vector<2x128xf32>
    %272 = arith.subf %271, %265 : vector<2x128xf32>
    %273 = arith.mulf %272, %270 : vector<2x128xf32>
    %274 = arith.mulf %265, %219 : vector<2x128xf32>
    %275 = arith.addf %273, %274 : vector<2x128xf32>
    %276 = arith.truncf %275 : vector<2x128xf32> to vector<2x128xbf16>
    %c0_73 = arith.constant 0 : index
    %c0_74 = arith.constant 0 : index
    %277 = vector.load %arg5[%c0_73, %c0_74] : memref<128x768xbf16, #tpu.memory_space<vmem>>, vector<128x768xbf16>
    %cst_75 = arith.constant dense<0.000000e+00> : vector<2x768xf32>
    %278 = tpu.matmul %276, %277, %cst_75 {dimension_numbers = #tpu.dot_dimension_numbers<[1], [0], [0], [1], [0, 0, 1, 1], [], []>} : vector<2x128xbf16>, vector<128x768xbf16>, vector<2x768xf32> -> vector<2x768xf32>
    %279 = vector.extract_strided_slice %278 {offsets = [0, 0], sizes = [2, 384], strides = [1, 1]} : vector<2x768xf32> to vector<2x384xf32>
    %280 = arith.addf %279, %14 : vector<2x384xf32>
    %281 = vector.extract_strided_slice %278 {offsets = [0, 384], sizes = [2, 384], strides = [1, 1]} : vector<2x768xf32> to vector<2x384xf32>
    %282 = arith.addf %281, %11 : vector<2x384xf32>
    %283 = vector.extract_strided_slice %280 {offsets = [0, 0], sizes = [2, 256], strides = [1, 1]} : vector<2x384xf32> to vector<2x256xf32>
    %284 = vector.extract_strided_slice %250 {offsets = [0, 0], sizes = [2, 256], strides = [1, 1]} : vector<2x384xf32> to vector<2x256xf32>
    %285 = arith.addf %283, %284 : vector<2x256xf32>
    %286 = arith.negf %285 : vector<2x256xf32>
    %287 = math.exp %286 : vector<2x256xf32>
    %cst_76 = arith.constant 1.000000e+00 : f32
    %288 = vector.broadcast %cst_76 : f32 to vector<2x256xf32>
    %289 = arith.addf %288, %287 : vector<2x256xf32>
    %290 = arith.divf %288, %289 : vector<2x256xf32>
    %291 = vector.extract_strided_slice %290 {offsets = [0, 0], sizes = [2, 128], strides = [1, 1]} : vector<2x256xf32> to vector<2x128xf32>
    %292 = vector.extract_strided_slice %290 {offsets = [0, 128], sizes = [2, 128], strides = [1, 1]} : vector<2x256xf32> to vector<2x128xf32>
    %293 = vector.extract_strided_slice %280 {offsets = [0, 256], sizes = [2, 128], strides = [1, 1]} : vector<2x384xf32> to vector<2x128xf32>
    %294 = vector.extract_strided_slice %250 {offsets = [0, 256], sizes = [2, 128], strides = [1, 1]} : vector<2x384xf32> to vector<2x128xf32>
    %295 = arith.mulf %291, %294 : vector<2x128xf32>
    %296 = arith.addf %293, %295 : vector<2x128xf32>
    %297 = math.tanh %296 : vector<2x128xf32>
    %cst_77 = arith.constant 1.000000e+00 : f32
    %298 = vector.broadcast %cst_77 : f32 to vector<2x128xf32>
    %299 = arith.subf %298, %292 : vector<2x128xf32>
    %300 = arith.mulf %299, %297 : vector<2x128xf32>
    %301 = arith.mulf %292, %246 : vector<2x128xf32>
    %302 = arith.addf %300, %301 : vector<2x128xf32>
    %303 = arith.truncf %302 : vector<2x128xf32> to vector<2x128xbf16>
    %c0_78 = arith.constant 0 : index
    %c0_79 = arith.constant 0 : index
    %304 = vector.load %arg8[%c0_78, %c0_79] : memref<128x384xbf16, #tpu.memory_space<vmem>>, vector<128x384xbf16>
    %cst_80 = arith.constant dense<0.000000e+00> : vector<2x384xf32>
    %305 = tpu.matmul %303, %304, %cst_80 {dimension_numbers = #tpu.dot_dimension_numbers<[1], [0], [0], [1], [0, 0, 1, 1], [], []>} : vector<2x128xbf16>, vector<128x384xbf16>, vector<2x384xf32> -> vector<2x384xf32>
    %306 = arith.addf %305, %17 : vector<2x384xf32>
    %c0_81 = arith.constant 0 : index
    %c4 = arith.constant 4 : index
    %c0_82 = arith.constant 0 : index
    %307 = vector.load %arg14[%c0_81, %c4, %c0_82] : memref<2x8x128xf32, #tpu.memory_space<vmem>>, vector<2x1x128xf32>
    %308 = vector.shape_cast %307 : vector<2x1x128xf32> to vector<2x128xf32>
    %309 = vector.shape_cast %302 : vector<2x128xf32> to vector<2x1x128xf32>
    tpu.vector_store %arg14[%c0_81, %c4, %c0_82], %309 {strides = array<i32>} : memref<2x8x128xf32, #tpu.memory_space<vmem>>, vector<2x1x128xf32>,
    %310 = vector.extract_strided_slice %8 {offsets = [5, 0, 0], sizes = [1, 2, 384], strides = [1, 1, 1]} : vector<8x2x384xf32> to vector<1x2x384xf32>
    %311 = vector.shape_cast %310 : vector<1x2x384xf32> to vector<2x384xf32>
    %312 = vector.extract_strided_slice %311 {offsets = [0, 0], sizes = [2, 256], strides = [1, 1]} : vector<2x384xf32> to vector<2x256xf32>
    %313 = vector.extract_strided_slice %282 {offsets = [0, 0], sizes = [2, 256], strides = [1, 1]} : vector<2x384xf32> to vector<2x256xf32>
    %314 = arith.addf %312, %313 : vector<2x256xf32>
    %315 = arith.negf %314 : vector<2x256xf32>
    %316 = math.exp %315 : vector<2x256xf32>
    %cst_83 = arith.constant 1.000000e+00 : f32
    %317 = vector.broadcast %cst_83 : f32 to vector<2x256xf32>
    %318 = arith.addf %317, %316 : vector<2x256xf32>
    %319 = arith.divf %317, %318 : vector<2x256xf32>
    %320 = vector.extract_strided_slice %319 {offsets = [0, 0], sizes = [2, 128], strides = [1, 1]} : vector<2x256xf32> to vector<2x128xf32>
    %321 = vector.extract_strided_slice %319 {offsets = [0, 128], sizes = [2, 128], strides = [1, 1]} : vector<2x256xf32> to vector<2x128xf32>
    %322 = vector.extract_strided_slice %311 {offsets = [0, 256], sizes = [2, 128], strides = [1, 1]} : vector<2x384xf32> to vector<2x128xf32>
    %323 = vector.extract_strided_slice %282 {offsets = [0, 256], sizes = [2, 128], strides = [1, 1]} : vector<2x384xf32> to vector<2x128xf32>
    %324 = arith.mulf %320, %323 : vector<2x128xf32>
    %325 = arith.addf %322, %324 : vector<2x128xf32>
    %326 = math.tanh %325 : vector<2x128xf32>
    %cst_84 = arith.constant 1.000000e+00 : f32
    %327 = vector.broadcast %cst_84 : f32 to vector<2x128xf32>
    %328 = arith.subf %327, %321 : vector<2x128xf32>
    %329 = arith.mulf %328, %326 : vector<2x128xf32>
    %330 = arith.mulf %321, %275 : vector<2x128xf32>
    %331 = arith.addf %329, %330 : vector<2x128xf32>
    %332 = arith.truncf %331 : vector<2x128xf32> to vector<2x128xbf16>
    %c0_85 = arith.constant 0 : index
    %c0_86 = arith.constant 0 : index
    %333 = vector.load %arg5[%c0_85, %c0_86] : memref<128x768xbf16, #tpu.memory_space<vmem>>, vector<128x768xbf16>
    %cst_87 = arith.constant dense<0.000000e+00> : vector<2x768xf32>
    %334 = tpu.matmul %332, %333, %cst_87 {dimension_numbers = #tpu.dot_dimension_numbers<[1], [0], [0], [1], [0, 0, 1, 1], [], []>} : vector<2x128xbf16>, vector<128x768xbf16>, vector<2x768xf32> -> vector<2x768xf32>
    %335 = vector.extract_strided_slice %334 {offsets = [0, 0], sizes = [2, 384], strides = [1, 1]} : vector<2x768xf32> to vector<2x384xf32>
    %336 = arith.addf %335, %14 : vector<2x384xf32>
    %337 = vector.extract_strided_slice %334 {offsets = [0, 384], sizes = [2, 384], strides = [1, 1]} : vector<2x768xf32> to vector<2x384xf32>
    %338 = arith.addf %337, %11 : vector<2x384xf32>
    %339 = vector.extract_strided_slice %336 {offsets = [0, 0], sizes = [2, 256], strides = [1, 1]} : vector<2x384xf32> to vector<2x256xf32>
    %340 = vector.extract_strided_slice %306 {offsets = [0, 0], sizes = [2, 256], strides = [1, 1]} : vector<2x384xf32> to vector<2x256xf32>
    %341 = arith.addf %339, %340 : vector<2x256xf32>
    %342 = arith.negf %341 : vector<2x256xf32>
    %343 = math.exp %342 : vector<2x256xf32>
    %cst_88 = arith.constant 1.000000e+00 : f32
    %344 = vector.broadcast %cst_88 : f32 to vector<2x256xf32>
    %345 = arith.addf %344, %343 : vector<2x256xf32>
    %346 = arith.divf %344, %345 : vector<2x256xf32>
    %347 = vector.extract_strided_slice %346 {offsets = [0, 0], sizes = [2, 128], strides = [1, 1]} : vector<2x256xf32> to vector<2x128xf32>
    %348 = vector.extract_strided_slice %346 {offsets = [0, 128], sizes = [2, 128], strides = [1, 1]} : vector<2x256xf32> to vector<2x128xf32>
    %349 = vector.extract_strided_slice %336 {offsets = [0, 256], sizes = [2, 128], strides = [1, 1]} : vector<2x384xf32> to vector<2x128xf32>
    %350 = vector.extract_strided_slice %306 {offsets = [0, 256], sizes = [2, 128], strides = [1, 1]} : vector<2x384xf32> to vector<2x128xf32>
    %351 = arith.mulf %347, %350 : vector<2x128xf32>
    %352 = arith.addf %349, %351 : vector<2x128xf32>
    %353 = math.tanh %352 : vector<2x128xf32>
    %cst_89 = arith.constant 1.000000e+00 : f32
    %354 = vector.broadcast %cst_89 : f32 to vector<2x128xf32>
    %355 = arith.subf %354, %348 : vector<2x128xf32>
    %356 = arith.mulf %355, %353 : vector<2x128xf32>
    %357 = arith.mulf %348, %302 : vector<2x128xf32>
    %358 = arith.addf %356, %357 : vector<2x128xf32>
    %359 = arith.truncf %358 : vector<2x128xf32> to vector<2x128xbf16>
    %c0_90 = arith.constant 0 : index
    %c0_91 = arith.constant 0 : index
    %360 = vector.load %arg8[%c0_90, %c0_91] : memref<128x384xbf16, #tpu.memory_space<vmem>>, vector<128x384xbf16>
    %cst_92 = arith.constant dense<0.000000e+00> : vector<2x384xf32>
    %361 = tpu.matmul %359, %360, %cst_92 {dimension_numbers = #tpu.dot_dimension_numbers<[1], [0], [0], [1], [0, 0, 1, 1], [], []>} : vector<2x128xbf16>, vector<128x384xbf16>, vector<2x384xf32> -> vector<2x384xf32>
    %362 = arith.addf %361, %17 : vector<2x384xf32>
    %c0_93 = arith.constant 0 : index
    %c5 = arith.constant 5 : index
    %c0_94 = arith.constant 0 : index
    %363 = vector.load %arg14[%c0_93, %c5, %c0_94] : memref<2x8x128xf32, #tpu.memory_space<vmem>>, vector<2x1x128xf32>
    %364 = vector.shape_cast %363 : vector<2x1x128xf32> to vector<2x128xf32>
    %365 = vector.shape_cast %358 : vector<2x128xf32> to vector<2x1x128xf32>
    tpu.vector_store %arg14[%c0_93, %c5, %c0_94], %365 {strides = array<i32>} : memref<2x8x128xf32, #tpu.memory_space<vmem>>, vector<2x1x128xf32>,
    %366 = vector.extract_strided_slice %8 {offsets = [6, 0, 0], sizes = [1, 2, 384], strides = [1, 1, 1]} : vector<8x2x384xf32> to vector<1x2x384xf32>
    %367 = vector.shape_cast %366 : vector<1x2x384xf32> to vector<2x384xf32>
    %368 = vector.extract_strided_slice %367 {offsets = [0, 0], sizes = [2, 256], strides = [1, 1]} : vector<2x384xf32> to vector<2x256xf32>
    %369 = vector.extract_strided_slice %338 {offsets = [0, 0], sizes = [2, 256], strides = [1, 1]} : vector<2x384xf32> to vector<2x256xf32>
    %370 = arith.addf %368, %369 : vector<2x256xf32>
    %371 = arith.negf %370 : vector<2x256xf32>
    %372 = math.exp %371 : vector<2x256xf32>
    %cst_95 = arith.constant 1.000000e+00 : f32
    %373 = vector.broadcast %cst_95 : f32 to vector<2x256xf32>
    %374 = arith.addf %373, %372 : vector<2x256xf32>
    %375 = arith.divf %373, %374 : vector<2x256xf32>
    %376 = vector.extract_strided_slice %375 {offsets = [0, 0], sizes = [2, 128], strides = [1, 1]} : vector<2x256xf32> to vector<2x128xf32>
    %377 = vector.extract_strided_slice %375 {offsets = [0, 128], sizes = [2, 128], strides = [1, 1]} : vector<2x256xf32> to vector<2x128xf32>
    %378 = vector.extract_strided_slice %367 {offsets = [0, 256], sizes = [2, 128], strides = [1, 1]} : vector<2x384xf32> to vector<2x128xf32>
    %379 = vector.extract_strided_slice %338 {offsets = [0, 256], sizes = [2, 128], strides = [1, 1]} : vector<2x384xf32> to vector<2x128xf32>
    %380 = arith.mulf %376, %379 : vector<2x128xf32>
    %381 = arith.addf %378, %380 : vector<2x128xf32>
    %382 = math.tanh %381 : vector<2x128xf32>
    %cst_96 = arith.constant 1.000000e+00 : f32
    %383 = vector.broadcast %cst_96 : f32 to vector<2x128xf32>
    %384 = arith.subf %383, %377 : vector<2x128xf32>
    %385 = arith.mulf %384, %382 : vector<2x128xf32>
    %386 = arith.mulf %377, %331 : vector<2x128xf32>
    %387 = arith.addf %385, %386 : vector<2x128xf32>
    %388 = arith.truncf %387 : vector<2x128xf32> to vector<2x128xbf16>
    %c0_97 = arith.constant 0 : index
    %c0_98 = arith.constant 0 : index
    %389 = vector.load %arg5[%c0_97, %c0_98] : memref<128x768xbf16, #tpu.memory_space<vmem>>, vector<128x768xbf16>
    %cst_99 = arith.constant dense<0.000000e+00> : vector<2x768xf32>
    %390 = tpu.matmul %388, %389, %cst_99 {dimension_numbers = #tpu.dot_dimension_numbers<[1], [0], [0], [1], [0, 0, 1, 1], [], []>} : vector<2x128xbf16>, vector<128x768xbf16>, vector<2x768xf32> -> vector<2x768xf32>
    %391 = vector.extract_strided_slice %390 {offsets = [0, 0], sizes = [2, 384], strides = [1, 1]} : vector<2x768xf32> to vector<2x384xf32>
    %392 = arith.addf %391, %14 : vector<2x384xf32>
    %393 = vector.extract_strided_slice %390 {offsets = [0, 384], sizes = [2, 384], strides = [1, 1]} : vector<2x768xf32> to vector<2x384xf32>
    %394 = arith.addf %393, %11 : vector<2x384xf32>
    %395 = vector.extract_strided_slice %392 {offsets = [0, 0], sizes = [2, 256], strides = [1, 1]} : vector<2x384xf32> to vector<2x256xf32>
    %396 = vector.extract_strided_slice %362 {offsets = [0, 0], sizes = [2, 256], strides = [1, 1]} : vector<2x384xf32> to vector<2x256xf32>
    %397 = arith.addf %395, %396 : vector<2x256xf32>
    %398 = arith.negf %397 : vector<2x256xf32>
    %399 = math.exp %398 : vector<2x256xf32>
    %cst_100 = arith.constant 1.000000e+00 : f32
    %400 = vector.broadcast %cst_100 : f32 to vector<2x256xf32>
    %401 = arith.addf %400, %399 : vector<2x256xf32>
    %402 = arith.divf %400, %401 : vector<2x256xf32>
    %403 = vector.extract_strided_slice %402 {offsets = [0, 0], sizes = [2, 128], strides = [1, 1]} : vector<2x256xf32> to vector<2x128xf32>
    %404 = vector.extract_strided_slice %402 {offsets = [0, 128], sizes = [2, 128], strides = [1, 1]} : vector<2x256xf32> to vector<2x128xf32>
    %405 = vector.extract_strided_slice %392 {offsets = [0, 256], sizes = [2, 128], strides = [1, 1]} : vector<2x384xf32> to vector<2x128xf32>
    %406 = vector.extract_strided_slice %362 {offsets = [0, 256], sizes = [2, 128], strides = [1, 1]} : vector<2x384xf32> to vector<2x128xf32>
    %407 = arith.mulf %403, %406 : vector<2x128xf32>
    %408 = arith.addf %405, %407 : vector<2x128xf32>
    %409 = math.tanh %408 : vector<2x128xf32>
    %cst_101 = arith.constant 1.000000e+00 : f32
    %410 = vector.broadcast %cst_101 : f32 to vector<2x128xf32>
    %411 = arith.subf %410, %404 : vector<2x128xf32>
    %412 = arith.mulf %411, %409 : vector<2x128xf32>
    %413 = arith.mulf %404, %358 : vector<2x128xf32>
    %414 = arith.addf %412, %413 : vector<2x128xf32>
    %415 = arith.truncf %414 : vector<2x128xf32> to vector<2x128xbf16>
    %c0_102 = arith.constant 0 : index
    %c0_103 = arith.constant 0 : index
    %416 = vector.load %arg8[%c0_102, %c0_103] : memref<128x384xbf16, #tpu.memory_space<vmem>>, vector<128x384xbf16>
    %cst_104 = arith.constant dense<0.000000e+00> : vector<2x384xf32>
    %417 = tpu.matmul %415, %416, %cst_104 {dimension_numbers = #tpu.dot_dimension_numbers<[1], [0], [0], [1], [0, 0, 1, 1], [], []>} : vector<2x128xbf16>, vector<128x384xbf16>, vector<2x384xf32> -> vector<2x384xf32>
    %418 = arith.addf %417, %17 : vector<2x384xf32>
    %c0_105 = arith.constant 0 : index
    %c6 = arith.constant 6 : index
    %c0_106 = arith.constant 0 : index
    %419 = vector.load %arg14[%c0_105, %c6, %c0_106] : memref<2x8x128xf32, #tpu.memory_space<vmem>>, vector<2x1x128xf32>
    %420 = vector.shape_cast %419 : vector<2x1x128xf32> to vector<2x128xf32>
    %421 = vector.shape_cast %414 : vector<2x128xf32> to vector<2x1x128xf32>
    tpu.vector_store %arg14[%c0_105, %c6, %c0_106], %421 {strides = array<i32>} : memref<2x8x128xf32, #tpu.memory_space<vmem>>, vector<2x1x128xf32>,
    %422 = vector.extract_strided_slice %8 {offsets = [7, 0, 0], sizes = [1, 2, 384], strides = [1, 1, 1]} : vector<8x2x384xf32> to vector<1x2x384xf32>
    %423 = vector.shape_cast %422 : vector<1x2x384xf32> to vector<2x384xf32>
    %424 = vector.extract_strided_slice %423 {offsets = [0, 0], sizes = [2, 256], strides = [1, 1]} : vector<2x384xf32> to vector<2x256xf32>
    %425 = vector.extract_strided_slice %394 {offsets = [0, 0], sizes = [2, 256], strides = [1, 1]} : vector<2x384xf32> to vector<2x256xf32>
    %426 = arith.addf %424, %425 : vector<2x256xf32>
    %427 = arith.negf %426 : vector<2x256xf32>
    %428 = math.exp %427 : vector<2x256xf32>
    %cst_107 = arith.constant 1.000000e+00 : f32
    %429 = vector.broadcast %cst_107 : f32 to vector<2x256xf32>
    %430 = arith.addf %429, %428 : vector<2x256xf32>
    %431 = arith.divf %429, %430 : vector<2x256xf32>
    %432 = vector.extract_strided_slice %431 {offsets = [0, 0], sizes = [2, 128], strides = [1, 1]} : vector<2x256xf32> to vector<2x128xf32>
    %433 = vector.extract_strided_slice %431 {offsets = [0, 128], sizes = [2, 128], strides = [1, 1]} : vector<2x256xf32> to vector<2x128xf32>
    %434 = vector.extract_strided_slice %423 {offsets = [0, 256], sizes = [2, 128], strides = [1, 1]} : vector<2x384xf32> to vector<2x128xf32>
    %435 = vector.extract_strided_slice %394 {offsets = [0, 256], sizes = [2, 128], strides = [1, 1]} : vector<2x384xf32> to vector<2x128xf32>
    %436 = arith.mulf %432, %435 : vector<2x128xf32>
    %437 = arith.addf %434, %436 : vector<2x128xf32>
    %438 = math.tanh %437 : vector<2x128xf32>
    %cst_108 = arith.constant 1.000000e+00 : f32
    %439 = vector.broadcast %cst_108 : f32 to vector<2x128xf32>
    %440 = arith.subf %439, %433 : vector<2x128xf32>
    %441 = arith.mulf %440, %438 : vector<2x128xf32>
    %442 = arith.mulf %433, %387 : vector<2x128xf32>
    %443 = arith.addf %441, %442 : vector<2x128xf32>
    %444 = arith.truncf %443 : vector<2x128xf32> to vector<2x128xbf16>
    %c0_109 = arith.constant 0 : index
    %c0_110 = arith.constant 0 : index
    %445 = vector.load %arg5[%c0_109, %c0_110] : memref<128x768xbf16, #tpu.memory_space<vmem>>, vector<128x768xbf16>
    %cst_111 = arith.constant dense<0.000000e+00> : vector<2x768xf32>
    %446 = tpu.matmul %444, %445, %cst_111 {dimension_numbers = #tpu.dot_dimension_numbers<[1], [0], [0], [1], [0, 0, 1, 1], [], []>} : vector<2x128xbf16>, vector<128x768xbf16>, vector<2x768xf32> -> vector<2x768xf32>
    %447 = vector.extract_strided_slice %446 {offsets = [0, 0], sizes = [2, 384], strides = [1, 1]} : vector<2x768xf32> to vector<2x384xf32>
    %448 = arith.addf %447, %14 : vector<2x384xf32>
    %449 = vector.extract_strided_slice %448 {offsets = [0, 0], sizes = [2, 256], strides = [1, 1]} : vector<2x384xf32> to vector<2x256xf32>
    %450 = vector.extract_strided_slice %418 {offsets = [0, 0], sizes = [2, 256], strides = [1, 1]} : vector<2x384xf32> to vector<2x256xf32>
    %451 = arith.addf %449, %450 : vector<2x256xf32>
    %452 = arith.negf %451 : vector<2x256xf32>
    %453 = math.exp %452 : vector<2x256xf32>
    %cst_112 = arith.constant 1.000000e+00 : f32
    %454 = vector.broadcast %cst_112 : f32 to vector<2x256xf32>
    %455 = arith.addf %454, %453 : vector<2x256xf32>
    %456 = arith.divf %454, %455 : vector<2x256xf32>
    %457 = vector.extract_strided_slice %456 {offsets = [0, 0], sizes = [2, 128], strides = [1, 1]} : vector<2x256xf32> to vector<2x128xf32>
    %458 = vector.extract_strided_slice %456 {offsets = [0, 128], sizes = [2, 128], strides = [1, 1]} : vector<2x256xf32> to vector<2x128xf32>
    %459 = vector.extract_strided_slice %448 {offsets = [0, 256], sizes = [2, 128], strides = [1, 1]} : vector<2x384xf32> to vector<2x128xf32>
    %460 = vector.extract_strided_slice %418 {offsets = [0, 256], sizes = [2, 128], strides = [1, 1]} : vector<2x384xf32> to vector<2x128xf32>
    %461 = arith.mulf %457, %460 : vector<2x128xf32>
    %462 = arith.addf %459, %461 : vector<2x128xf32>
    %463 = math.tanh %462 : vector<2x128xf32>
    %cst_113 = arith.constant 1.000000e+00 : f32
    %464 = vector.broadcast %cst_113 : f32 to vector<2x128xf32>
    %465 = arith.subf %464, %458 : vector<2x128xf32>
    %466 = arith.mulf %465, %463 : vector<2x128xf32>
    %467 = arith.mulf %458, %414 : vector<2x128xf32>
    %468 = arith.addf %466, %467 : vector<2x128xf32>
    %c0_114 = arith.constant 0 : index
    %c7 = arith.constant 7 : index
    %c0_115 = arith.constant 0 : index
    %469 = vector.load %arg14[%c0_114, %c7, %c0_115] : memref<2x8x128xf32, #tpu.memory_space<vmem>>, vector<2x1x128xf32>
    %470 = vector.shape_cast %469 : vector<2x1x128xf32> to vector<2x128xf32>
    %471 = vector.shape_cast %468 : vector<2x128xf32> to vector<2x1x128xf32>
    tpu.vector_store %arg14[%c0_114, %c7, %c0_115], %471 {strides = array<i32>} : memref<2x8x128xf32, #tpu.memory_space<vmem>>, vector<2x1x128xf32>,
    %c0_116 = arith.constant 0 : index
    %c0_117 = arith.constant 0 : index
    %c0_118 = arith.constant 0 : index
    %472 = vector.load %arg14[%c0_116, %c0_117, %c0_118] : memref<2x8x128xf32, #tpu.memory_space<vmem>>, vector<2x8x128xf32>
    %473 = vector.shape_cast %472 : vector<2x8x128xf32> to vector<16x128xf32>
    %474 = arith.truncf %473 : vector<16x128xf32> to vector<16x128xbf16>
    %c0_119 = arith.constant 0 : index
    %c0_120 = arith.constant 0 : index
    %475 = vector.load %arg10[%c0_119, %c0_120] : memref<128x32xbf16, #tpu.memory_space<vmem>>, vector<128x32xbf16>
    %cst_121 = arith.constant dense<0.000000e+00> : vector<16x32xf32>
    %476 = tpu.matmul %474, %475, %cst_121 {dimension_numbers = #tpu.dot_dimension_numbers<[1], [0], [0], [1], [0, 0, 1, 1], [], []>} : vector<16x128xbf16>, vector<128x32xbf16>, vector<16x32xf32> -> vector<16x32xf32>
    %c0_122 = arith.constant 0 : index
    %c0_123 = arith.constant 0 : index
    %477 = vector.load %arg11[%c0_122, %c0_123] : memref<1x32xf32, #tpu.memory_space<vmem>>, vector<1x32xf32>
    %478 = vector.shape_cast %477 : vector<1x32xf32> to vector<1x32xf32>
    %479 = vector.broadcast %478 : vector<1x32xf32> to vector<16x32xf32>
    %480 = arith.addf %476, %479 : vector<16x32xf32>
    %c0_124 = arith.constant 0 : index
    %c0_125 = arith.constant 0 : index
    %c0_126 = arith.constant 0 : index
    %481 = vector.load %arg1[%c0_124, %c0_125, %c0_126] : memref<2x8x32xf32, #tpu.memory_space<vmem>>, vector<2x8x32xf32>
    %482 = vector.shape_cast %480 : vector<16x32xf32> to vector<2x8x32xf32>
    %483 = tpu.concatenate %481, %482 in 2 : vector<2x8x32xf32>, vector<2x8x32xf32> -> vector<2x8x64xf32>
    %c0_127 = arith.constant 0 : index
    %c0_128 = arith.constant 0 : index
    %c0_129 = arith.constant 0 : index
    %484 = vector.load %arg12[%c0_127, %c0_128, %c0_129] : memref<2x8x64xf32, #tpu.memory_space<vmem>>, vector<2x8x64xf32>
    tpu.vector_store %arg12[%c0_127, %c0_128, %c0_129], %483 {strides = array<i32>} : memref<2x8x64xf32, #tpu.memory_space<vmem>>, vector<2x8x64xf32>,
    %c0_130 = arith.constant 0 : index
    %c0_131 = arith.constant 0 : index
    %c0_132 = arith.constant 0 : index
    %485 = vector.load %arg13[%c0_130, %c0_131, %c0_132] : memref<2x2x128xf32, #tpu.memory_space<vmem>>, vector<1x2x128xf32>
    %486 = vector.shape_cast %485 : vector<1x2x128xf32> to vector<2x128xf32>
    %487 = vector.shape_cast %443 : vector<2x128xf32> to vector<1x2x128xf32>
    tpu.vector_store %arg13[%c0_130, %c0_131, %c0_132], %487 {strides = array<i32>} : memref<2x2x128xf32, #tpu.memory_space<vmem>>, vector<1x2x128xf32>,
    %c1_133 = arith.constant 1 : index
    %c0_134 = arith.constant 0 : index
    %c0_135 = arith.constant 0 : index
    %488 = vector.load %arg13[%c1_133, %c0_134, %c0_135] : memref<2x2x128xf32, #tpu.memory_space<vmem>>, vector<1x2x128xf32>
    %489 = vector.shape_cast %488 : vector<1x2x128xf32> to vector<2x128xf32>
    %490 = vector.shape_cast %468 : vector<2x128xf32> to vector<1x2x128xf32>
    tpu.vector_store %arg13[%c1_133, %c0_134, %c0_135], %490 {strides = array<i32>} : memref<2x2x128xf32, #tpu.memory_space<vmem>>, vector<1x2x128xf32>,
    return
  }
}

</mosaic_0001>

<llo_original>
// kernel: tile.7
$region0: #{tile.7}
  %s0 = inlined_call_operand.vmem [shape: f32[3,4,32], index: 0, kind: input, shape index: {}]
  %s1 = inlined_call_operand.vmem [shape: f32[12,32], index: 1, kind: output, shape index: {}]
  $region1: #{tile.7} parent=0
    #allocation0 [shape = 'u8[12288]{0}', space=vmem, size = 0x3000, scoped, tag = 'scoped mem for input reshape']
    %s3 = sshllo.u32 0, 4
    %s4 = smul.addr 4, 2
    %s5 = scalar_lea.vmem %s0, %s4
    %v6 = vld [vmem:[%s5] sm:%s3]
    %s7 = scalar_lea.vmem [#allocation0], 16
    %8 = vst [vmem:[%s7] sm:%s3] %v6
    %s9 = scalar_lea.vmem %s0, 4
    %v10 = vld [vmem:[%s9] sm:%s3]
    %s11 = scalar_lea.vmem [#allocation0], 8
    %12 = vst [vmem:[%s11] sm:%s3] %v10
    %v13 = vld [vmem:[%s0] sm:%s3]
    %14 = vst [vmem:[#allocation0] sm:%s3] %v13
    %v15 = vld [vmem:[#allocation0] sm:$0xf]
    %vm16 = vcmask 261120
    %17 = vst.msk [vmem:[%s1] sm:$0xf] %vm16, %v15
    %s18 = scalar_lea.vmem [#allocation0], 8
    %v19 = vld [vmem:[%s18] sm:$0xf]
    %vm20 = vcmask 261120
    %s21 = scalar_lea.vmem %s1, 4
    %22 = vst.msk [vmem:[%s21] sm:$0xf] %vm20, %v19
    %s23 = scalar_lea.vmem [#allocation0], 16
    %v24 = vld [vmem:[%s23] sm:$0xf]
    %vm25 = vcmask 261120
    %s26 = scalar_lea.vmem %s1, 8
    %27 = vst.msk [vmem:[%s26] sm:$0xf] %vm25, %v24

// kernel: forward.1
$region0: #{forward.1}
  #allocation0 [shape = 'u32[]', space=smem, size = 0x4, offset = 0x4, fixed_abs, tag = 'smem constant byte address 0x4 - core index']
  #allocation1 [shape = 'u32[144,128]{1,0:T(1,128)}', space=vmem, size = 0x12000, scoped, tag = 'internal scratch']
  #allocation2 [shape = 'f32[2,8,128]{2,1,0:T(8,128)}', space=vmem, size = 0x2000, scoped, tag = 'scratch operand']
  %s0 = inlined_call_operand.vmem [shape: f32[8,32], index: 0, kind: input, shape index: {}]
  %s1 = inlined_call_operand.vmem [shape: f32[2,8,32], index: 1, kind: input, shape index: {}]
  %s2 = inlined_call_operand.vmem [shape: f32[2,2,128], index: 2, kind: input, shape index: {}]
  %s3 = inlined_call_operand.vmem [shape: f32[32,384], index: 3, kind: input, shape index: {}]
  %s4 = inlined_call_operand.vmem [shape: f32[1,384], index: 4, kind: input, shape index: {}]
  %s5 = inlined_call_operand.vmem [shape: bf16[128,768], index: 5, kind: input, shape index: {}]
  %s6 = inlined_call_operand.vmem [shape: f32[1,384], index: 6, kind: input, shape index: {}]
  %s7 = inlined_call_operand.vmem [shape: f32[1,384], index: 7, kind: input, shape index: {}]
  %s8 = inlined_call_operand.vmem [shape: bf16[128,384], index: 8, kind: input, shape index: {}]
  %s9 = inlined_call_operand.vmem [shape: f32[1,384], index: 9, kind: input, shape index: {}]
  %s10 = inlined_call_operand.vmem [shape: bf16[128,32], index: 10, kind: input, shape index: {}]
  %s11 = inlined_call_operand.vmem [shape: f32[1,32], index: 11, kind: input, shape index: {}]
  %s12 = inlined_call_operand.hbm [shape: f32[2,8,64], index: 12, kind: output, shape index: {0}]
  %s13 = inlined_call_operand.hbm [shape: f32[2,2,128], index: 13, kind: output, shape index: {1}]
  %14 = xla_tuple %s12, %s13
  %s15 = sld [smem:[#allocation0]]
  $region66: #{forward.1} parent=0
    _
  %s17 = ssub.s32 1, %s15
  %s18 = scalar_select 0, %s17, %s15
  $region1: #{forward.1} parent=0
    #allocation3 [shape = 'u8[8192]{0}', space=vmem, size = 0x2000, scoped, tag = 'output window, operand 0, single buffered']
    #allocation4 [shape = 's32[1]{0}', space=sflag, size = 0x4, scoped, tag = 'scoped memory for forward.1']
    #allocation5 [shape = 'u8[2048]{0}', space=vmem, size = 0x800, scoped, tag = 'output window, operand 1, single buffered']
    #allocation6 [shape = 's32[1]{0}', space=sflag, size = 0x4, scoped, tag = 'scoped memory for forward.1']
    %19 = vsyncpa [#allocation4], 0
    %20 = vsyncpa [#allocation6], 0
    // Predicated region
    $region2: #{forward.1} parent=1 // pred_check
      _
    $region3: #{forward.1} parent=1 // pred_check_branch
      %22 = sbr.rel (0) target = $region5
    $region4: #{forward.1} parent=1 // pred_region
      _
    $region5: #{forward.1} parent=1 // pred_fallthru
      _
    // Predicated region
    $region6: #{forward.1} parent=1 // pred_check
      _
    $region7: #{forward.1} parent=1 // pred_check_branch
      %24 = sbr.rel (0) target = $region9
    $region8: #{forward.1} parent=1 // pred_region
      _
    $region9: #{forward.1} parent=1 // pred_fallthru
      _
    // Predicated region
    $region10: #{forward.1} parent=1 // pred_check
      _
    $region11: #{forward.1} parent=1 // pred_check_branch
      %26 = sbr.rel (0) target = $region13
    $region12: #{forward.1} parent=1 // pred_region
      _
    $region13: #{forward.1} parent=1 // pred_fallthru
      _
    // Predicated region
    $region14: #{forward.1} parent=1 // pred_check
      _
    $region15: #{forward.1} parent=1 // pred_check_branch
      %28 = sbr.rel (0) target = $region17
    $region16: #{forward.1} parent=1 // pred_region
      _
    $region17: #{forward.1} parent=1 // pred_fallthru
      _
    // Predicated region
    $region18: #{forward.1} parent=1 // pred_check
      _
    $region19: #{forward.1} parent=1 // pred_check_branch
      %30 = sbr.rel (0) target = $region21
    $region20: #{forward.1} parent=1 // pred_region
      _
    $region21: #{forward.1} parent=1 // pred_fallthru
      _
    // Predicated region
    $region22: #{forward.1} parent=1 // pred_check
      _
    $region23: #{forward.1} parent=1 // pred_check_branch
      %32 = sbr.rel (0) target = $region25
    $region24: #{forward.1} parent=1 // pred_region
      _
    $region25: #{forward.1} parent=1 // pred_fallthru
      _
    // Predicated region
    $region26: #{forward.1} parent=1 // pred_check
      _
    $region27: #{forward.1} parent=1 // pred_check_branch
      %34 = sbr.rel (0) target = $region29
    $region28: #{forward.1} parent=1 // pred_region
      _
    $region29: #{forward.1} parent=1 // pred_fallthru
      _
    // Predicated region
    $region30: #{forward.1} parent=1 // pred_check
      _
    $region31: #{forward.1} parent=1 // pred_check_branch
      %36 = sbr.rel (0) target = $region33
    $region32: #{forward.1} parent=1 // pred_region
      _
    $region33: #{forward.1} parent=1 // pred_fallthru
      _
    // Predicated region
    $region34: #{forward.1} parent=1 // pred_check
      _
    $region35: #{forward.1} parent=1 // pred_check_branch
      %38 = sbr.rel (0) target = $region37
    $region36: #{forward.1} parent=1 // pred_region
      _
    $region37: #{forward.1} parent=1 // pred_fallthru
      _
    // Predicated region
    $region38: #{forward.1} parent=1 // pred_check
      _
    $region39: #{forward.1} parent=1 // pred_check_branch
      %40 = sbr.rel (0) target = $region41
    $region40: #{forward.1} parent=1 // pred_region
      _
    $region41: #{forward.1} parent=1 // pred_fallthru
      _
    // Predicated region
    $region42: #{forward.1} parent=1 // pred_check
      _
    $region43: #{forward.1} parent=1 // pred_check_branch
      %42 = sbr.rel (0) target = $region45
    $region44: #{forward.1} parent=1 // pred_region
      _
    $region45: #{forward.1} parent=1 // pred_fallthru
      _
    // Predicated region
    $region46: #{forward.1} parent=1 // pred_check
      _
    $region47: #{forward.1} parent=1 // pred_check_branch
      %44 = sbr.rel (0) target = $region49
    $region48: #{forward.1} parent=1 // pred_region
      _
    $region49: #{forward.1} parent=1 // pred_fallthru
      _
    %v46 = vld [vmem:[%s0] sm:$0xff]
    %v47 = vld [vmem:[%s3] sm:$0xff]
    %v48 = vld [vmem:[%s3 + $0x8] sm:$0xff]
    %v49 = vld [vmem:[%s3 + $0x10] sm:$0xff]
    %v50 = vld [vmem:[%s3 + $0x18] sm:$0xff]
    %v51 = vld [vmem:[%s3 + $0x20] sm:$0xff]
    %v52 = vld [vmem:[%s3 + $0x28] sm:$0xff]
    %v53 = vld [vmem:[%s3 + $0x30] sm:$0xff]
    %v54 = vld [vmem:[%s3 + $0x38] sm:$0xff]
    %v55 = vld [vmem:[%s3 + $0x40] sm:$0xff]
    %v56 = vld [vmem:[%s3 + $0x48] sm:$0xff]
    %v57 = vld [vmem:[%s3 + $0x50] sm:$0xff]
    %v58 = vld [vmem:[%s3 + $0x58] sm:$0xff]
    %v59 = vld [vmem:[%s4] sm:$0x7]
    %v61 = vlaneseq
    %v62 = vshrl.u32 %v61, 7
    %v63 = vsub.s32 0, %v62
    %v64 = vrot.slane %v59, %v63
    %v65 = vlaneseq
    %v66 = vshrl.u32 %v65, 7
    %v67 = vsub.s32 1, %v66
    %v68 = vrot.slane %v59, %v67
    %v69 = vlaneseq
    %v70 = vshrl.u32 %v69, 7
    %v71 = vsub.s32 2, %v70
    %v72 = vrot.slane %v59, %v71
    %vm76 = vcmask 261120
    %v78 = vsel %vm76, %v46, 0
    %80 = vmatprep.subr.mxu0 %v48
    %81 = vmatpush1.msra.mxu0 %v47
    %82 = vmatprep.subr.mxu0 %v51
    %83 = vmatpush1.msra.mxu0 %v50
    %84 = vmatprep.subr.mxu0 %v54
    %85 = vmatpush1.msra.mxu0 %v53
    %86 = vmatprep.subr.mxu0 %v57
    %87 = vmatpush1.msra.mxu0 %v56
    %88 = vmatprep.subr.mxu0 0.0
    %89 = vmatpush1.msra.mxu0 0.0
    %90 = vmatprep.subr.mxu0 0.0
    %91 = vmatpush1.msra.mxu0 0.0
    %92 = vmatprep.subr.mxu0 0.0
    %93 = vmatpush1.msra.mxu0 0.0
    %94 = vmatprep.subr.mxu0 0.0
    %95 = vmatpush1.msra.mxu0 0.0
    %96 = vmatprep.subr.mxu0 0.0
    %97 = vmatpush1.msra.mxu0 0.0
    %98 = vmatprep.subr.mxu0 0.0
    %99 = vmatpush1.msra.mxu0 0.0
    %100 = vmatprep.subr.mxu0 0.0
    %101 = vmatpush1.msra.mxu0 0.0
    %102 = vmatprep.subr.mxu0 0.0
    %103 = vmatpush1.msra.mxu0 0.0
    %104 = vmatprep.subr.mxu0 0.0
    %105 = vmatpush1.msra.mxu0 0.0
    %106 = vmatprep.subr.mxu0 0.0
    %107 = vmatpush1.msra.mxu0 0.0
    %108 = vmatprep.subr.mxu0 0.0
    %109 = vmatpush1.msra.mxu0 0.0
    %110 = vmatprep.subr.mxu0 0.0
    %111 = vmatpush1.msra.mxu0 0.0
    %112 = vmatprep.subr.mxu0 0.0
    %113 = vmatpush1.msra.mxu0 0.0
    %114 = vmatprep.subr.mxu0 0.0
    %115 = vmatpush1.msra.mxu0 0.0
    %116 = vmatprep.subr.mxu0 0.0
    %117 = vmatpush1.msra.mxu0 0.0
    %118 = vmatprep.subr.mxu0 0.0
    %119 = vmatpush1.msra.mxu0 0.0
    %120 = vmatprep.subr.mxu0 0.0
    %121 = vmatpush1.msra.mxu0 0.0
    %122 = vmatprep.subr.mxu0 0.0
    %123 = vmatpush1.msra.mxu0 0.0
    %124 = vmatprep.subr.mxu0 0.0
    %125 = vmatpush1.msra.mxu0 0.0
    %126 = vmatprep.subr.mxu0 0.0
    %127 = vmatpush1.msra.mxu0 0.0
    %128 = vmatprep.subr.mxu0 0.0
    %129 = vmatpush1.msra.mxu0 0.0
    %130 = vmatprep.subr.mxu0 0.0
    %131 = vmatpush1.msra.mxu0 0.0
    %132 = vmatprep.subr.mxu0 0.0
    %133 = vmatpush1.msra.mxu0 0.0
    %134 = vmatprep.subr.mxu0 0.0
    %135 = vmatpush1.msra.mxu0 0.0
    %136 = vmatprep.subr.mxu0 0.0
    %137 = vmatpush1.msra.mxu0 0.0
    %138 = vmatprep.subr.mxu0 0.0
    %139 = vmatpush1.msra.mxu0 0.0
    %140 = vmatprep.subr.mxu0 0.0
    %141 = vmatpush1.msra.mxu0 0.0
    %142 = vmatprep.subr.mxu0 0.0
    %143 = vmatpush1.msra.mxu0 0.0
    %144 = vmatprep.mubr.f32.mxu0 0.0
    %145 = vmatmul.mubr.f32.gmra.mrb[0].mxu0 %v78
    %v146 = vpop.f32.mrb[0].mxu0
    %v147 = vadd.f32 %v64, %v146
    %v148 = vpop.f32.mrb[0].mxu0
    %v149 = vadd.f32 %v68, %v148
    %150 = vdwg.mxu0
    %151 = vmatprep.subr.mxu0 0.0
    %152 = vmatpush1.msra.mxu0 %v49
    %153 = vmatprep.subr.mxu0 0.0
    %154 = vmatpush1.msra.mxu0 %v52
    %155 = vmatprep.subr.mxu0 0.0
    %156 = vmatpush1.msra.mxu0 %v55
    %157 = vmatprep.subr.mxu0 0.0
    %158 = vmatpush1.msra.mxu0 %v58
    %159 = vmatprep.subr.mxu0 0.0
    %160 = vmatpush1.msra.mxu0 0.0
    %161 = vmatprep.subr.mxu0 0.0
    %162 = vmatpush1.msra.mxu0 0.0
    %163 = vmatprep.subr.mxu0 0.0
    %164 = vmatpush1.msra.mxu0 0.0
    %165 = vmatprep.subr.mxu0 0.0
    %166 = vmatpush1.msra.mxu0 0.0
    %167 = vmatprep.subr.mxu0 0.0
    %168 = vmatpush1.msra.mxu0 0.0
    %169 = vmatprep.subr.mxu0 0.0
    %170 = vmatpush1.msra.mxu0 0.0
    %171 = vmatprep.subr.mxu0 0.0
    %172 = vmatpush1.msra.mxu0 0.0
    %173 = vmatprep.subr.mxu0 0.0
    %174 = vmatpush1.msra.mxu0 0.0
    %175 = vmatprep.subr.mxu0 0.0
    %176 = vmatpush1.msra.mxu0 0.0
    %177 = vmatprep.subr.mxu0 0.0
    %178 = vmatpush1.msra.mxu0 0.0
    %179 = vmatprep.subr.mxu0 0.0
    %180 = vmatpush1.msra.mxu0 0.0
    %181 = vmatprep.subr.mxu0 0.0
    %182 = vmatpush1.msra.mxu0 0.0
    %183 = vmatprep.subr.mxu0 0.0
    %184 = vmatpush1.msra.mxu0 0.0
    %185 = vmatprep.subr.mxu0 0.0
    %186 = vmatpush1.msra.mxu0 0.0
    %187 = vmatprep.subr.mxu0 0.0
    %188 = vmatpush1.msra.mxu0 0.0
    %189 = vmatprep.subr.mxu0 0.0
    %190 = vmatpush1.msra.mxu0 0.0
    %191 = vmatprep.subr.mxu0 0.0
    %192 = vmatpush1.msra.mxu0 0.0
    %193 = vmatprep.subr.mxu0 0.0
    %194 = vmatpush1.msra.mxu0 0.0
    %195 = vmatprep.subr.mxu0 0.0
    %196 = vmatpush1.msra.mxu0 0.0
    %197 = vmatprep.subr.mxu0 0.0
    %198 = vmatpush1.msra.mxu0 0.0
    %199 = vmatprep.subr.mxu0 0.0
    %200 = vmatpush1.msra.mxu0 0.0
    %201 = vmatprep.subr.mxu0 0.0
    %202 = vmatpush1.msra.mxu0 0.0
    %203 = vmatprep.subr.mxu0 0.0
    %204 = vmatpush1.msra.mxu0 0.0
    %205 = vmatprep.subr.mxu0 0.0
    %206 = vmatpush1.msra.mxu0 0.0
    %207 = vmatprep.subr.mxu0 0.0
    %208 = vmatpush1.msra.mxu0 0.0
    %209 = vmatprep.subr.mxu0 0.0
    %210 = vmatpush1.msra.mxu0 0.0
    %211 = vmatprep.subr.mxu0 0.0
    %212 = vmatpush1.msra.mxu0 0.0
    %213 = vmatprep.subr.mxu0 0.0
    %214 = vmatpush1.msra.mxu0 0.0
    %215 = vmatprep.mubr.f32.mxu0 0.0
    %216 = vmatmul.mubr.f32.gmra.mrb[0].mxu0 %v78
    %v217 = vpop.f32.mrb[0].mxu0
    %v218 = vadd.f32 %v72, %v217
    %v219 = vpop.f32.mrb[0].mxu0
    %220 = vdwg.mxu0
    %v221 = vld [vmem:[%s7] sm:$0x7]
    %v223 = vlaneseq
    %v224 = vshrl.u32 %v223, 7
    %v225 = vsub.s32 0, %v224
    %v226 = vrot.slane %v221, %v225
    %v227 = vlaneseq
    %v228 = vshrl.u32 %v227, 7
    %v229 = vsub.s32 1, %v228
    %v230 = vrot.slane %v221, %v229
    %v231 = vlaneseq
    %v232 = vshrl.u32 %v231, 7
    %v233 = vsub.s32 2, %v232
    %v234 = vrot.slane %v221, %v233
    %v238 = vld [vmem:[%s6] sm:$0x7]
    %v240 = vlaneseq
    %v241 = vshrl.u32 %v240, 7
    %v242 = vsub.s32 0, %v241
    %v243 = vrot.slane %v238, %v242
    %v244 = vlaneseq
    %v245 = vshrl.u32 %v244, 7
    %v246 = vsub.s32 1, %v245
    %v247 = vrot.slane %v238, %v246
    %v248 = vlaneseq
    %v249 = vshrl.u32 %v248, 7
    %v250 = vsub.s32 2, %v249
    %v251 = vrot.slane %v238, %v250
    %v255 = vld [vmem:[%s9] sm:$0x7]
    %v257 = vlaneseq
    %v258 = vshrl.u32 %v257, 7
    %v259 = vsub.s32 0, %v258
    %v260 = vrot.slane %v255, %v259
    %v261 = vlaneseq
    %v262 = vshrl.u32 %v261, 7
    %v263 = vsub.s32 1, %v262
    %v264 = vrot.slane %v255, %v263
    %v265 = vlaneseq
    %v266 = vshrl.u32 %v265, 7
    %v267 = vsub.s32 2, %v266
    %v268 = vrot.slane %v255, %v267
    %v272 = vld [vmem:[%s2] sm:$0x3]
    %s273 = scalar_lea.vmem %s2, 2
    %v274 = vld [vmem:[%s273] sm:$0x3]
    %v275 = vpack.c.bf16 %v272, %v272
    %v276 = vld [vmem:[%s5 + $0xc] sm:$0xff]
    %v277 = vld [vmem:[%s5 + $0x14] sm:$0xf]
    %v278 = vld [vmem:[%s5 + $0x24] sm:$0xff]
    %v279 = vld [vmem:[%s5 + $0x2c] sm:$0xf]
    %v280 = vld [vmem:[%s5 + $0x3c] sm:$0xff]
    %v281 = vld [vmem:[%s5 + $0x44] sm:$0xf]
    %v282 = vld [vmem:[%s5 + $0x54] sm:$0xff]
    %v283 = vld [vmem:[%s5 + $0x5c] sm:$0xf]
    %v284 = vld [vmem:[%s5 + $0x6c] sm:$0xff]
    %v285 = vld [vmem:[%s5 + $0x74] sm:$0xf]
    %v286 = vld [vmem:[%s5 + $0x84] sm:$0xff]
    %v287 = vld [vmem:[%s5 + $0x8c] sm:$0xf]
    %v288 = vld [vmem:[%s5 + $0x9c] sm:$0xff]
    %v289 = vld [vmem:[%s5 + $0xa4] sm:$0xf]
    %v290 = vld [vmem:[%s5 + $0xb4] sm:$0xff]
    %v291 = vld [vmem:[%s5 + $0xbc] sm:$0xf]
    %v292 = vld [vmem:[%s5 + $0xcc] sm:$0xff]
    %v293 = vld [vmem:[%s5 + $0xd4] sm:$0xf]
    %v294 = vld [vmem:[%s5 + $0xe4] sm:$0xff]
    %v295 = vld [vmem:[%s5 + $0xec] sm:$0xf]
    %v296 = vld [vmem:[%s5 + $0xfc] sm:$0xff]
    %v297 = vld [vmem:[%s5 + $0x104] sm:$0xf]
    %v298 = vld [vmem:[%s5 + $0x114] sm:$0xff]
    %v299 = vld [vmem:[%s5 + $0x11c] sm:$0xf]
    %v300 = vld [vmem:[%s5 + $0x12c] sm:$0xff]
    %v301 = vld [vmem:[%s5 + $0x134] sm:$0xf]
    %v302 = vld [vmem:[%s5 + $0x144] sm:$0xff]
    %v303 = vld [vmem:[%s5 + $0x14c] sm:$0xf]
    %v304 = vld [vmem:[%s5 + $0x15c] sm:$0xff]
    %v305 = vld [vmem:[%s5 + $0x164] sm:$0xf]
    %v306 = vld [vmem:[%s5 + $0x174] sm:$0xff]
    %v307 = vld [vmem:[%s5 + $0x17c] sm:$0xf]
    %v340 = vunpack.c.l.b16 %v276
    %v341 = vunpack.c.h.b16 %v276
    %v342 = vunpack.c.l.b16 %v277
    %v343 = vunpack.c.l.b16 %v278
    %v344 = vunpack.c.h.b16 %v278
    %v345 = vunpack.c.l.b16 %v279
    %v346 = vunpack.c.l.b16 %v280
    %v347 = vunpack.c.h.b16 %v280
    %v348 = vunpack.c.l.b16 %v281
    %v349 = vunpack.c.l.b16 %v282
    %v350 = vunpack.c.h.b16 %v282
    %v351 = vunpack.c.l.b16 %v283
    %v352 = vunpack.c.l.b16 %v284
    %v353 = vunpack.c.h.b16 %v284
    %v354 = vunpack.c.l.b16 %v285
    %v355 = vunpack.c.l.b16 %v286
    %v356 = vunpack.c.h.b16 %v286
    %v357 = vunpack.c.l.b16 %v287
    %v358 = vunpack.c.l.b16 %v288
    %v359 = vunpack.c.h.b16 %v288
    %v360 = vunpack.c.l.b16 %v289
    %v361 = vunpack.c.l.b16 %v290
    %v362 = vunpack.c.h.b16 %v290
    %v363 = vunpack.c.l.b16 %v291
    %v364 = vunpack.c.l.b16 %v292
    %v365 = vunpack.c.h.b16 %v292
    %v366 = vunpack.c.l.b16 %v293
    %v367 = vunpack.c.l.b16 %v294
    %v368 = vunpack.c.h.b16 %v294
    %v369 = vunpack.c.l.b16 %v295
    %v370 = vunpack.c.l.b16 %v296
    %v371 = vunpack.c.h.b16 %v296
    %v372 = vunpack.c.l.b16 %v297
    %v373 = vunpack.c.l.b16 %v298
    %v374 = vunpack.c.h.b16 %v298
    %v375 = vunpack.c.l.b16 %v299
    %v376 = vunpack.c.l.b16 %v300
    %v377 = vunpack.c.h.b16 %v300
    %v378 = vunpack.c.l.b16 %v301
    %v379 = vunpack.c.l.b16 %v302
    %v380 = vunpack.c.h.b16 %v302
    %v381 = vunpack.c.l.b16 %v303
    %v382 = vunpack.c.l.b16 %v304
    %v383 = vunpack.c.h.b16 %v304
    %v384 = vunpack.c.l.b16 %v305
    %v385 = vunpack.c.l.b16 %v306
    %v386 = vunpack.c.h.b16 %v306
    %v387 = vunpack.c.l.b16 %v307
    %v388 = vpack.c.b16 %v343, %v340
    %v389 = vpack.c.b16 %v344, %v341
    %v390 = vpack.c.b16 %v345, %v342
    %v391 = vpack.c.b16 %v349, %v346
    %v392 = vpack.c.b16 %v350, %v347
    %v393 = vpack.c.b16 %v351, %v348
    %v394 = vpack.c.b16 %v355, %v352
    %v395 = vpack.c.b16 %v356, %v353
    %v396 = vpack.c.b16 %v357, %v354
    %v397 = vpack.c.b16 %v361, %v358
    %v398 = vpack.c.b16 %v362, %v359
    %v399 = vpack.c.b16 %v363, %v360
    %v400 = vpack.c.b16 %v367, %v364
    %v401 = vpack.c.b16 %v368, %v365
    %v402 = vpack.c.b16 %v369, %v366
    %v403 = vpack.c.b16 %v373, %v370
    %v404 = vpack.c.b16 %v374, %v371
    %v405 = vpack.c.b16 %v375, %v372
    %v406 = vpack.c.b16 %v379, %v376
    %v407 = vpack.c.b16 %v380, %v377
    %v408 = vpack.c.b16 %v381, %v378
    %v409 = vpack.c.b16 %v385, %v382
    %v410 = vpack.c.b16 %v386, %v383
    %v411 = vpack.c.b16 %v387, %v384
    %436 = vmatprep.subr.bf16.mxu0 %v389
    %437 = vmatpush1.bf16.msra.mxu0 %v388
    %438 = vmatprep.subr.bf16.mxu0 %v392
    %439 = vmatpush1.bf16.msra.mxu0 %v391
    %440 = vmatprep.subr.bf16.mxu0 %v395
    %441 = vmatpush1.bf16.msra.mxu0 %v394
    %442 = vmatprep.subr.bf16.mxu0 %v398
    %443 = vmatpush1.bf16.msra.mxu0 %v397
    %444 = vmatprep.subr.bf16.mxu0 %v401
    %445 = vmatpush1.bf16.msra.mxu0 %v400
    %446 = vmatprep.subr.bf16.mxu0 %v404
    %447 = vmatpush1.bf16.msra.mxu0 %v403
    %448 = vmatprep.subr.bf16.mxu0 %v407
    %449 = vmatpush1.bf16.msra.mxu0 %v406
    %450 = vmatprep.subr.bf16.mxu0 %v410
    %451 = vmatpush1.bf16.msra.mxu0 %v409
    %452 = vmatprep.subr.bf16.mxu0 0
    %453 = vmatpush1.bf16.msra.mxu0 0
    %454 = vmatprep.subr.bf16.mxu0 0
    %455 = vmatpush1.bf16.msra.mxu0 0
    %456 = vmatprep.subr.bf16.mxu0 0
    %457 = vmatpush1.bf16.msra.mxu0 0
    %458 = vmatprep.subr.bf16.mxu0 0
    %459 = vmatpush1.bf16.msra.mxu0 0
    %460 = vmatprep.subr.bf16.mxu0 0
    %461 = vmatpush1.bf16.msra.mxu0 0
    %462 = vmatprep.subr.bf16.mxu0 0
    %463 = vmatpush1.bf16.msra.mxu0 0
    %464 = vmatprep.subr.bf16.mxu0 0
    %465 = vmatpush1.bf16.msra.mxu0 0
    %466 = vmatprep.subr.bf16.mxu0 0
    %467 = vmatpush1.bf16.msra.mxu0 0
    %468 = vmatprep.mubr.bf16.mxu0 0
    %469 = vmatmul.mubr.bf16.gmra.mrb[0].mxu0 %v275
    %v470 = vpop.f32.mrb[0].mxu0
    %v471 = vadd.f32 %v226, %v470
    %v472 = vpop.f32.mrb[0].mxu0
    %v473 = vadd.f32 %v230, %v472
    %v474 = vpop.f32.mrb[0].mxu0
    %v475 = vpop.f32.mrb[0].mxu0
    %476 = vdwg.mxu0
    %477 = vmatprep.subr.bf16.mxu0 0
    %478 = vmatpush1.bf16.msra.mxu0 %v390
    %479 = vmatprep.subr.bf16.mxu0 0
    %480 = vmatpush1.bf16.msra.mxu0 %v393
    %481 = vmatprep.subr.bf16.mxu0 0
    %482 = vmatpush1.bf16.msra.mxu0 %v396
    %483 = vmatprep.subr.bf16.mxu0 0
    %484 = vmatpush1.bf16.msra.mxu0 %v399
    %485 = vmatprep.subr.bf16.mxu0 0
    %486 = vmatpush1.bf16.msra.mxu0 %v402
    %487 = vmatprep.subr.bf16.mxu0 0
    %488 = vmatpush1.bf16.msra.mxu0 %v405
    %489 = vmatprep.subr.bf16.mxu0 0
    %490 = vmatpush1.bf16.msra.mxu0 %v408
    %491 = vmatprep.subr.bf16.mxu0 0
    %492 = vmatpush1.bf16.msra.mxu0 %v411
    %493 = vmatprep.subr.bf16.mxu0 0
    %494 = vmatpush1.bf16.msra.mxu0 0
    %495 = vmatprep.subr.bf16.mxu0 0
    %496 = vmatpush1.bf16.msra.mxu0 0
    %497 = vmatprep.subr.bf16.mxu0 0
    %498 = vmatpush1.bf16.msra.mxu0 0
    %499 = vmatprep.subr.bf16.mxu0 0
    %500 = vmatpush1.bf16.msra.mxu0 0
    %501 = vmatprep.subr.bf16.mxu0 0
    %502 = vmatpush1.bf16.msra.mxu0 0
    %503 = vmatprep.subr.bf16.mxu0 0
    %504 = vmatpush1.bf16.msra.mxu0 0
    %505 = vmatprep.subr.bf16.mxu0 0
    %506 = vmatpush1.bf16.msra.mxu0 0
    %507 = vmatprep.subr.bf16.mxu0 0
    %508 = vmatpush1.bf16.msra.mxu0 0
    %509 = vmatprep.mubr.bf16.mxu0 0
    %510 = vmatmul.mubr.bf16.gmra.mrb[0].mxu0 %v275
    %v511 = vpop.f32.mrb[0].mxu0
    %v512 = vadd.f32 %v234, %v511
    %v513 = vpop.f32.mrb[0].mxu0
    %v514 = vpop.f32.mrb[0].mxu0
    %v515 = vpop.f32.mrb[0].mxu0
    %516 = vdwg.mxu0
    %v517 = vpack.c.bf16 %v274, %v274
    %v518 = vld [vmem:[%s8] sm:$0xff]
    %v519 = vld [vmem:[%s8 + $0x8] sm:$0xf]
    %v520 = vld [vmem:[%s8 + $0xc] sm:$0xff]
    %v521 = vld [vmem:[%s8 + $0x14] sm:$0xf]
    %v522 = vld [vmem:[%s8 + $0x18] sm:$0xff]
    %v523 = vld [vmem:[%s8 + $0x20] sm:$0xf]
    %v524 = vld [vmem:[%s8 + $0x24] sm:$0xff]
    %v525 = vld [vmem:[%s8 + $0x2c] sm:$0xf]
    %v526 = vld [vmem:[%s8 + $0x30] sm:$0xff]
    %v527 = vld [vmem:[%s8 + $0x38] sm:$0xf]
    %v528 = vld [vmem:[%s8 + $0x3c] sm:$0xff]
    %v529 = vld [vmem:[%s8 + $0x44] sm:$0xf]
    %v530 = vld [vmem:[%s8 + $0x48] sm:$0xff]
    %v531 = vld [vmem:[%s8 + $0x50] sm:$0xf]
    %v532 = vld [vmem:[%s8 + $0x54] sm:$0xff]
    %v533 = vld [vmem:[%s8 + $0x5c] sm:$0xf]
    %v534 = vld [vmem:[%s8 + $0x60] sm:$0xff]
    %v535 = vld [vmem:[%s8 + $0x68] sm:$0xf]
    %v536 = vld [vmem:[%s8 + $0x6c] sm:$0xff]
    %v537 = vld [vmem:[%s8 + $0x74] sm:$0xf]
    %v538 = vld [vmem:[%s8 + $0x78] sm:$0xff]
    %v539 = vld [vmem:[%s8 + $0x80] sm:$0xf]
    %v540 = vld [vmem:[%s8 + $0x84] sm:$0xff]
    %v541 = vld [vmem:[%s8 + $0x8c] sm:$0xf]
    %v542 = vld [vmem:[%s8 + $0x90] sm:$0xff]
    %v543 = vld [vmem:[%s8 + $0x98] sm:$0xf]
    %v544 = vld [vmem:[%s8 + $0x9c] sm:$0xff]
    %v545 = vld [vmem:[%s8 + $0xa4] sm:$0xf]
    %v546 = vld [vmem:[%s8 + $0xa8] sm:$0xff]
    %v547 = vld [vmem:[%s8 + $0xb0] sm:$0xf]
    %v548 = vld [vmem:[%s8 + $0xb4] sm:$0xff]
    %v549 = vld [vmem:[%s8 + $0xbc] sm:$0xf]
    %v582 = vunpack.c.l.b16 %v518
    %v583 = vunpack.c.h.b16 %v518
    %v584 = vunpack.c.l.b16 %v519
    %v585 = vunpack.c.l.b16 %v520
    %v586 = vunpack.c.h.b16 %v520
    %v587 = vunpack.c.l.b16 %v521
    %v588 = vunpack.c.l.b16 %v522
    %v589 = vunpack.c.h.b16 %v522
    %v590 = vunpack.c.l.b16 %v523
    %v591 = vunpack.c.l.b16 %v524
    %v592 = vunpack.c.h.b16 %v524
    %v593 = vunpack.c.l.b16 %v525
    %v594 = vunpack.c.l.b16 %v526
    %v595 = vunpack.c.h.b16 %v526
    %v596 = vunpack.c.l.b16 %v527
    %v597 = vunpack.c.l.b16 %v528
    %v598 = vunpack.c.h.b16 %v528
    %v599 = vunpack.c.l.b16 %v529
    %v600 = vunpack.c.l.b16 %v530
    %v601 = vunpack.c.h.b16 %v530
    %v602 = vunpack.c.l.b16 %v531
    %v603 = vunpack.c.l.b16 %v532
    %v604 = vunpack.c.h.b16 %v532
    %v605 = vunpack.c.l.b16 %v533
    %v606 = vunpack.c.l.b16 %v534
    %v607 = vunpack.c.h.b16 %v534
    %v608 = vunpack.c.l.b16 %v535
    %v609 = vunpack.c.l.b16 %v536
    %v610 = vunpack.c.h.b16 %v536
    %v611 = vunpack.c.l.b16 %v537
    %v612 = vunpack.c.l.b16 %v538
    %v613 = vunpack.c.h.b16 %v538
    %v614 = vunpack.c.l.b16 %v539
    %v615 = vunpack.c.l.b16 %v540
    %v616 = vunpack.c.h.b16 %v540
    %v617 = vunpack.c.l.b16 %v541
    %v618 = vunpack.c.l.b16 %v542
    %v619 = vunpack.c.h.b16 %v542
    %v620 = vunpack.c.l.b16 %v543
    %v621 = vunpack.c.l.b16 %v544
    %v622 = vunpack.c.h.b16 %v544
    %v623 = vunpack.c.l.b16 %v545
    %v624 = vunpack.c.l.b16 %v546
    %v625 = vunpack.c.h.b16 %v546
    %v626 = vunpack.c.l.b16 %v547
    %v627 = vunpack.c.l.b16 %v548
    %v628 = vunpack.c.h.b16 %v548
    %v629 = vunpack.c.l.b16 %v549
    %v630 = vpack.c.b16 %v585, %v582
    %v631 = vpack.c.b16 %v586, %v583
    %v632 = vpack.c.b16 %v587, %v584
    %v633 = vpack.c.b16 %v591, %v588
    %v634 = vpack.c.b16 %v592, %v589
    %v635 = vpack.c.b16 %v593, %v590
    %v636 = vpack.c.b16 %v597, %v594
    %v637 = vpack.c.b16 %v598, %v595
    %v638 = vpack.c.b16 %v599, %v596
    %v639 = vpack.c.b16 %v603, %v600
    %v640 = vpack.c.b16 %v604, %v601
    %v641 = vpack.c.b16 %v605, %v602
    %v642 = vpack.c.b16 %v609, %v606
    %v643 = vpack.c.b16 %v610, %v607
    %v644 = vpack.c.b16 %v611, %v608
    %v645 = vpack.c.b16 %v615, %v612
    %v646 = vpack.c.b16 %v616, %v613
    %v647 = vpack.c.b16 %v617, %v614
    %v648 = vpack.c.b16 %v621, %v618
    %v649 = vpack.c.b16 %v622, %v619
    %v650 = vpack.c.b16 %v623, %v620
    %v651 = vpack.c.b16 %v627, %v624
    %v652 = vpack.c.b16 %v628, %v625
    %v653 = vpack.c.b16 %v629, %v626
    %678 = vmatprep.subr.bf16.mxu0 %v631
    %679 = vmatpush1.bf16.msra.mxu0 %v630
    %680 = vmatprep.subr.bf16.mxu0 %v634
    %681 = vmatpush1.bf16.msra.mxu0 %v633
    %682 = vmatprep.subr.bf16.mxu0 %v637
    %683 = vmatpush1.bf16.msra.mxu0 %v636
    %684 = vmatprep.subr.bf16.mxu0 %v640
    %685 = vmatpush1.bf16.msra.mxu0 %v639
    %686 = vmatprep.subr.bf16.mxu0 %v643
    %687 = vmatpush1.bf16.msra.mxu0 %v642
    %688 = vmatprep.subr.bf16.mxu0 %v646
    %689 = vmatpush1.bf16.msra.mxu0 %v645
    %690 = vmatprep.subr.bf16.mxu0 %v649
    %691 = vmatpush1.bf16.msra.mxu0 %v648
    %692 = vmatprep.subr.bf16.mxu0 %v652
    %693 = vmatpush1.bf16.msra.mxu0 %v651
    %694 = vmatprep.subr.bf16.mxu0 0
    %695 = vmatpush1.bf16.msra.mxu0 0
    %696 = vmatprep.subr.bf16.mxu0 0
    %697 = vmatpush1.bf16.msra.mxu0 0
    %698 = vmatprep.subr.bf16.mxu0 0
    %699 = vmatpush1.bf16.msra.mxu0 0
    %700 = vmatprep.subr.bf16.mxu0 0
    %701 = vmatpush1.bf16.msra.mxu0 0
    %702 = vmatprep.subr.bf16.mxu0 0
    %703 = vmatpush1.bf16.msra.mxu0 0
    %704 = vmatprep.subr.bf16.mxu0 0
    %705 = vmatpush1.bf16.msra.mxu0 0
    %706 = vmatprep.subr.bf16.mxu0 0
    %707 = vmatpush1.bf16.msra.mxu0 0
    %708 = vmatprep.subr.bf16.mxu0 0
    %709 = vmatpush1.bf16.msra.mxu0 0
    %710 = vmatprep.mubr.bf16.mxu0 0
    %711 = vmatmul.mubr.bf16.gmra.mrb[0].mxu0 %v517
    %v712 = vpop.f32.mrb[0].mxu0
    %v713 = vadd.f32 %v260, %v712
    %v714 = vpop.f32.mrb[0].mxu0
    %v715 = vadd.f32 %v264, %v714
    %v716 = vpop.f32.mrb[0].mxu0
    %v717 = vpop.f32.mrb[0].mxu0
    %718 = vdwg.mxu0
    %719 = vmatprep.subr.bf16.mxu0 0
    %720 = vmatpush1.bf16.msra.mxu0 %v632
    %721 = vmatprep.subr.bf16.mxu0 0
    %722 = vmatpush1.bf16.msra.mxu0 %v635
    %723 = vmatprep.subr.bf16.mxu0 0
    %724 = vmatpush1.bf16.msra.mxu0 %v638
    %725 = vmatprep.subr.bf16.mxu0 0
    %726 = vmatpush1.bf16.msra.mxu0 %v641
    %727 = vmatprep.subr.bf16.mxu0 0
    %728 = vmatpush1.bf16.msra.mxu0 %v644
    %729 = vmatprep.subr.bf16.mxu0 0
    %730 = vmatpush1.bf16.msra.mxu0 %v647
    %731 = vmatprep.subr.bf16.mxu0 0
    %732 = vmatpush1.bf16.msra.mxu0 %v650
    %733 = vmatprep.subr.bf16.mxu0 0
    %734 = vmatpush1.bf16.msra.mxu0 %v653
    %735 = vmatprep.subr.bf16.mxu0 0
    %736 = vmatpush1.bf16.msra.mxu0 0
    %737 = vmatprep.subr.bf16.mxu0 0
    %738 = vmatpush1.bf16.msra.mxu0 0
    %739 = vmatprep.subr.bf16.mxu0 0
    %740 = vmatpush1.bf16.msra.mxu0 0
    %741 = vmatprep.subr.bf16.mxu0 0
    %742 = vmatpush1.bf16.msra.mxu0 0
    %743 = vmatprep.subr.bf16.mxu0 0
    %744 = vmatpush1.bf16.msra.mxu0 0
    %745 = vmatprep.subr.bf16.mxu0 0
    %746 = vmatpush1.bf16.msra.mxu0 0
    %747 = vmatprep.subr.bf16.mxu0 0
    %748 = vmatpush1.bf16.msra.mxu0 0
    %749 = vmatprep.subr.bf16.mxu0 0
    %750 = vmatpush1.bf16.msra.mxu0 0
    %751 = vmatprep.mubr.bf16.mxu0 0
    %752 = vmatmul.mubr.bf16.gmra.mrb[0].mxu0 %v517
    %v753 = vpop.f32.mrb[0].mxu0
    %v754 = vadd.f32 %v268, %v753
    %v755 = vpop.f32.mrb[0].mxu0
    %v756 = vpop.f32.mrb[0].mxu0
    %v757 = vpop.f32.mrb[0].mxu0
    %758 = vdwg.mxu0
    %v759 = vlaneseq
    %v760 = vshrl.u32 %v759, 7
    %v761 = vsub.s32 0, %v760
    %v762 = vrot.slane %v147, %v761
    %v763 = vlaneseq
    %v764 = vshrl.u32 %v763, 7
    %v765 = vsub.s32 0, %v764
    %v766 = vrot.slane %v149, %v765
    %v767 = vadd.f32 %v762, %v471
    %v768 = vadd.f32 %v766, %v473
    %v769 = vxor.u32 %v767, 2147483648
    %v770 = vxor.u32 %v768, 2147483648
    %v771 = vmul.f32 %v769, 1.442695
    %v772 = vpow.pop %v771
    %v773 = vmul.f32 %v770, 1.442695
    %v774 = vpow.pop %v773
    %v775 = vadd.f32 %v772, 1.0
    %v776 = vadd.f32 %v774, 1.0
    %v777 = vrcp.pop %v775
    %v778 = vmul.f32 1.0, %v777
    %v779 = vrcp.pop %v776
    %v780 = vmul.f32 1.0, %v779
    %v781 = vlaneseq
    %v782 = vshrl.u32 %v781, 7
    %v783 = vsub.s32 0, %v782
    %v784 = vrot.slane %v218, %v783
    %v785 = vmul.f32 %v778, %v512
    %v786 = vadd.f32 %v784, %v785
    %v787 = vtanh.pop %v786
    %v788 = vsub.f32 1.0, %v780
    %v789 = vmul.f32 %v788, %v787
    %v790 = vmul.f32 %v780, %v272
    %v791 = vadd.f32 %v789, %v790
    %v792 = vpack.c.bf16 %v791, %v791
    %v793 = vld [vmem:[%s5] sm:$0xff]
    %v794 = vld [vmem:[%s5 + $0x8] sm:$0xff]
    %v795 = vld [vmem:[%s5 + $0x10] sm:$0xff]
    %v796 = vld [vmem:[%s5 + $0x18] sm:$0xff]
    %v797 = vld [vmem:[%s5 + $0x20] sm:$0xff]
    %v798 = vld [vmem:[%s5 + $0x28] sm:$0xff]
    %v799 = vld [vmem:[%s5 + $0x30] sm:$0xff]
    %v800 = vld [vmem:[%s5 + $0x38] sm:$0xff]
    %v801 = vld [vmem:[%s5 + $0x40] sm:$0xff]
    %v802 = vld [vmem:[%s5 + $0x48] sm:$0xff]
    %v803 = vld [vmem:[%s5 + $0x50] sm:$0xff]
    %v804 = vld [vmem:[%s5 + $0x58] sm:$0xff]
    %v805 = vld [vmem:[%s5 + $0x60] sm:$0xff]
    %v806 = vld [vmem:[%s5 + $0x68] sm:$0xff]
    %v807 = vld [vmem:[%s5 + $0x70] sm:$0xff]
    %v808 = vld [vmem:[%s5 + $0x78] sm:$0xff]
    %v809 = vld [vmem:[%s5 + $0x80] sm:$0xff]
    %v810 = vld [vmem:[%s5 + $0x88] sm:$0xff]
    %v811 = vld [vmem:[%s5 + $0x90] sm:$0xff]
    %v812 = vld [vmem:[%s5 + $0x98] sm:$0xff]
    %v813 = vld [vmem:[%s5 + $0xa0] sm:$0xff]
    %v814 = vld [vmem:[%s5 + $0xa8] sm:$0xff]
    %v815 = vld [vmem:[%s5 + $0xb0] sm:$0xff]
    %v816 = vld [vmem:[%s5 + $0xb8] sm:$0xff]
    %v817 = vld [vmem:[%s5 + $0xc0] sm:$0xff]
    %v818 = vld [vmem:[%s5 + $0xc8] sm:$0xff]
    %v819 = vld [vmem:[%s5 + $0xd0] sm:$0xff]
    %v820 = vld [vmem:[%s5 + $0xd8] sm:$0xff]
    %v821 = vld [vmem:[%s5 + $0xe0] sm:$0xff]
    %v822 = vld [vmem:[%s5 + $0xe8] sm:$0xff]
    %v823 = vld [vmem:[%s5 + $0xf0] sm:$0xff]
    %v824 = vld [vmem:[%s5 + $0xf8] sm:$0xff]
    %v825 = vld [vmem:[%s5 + $0x100] sm:$0xff]
    %v826 = vld [vmem:[%s5 + $0x108] sm:$0xff]
    %v827 = vld [vmem:[%s5 + $0x110] sm:$0xff]
    %v828 = vld [vmem:[%s5 + $0x118] sm:$0xff]
    %v829 = vld [vmem:[%s5 + $0x120] sm:$0xff]
    %v830 = vld [vmem:[%s5 + $0x128] sm:$0xff]
    %v831 = vld [vmem:[%s5 + $0x130] sm:$0xff]
    %v832 = vld [vmem:[%s5 + $0x138] sm:$0xff]
    %v833 = vld [vmem:[%s5 + $0x140] sm:$0xff]
    %v834 = vld [vmem:[%s5 + $0x148] sm:$0xff]
    %v835 = vld [vmem:[%s5 + $0x150] sm:$0xff]
    %v836 = vld [vmem:[%s5 + $0x158] sm:$0xff]
    %v837 = vld [vmem:[%s5 + $0x160] sm:$0xff]
    %v838 = vld [vmem:[%s5 + $0x168] sm:$0xff]
    %v839 = vld [vmem:[%s5 + $0x170] sm:$0xff]
    %v840 = vld [vmem:[%s5 + $0x178] sm:$0xff]
    %v889 = vunpack.c.l.b16 %v793
    %v890 = vunpack.c.h.b16 %v793
    %v891 = vunpack.c.l.b16 %v794
    %v892 = vunpack.c.h.b16 %v794
    %v893 = vunpack.c.l.b16 %v795
    %v894 = vunpack.c.h.b16 %v795
    %v895 = vunpack.c.l.b16 %v796
    %v896 = vunpack.c.h.b16 %v796
    %v897 = vunpack.c.l.b16 %v797
    %v898 = vunpack.c.h.b16 %v797
    %v899 = vunpack.c.l.b16 %v798
    %v900 = vunpack.c.h.b16 %v798
    %v901 = vunpack.c.l.b16 %v799
    %v902 = vunpack.c.h.b16 %v799
    %v903 = vunpack.c.l.b16 %v800
    %v904 = vunpack.c.h.b16 %v800
    %v905 = vunpack.c.l.b16 %v801
    %v906 = vunpack.c.h.b16 %v801
    %v907 = vunpack.c.l.b16 %v802
    %v908 = vunpack.c.h.b16 %v802
    %v909 = vunpack.c.l.b16 %v803
    %v910 = vunpack.c.h.b16 %v803
    %v911 = vunpack.c.l.b16 %v804
    %v912 = vunpack.c.h.b16 %v804
    %v913 = vunpack.c.l.b16 %v805
    %v914 = vunpack.c.h.b16 %v805
    %v915 = vunpack.c.l.b16 %v806
    %v916 = vunpack.c.h.b16 %v806
    %v917 = vunpack.c.l.b16 %v807
    %v918 = vunpack.c.h.b16 %v807
    %v919 = vunpack.c.l.b16 %v808
    %v920 = vunpack.c.h.b16 %v808
    %v921 = vunpack.c.l.b16 %v809
    %v922 = vunpack.c.h.b16 %v809
    %v923 = vunpack.c.l.b16 %v810
    %v924 = vunpack.c.h.b16 %v810
    %v925 = vunpack.c.l.b16 %v811
    %v926 = vunpack.c.h.b16 %v811
    %v927 = vunpack.c.l.b16 %v812
    %v928 = vunpack.c.h.b16 %v812
    %v929 = vunpack.c.l.b16 %v813
    %v930 = vunpack.c.h.b16 %v813
    %v931 = vunpack.c.l.b16 %v814
    %v932 = vunpack.c.h.b16 %v814
    %v933 = vunpack.c.l.b16 %v815
    %v934 = vunpack.c.h.b16 %v815
    %v935 = vunpack.c.l.b16 %v816
    %v936 = vunpack.c.h.b16 %v816
    %v937 = vunpack.c.l.b16 %v817
    %v938 = vunpack.c.h.b16 %v817
    %v939 = vunpack.c.l.b16 %v818
    %v940 = vunpack.c.h.b16 %v818
    %v941 = vunpack.c.l.b16 %v819
    %v942 = vunpack.c.h.b16 %v819
    %v943 = vunpack.c.l.b16 %v820
    %v944 = vunpack.c.h.b16 %v820
    %v945 = vunpack.c.l.b16 %v821
    %v946 = vunpack.c.h.b16 %v821
    %v947 = vunpack.c.l.b16 %v822
    %v948 = vunpack.c.h.b16 %v822
    %v949 = vunpack.c.l.b16 %v823
    %v950 = vunpack.c.h.b16 %v823
    %v951 = vunpack.c.l.b16 %v824
    %v952 = vunpack.c.h.b16 %v824
    %v953 = vunpack.c.l.b16 %v825
    %v954 = vunpack.c.h.b16 %v825
    %v955 = vunpack.c.l.b16 %v826
    %v956 = vunpack.c.h.b16 %v826
    %v957 = vunpack.c.l.b16 %v827
    %v958 = vunpack.c.h.b16 %v827
    %v959 = vunpack.c.l.b16 %v828
    %v960 = vunpack.c.h.b16 %v828
    %v961 = vunpack.c.l.b16 %v829
    %v962 = vunpack.c.h.b16 %v829
    %v963 = vunpack.c.l.b16 %v830
    %v964 = vunpack.c.h.b16 %v830
    %v965 = vunpack.c.l.b16 %v831
    %v966 = vunpack.c.h.b16 %v831
    %v967 = vunpack.c.l.b16 %v832
    %v968 = vunpack.c.h.b16 %v832
    %v969 = vunpack.c.l.b16 %v833
    %v970 = vunpack.c.h.b16 %v833
    %v971 = vunpack.c.l.b16 %v834
    %v972 = vunpack.c.h.b16 %v834
    %v973 = vunpack.c.l.b16 %v835
    %v974 = vunpack.c.h.b16 %v835
    %v975 = vunpack.c.l.b16 %v836
    %v976 = vunpack.c.h.b16 %v836
    %v977 = vunpack.c.l.b16 %v837
    %v978 = vunpack.c.h.b16 %v837
    %v979 = vunpack.c.l.b16 %v838
    %v980 = vunpack.c.h.b16 %v838
    %v981 = vunpack.c.l.b16 %v839
    %v982 = vunpack.c.h.b16 %v839
    %v983 = vunpack.c.l.b16 %v840
    %v984 = vunpack.c.h.b16 %v840
    %v985 = vpack.c.b16 %v895, %v889
    %v986 = vpack.c.b16 %v896, %v890
    %v987 = vpack.c.b16 %v897, %v891
    %v988 = vpack.c.b16 %v898, %v892
    %v989 = vpack.c.b16 %v899, %v893
    %v990 = vpack.c.b16 %v900, %v894
    %v991 = vpack.c.b16 %v907, %v901
    %v992 = vpack.c.b16 %v908, %v902
    %v993 = vpack.c.b16 %v909, %v903
    %v994 = vpack.c.b16 %v910, %v904
    %v995 = vpack.c.b16 %v911, %v905
    %v996 = vpack.c.b16 %v912, %v906
    %v997 = vpack.c.b16 %v919, %v913
    %v998 = vpack.c.b16 %v920, %v914
    %v999 = vpack.c.b16 %v921, %v915
    %v1000 = vpack.c.b16 %v922, %v916
    %v1001 = vpack.c.b16 %v923, %v917
    %v1002 = vpack.c.b16 %v924, %v918
    %v1003 = vpack.c.b16 %v931, %v925
    %v1004 = vpack.c.b16 %v932, %v926
    %v1005 = vpack.c.b16 %v933, %v927
    %v1006 = vpack.c.b16 %v934, %v928
    %v1007 = vpack.c.b16 %v935, %v929
    %v1008 = vpack.c.b16 %v936, %v930
    %v1009 = vpack.c.b16 %v943, %v937
    %v1010 = vpack.c.b16 %v944, %v938
    %v1011 = vpack.c.b16 %v945, %v939
    %v1012 = vpack.c.b16 %v946, %v940
    %v1013 = vpack.c.b16 %v947, %v941
    %v1014 = vpack.c.b16 %v948, %v942
    %v1015 = vpack.c.b16 %v955, %v949
    %v1016 = vpack.c.b16 %v956, %v950
    %v1017 = vpack.c.b16 %v957, %v951
    %v1018 = vpack.c.b16 %v958, %v952
    %v1019 = vpack.c.b16 %v959, %v953
    %v1020 = vpack.c.b16 %v960, %v954
    %v1021 = vpack.c.b16 %v967, %v961
    %v1022 = vpack.c.b16 %v968, %v962
    %v1023 = vpack.c.b16 %v969, %v963
    %v1024 = vpack.c.b16 %v970, %v964
    %v1025 = vpack.c.b16 %v971, %v965
    %v1026 = vpack.c.b16 %v972, %v966
    %v1027 = vpack.c.b16 %v979, %v973
    %v1028 = vpack.c.b16 %v980, %v974
    %v1029 = vpack.c.b16 %v981, %v975
    %v1030 = vpack.c.b16 %v982, %v976
    %v1031 = vpack.c.b16 %v983, %v977
    %v1032 = vpack.c.b16 %v984, %v978
    %1081 = vmatprep.subr.bf16.mxu0 %v986
    %1082 = vmatpush1.bf16.msra.mxu0 %v985
    %1083 = vmatprep.subr.bf16.mxu0 %v992
    %1084 = vmatpush1.bf16.msra.mxu0 %v991
    %1085 = vmatprep.subr.bf16.mxu0 %v998
    %1086 = vmatpush1.bf16.msra.mxu0 %v997
    %1087 = vmatprep.subr.bf16.mxu0 %v1004
    %1088 = vmatpush1.bf16.msra.mxu0 %v1003
    %1089 = vmatprep.subr.bf16.mxu0 %v1010
    %1090 = vmatpush1.bf16.msra.mxu0 %v1009
    %1091 = vmatprep.subr.bf16.mxu0 %v1016
    %1092 = vmatpush1.bf16.msra.mxu0 %v1015
    %1093 = vmatprep.subr.bf16.mxu0 %v1022
    %1094 = vmatpush1.bf16.msra.mxu0 %v1021
    %1095 = vmatprep.subr.bf16.mxu0 %v1028
    %1096 = vmatpush1.bf16.msra.mxu0 %v1027
    %1097 = vmatprep.subr.bf16.mxu0 0
    %1098 = vmatpush1.bf16.msra.mxu0 0
    %1099 = vmatprep.subr.bf16.mxu0 0
    %1100 = vmatpush1.bf16.msra.mxu0 0
    %1101 = vmatprep.subr.bf16.mxu0 0
    %1102 = vmatpush1.bf16.msra.mxu0 0
    %1103 = vmatprep.subr.bf16.mxu0 0
    %1104 = vmatpush1.bf16.msra.mxu0 0
    %1105 = vmatprep.subr.bf16.mxu0 0
    %1106 = vmatpush1.bf16.msra.mxu0 0
    %1107 = vmatprep.subr.bf16.mxu0 0
    %1108 = vmatpush1.bf16.msra.mxu0 0
    %1109 = vmatprep.subr.bf16.mxu0 0
    %1110 = vmatpush1.bf16.msra.mxu0 0
    %1111 = vmatprep.subr.bf16.mxu0 0
    %1112 = vmatpush1.bf16.msra.mxu0 0
    %1113 = vmatprep.mubr.bf16.mxu0 0
    %1114 = vmatmul.mubr.bf16.gmra.mrb[0].mxu0 %v792
    %v1115 = vpop.f32.mrb[0].mxu0
    %v1116 = vadd.f32 0.0, %v1115
    %v1117 = vpop.f32.mrb[0].mxu0
    %v1118 = vadd.f32 0.0, %v1117
    %v1119 = vpop.f32.mrb[0].mxu0
    %v1120 = vpop.f32.mrb[0].mxu0
    %1121 = vdwg.mxu0
    %1122 = vmatprep.subr.bf16.mxu0 %v988
    %1123 = vmatpush1.bf16.msra.mxu0 %v987
    %1124 = vmatprep.subr.bf16.mxu0 %v994
    %1125 = vmatpush1.bf16.msra.mxu0 %v993
    %1126 = vmatprep.subr.bf16.mxu0 %v1000
    %1127 = vmatpush1.bf16.msra.mxu0 %v999
    %1128 = vmatprep.subr.bf16.mxu0 %v1006
    %1129 = vmatpush1.bf16.msra.mxu0 %v1005
    %1130 = vmatprep.subr.bf16.mxu0 %v1012
    %1131 = vmatpush1.bf16.msra.mxu0 %v1011
    %1132 = vmatprep.subr.bf16.mxu0 %v1018
    %1133 = vmatpush1.bf16.msra.mxu0 %v1017
    %1134 = vmatprep.subr.bf16.mxu0 %v1024
    %1135 = vmatpush1.bf16.msra.mxu0 %v1023
    %1136 = vmatprep.subr.bf16.mxu0 %v1030
    %1137 = vmatpush1.bf16.msra.mxu0 %v1029
    %1138 = vmatprep.subr.bf16.mxu0 0
    %1139 = vmatpush1.bf16.msra.mxu0 0
    %1140 = vmatprep.subr.bf16.mxu0 0
    %1141 = vmatpush1.bf16.msra.mxu0 0
    %1142 = vmatprep.subr.bf16.mxu0 0
    %1143 = vmatpush1.bf16.msra.mxu0 0
    %1144 = vmatprep.subr.bf16.mxu0 0
    %1145 = vmatpush1.bf16.msra.mxu0 0
    %1146 = vmatprep.subr.bf16.mxu0 0
    %1147 = vmatpush1.bf16.msra.mxu0 0
    %1148 = vmatprep.subr.bf16.mxu0 0
    %1149 = vmatpush1.bf16.msra.mxu0 0
    %1150 = vmatprep.subr.bf16.mxu0 0
    %1151 = vmatpush1.bf16.msra.mxu0 0
    %1152 = vmatprep.subr.bf16.mxu0 0
    %1153 = vmatpush1.bf16.msra.mxu0 0
    %1154 = vmatprep.mubr.bf16.mxu0 0
    %1155 = vmatmul.mubr.bf16.gmra.mrb[0].mxu0 %v792
    %v1156 = vpop.f32.mrb[0].mxu0
    %v1157 = vadd.f32 0.0, %v1156
    %v1158 = vpop.f32.mrb[0].mxu0
    %v1159 = vadd.f32 0.0, %v1158
    %v1160 = vpop.f32.mrb[0].mxu0
    %v1161 = vpop.f32.mrb[0].mxu0
    %1162 = vdwg.mxu0
    %1163 = vmatprep.subr.bf16.mxu0 %v990
    %1164 = vmatpush1.bf16.msra.mxu0 %v989
    %1165 = vmatprep.subr.bf16.mxu0 %v996
    %1166 = vmatpush1.bf16.msra.mxu0 %v995
    %1167 = vmatprep.subr.bf16.mxu0 %v1002
    %1168 = vmatpush1.bf16.msra.mxu0 %v1001
    %1169 = vmatprep.subr.bf16.mxu0 %v1008
    %1170 = vmatpush1.bf16.msra.mxu0 %v1007
    %1171 = vmatprep.subr.bf16.mxu0 %v1014
    %1172 = vmatpush1.bf16.msra.mxu0 %v1013
    %1173 = vmatprep.subr.bf16.mxu0 %v1020
    %1174 = vmatpush1.bf16.msra.mxu0 %v1019
    %1175 = vmatprep.subr.bf16.mxu0 %v1026
    %1176 = vmatpush1.bf16.msra.mxu0 %v1025
    %1177 = vmatprep.subr.bf16.mxu0 %v1032
    %1178 = vmatpush1.bf16.msra.mxu0 %v1031
    %1179 = vmatprep.subr.bf16.mxu0 0
    %1180 = vmatpush1.bf16.msra.mxu0 0
    %1181 = vmatprep.subr.bf16.mxu0 0
    %1182 = vmatpush1.bf16.msra.mxu0 0
    %1183 = vmatprep.subr.bf16.mxu0 0
    %1184 = vmatpush1.bf16.msra.mxu0 0
    %1185 = vmatprep.subr.bf16.mxu0 0
    %1186 = vmatpush1.bf16.msra.mxu0 0
    %1187 = vmatprep.subr.bf16.mxu0 0
    %1188 = vmatpush1.bf16.msra.mxu0 0
    %1189 = vmatprep.subr.bf16.mxu0 0
    %1190 = vmatpush1.bf16.msra.mxu0 0
    %1191 = vmatprep.subr.bf16.mxu0 0
    %1192 = vmatpush1.bf16.msra.mxu0 0
    %1193 = vmatprep.subr.bf16.mxu0 0
    %1194 = vmatpush1.bf16.msra.mxu0 0
    %1195 = vmatprep.mubr.bf16.mxu0 0
    %1196 = vmatmul.mubr.bf16.gmra.mrb[0].mxu0 %v792
    %v1197 = vpop.f32.mrb[0].mxu0
    %v1198 = vadd.f32 0.0, %v1197
    %v1199 = vpop.f32.mrb[0].mxu0
    %v1200 = vadd.f32 0.0, %v1199
    %v1201 = vpop.f32.mrb[0].mxu0
    %v1202 = vpop.f32.mrb[0].mxu0
    %1203 = vdwg.mxu0
    %v1204 = vadd.f32 %v1116, %v243
    %v1205 = vadd.f32 %v1118, %v247
    %v1206 = vadd.f32 %v1157, %v251
    %v1207 = vadd.f32 %v1159, %v226
    %v1208 = vadd.f32 %v1198, %v230
    %v1209 = vadd.f32 %v1200, %v234
    %v1210 = vadd.f32 %v1204, %v713
    %v1211 = vadd.f32 %v1205, %v715
    %v1212 = vxor.u32 %v1210, 2147483648
    %v1213 = vxor.u32 %v1211, 2147483648
    %v1214 = vmul.f32 %v1212, 1.442695
    %v1215 = vpow.pop %v1214
    %v1216 = vmul.f32 %v1213, 1.442695
    %v1217 = vpow.pop %v1216
    %v1218 = vadd.f32 %v1215, 1.0
    %v1219 = vadd.f32 %v1217, 1.0
    %v1220 = vrcp.pop %v1218
    %v1221 = vmul.f32 1.0, %v1220
    %v1222 = vrcp.pop %v1219
    %v1223 = vmul.f32 1.0, %v1222
    %v1224 = vmul.f32 %v1221, %v754
    %v1225 = vadd.f32 %v1206, %v1224
    %v1226 = vtanh.pop %v1225
    %v1227 = vsub.f32 1.0, %v1223
    %v1228 = vmul.f32 %v1227, %v1226
    %v1229 = vmul.f32 %v1223, %v274
    %v1230 = vadd.f32 %v1228, %v1229
    %v1231 = vpack.c.bf16 %v1230, %v1230
    %1232 = vmatprep.subr.bf16.mxu0 %v631
    %1233 = vmatpush1.bf16.msra.mxu0 %v630
    %1234 = vmatprep.subr.bf16.mxu0 %v634
    %1235 = vmatpush1.bf16.msra.mxu0 %v633
    %1236 = vmatprep.subr.bf16.mxu0 %v637
    %1237 = vmatpush1.bf16.msra.mxu0 %v636
    %1238 = vmatprep.subr.bf16.mxu0 %v640
    %1239 = vmatpush1.bf16.msra.mxu0 %v639
    %1240 = vmatprep.subr.bf16.mxu0 %v643
    %1241 = vmatpush1.bf16.msra.mxu0 %v642
    %1242 = vmatprep.subr.bf16.mxu0 %v646
    %1243 = vmatpush1.bf16.msra.mxu0 %v645
    %1244 = vmatprep.subr.bf16.mxu0 %v649
    %1245 = vmatpush1.bf16.msra.mxu0 %v648
    %1246 = vmatprep.subr.bf16.mxu0 %v652
    %1247 = vmatpush1.bf16.msra.mxu0 %v651
    %1248 = vmatprep.subr.bf16.mxu0 0
    %1249 = vmatpush1.bf16.msra.mxu0 0
    %1250 = vmatprep.subr.bf16.mxu0 0
    %1251 = vmatpush1.bf16.msra.mxu0 0
    %1252 = vmatprep.subr.bf16.mxu0 0
    %1253 = vmatpush1.bf16.msra.mxu0 0
    %1254 = vmatprep.subr.bf16.mxu0 0
    %1255 = vmatpush1.bf16.msra.mxu0 0
    %1256 = vmatprep.subr.bf16.mxu0 0
    %1257 = vmatpush1.bf16.msra.mxu0 0
    %1258 = vmatprep.subr.bf16.mxu0 0
    %1259 = vmatpush1.bf16.msra.mxu0 0
    %1260 = vmatprep.subr.bf16.mxu0 0
    %1261 = vmatpush1.bf16.msra.mxu0 0
    %1262 = vmatprep.subr.bf16.mxu0 0
    %1263 = vmatpush1.bf16.msra.mxu0 0
    %1264 = vmatprep.mubr.bf16.mxu0 0
    %1265 = vmatmul.mubr.bf16.gmra.mrb[0].mxu0 %v1231
    %v1266 = vpop.f32.mrb[0].mxu0
    %v1267 = vadd.f32 %v260, %v1266
    %v1268 = vpop.f32.mrb[0].mxu0
    %v1269 = vadd.f32 %v264, %v1268
    %v1270 = vpop.f32.mrb[0].mxu0
    %v1271 = vpop.f32.mrb[0].mxu0
    %1272 = vdwg.mxu0
    %1273 = vmatprep.subr.bf16.mxu0 0
    %1274 = vmatpush1.bf16.msra.mxu0 %v632
    %1275 = vmatprep.subr.bf16.mxu0 0
    %1276 = vmatpush1.bf16.msra.mxu0 %v635
    %1277 = vmatprep.subr.bf16.mxu0 0
    %1278 = vmatpush1.bf16.msra.mxu0 %v638
    %1279 = vmatprep.subr.bf16.mxu0 0
    %1280 = vmatpush1.bf16.msra.mxu0 %v641
    %1281 = vmatprep.subr.bf16.mxu0 0
    %1282 = vmatpush1.bf16.msra.mxu0 %v644
    %1283 = vmatprep.subr.bf16.mxu0 0
    %1284 = vmatpush1.bf16.msra.mxu0 %v647
    %1285 = vmatprep.subr.bf16.mxu0 0
    %1286 = vmatpush1.bf16.msra.mxu0 %v650
    %1287 = vmatprep.subr.bf16.mxu0 0
    %1288 = vmatpush1.bf16.msra.mxu0 %v653
    %1289 = vmatprep.subr.bf16.mxu0 0
    %1290 = vmatpush1.bf16.msra.mxu0 0
    %1291 = vmatprep.subr.bf16.mxu0 0
    %1292 = vmatpush1.bf16.msra.mxu0 0
    %1293 = vmatprep.subr.bf16.mxu0 0
    %1294 = vmatpush1.bf16.msra.mxu0 0
    %1295 = vmatprep.subr.bf16.mxu0 0
    %1296 = vmatpush1.bf16.msra.mxu0 0
    %1297 = vmatprep.subr.bf16.mxu0 0
    %1298 = vmatpush1.bf16.msra.mxu0 0
    %1299 = vmatprep.subr.bf16.mxu0 0
    %1300 = vmatpush1.bf16.msra.mxu0 0
    %1301 = vmatprep.subr.bf16.mxu0 0
    %1302 = vmatpush1.bf16.msra.mxu0 0
    %1303 = vmatprep.subr.bf16.mxu0 0
    %1304 = vmatpush1.bf16.msra.mxu0 0
    %1305 = vmatprep.mubr.bf16.mxu0 0
    %1306 = vmatmul.mubr.bf16.gmra.mrb[0].mxu0 %v1231
    %v1307 = vpop.f32.mrb[0].mxu0
    %v1308 = vadd.f32 %v268, %v1307
    %v1309 = vpop.f32.mrb[0].mxu0
    %v1310 = vpop.f32.mrb[0].mxu0
    %v1311 = vpop.f32.mrb[0].mxu0
    %1312 = vdwg.mxu0
    %v1315 = vunpack.c.l.s4 1966171168
    %v1316 = vunpack.c.0.s8 %v1315
    %v1317 = vlaneseq
    %v1318 = vshrl.u32 %v1317, 7
    %v1319 = vsub.s32 %v1316, %v1318
    %v1320 = vrot.slane %v1230, %v1319
    %v1321 = vcombine.high %v1320, %v1320
    %v1323 = vunpack.c.l.s4 1966171168
    %v1324 = vunpack.c.0.s8 %v1323
    %v1325 = vlaneseq
    %v1326 = vshrl.u32 %v1325, 7
    %v1327 = vsub.s32 %v1324, %v1326
    %v1328 = vrot.slane %v1320, %v1327
    %v1330 = vunpack.c.l.s4 1966171168
    %v1331 = vunpack.c.0.s8 %v1330
    %v1332 = vlaneseq
    %v1333 = vshrl.u32 %v1332, 7
    %v1334 = vsub.s32 %v1331, %v1333
    %v1335 = vrot.slane %v1321, %v1334
    %1338 = vst [vmem:[#allocation2] sm:$0x1] %v1328
    %1339 = vst [vmem:[#allocation2 + $0x8] sm:$0x1] %v1335
    %v1340 = vlaneseq
    %v1341 = vshrl.u32 %v1340, 7
    %v1342 = vsub.s32 1, %v1341
    %v1343 = vrot.slane %v147, %v1342
    %v1344 = vlaneseq
    %v1345 = vshrl.u32 %v1344, 7
    %v1346 = vsub.s32 1, %v1345
    %v1347 = vrot.slane %v149, %v1346
    %v1348 = vadd.f32 %v1343, %v1207
    %v1349 = vadd.f32 %v1347, %v1208
    %v1350 = vxor.u32 %v1348, 2147483648
    %v1351 = vxor.u32 %v1349, 2147483648
    %v1352 = vmul.f32 %v1350, 1.442695
    %v1353 = vpow.pop %v1352
    %v1354 = vmul.f32 %v1351, 1.442695
    %v1355 = vpow.pop %v1354
    %v1356 = vadd.f32 %v1353, 1.0
    %v1357 = vadd.f32 %v1355, 1.0
    %v1358 = vrcp.pop %v1356
    %v1359 = vmul.f32 1.0, %v1358
    %v1360 = vrcp.pop %v1357
    %v1361 = vmul.f32 1.0, %v1360
    %v1362 = vlaneseq
    %v1363 = vshrl.u32 %v1362, 7
    %v1364 = vsub.s32 1, %v1363
    %v1365 = vrot.slane %v218, %v1364
    %v1366 = vmul.f32 %v1359, %v1209
    %v1367 = vadd.f32 %v1365, %v1366
    %v1368 = vtanh.pop %v1367
    %v1369 = vsub.f32 1.0, %v1361
    %v1370 = vmul.f32 %v1369, %v1368
    %v1371 = vmul.f32 %v1361, %v791
    %v1372 = vadd.f32 %v1370, %v1371
    %v1373 = vpack.c.bf16 %v1372, %v1372
    %v1374 = vld [vmem:[%s5] sm:$0xff]
    %v1375 = vld [vmem:[%s5 + $0x8] sm:$0xff]
    %v1376 = vld [vmem:[%s5 + $0x10] sm:$0xff]
    %v1377 = vld [vmem:[%s5 + $0x18] sm:$0xff]
    %v1378 = vld [vmem:[%s5 + $0x20] sm:$0xff]
    %v1379 = vld [vmem:[%s5 + $0x28] sm:$0xff]
    %v1380 = vld [vmem:[%s5 + $0x30] sm:$0xff]
    %v1381 = vld [vmem:[%s5 + $0x38] sm:$0xff]
    %v1382 = vld [vmem:[%s5 + $0x40] sm:$0xff]
    %v1383 = vld [vmem:[%s5 + $0x48] sm:$0xff]
    %v1384 = vld [vmem:[%s5 + $0x50] sm:$0xff]
    %v1385 = vld [vmem:[%s5 + $0x58] sm:$0xff]
    %v1386 = vld [vmem:[%s5 + $0x60] sm:$0xff]
    %v1387 = vld [vmem:[%s5 + $0x68] sm:$0xff]
    %v1388 = vld [vmem:[%s5 + $0x70] sm:$0xff]
    %v1389 = vld [vmem:[%s5 + $0x78] sm:$0xff]
    %v1390 = vld [vmem:[%s5 + $0x80] sm:$0xff]
    %v1391 = vld [vmem:[%s5 + $0x88] sm:$0xff]
    %v1392 = vld [vmem:[%s5 + $0x90] sm:$0xff]
    %v1393 = vld [vmem:[%s5 + $0x98] sm:$0xff]
    %v1394 = vld [vmem:[%s5 + $0xa0] sm:$0xff]
    %v1395 = vld [vmem:[%s5 + $0xa8] sm:$0xff]
    %v1396 = vld [vmem:[%s5 + $0xb0] sm:$0xff]
    %v1397 = vld [vmem:[%s5 + $0xb8] sm:$0xff]
    %v1398 = vld [vmem:[%s5 + $0xc0] sm:$0xff]
    %v1399 = vld [vmem:[%s5 + $0xc8] sm:$0xff]
    %v1400 = vld [vmem:[%s5 + $0xd0] sm:$0xff]
    %v1401 = vld [vmem:[%s5 + $0xd8] sm:$0xff]
    %v1402 = vld [vmem:[%s5 + $0xe0] sm:$0xff]
    %v1403 = vld [vmem:[%s5 + $0xe8] sm:$0xff]
    %v1404 = vld [vmem:[%s5 + $0xf0] sm:$0xff]
    %v1405 = vld [vmem:[%s5 + $0xf8] sm:$0xff]
    %v1406 = vld [vmem:[%s5 + $0x100] sm:$0xff]
    %v1407 = vld [vmem:[%s5 + $0x108] sm:$0xff]
    %v1408 = vld [vmem:[%s5 + $0x110] sm:$0xff]
    %v1409 = vld [vmem:[%s5 + $0x118] sm:$0xff]
    %v1410 = vld [vmem:[%s5 + $0x120] sm:$0xff]
    %v1411 = vld [vmem:[%s5 + $0x128] sm:$0xff]
    %v1412 = vld [vmem:[%s5 + $0x130] sm:$0xff]
    %v1413 = vld [vmem:[%s5 + $0x138] sm:$0xff]
    %v1414 = vld [vmem:[%s5 + $0x140] sm:$0xff]
    %v1415 = vld [vmem:[%s5 + $0x148] sm:$0xff]
    %v1416 = vld [vmem:[%s5 + $0x150] sm:$0xff]
    %v1417 = vld [vmem:[%s5 + $0x158] sm:$0xff]
    %v1418 = vld [vmem:[%s5 + $0x160] sm:$0xff]
    %v1419 = vld [vmem:[%s5 + $0x168] sm:$0xff]
    %v1420 = vld [vmem:[%s5 + $0x170] sm:$0xff]
    %v1421 = vld [vmem:[%s5 + $0x178] sm:$0xff]
    %v1470 = vunpack.c.l.b16 %v1374
    %v1471 = vunpack.c.h.b16 %v1374
    %v1472 = vunpack.c.l.b16 %v1375
    %v1473 = vunpack.c.h.b16 %v1375
    %v1474 = vunpack.c.l.b16 %v1376
    %v1475 = vunpack.c.h.b16 %v1376
    %v1476 = vunpack.c.l.b16 %v1377
    %v1477 = vunpack.c.h.b16 %v1377
    %v1478 = vunpack.c.l.b16 %v1378
    %v1479 = vunpack.c.h.b16 %v1378
    %v1480 = vunpack.c.l.b16 %v1379
    %v1481 = vunpack.c.h.b16 %v1379
    %v1482 = vunpack.c.l.b16 %v1380
    %v1483 = vunpack.c.h.b16 %v1380
    %v1484 = vunpack.c.l.b16 %v1381
    %v1485 = vunpack.c.h.b16 %v1381
    %v1486 = vunpack.c.l.b16 %v1382
    %v1487 = vunpack.c.h.b16 %v1382
    %v1488 = vunpack.c.l.b16 %v1383
    %v1489 = vunpack.c.h.b16 %v1383
    %v1490 = vunpack.c.l.b16 %v1384
    %v1491 = vunpack.c.h.b16 %v1384
    %v1492 = vunpack.c.l.b16 %v1385
    %v1493 = vunpack.c.h.b16 %v1385
    %v1494 = vunpack.c.l.b16 %v1386
    %v1495 = vunpack.c.h.b16 %v1386
    %v1496 = vunpack.c.l.b16 %v1387
    %v1497 = vunpack.c.h.b16 %v1387
    %v1498 = vunpack.c.l.b16 %v1388
    %v1499 = vunpack.c.h.b16 %v1388
    %v1500 = vunpack.c.l.b16 %v1389
    %v1501 = vunpack.c.h.b16 %v1389
    %v1502 = vunpack.c.l.b16 %v1390
    %v1503 = vunpack.c.h.b16 %v1390
    %v1504 = vunpack.c.l.b16 %v1391
    %v1505 = vunpack.c.h.b16 %v1391
    %v1506 = vunpack.c.l.b16 %v1392
    %v1507 = vunpack.c.h.b16 %v1392
    %v1508 = vunpack.c.l.b16 %v1393
    %v1509 = vunpack.c.h.b16 %v1393
    %v1510 = vunpack.c.l.b16 %v1394
    %v1511 = vunpack.c.h.b16 %v1394
    %v1512 = vunpack.c.l.b16 %v1395
    %v1513 = vunpack.c.h.b16 %v1395
    %v1514 = vunpack.c.l.b16 %v1396
    %v1515 = vunpack.c.h.b16 %v1396
    %v1516 = vunpack.c.l.b16 %v1397
    %v1517 = vunpack.c.h.b16 %v1397
    %v1518 = vunpack.c.l.b16 %v1398
    %v1519 = vunpack.c.h.b16 %v1398
    %v1520 = vunpack.c.l.b16 %v1399
    %v1521 = vunpack.c.h.b16 %v1399
    %v1522 = vunpack.c.l.b16 %v1400
    %v1523 = vunpack.c.h.b16 %v1400
    %v1524 = vunpack.c.l.b16 %v1401
    %v1525 = vunpack.c.h.b16 %v1401
    %v1526 = vunpack.c.l.b16 %v1402
    %v1527 = vunpack.c.h.b16 %v1402
    %v1528 = vunpack.c.l.b16 %v1403
    %v1529 = vunpack.c.h.b16 %v1403
    %v1530 = vunpack.c.l.b16 %v1404
    %v1531 = vunpack.c.h.b16 %v1404
    %v1532 = vunpack.c.l.b16 %v1405
    %v1533 = vunpack.c.h.b16 %v1405
    %v1534 = vunpack.c.l.b16 %v1406
    %v1535 = vunpack.c.h.b16 %v1406
    %v1536 = vunpack.c.l.b16 %v1407
    %v1537 = vunpack.c.h.b16 %v1407
    %v1538 = vunpack.c.l.b16 %v1408
    %v1539 = vunpack.c.h.b16 %v1408
    %v1540 = vunpack.c.l.b16 %v1409
    %v1541 = vunpack.c.h.b16 %v1409
    %v1542 = vunpack.c.l.b16 %v1410
    %v1543 = vunpack.c.h.b16 %v1410
    %v1544 = vunpack.c.l.b16 %v1411
    %v1545 = vunpack.c.h.b16 %v1411
    %v1546 = vunpack.c.l.b16 %v1412
    %v1547 = vunpack.c.h.b16 %v1412
    %v1548 = vunpack.c.l.b16 %v1413
    %v1549 = vunpack.c.h.b16 %v1413
    %v1550 = vunpack.c.l.b16 %v1414
    %v1551 = vunpack.c.h.b16 %v1414
    %v1552 = vunpack.c.l.b16 %v1415
    %v1553 = vunpack.c.h.b16 %v1415
    %v1554 = vunpack.c.l.b16 %v1416
    %v1555 = vunpack.c.h.b16 %v1416
    %v1556 = vunpack.c.l.b16 %v1417
    %v1557 = vunpack.c.h.b16 %v1417
    %v1558 = vunpack.c.l.b16 %v1418
    %v1559 = vunpack.c.h.b16 %v1418
    %v1560 = vunpack.c.l.b16 %v1419
    %v1561 = vunpack.c.h.b16 %v1419
    %v1562 = vunpack.c.l.b16 %v1420
    %v1563 = vunpack.c.h.b16 %v1420
    %v1564 = vunpack.c.l.b16 %v1421
    %v1565 = vunpack.c.h.b16 %v1421
    %v1566 = vpack.c.b16 %v1476, %v1470
    %v1567 = vpack.c.b16 %v1477, %v1471
    %v1568 = vpack.c.b16 %v1478, %v1472
    %v1569 = vpack.c.b16 %v1479, %v1473
    %v1570 = vpack.c.b16 %v1480, %v1474
    %v1571 = vpack.c.b16 %v1481, %v1475
    %v1572 = vpack.c.b16 %v1488, %v1482
    %v1573 = vpack.c.b16 %v1489, %v1483
    %v1574 = vpack.c.b16 %v1490, %v1484
    %v1575 = vpack.c.b16 %v1491, %v1485
    %v1576 = vpack.c.b16 %v1492, %v1486
    %v1577 = vpack.c.b16 %v1493, %v1487
    %v1578 = vpack.c.b16 %v1500, %v1494
    %v1579 = vpack.c.b16 %v1501, %v1495
    %v1580 = vpack.c.b16 %v1502, %v1496
    %v1581 = vpack.c.b16 %v1503, %v1497
    %v1582 = vpack.c.b16 %v1504, %v1498
    %v1583 = vpack.c.b16 %v1505, %v1499
    %v1584 = vpack.c.b16 %v1512, %v1506
    %v1585 = vpack.c.b16 %v1513, %v1507
    %v1586 = vpack.c.b16 %v1514, %v1508
    %v1587 = vpack.c.b16 %v1515, %v1509
    %v1588 = vpack.c.b16 %v1516, %v1510
    %v1589 = vpack.c.b16 %v1517, %v1511
    %v1590 = vpack.c.b16 %v1524, %v1518
    %v1591 = vpack.c.b16 %v1525, %v1519
    %v1592 = vpack.c.b16 %v1526, %v1520
    %v1593 = vpack.c.b16 %v1527, %v1521
    %v1594 = vpack.c.b16 %v1528, %v1522
    %v1595 = vpack.c.b16 %v1529, %v1523
    %v1596 = vpack.c.b16 %v1536, %v1530
    %v1597 = vpack.c.b16 %v1537, %v1531
    %v1598 = vpack.c.b16 %v1538, %v1532
    %v1599 = vpack.c.b16 %v1539, %v1533
    %v1600 = vpack.c.b16 %v1540, %v1534
    %v1601 = vpack.c.b16 %v1541, %v1535
    %v1602 = vpack.c.b16 %v1548, %v1542
    %v1603 = vpack.c.b16 %v1549, %v1543
    %v1604 = vpack.c.b16 %v1550, %v1544
    %v1605 = vpack.c.b16 %v1551, %v1545
    %v1606 = vpack.c.b16 %v1552, %v1546
    %v1607 = vpack.c.b16 %v1553, %v1547
    %v1608 = vpack.c.b16 %v1560, %v1554
    %v1609 = vpack.c.b16 %v1561, %v1555
    %v1610 = vpack.c.b16 %v1562, %v1556
    %v1611 = vpack.c.b16 %v1563, %v1557
    %v1612 = vpack.c.b16 %v1564, %v1558
    %v1613 = vpack.c.b16 %v1565, %v1559
    %1662 = vmatprep.subr.bf16.mxu0 %v1567
    %1663 = vmatpush1.bf16.msra.mxu0 %v1566
    %1664 = vmatprep.subr.bf16.mxu0 %v1573
    %1665 = vmatpush1.bf16.msra.mxu0 %v1572
    %1666 = vmatprep.subr.bf16.mxu0 %v1579
    %1667 = vmatpush1.bf16.msra.mxu0 %v1578
    %1668 = vmatprep.subr.bf16.mxu0 %v1585
    %1669 = vmatpush1.bf16.msra.mxu0 %v1584
    %1670 = vmatprep.subr.bf16.mxu0 %v1591
    %1671 = vmatpush1.bf16.msra.mxu0 %v1590
    %1672 = vmatprep.subr.bf16.mxu0 %v1597
    %1673 = vmatpush1.bf16.msra.mxu0 %v1596
    %1674 = vmatprep.subr.bf16.mxu0 %v1603
    %1675 = vmatpush1.bf16.msra.mxu0 %v1602
    %1676 = vmatprep.subr.bf16.mxu0 %v1609
    %1677 = vmatpush1.bf16.msra.mxu0 %v1608
    %1678 = vmatprep.subr.bf16.mxu0 0
    %1679 = vmatpush1.bf16.msra.mxu0 0
    %1680 = vmatprep.subr.bf16.mxu0 0
    %1681 = vmatpush1.bf16.msra.mxu0 0
    %1682 = vmatprep.subr.bf16.mxu0 0
    %1683 = vmatpush1.bf16.msra.mxu0 0
    %1684 = vmatprep.subr.bf16.mxu0 0
    %1685 = vmatpush1.bf16.msra.mxu0 0
    %1686 = vmatprep.subr.bf16.mxu0 0
    %1687 = vmatpush1.bf16.msra.mxu0 0
    %1688 = vmatprep.subr.bf16.mxu0 0
    %1689 = vmatpush1.bf16.msra.mxu0 0
    %1690 = vmatprep.subr.bf16.mxu0 0
    %1691 = vmatpush1.bf16.msra.mxu0 0
    %1692 = vmatprep.subr.bf16.mxu0 0
    %1693 = vmatpush1.bf16.msra.mxu0 0
    %1694 = vmatprep.mubr.bf16.mxu0 0
    %1695 = vmatmul.mubr.bf16.gmra.mrb[0].mxu0 %v1373
    %v1696 = vpop.f32.mrb[0].mxu0
    %v1697 = vadd.f32 0.0, %v1696
    %v1698 = vpop.f32.mrb[0].mxu0
    %v1699 = vadd.f32 0.0, %v1698
    %v1700 = vpop.f32.mrb[0].mxu0
    %v1701 = vpop.f32.mrb[0].mxu0
    %1702 = vdwg.mxu0
    %1703 = vmatprep.subr.bf16.mxu0 %v1569
    %1704 = vmatpush1.bf16.msra.mxu0 %v1568
    %1705 = vmatprep.subr.bf16.mxu0 %v1575
    %1706 = vmatpush1.bf16.msra.mxu0 %v1574
    %1707 = vmatprep.subr.bf16.mxu0 %v1581
    %1708 = vmatpush1.bf16.msra.mxu0 %v1580
    %1709 = vmatprep.subr.bf16.mxu0 %v1587
    %1710 = vmatpush1.bf16.msra.mxu0 %v1586
    %1711 = vmatprep.subr.bf16.mxu0 %v1593
    %1712 = vmatpush1.bf16.msra.mxu0 %v1592
    %1713 = vmatprep.subr.bf16.mxu0 %v1599
    %1714 = vmatpush1.bf16.msra.mxu0 %v1598
    %1715 = vmatprep.subr.bf16.mxu0 %v1605
    %1716 = vmatpush1.bf16.msra.mxu0 %v1604
    %1717 = vmatprep.subr.bf16.mxu0 %v1611
    %1718 = vmatpush1.bf16.msra.mxu0 %v1610
    %1719 = vmatprep.subr.bf16.mxu0 0
    %1720 = vmatpush1.bf16.msra.mxu0 0
    %1721 = vmatprep.subr.bf16.mxu0 0
    %1722 = vmatpush1.bf16.msra.mxu0 0
    %1723 = vmatprep.subr.bf16.mxu0 0
    %1724 = vmatpush1.bf16.msra.mxu0 0
    %1725 = vmatprep.subr.bf16.mxu0 0
    %1726 = vmatpush1.bf16.msra.mxu0 0
    %1727 = vmatprep.subr.bf16.mxu0 0
    %1728 = vmatpush1.bf16.msra.mxu0 0
    %1729 = vmatprep.subr.bf16.mxu0 0
    %1730 = vmatpush1.bf16.msra.mxu0 0
    %1731 = vmatprep.subr.bf16.mxu0 0
    %1732 = vmatpush1.bf16.msra.mxu0 0
    %1733 = vmatprep.subr.bf16.mxu0 0
    %1734 = vmatpush1.bf16.msra.mxu0 0
    %1735 = vmatprep.mubr.bf16.mxu0 0
    %1736 = vmatmul.mubr.bf16.gmra.mrb[0].mxu0 %v1373
    %v1737 = vpop.f32.mrb[0].mxu0
    %v1738 = vadd.f32 0.0, %v1737
    %v1739 = vpop.f32.mrb[0].mxu0
    %v1740 = vadd.f32 0.0, %v1739
    %v1741 = vpop.f32.mrb[0].mxu0
    %v1742 = vpop.f32.mrb[0].mxu0
    %1743 = vdwg.mxu0
    %1744 = vmatprep.subr.bf16.mxu0 %v1571
    %1745 = vmatpush1.bf16.msra.mxu0 %v1570
    %1746 = vmatprep.subr.bf16.mxu0 %v1577
    %1747 = vmatpush1.bf16.msra.mxu0 %v1576
    %1748 = vmatprep.subr.bf16.mxu0 %v1583
    %1749 = vmatpush1.bf16.msra.mxu0 %v1582
    %1750 = vmatprep.subr.bf16.mxu0 %v1589
    %1751 = vmatpush1.bf16.msra.mxu0 %v1588
    %1752 = vmatprep.subr.bf16.mxu0 %v1595
    %1753 = vmatpush1.bf16.msra.mxu0 %v1594
    %1754 = vmatprep.subr.bf16.mxu0 %v1601
    %1755 = vmatpush1.bf16.msra.mxu0 %v1600
    %1756 = vmatprep.subr.bf16.mxu0 %v1607
    %1757 = vmatpush1.bf16.msra.mxu0 %v1606
    %1758 = vmatprep.subr.bf16.mxu0 %v1613
    %1759 = vmatpush1.bf16.msra.mxu0 %v1612
    %1760 = vmatprep.subr.bf16.mxu0 0
    %1761 = vmatpush1.bf16.msra.mxu0 0
    %1762 = vmatprep.subr.bf16.mxu0 0
    %1763 = vmatpush1.bf16.msra.mxu0 0
    %1764 = vmatprep.subr.bf16.mxu0 0
    %1765 = vmatpush1.bf16.msra.mxu0 0
    %1766 = vmatprep.subr.bf16.mxu0 0
    %1767 = vmatpush1.bf16.msra.mxu0 0
    %1768 = vmatprep.subr.bf16.mxu0 0
    %1769 = vmatpush1.bf16.msra.mxu0 0
    %1770 = vmatprep.subr.bf16.mxu0 0
    %1771 = vmatpush1.bf16.msra.mxu0 0
    %1772 = vmatprep.subr.bf16.mxu0 0
    %1773 = vmatpush1.bf16.msra.mxu0 0
    %1774 = vmatprep.subr.bf16.mxu0 0
    %1775 = vmatpush1.bf16.msra.mxu0 0
    %1776 = vmatprep.mubr.bf16.mxu0 0
    %1777 = vmatmul.mubr.bf16.gmra.mrb[0].mxu0 %v1373
    %v1778 = vpop.f32.mrb[0].mxu0
    %v1779 = vadd.f32 0.0, %v1778
    %v1780 = vpop.f32.mrb[0].mxu0
    %v1781 = vadd.f32 0.0, %v1780
    %v1782 = vpop.f32.mrb[0].mxu0
    %v1783 = vpop.f32.mrb[0].mxu0
    %1784 = vdwg.mxu0
    %v1785 = vadd.f32 %v1697, %v243
    %v1786 = vadd.f32 %v1699, %v247
    %v1787 = vadd.f32 %v1738, %v251
    %v1788 = vadd.f32 %v1740, %v226
    %v1789 = vadd.f32 %v1779, %v230
    %v1790 = vadd.f32 %v1781, %v234
    %v1791 = vadd.f32 %v1785, %v1267
    %v1792 = vadd.f32 %v1786, %v1269
    %v1793 = vxor.u32 %v1791, 2147483648
    %v1794 = vxor.u32 %v1792, 2147483648
    %v1795 = vmul.f32 %v1793, 1.442695
    %v1796 = vpow.pop %v1795
    %v1797 = vmul.f32 %v1794, 1.442695
    %v1798 = vpow.pop %v1797
    %v1799 = vadd.f32 %v1796, 1.0
    %v1800 = vadd.f32 %v1798, 1.0
    %v1801 = vrcp.pop %v1799
    %v1802 = vmul.f32 1.0, %v1801
    %v1803 = vrcp.pop %v1800
    %v1804 = vmul.f32 1.0, %v1803
    %v1805 = vmul.f32 %v1802, %v1308
    %v1806 = vadd.f32 %v1787, %v1805
    %v1807 = vtanh.pop %v1806
    %v1808 = vsub.f32 1.0, %v1804
    %v1809 = vmul.f32 %v1808, %v1807
    %v1810 = vmul.f32 %v1804, %v1230
    %v1811 = vadd.f32 %v1809, %v1810
    %v1812 = vpack.c.bf16 %v1811, %v1811
    %v1813 = vld [vmem:[%s8] sm:$0xff]
    %v1814 = vld [vmem:[%s8 + $0x8] sm:$0xf]
    %v1815 = vld [vmem:[%s8 + $0xc] sm:$0xff]
    %v1816 = vld [vmem:[%s8 + $0x14] sm:$0xf]
    %v1817 = vld [vmem:[%s8 + $0x18] sm:$0xff]
    %v1818 = vld [vmem:[%s8 + $0x20] sm:$0xf]
    %v1819 = vld [vmem:[%s8 + $0x24] sm:$0xff]
    %v1820 = vld [vmem:[%s8 + $0x2c] sm:$0xf]
    %v1821 = vld [vmem:[%s8 + $0x30] sm:$0xff]
    %v1822 = vld [vmem:[%s8 + $0x38] sm:$0xf]
    %v1823 = vld [vmem:[%s8 + $0x3c] sm:$0xff]
    %v1824 = vld [vmem:[%s8 + $0x44] sm:$0xf]
    %v1825 = vld [vmem:[%s8 + $0x48] sm:$0xff]
    %v1826 = vld [vmem:[%s8 + $0x50] sm:$0xf]
    %v1827 = vld [vmem:[%s8 + $0x54] sm:$0xff]
    %v1828 = vld [vmem:[%s8 + $0x5c] sm:$0xf]
    %v1829 = vld [vmem:[%s8 + $0x60] sm:$0xff]
    %v1830 = vld [vmem:[%s8 + $0x68] sm:$0xf]
    %v1831 = vld [vmem:[%s8 + $0x6c] sm:$0xff]
    %v1832 = vld [vmem:[%s8 + $0x74] sm:$0xf]
    %v1833 = vld [vmem:[%s8 + $0x78] sm:$0xff]
    %v1834 = vld [vmem:[%s8 + $0x80] sm:$0xf]
    %v1835 = vld [vmem:[%s8 + $0x84] sm:$0xff]
    %v1836 = vld [vmem:[%s8 + $0x8c] sm:$0xf]
    %v1837 = vld [vmem:[%s8 + $0x90] sm:$0xff]
    %v1838 = vld [vmem:[%s8 + $0x98] sm:$0xf]
    %v1839 = vld [vmem:[%s8 + $0x9c] sm:$0xff]
    %v1840 = vld [vmem:[%s8 + $0xa4] sm:$0xf]
    %v1841 = vld [vmem:[%s8 + $0xa8] sm:$0xff]
    %v1842 = vld [vmem:[%s8 + $0xb0] sm:$0xf]
    %v1843 = vld [vmem:[%s8 + $0xb4] sm:$0xff]
    %v1844 = vld [vmem:[%s8 + $0xbc] sm:$0xf]
    %v1877 = vunpack.c.l.b16 %v1813
    %v1878 = vunpack.c.h.b16 %v1813
    %v1879 = vunpack.c.l.b16 %v1814
    %v1880 = vunpack.c.l.b16 %v1815
    %v1881 = vunpack.c.h.b16 %v1815
    %v1882 = vunpack.c.l.b16 %v1816
    %v1883 = vunpack.c.l.b16 %v1817
    %v1884 = vunpack.c.h.b16 %v1817
    %v1885 = vunpack.c.l.b16 %v1818
    %v1886 = vunpack.c.l.b16 %v1819
    %v1887 = vunpack.c.h.b16 %v1819
    %v1888 = vunpack.c.l.b16 %v1820
    %v1889 = vunpack.c.l.b16 %v1821
    %v1890 = vunpack.c.h.b16 %v1821
    %v1891 = vunpack.c.l.b16 %v1822
    %v1892 = vunpack.c.l.b16 %v1823
    %v1893 = vunpack.c.h.b16 %v1823
    %v1894 = vunpack.c.l.b16 %v1824
    %v1895 = vunpack.c.l.b16 %v1825
    %v1896 = vunpack.c.h.b16 %v1825
    %v1897 = vunpack.c.l.b16 %v1826
    %v1898 = vunpack.c.l.b16 %v1827
    %v1899 = vunpack.c.h.b16 %v1827
    %v1900 = vunpack.c.l.b16 %v1828
    %v1901 = vunpack.c.l.b16 %v1829
    %v1902 = vunpack.c.h.b16 %v1829
    %v1903 = vunpack.c.l.b16 %v1830
    %v1904 = vunpack.c.l.b16 %v1831
    %v1905 = vunpack.c.h.b16 %v1831
    %v1906 = vunpack.c.l.b16 %v1832
    %v1907 = vunpack.c.l.b16 %v1833
    %v1908 = vunpack.c.h.b16 %v1833
    %v1909 = vunpack.c.l.b16 %v1834
    %v1910 = vunpack.c.l.b16 %v1835
    %v1911 = vunpack.c.h.b16 %v1835
    %v1912 = vunpack.c.l.b16 %v1836
    %v1913 = vunpack.c.l.b16 %v1837
    %v1914 = vunpack.c.h.b16 %v1837
    %v1915 = vunpack.c.l.b16 %v1838
    %v1916 = vunpack.c.l.b16 %v1839
    %v1917 = vunpack.c.h.b16 %v1839
    %v1918 = vunpack.c.l.b16 %v1840
    %v1919 = vunpack.c.l.b16 %v1841
    %v1920 = vunpack.c.h.b16 %v1841
    %v1921 = vunpack.c.l.b16 %v1842
    %v1922 = vunpack.c.l.b16 %v1843
    %v1923 = vunpack.c.h.b16 %v1843
    %v1924 = vunpack.c.l.b16 %v1844
    %v1925 = vpack.c.b16 %v1880, %v1877
    %v1926 = vpack.c.b16 %v1881, %v1878
    %v1927 = vpack.c.b16 %v1882, %v1879
    %v1928 = vpack.c.b16 %v1886, %v1883
    %v1929 = vpack.c.b16 %v1887, %v1884
    %v1930 = vpack.c.b16 %v1888, %v1885
    %v1931 = vpack.c.b16 %v1892, %v1889
    %v1932 = vpack.c.b16 %v1893, %v1890
    %v1933 = vpack.c.b16 %v1894, %v1891
    %v1934 = vpack.c.b16 %v1898, %v1895
    %v1935 = vpack.c.b16 %v1899, %v1896
    %v1936 = vpack.c.b16 %v1900, %v1897
    %v1937 = vpack.c.b16 %v1904, %v1901
    %v1938 = vpack.c.b16 %v1905, %v1902
    %v1939 = vpack.c.b16 %v1906, %v1903
    %v1940 = vpack.c.b16 %v1910, %v1907
    %v1941 = vpack.c.b16 %v1911, %v1908
    %v1942 = vpack.c.b16 %v1912, %v1909
    %v1943 = vpack.c.b16 %v1916, %v1913
    %v1944 = vpack.c.b16 %v1917, %v1914
    %v1945 = vpack.c.b16 %v1918, %v1915
    %v1946 = vpack.c.b16 %v1922, %v1919
    %v1947 = vpack.c.b16 %v1923, %v1920
    %v1948 = vpack.c.b16 %v1924, %v1921
    %1973 = vmatprep.subr.bf16.mxu0 %v1926
    %1974 = vmatpush1.bf16.msra.mxu0 %v1925
    %1975 = vmatprep.subr.bf16.mxu0 %v1929
    %1976 = vmatpush1.bf16.msra.mxu0 %v1928
    %1977 = vmatprep.subr.bf16.mxu0 %v1932
    %1978 = vmatpush1.bf16.msra.mxu0 %v1931
    %1979 = vmatprep.subr.bf16.mxu0 %v1935
    %1980 = vmatpush1.bf16.msra.mxu0 %v1934
    %1981 = vmatprep.subr.bf16.mxu0 %v1938
    %1982 = vmatpush1.bf16.msra.mxu0 %v1937
    %1983 = vmatprep.subr.bf16.mxu0 %v1941
    %1984 = vmatpush1.bf16.msra.mxu0 %v1940
    %1985 = vmatprep.subr.bf16.mxu0 %v1944
    %1986 = vmatpush1.bf16.msra.mxu0 %v1943
    %1987 = vmatprep.subr.bf16.mxu0 %v1947
    %1988 = vmatpush1.bf16.msra.mxu0 %v1946
    %1989 = vmatprep.subr.bf16.mxu0 0
    %1990 = vmatpush1.bf16.msra.mxu0 0
    %1991 = vmatprep.subr.bf16.mxu0 0
    %1992 = vmatpush1.bf16.msra.mxu0 0
    %1993 = vmatprep.subr.bf16.mxu0 0
    %1994 = vmatpush1.bf16.msra.mxu0 0
    %1995 = vmatprep.subr.bf16.mxu0 0
    %1996 = vmatpush1.bf16.msra.mxu0 0
    %1997 = vmatprep.subr.bf16.mxu0 0
    %1998 = vmatpush1.bf16.msra.mxu0 0
    %1999 = vmatprep.subr.bf16.mxu0 0
    %2000 = vmatpush1.bf16.msra.mxu0 0
    %2001 = vmatprep.subr.bf16.mxu0 0
    %2002 = vmatpush1.bf16.msra.mxu0 0
    %2003 = vmatprep.subr.bf16.mxu0 0
    %2004 = vmatpush1.bf16.msra.mxu0 0
    %2005 = vmatprep.mubr.bf16.mxu0 0
    %2006 = vmatmul.mubr.bf16.gmra.mrb[0].mxu0 %v1812
    %v2007 = vpop.f32.mrb[0].mxu0
    %v2008 = vadd.f32 %v260, %v2007
    %v2009 = vpop.f32.mrb[0].mxu0
    %v2010 = vadd.f32 %v264, %v2009
    %v2011 = vpop.f32.mrb[0].mxu0
    %v2012 = vpop.f32.mrb[0].mxu0
    %2013 = vdwg.mxu0
    %2014 = vmatprep.subr.bf16.mxu0 0
    %2015 = vmatpush1.bf16.msra.mxu0 %v1927
    %2016 = vmatprep.subr.bf16.mxu0 0
    %2017 = vmatpush1.bf16.msra.mxu0 %v1930
    %2018 = vmatprep.subr.bf16.mxu0 0
    %2019 = vmatpush1.bf16.msra.mxu0 %v1933
    %2020 = vmatprep.subr.bf16.mxu0 0
    %2021 = vmatpush1.bf16.msra.mxu0 %v1936
    %2022 = vmatprep.subr.bf16.mxu0 0
    %2023 = vmatpush1.bf16.msra.mxu0 %v1939
    %2024 = vmatprep.subr.bf16.mxu0 0
    %2025 = vmatpush1.bf16.msra.mxu0 %v1942
    %2026 = vmatprep.subr.bf16.mxu0 0
    %2027 = vmatpush1.bf16.msra.mxu0 %v1945
    %2028 = vmatprep.subr.bf16.mxu0 0
    %2029 = vmatpush1.bf16.msra.mxu0 %v1948
    %2030 = vmatprep.subr.bf16.mxu0 0
    %2031 = vmatpush1.bf16.msra.mxu0 0
    %2032 = vmatprep.subr.bf16.mxu0 0
    %2033 = vmatpush1.bf16.msra.mxu0 0
    %2034 = vmatprep.subr.bf16.mxu0 0
    %2035 = vmatpush1.bf16.msra.mxu0 0
    %2036 = vmatprep.subr.bf16.mxu0 0
    %2037 = vmatpush1.bf16.msra.mxu0 0
    %2038 = vmatprep.subr.bf16.mxu0 0
    %2039 = vmatpush1.bf16.msra.mxu0 0
    %2040 = vmatprep.subr.bf16.mxu0 0
    %2041 = vmatpush1.bf16.msra.mxu0 0
    %2042 = vmatprep.subr.bf16.mxu0 0
    %2043 = vmatpush1.bf16.msra.mxu0 0
    %2044 = vmatprep.subr.bf16.mxu0 0
    %2045 = vmatpush1.bf16.msra.mxu0 0
    %2046 = vmatprep.mubr.bf16.mxu0 0
    %2047 = vmatmul.mubr.bf16.gmra.mrb[0].mxu0 %v1812
    %v2048 = vpop.f32.mrb[0].mxu0
    %v2049 = vadd.f32 %v268, %v2048
    %v2050 = vpop.f32.mrb[0].mxu0
    %v2051 = vpop.f32.mrb[0].mxu0
    %v2052 = vpop.f32.mrb[0].mxu0
    %2053 = vdwg.mxu0
    %v2056 = vunpack.c.l.s4 1966171168
    %v2057 = vunpack.c.0.s8 %v2056
    %v2058 = vlaneseq
    %v2059 = vshrl.u32 %v2058, 7
    %v2060 = vsub.s32 %v2057, %v2059
    %v2061 = vrot.slane %v1811, %v2060
    %v2062 = vcombine.high %v2061, %v2061
    %v2064 = vunpack.c.l.s4 1966171168
    %v2065 = vunpack.c.0.s8 %v2064
    %v2066 = vlaneseq
    %v2067 = vshrl.u32 %v2066, 7
    %v2068 = vsub.s32 %v2065, %v2067
    %v2069 = vrot.slane %v2061, %v2068
    %v2071 = vunpack.c.l.s4 1966171168
    %v2072 = vunpack.c.0.s8 %v2071
    %v2073 = vlaneseq
    %v2074 = vshrl.u32 %v2073, 7
    %v2075 = vsub.s32 %v2072, %v2074
    %v2076 = vrot.slane %v2062, %v2075
    %2079 = vst [vmem:[#allocation2 + $0x1] sm:$0x1] %v2069
    %2080 = vst [vmem:[#allocation2 + $0x9] sm:$0x1] %v2076
    %v2081 = vlaneseq
    %v2082 = vshrl.u32 %v2081, 7
    %v2083 = vsub.s32 2, %v2082
    %v2084 = vrot.slane %v147, %v2083
    %v2085 = vlaneseq
    %v2086 = vshrl.u32 %v2085, 7
    %v2087 = vsub.s32 2, %v2086
    %v2088 = vrot.slane %v149, %v2087
    %v2089 = vadd.f32 %v2084, %v1788
    %v2090 = vadd.f32 %v2088, %v1789
    %v2091 = vxor.u32 %v2089, 2147483648
    %v2092 = vxor.u32 %v2090, 2147483648
    %v2093 = vmul.f32 %v2091, 1.442695
    %v2094 = vpow.pop %v2093
    %v2095 = vmul.f32 %v2092, 1.442695
    %v2096 = vpow.pop %v2095
    %v2097 = vadd.f32 %v2094, 1.0
    %v2098 = vadd.f32 %v2096, 1.0
    %v2099 = vrcp.pop %v2097
    %v2100 = vmul.f32 1.0, %v2099
    %v2101 = vrcp.pop %v2098
    %v2102 = vmul.f32 1.0, %v2101
    %v2103 = vlaneseq
    %v2104 = vshrl.u32 %v2103, 7
    %v2105 = vsub.s32 2, %v2104
    %v2106 = vrot.slane %v218, %v2105
    %v2107 = vmul.f32 %v2100, %v1790
    %v2108 = vadd.f32 %v2106, %v2107
    %v2109 = vtanh.pop %v2108
    %v2110 = vsub.f32 1.0, %v2102
    %v2111 = vmul.f32 %v2110, %v2109
    %v2112 = vmul.f32 %v2102, %v1372
    %v2113 = vadd.f32 %v2111, %v2112
    %v2114 = vpack.c.bf16 %v2113, %v2113
    %v2115 = vld [vmem:[%s5] sm:$0xff]
    %v2116 = vld [vmem:[%s5 + $0x8] sm:$0xff]
    %v2117 = vld [vmem:[%s5 + $0x10] sm:$0xff]
    %v2118 = vld [vmem:[%s5 + $0x18] sm:$0xff]
    %v2119 = vld [vmem:[%s5 + $0x20] sm:$0xff]
    %v2120 = vld [vmem:[%s5 + $0x28] sm:$0xff]
    %v2121 = vld [vmem:[%s5 + $0x30] sm:$0xff]
    %v2122 = vld [vmem:[%s5 + $0x38] sm:$0xff]
    %v2123 = vld [vmem:[%s5 + $0x40] sm:$0xff]
    %v2124 = vld [vmem:[%s5 + $0x48] sm:$0xff]
    %v2125 = vld [vmem:[%s5 + $0x50] sm:$0xff]
    %v2126 = vld [vmem:[%s5 + $0x58] sm:$0xff]
    %v2127 = vld [vmem:[%s5 + $0x60] sm:$0xff]
    %v2128 = vld [vmem:[%s5 + $0x68] sm:$0xff]
    %v2129 = vld [vmem:[%s5 + $0x70] sm:$0xff]
    %v2130 = vld [vmem:[%s5 + $0x78] sm:$0xff]
    %v2131 = vld [vmem:[%s5 + $0x80] sm:$0xff]
    %v2132 = vld [vmem:[%s5 + $0x88] sm:$0xff]
    %v2133 = vld [vmem:[%s5 + $0x90] sm:$0xff]
    %v2134 = vld [vmem:[%s5 + $0x98] sm:$0xff]
    %v2135 = vld [vmem:[%s5 + $0xa0] sm:$0xff]
    %v2136 = vld [vmem:[%s5 + $0xa8] sm:$0xff]
    %v2137 = vld [vmem:[%s5 + $0xb0] sm:$0xff]
    %v2138 = vld [vmem:[%s5 + $0xb8] sm:$0xff]
    %v2139 = vld [vmem:[%s5 + $0xc0] sm:$0xff]
    %v2140 = vld [vmem:[%s5 + $0xc8] sm:$0xff]
    %v2141 = vld [vmem:[%s5 + $0xd0] sm:$0xff]
    %v2142 = vld [vmem:[%s5 + $0xd8] sm:$0xff]
    %v2143 = vld [vmem:[%s5 + $0xe0] sm:$0xff]
    %v2144 = vld [vmem:[%s5 + $0xe8] sm:$0xff]
    %v2145 = vld [vmem:[%s5 + $0xf0] sm:$0xff]
    %v2146 = vld [vmem:[%s5 + $0xf8] sm:$0xff]
    %v2147 = vld [vmem:[%s5 + $0x100] sm:$0xff]
    %v2148 = vld [vmem:[%s5 + $0x108] sm:$0xff]
    %v2149 = vld [vmem:[%s5 + $0x110] sm:$0xff]
    %v2150 = vld [vmem:[%s5 + $0x118] sm:$0xff]
    %v2151 = vld [vmem:[%s5 + $0x120] sm:$0xff]
    %v2152 = vld [vmem:[%s5 + $0x128] sm:$0xff]
    %v2153 = vld [vmem:[%s5 + $0x130] sm:$0xff]
    %v2154 = vld [vmem:[%s5 + $0x138] sm:$0xff]
    %v2155 = vld [vmem:[%s5 + $0x140] sm:$0xff]
    %v2156 = vld [vmem:[%s5 + $0x148] sm:$0xff]
    %v2157 = vld [vmem:[%s5 + $0x150] sm:$0xff]
    %v2158 = vld [vmem:[%s5 + $0x158] sm:$0xff]
    %v2159 = vld [vmem:[%s5 + $0x160] sm:$0xff]
    %v2160 = vld [vmem:[%s5 + $0x168] sm:$0xff]
    %v2161 = vld [vmem:[%s5 + $0x170] sm:$0xff]
    %v2162 = vld [vmem:[%s5 + $0x178] sm:$0xff]
    %v2211 = vunpack.c.l.b16 %v2115
    %v2212 = vunpack.c.h.b16 %v2115
    %v2213 = vunpack.c.l.b16 %v2116
    %v2214 = vunpack.c.h.b16 %v2116
    %v2215 = vunpack.c.l.b16 %v2117
    %v2216 = vunpack.c.h.b16 %v2117
    %v2217 = vunpack.c.l.b16 %v2118
    %v2218 = vunpack.c.h.b16 %v2118
    %v2219 = vunpack.c.l.b16 %v2119
    %v2220 = vunpack.c.h.b16 %v2119
    %v2221 = vunpack.c.l.b16 %v2120
    %v2222 = vunpack.c.h.b16 %v2120
    %v2223 = vunpack.c.l.b16 %v2121
    %v2224 = vunpack.c.h.b16 %v2121
    %v2225 = vunpack.c.l.b16 %v2122
    %v2226 = vunpack.c.h.b16 %v2122
    %v2227 = vunpack.c.l.b16 %v2123
    %v2228 = vunpack.c.h.b16 %v2123
    %v2229 = vunpack.c.l.b16 %v2124
    %v2230 = vunpack.c.h.b16 %v2124
    %v2231 = vunpack.c.l.b16 %v2125
    %v2232 = vunpack.c.h.b16 %v2125
    %v2233 = vunpack.c.l.b16 %v2126
    %v2234 = vunpack.c.h.b16 %v2126
    %v2235 = vunpack.c.l.b16 %v2127
    %v2236 = vunpack.c.h.b16 %v2127
    %v2237 = vunpack.c.l.b16 %v2128
    %v2238 = vunpack.c.h.b16 %v2128
    %v2239 = vunpack.c.l.b16 %v2129
    %v2240 = vunpack.c.h.b16 %v2129
    %v2241 = vunpack.c.l.b16 %v2130
    %v2242 = vunpack.c.h.b16 %v2130
    %v2243 = vunpack.c.l.b16 %v2131
    %v2244 = vunpack.c.h.b16 %v2131
    %v2245 = vunpack.c.l.b16 %v2132
    %v2246 = vunpack.c.h.b16 %v2132
    %v2247 = vunpack.c.l.b16 %v2133
    %v2248 = vunpack.c.h.b16 %v2133
    %v2249 = vunpack.c.l.b16 %v2134
    %v2250 = vunpack.c.h.b16 %v2134
    %v2251 = vunpack.c.l.b16 %v2135
    %v2252 = vunpack.c.h.b16 %v2135
    %v2253 = vunpack.c.l.b16 %v2136
    %v2254 = vunpack.c.h.b16 %v2136
    %v2255 = vunpack.c.l.b16 %v2137
    %v2256 = vunpack.c.h.b16 %v2137
    %v2257 = vunpack.c.l.b16 %v2138
    %v2258 = vunpack.c.h.b16 %v2138
    %v2259 = vunpack.c.l.b16 %v2139
    %v2260 = vunpack.c.h.b16 %v2139
    %v2261 = vunpack.c.l.b16 %v2140
    %v2262 = vunpack.c.h.b16 %v2140
    %v2263 = vunpack.c.l.b16 %v2141
    %v2264 = vunpack.c.h.b16 %v2141
    %v2265 = vunpack.c.l.b16 %v2142
    %v2266 = vunpack.c.h.b16 %v2142
    %v2267 = vunpack.c.l.b16 %v2143
    %v2268 = vunpack.c.h.b16 %v2143
    %v2269 = vunpack.c.l.b16 %v2144
    %v2270 = vunpack.c.h.b16 %v2144
    %v2271 = vunpack.c.l.b16 %v2145
    %v2272 = vunpack.c.h.b16 %v2145
    %v2273 = vunpack.c.l.b16 %v2146
    %v2274 = vunpack.c.h.b16 %v2146
    %v2275 = vunpack.c.l.b16 %v2147
    %v2276 = vunpack.c.h.b16 %v2147
    %v2277 = vunpack.c.l.b16 %v2148
    %v2278 = vunpack.c.h.b16 %v2148
    %v2279 = vunpack.c.l.b16 %v2149
    %v2280 = vunpack.c.h.b16 %v2149
    %v2281 = vunpack.c.l.b16 %v2150
    %v2282 = vunpack.c.h.b16 %v2150
    %v2283 = vunpack.c.l.b16 %v2151
    %v2284 = vunpack.c.h.b16 %v2151
    %v2285 = vunpack.c.l.b16 %v2152
    %v2286 = vunpack.c.h.b16 %v2152
    %v2287 = vunpack.c.l.b16 %v2153
    %v2288 = vunpack.c.h.b16 %v2153
    %v2289 = vunpack.c.l.b16 %v2154
    %v2290 = vunpack.c.h.b16 %v2154
    %v2291 = vunpack.c.l.b16 %v2155
    %v2292 = vunpack.c.h.b16 %v2155
    %v2293 = vunpack.c.l.b16 %v2156
    %v2294 = vunpack.c.h.b16 %v2156
    %v2295 = vunpack.c.l.b16 %v2157
    %v2296 = vunpack.c.h.b16 %v2157
    %v2297 = vunpack.c.l.b16 %v2158
    %v2298 = vunpack.c.h.b16 %v2158
    %v2299 = vunpack.c.l.b16 %v2159
    %v2300 = vunpack.c.h.b16 %v2159
    %v2301 = vunpack.c.l.b16 %v2160
    %v2302 = vunpack.c.h.b16 %v2160
    %v2303 = vunpack.c.l.b16 %v2161
    %v2304 = vunpack.c.h.b16 %v2161
    %v2305 = vunpack.c.l.b16 %v2162
    %v2306 = vunpack.c.h.b16 %v2162
    %v2307 = vpack.c.b16 %v2217, %v2211
    %v2308 = vpack.c.b16 %v2218, %v2212
    %v2309 = vpack.c.b16 %v2219, %v2213
    %v2310 = vpack.c.b16 %v2220, %v2214
    %v2311 = vpack.c.b16 %v2221, %v2215
    %v2312 = vpack.c.b16 %v2222, %v2216
    %v2313 = vpack.c.b16 %v2229, %v2223
    %v2314 = vpack.c.b16 %v2230, %v2224
    %v2315 = vpack.c.b16 %v2231, %v2225
    %v2316 = vpack.c.b16 %v2232, %v2226
    %v2317 = vpack.c.b16 %v2233, %v2227
    %v2318 = vpack.c.b16 %v2234, %v2228
    %v2319 = vpack.c.b16 %v2241, %v2235
    %v2320 = vpack.c.b16 %v2242, %v2236
    %v2321 = vpack.c.b16 %v2243, %v2237
    %v2322 = vpack.c.b16 %v2244, %v2238
    %v2323 = vpack.c.b16 %v2245, %v2239
    %v2324 = vpack.c.b16 %v2246, %v2240
    %v2325 = vpack.c.b16 %v2253, %v2247
    %v2326 = vpack.c.b16 %v2254, %v2248
    %v2327 = vpack.c.b16 %v2255, %v2249
    %v2328 = vpack.c.b16 %v2256, %v2250
    %v2329 = vpack.c.b16 %v2257, %v2251
    %v2330 = vpack.c.b16 %v2258, %v2252
    %v2331 = vpack.c.b16 %v2265, %v2259
    %v2332 = vpack.c.b16 %v2266, %v2260
    %v2333 = vpack.c.b16 %v2267, %v2261
    %v2334 = vpack.c.b16 %v2268, %v2262
    %v2335 = vpack.c.b16 %v2269, %v2263
    %v2336 = vpack.c.b16 %v2270, %v2264
    %v2337 = vpack.c.b16 %v2277, %v2271
    %v2338 = vpack.c.b16 %v2278, %v2272
    %v2339 = vpack.c.b16 %v2279, %v2273
    %v2340 = vpack.c.b16 %v2280, %v2274
    %v2341 = vpack.c.b16 %v2281, %v2275
    %v2342 = vpack.c.b16 %v2282, %v2276
    %v2343 = vpack.c.b16 %v2289, %v2283
    %v2344 = vpack.c.b16 %v2290, %v2284
    %v2345 = vpack.c.b16 %v2291, %v2285
    %v2346 = vpack.c.b16 %v2292, %v2286
    %v2347 = vpack.c.b16 %v2293, %v2287
    %v2348 = vpack.c.b16 %v2294, %v2288
    %v2349 = vpack.c.b16 %v2301, %v2295
    %v2350 = vpack.c.b16 %v2302, %v2296
    %v2351 = vpack.c.b16 %v2303, %v2297
    %v2352 = vpack.c.b16 %v2304, %v2298
    %v2353 = vpack.c.b16 %v2305, %v2299
    %v2354 = vpack.c.b16 %v2306, %v2300
    %2403 = vmatprep.subr.bf16.mxu0 %v2308
    %2404 = vmatpush1.bf16.msra.mxu0 %v2307
    %2405 = vmatprep.subr.bf16.mxu0 %v2314
    %2406 = vmatpush1.bf16.msra.mxu0 %v2313
    %2407 = vmatprep.subr.bf16.mxu0 %v2320
    %2408 = vmatpush1.bf16.msra.mxu0 %v2319
    %2409 = vmatprep.subr.bf16.mxu0 %v2326
    %2410 = vmatpush1.bf16.msra.mxu0 %v2325
    %2411 = vmatprep.subr.bf16.mxu0 %v2332
    %2412 = vmatpush1.bf16.msra.mxu0 %v2331
    %2413 = vmatprep.subr.bf16.mxu0 %v2338
    %2414 = vmatpush1.bf16.msra.mxu0 %v2337
    %2415 = vmatprep.subr.bf16.mxu0 %v2344
    %2416 = vmatpush1.bf16.msra.mxu0 %v2343
    %2417 = vmatprep.subr.bf16.mxu0 %v2350
    %2418 = vmatpush1.bf16.msra.mxu0 %v2349
    %2419 = vmatprep.subr.bf16.mxu0 0
    %2420 = vmatpush1.bf16.msra.mxu0 0
    %2421 = vmatprep.subr.bf16.mxu0 0
    %2422 = vmatpush1.bf16.msra.mxu0 0
    %2423 = vmatprep.subr.bf16.mxu0 0
    %2424 = vmatpush1.bf16.msra.mxu0 0
    %2425 = vmatprep.subr.bf16.mxu0 0
    %2426 = vmatpush1.bf16.msra.mxu0 0
    %2427 = vmatprep.subr.bf16.mxu0 0
    %2428 = vmatpush1.bf16.msra.mxu0 0
    %2429 = vmatprep.subr.bf16.mxu0 0
    %2430 = vmatpush1.bf16.msra.mxu0 0
    %2431 = vmatprep.subr.bf16.mxu0 0
    %2432 = vmatpush1.bf16.msra.mxu0 0
    %2433 = vmatprep.subr.bf16.mxu0 0
    %2434 = vmatpush1.bf16.msra.mxu0 0
    %2435 = vmatprep.mubr.bf16.mxu0 0
    %2436 = vmatmul.mubr.bf16.gmra.mrb[0].mxu0 %v2114
    %v2437 = vpop.f32.mrb[0].mxu0
    %v2438 = vadd.f32 0.0, %v2437
    %v2439 = vpop.f32.mrb[0].mxu0
    %v2440 = vadd.f32 0.0, %v2439
    %v2441 = vpop.f32.mrb[0].mxu0
    %v2442 = vpop.f32.mrb[0].mxu0
    %2443 = vdwg.mxu0
    %2444 = vmatprep.subr.bf16.mxu0 %v2310
    %2445 = vmatpush1.bf16.msra.mxu0 %v2309
    %2446 = vmatprep.subr.bf16.mxu0 %v2316
    %2447 = vmatpush1.bf16.msra.mxu0 %v2315
    %2448 = vmatprep.subr.bf16.mxu0 %v2322
    %2449 = vmatpush1.bf16.msra.mxu0 %v2321
    %2450 = vmatprep.subr.bf16.mxu0 %v2328
    %2451 = vmatpush1.bf16.msra.mxu0 %v2327
    %2452 = vmatprep.subr.bf16.mxu0 %v2334
    %2453 = vmatpush1.bf16.msra.mxu0 %v2333
    %2454 = vmatprep.subr.bf16.mxu0 %v2340
    %2455 = vmatpush1.bf16.msra.mxu0 %v2339
    %2456 = vmatprep.subr.bf16.mxu0 %v2346
    %2457 = vmatpush1.bf16.msra.mxu0 %v2345
    %2458 = vmatprep.subr.bf16.mxu0 %v2352
    %2459 = vmatpush1.bf16.msra.mxu0 %v2351
    %2460 = vmatprep.subr.bf16.mxu0 0
    %2461 = vmatpush1.bf16.msra.mxu0 0
    %2462 = vmatprep.subr.bf16.mxu0 0
    %2463 = vmatpush1.bf16.msra.mxu0 0
    %2464 = vmatprep.subr.bf16.mxu0 0
    %2465 = vmatpush1.bf16.msra.mxu0 0
    %2466 = vmatprep.subr.bf16.mxu0 0
    %2467 = vmatpush1.bf16.msra.mxu0 0
    %2468 = vmatprep.subr.bf16.mxu0 0
    %2469 = vmatpush1.bf16.msra.mxu0 0
    %2470 = vmatprep.subr.bf16.mxu0 0
    %2471 = vmatpush1.bf16.msra.mxu0 0
    %2472 = vmatprep.subr.bf16.mxu0 0
    %2473 = vmatpush1.bf16.msra.mxu0 0
    %2474 = vmatprep.subr.bf16.mxu0 0
    %2475 = vmatpush1.bf16.msra.mxu0 0
    %2476 = vmatprep.mubr.bf16.mxu0 0
    %2477 = vmatmul.mubr.bf16.gmra.mrb[0].mxu0 %v2114
    %v2478 = vpop.f32.mrb[0].mxu0
    %v2479 = vadd.f32 0.0, %v2478
    %v2480 = vpop.f32.mrb[0].mxu0
    %v2481 = vadd.f32 0.0, %v2480
    %v2482 = vpop.f32.mrb[0].mxu0
    %v2483 = vpop.f32.mrb[0].mxu0
    %2484 = vdwg.mxu0
    %2485 = vmatprep.subr.bf16.mxu0 %v2312
    %2486 = vmatpush1.bf16.msra.mxu0 %v2311
    %2487 = vmatprep.subr.bf16.mxu0 %v2318
    %2488 = vmatpush1.bf16.msra.mxu0 %v2317
    %2489 = vmatprep.subr.bf16.mxu0 %v2324
    %2490 = vmatpush1.bf16.msra.mxu0 %v2323
    %2491 = vmatprep.subr.bf16.mxu0 %v2330
    %2492 = vmatpush1.bf16.msra.mxu0 %v2329
    %2493 = vmatprep.subr.bf16.mxu0 %v2336
    %2494 = vmatpush1.bf16.msra.mxu0 %v2335
    %2495 = vmatprep.subr.bf16.mxu0 %v2342
    %2496 = vmatpush1.bf16.msra.mxu0 %v2341
    %2497 = vmatprep.subr.bf16.mxu0 %v2348
    %2498 = vmatpush1.bf16.msra.mxu0 %v2347
    %2499 = vmatprep.subr.bf16.mxu0 %v2354
    %2500 = vmatpush1.bf16.msra.mxu0 %v2353
    %2501 = vmatprep.subr.bf16.mxu0 0
    %2502 = vmatpush1.bf16.msra.mxu0 0
    %2503 = vmatprep.subr.bf16.mxu0 0
    %2504 = vmatpush1.bf16.msra.mxu0 0
    %2505 = vmatprep.subr.bf16.mxu0 0
    %2506 = vmatpush1.bf16.msra.mxu0 0
    %2507 = vmatprep.subr.bf16.mxu0 0
    %2508 = vmatpush1.bf16.msra.mxu0 0
    %2509 = vmatprep.subr.bf16.mxu0 0
    %2510 = vmatpush1.bf16.msra.mxu0 0
    %2511 = vmatprep.subr.bf16.mxu0 0
    %2512 = vmatpush1.bf16.msra.mxu0 0
    %2513 = vmatprep.subr.bf16.mxu0 0
    %2514 = vmatpush1.bf16.msra.mxu0 0
    %2515 = vmatprep.subr.bf16.mxu0 0
    %2516 = vmatpush1.bf16.msra.mxu0 0
    %2517 = vmatprep.mubr.bf16.mxu0 0
    %2518 = vmatmul.mubr.bf16.gmra.mrb[0].mxu0 %v2114
    %v2519 = vpop.f32.mrb[0].mxu0
    %v2520 = vadd.f32 0.0, %v2519
    %v2521 = vpop.f32.mrb[0].mxu0
    %v2522 = vadd.f32 0.0, %v2521
    %v2523 = vpop.f32.mrb[0].mxu0
    %v2524 = vpop.f32.mrb[0].mxu0
    %2525 = vdwg.mxu0
    %v2526 = vadd.f32 %v2438, %v243
    %v2527 = vadd.f32 %v2440, %v247
    %v2528 = vadd.f32 %v2479, %v251
    %v2529 = vadd.f32 %v2481, %v226
    %v2530 = vadd.f32 %v2520, %v230
    %v2531 = vadd.f32 %v2522, %v234
    %v2532 = vadd.f32 %v2526, %v2008
    %v2533 = vadd.f32 %v2527, %v2010
    %v2534 = vxor.u32 %v2532, 2147483648
    %v2535 = vxor.u32 %v2533, 2147483648
    %v2536 = vmul.f32 %v2534, 1.442695
    %v2537 = vpow.pop %v2536
    %v2538 = vmul.f32 %v2535, 1.442695
    %v2539 = vpow.pop %v2538
    %v2540 = vadd.f32 %v2537, 1.0
    %v2541 = vadd.f32 %v2539, 1.0
    %v2542 = vrcp.pop %v2540
    %v2543 = vmul.f32 1.0, %v2542
    %v2544 = vrcp.pop %v2541
    %v2545 = vmul.f32 1.0, %v2544
    %v2546 = vmul.f32 %v2543, %v2049
    %v2547 = vadd.f32 %v2528, %v2546
    %v2548 = vtanh.pop %v2547
    %v2549 = vsub.f32 1.0, %v2545
    %v2550 = vmul.f32 %v2549, %v2548
    %v2551 = vmul.f32 %v2545, %v1811
    %v2552 = vadd.f32 %v2550, %v2551
    %v2553 = vpack.c.bf16 %v2552, %v2552
    %v2554 = vld [vmem:[%s8] sm:$0xff]
    %v2555 = vld [vmem:[%s8 + $0x8] sm:$0xf]
    %v2556 = vld [vmem:[%s8 + $0xc] sm:$0xff]
    %v2557 = vld [vmem:[%s8 + $0x14] sm:$0xf]
    %v2558 = vld [vmem:[%s8 + $0x18] sm:$0xff]
    %v2559 = vld [vmem:[%s8 + $0x20] sm:$0xf]
    %v2560 = vld [vmem:[%s8 + $0x24] sm:$0xff]
    %v2561 = vld [vmem:[%s8 + $0x2c] sm:$0xf]
    %v2562 = vld [vmem:[%s8 + $0x30] sm:$0xff]
    %v2563 = vld [vmem:[%s8 + $0x38] sm:$0xf]
    %v2564 = vld [vmem:[%s8 + $0x3c] sm:$0xff]
    %v2565 = vld [vmem:[%s8 + $0x44] sm:$0xf]
    %v2566 = vld [vmem:[%s8 + $0x48] sm:$0xff]
    %v2567 = vld [vmem:[%s8 + $0x50] sm:$0xf]
    %v2568 = vld [vmem:[%s8 + $0x54] sm:$0xff]
    %v2569 = vld [vmem:[%s8 + $0x5c] sm:$0xf]
    %v2570 = vld [vmem:[%s8 + $0x60] sm:$0xff]
    %v2571 = vld [vmem:[%s8 + $0x68] sm:$0xf]
    %v2572 = vld [vmem:[%s8 + $0x6c] sm:$0xff]
    %v2573 = vld [vmem:[%s8 + $0x74] sm:$0xf]
    %v2574 = vld [vmem:[%s8 + $0x78] sm:$0xff]
    %v2575 = vld [vmem:[%s8 + $0x80] sm:$0xf]
    %v2576 = vld [vmem:[%s8 + $0x84] sm:$0xff]
    %v2577 = vld [vmem:[%s8 + $0x8c] sm:$0xf]
    %v2578 = vld [vmem:[%s8 + $0x90] sm:$0xff]
    %v2579 = vld [vmem:[%s8 + $0x98] sm:$0xf]
    %v2580 = vld [vmem:[%s8 + $0x9c] sm:$0xff]
    %v2581 = vld [vmem:[%s8 + $0xa4] sm:$0xf]
    %v2582 = vld [vmem:[%s8 + $0xa8] sm:$0xff]
    %v2583 = vld [vmem:[%s8 + $0xb0] sm:$0xf]
    %v2584 = vld [vmem:[%s8 + $0xb4] sm:$0xff]
    %v2585 = vld [vmem:[%s8 + $0xbc] sm:$0xf]
    %v2618 = vunpack.c.l.b16 %v2554
    %v2619 = vunpack.c.h.b16 %v2554
    %v2620 = vunpack.c.l.b16 %v2555
    %v2621 = vunpack.c.l.b16 %v2556
    %v2622 = vunpack.c.h.b16 %v2556
    %v2623 = vunpack.c.l.b16 %v2557
    %v2624 = vunpack.c.l.b16 %v2558
    %v2625 = vunpack.c.h.b16 %v2558
    %v2626 = vunpack.c.l.b16 %v2559
    %v2627 = vunpack.c.l.b16 %v2560
    %v2628 = vunpack.c.h.b16 %v2560
    %v2629 = vunpack.c.l.b16 %v2561
    %v2630 = vunpack.c.l.b16 %v2562
    %v2631 = vunpack.c.h.b16 %v2562
    %v2632 = vunpack.c.l.b16 %v2563
    %v2633 = vunpack.c.l.b16 %v2564
    %v2634 = vunpack.c.h.b16 %v2564
    %v2635 = vunpack.c.l.b16 %v2565
    %v2636 = vunpack.c.l.b16 %v2566
    %v2637 = vunpack.c.h.b16 %v2566
    %v2638 = vunpack.c.l.b16 %v2567
    %v2639 = vunpack.c.l.b16 %v2568
    %v2640 = vunpack.c.h.b16 %v2568
    %v2641 = vunpack.c.l.b16 %v2569
    %v2642 = vunpack.c.l.b16 %v2570
    %v2643 = vunpack.c.h.b16 %v2570
    %v2644 = vunpack.c.l.b16 %v2571
    %v2645 = vunpack.c.l.b16 %v2572
    %v2646 = vunpack.c.h.b16 %v2572
    %v2647 = vunpack.c.l.b16 %v2573
    %v2648 = vunpack.c.l.b16 %v2574
    %v2649 = vunpack.c.h.b16 %v2574
    %v2650 = vunpack.c.l.b16 %v2575
    %v2651 = vunpack.c.l.b16 %v2576
    %v2652 = vunpack.c.h.b16 %v2576
    %v2653 = vunpack.c.l.b16 %v2577
    %v2654 = vunpack.c.l.b16 %v2578
    %v2655 = vunpack.c.h.b16 %v2578
    %v2656 = vunpack.c.l.b16 %v2579
    %v2657 = vunpack.c.l.b16 %v2580
    %v2658 = vunpack.c.h.b16 %v2580
    %v2659 = vunpack.c.l.b16 %v2581
    %v2660 = vunpack.c.l.b16 %v2582
    %v2661 = vunpack.c.h.b16 %v2582
    %v2662 = vunpack.c.l.b16 %v2583
    %v2663 = vunpack.c.l.b16 %v2584
    %v2664 = vunpack.c.h.b16 %v2584
    %v2665 = vunpack.c.l.b16 %v2585
    %v2666 = vpack.c.b16 %v2621, %v2618
    %v2667 = vpack.c.b16 %v2622, %v2619
    %v2668 = vpack.c.b16 %v2623, %v2620
    %v2669 = vpack.c.b16 %v2627, %v2624
    %v2670 = vpack.c.b16 %v2628, %v2625
    %v2671 = vpack.c.b16 %v2629, %v2626
    %v2672 = vpack.c.b16 %v2633, %v2630
    %v2673 = vpack.c.b16 %v2634, %v2631
    %v2674 = vpack.c.b16 %v2635, %v2632
    %v2675 = vpack.c.b16 %v2639, %v2636
    %v2676 = vpack.c.b16 %v2640, %v2637
    %v2677 = vpack.c.b16 %v2641, %v2638
    %v2678 = vpack.c.b16 %v2645, %v2642
    %v2679 = vpack.c.b16 %v2646, %v2643
    %v2680 = vpack.c.b16 %v2647, %v2644
    %v2681 = vpack.c.b16 %v2651, %v2648
    %v2682 = vpack.c.b16 %v2652, %v2649
    %v2683 = vpack.c.b16 %v2653, %v2650
    %v2684 = vpack.c.b16 %v2657, %v2654
    %v2685 = vpack.c.b16 %v2658, %v2655
    %v2686 = vpack.c.b16 %v2659, %v2656
    %v2687 = vpack.c.b16 %v2663, %v2660
    %v2688 = vpack.c.b16 %v2664, %v2661
    %v2689 = vpack.c.b16 %v2665, %v2662
    %2714 = vmatprep.subr.bf16.mxu0 %v2667
    %2715 = vmatpush1.bf16.msra.mxu0 %v2666
    %2716 = vmatprep.subr.bf16.mxu0 %v2670
    %2717 = vmatpush1.bf16.msra.mxu0 %v2669
    %2718 = vmatprep.subr.bf16.mxu0 %v2673
    %2719 = vmatpush1.bf16.msra.mxu0 %v2672
    %2720 = vmatprep.subr.bf16.mxu0 %v2676
    %2721 = vmatpush1.bf16.msra.mxu0 %v2675
    %2722 = vmatprep.subr.bf16.mxu0 %v2679
    %2723 = vmatpush1.bf16.msra.mxu0 %v2678
    %2724 = vmatprep.subr.bf16.mxu0 %v2682
    %2725 = vmatpush1.bf16.msra.mxu0 %v2681
    %2726 = vmatprep.subr.bf16.mxu0 %v2685
    %2727 = vmatpush1.bf16.msra.mxu0 %v2684
    %2728 = vmatprep.subr.bf16.mxu0 %v2688
    %2729 = vmatpush1.bf16.msra.mxu0 %v2687
    %2730 = vmatprep.subr.bf16.mxu0 0
    %2731 = vmatpush1.bf16.msra.mxu0 0
    %2732 = vmatprep.subr.bf16.mxu0 0
    %2733 = vmatpush1.bf16.msra.mxu0 0
    %2734 = vmatprep.subr.bf16.mxu0 0
    %2735 = vmatpush1.bf16.msra.mxu0 0
    %2736 = vmatprep.subr.bf16.mxu0 0
    %2737 = vmatpush1.bf16.msra.mxu0 0
    %2738 = vmatprep.subr.bf16.mxu0 0
    %2739 = vmatpush1.bf16.msra.mxu0 0
    %2740 = vmatprep.subr.bf16.mxu0 0
    %2741 = vmatpush1.bf16.msra.mxu0 0
    %2742 = vmatprep.subr.bf16.mxu0 0
    %2743 = vmatpush1.bf16.msra.mxu0 0
    %2744 = vmatprep.subr.bf16.mxu0 0
    %2745 = vmatpush1.bf16.msra.mxu0 0
    %2746 = vmatprep.mubr.bf16.mxu0 0
    %2747 = vmatmul.mubr.bf16.gmra.mrb[0].mxu0 %v2553
    %v2748 = vpop.f32.mrb[0].mxu0
    %v2749 = vadd.f32 %v260, %v2748
    %v2750 = vpop.f32.mrb[0].mxu0
    %v2751 = vadd.f32 %v264, %v2750
    %v2752 = vpop.f32.mrb[0].mxu0
    %v2753 = vpop.f32.mrb[0].mxu0
    %2754 = vdwg.mxu0
    %2755 = vmatprep.subr.bf16.mxu0 0
    %2756 = vmatpush1.bf16.msra.mxu0 %v2668
    %2757 = vmatprep.subr.bf16.mxu0 0
    %2758 = vmatpush1.bf16.msra.mxu0 %v2671
    %2759 = vmatprep.subr.bf16.mxu0 0
    %2760 = vmatpush1.bf16.msra.mxu0 %v2674
    %2761 = vmatprep.subr.bf16.mxu0 0
    %2762 = vmatpush1.bf16.msra.mxu0 %v2677
    %2763 = vmatprep.subr.bf16.mxu0 0
    %2764 = vmatpush1.bf16.msra.mxu0 %v2680
    %2765 = vmatprep.subr.bf16.mxu0 0
    %2766 = vmatpush1.bf16.msra.mxu0 %v2683
    %2767 = vmatprep.subr.bf16.mxu0 0
    %2768 = vmatpush1.bf16.msra.mxu0 %v2686
    %2769 = vmatprep.subr.bf16.mxu0 0
    %2770 = vmatpush1.bf16.msra.mxu0 %v2689
    %2771 = vmatprep.subr.bf16.mxu0 0
    %2772 = vmatpush1.bf16.msra.mxu0 0
    %2773 = vmatprep.subr.bf16.mxu0 0
    %2774 = vmatpush1.bf16.msra.mxu0 0
    %2775 = vmatprep.subr.bf16.mxu0 0
    %2776 = vmatpush1.bf16.msra.mxu0 0
    %2777 = vmatprep.subr.bf16.mxu0 0
    %2778 = vmatpush1.bf16.msra.mxu0 0
    %2779 = vmatprep.subr.bf16.mxu0 0
    %2780 = vmatpush1.bf16.msra.mxu0 0
    %2781 = vmatprep.subr.bf16.mxu0 0
    %2782 = vmatpush1.bf16.msra.mxu0 0
    %2783 = vmatprep.subr.bf16.mxu0 0
    %2784 = vmatpush1.bf16.msra.mxu0 0
    %2785 = vmatprep.subr.bf16.mxu0 0
    %2786 = vmatpush1.bf16.msra.mxu0 0
    %2787 = vmatprep.mubr.bf16.mxu0 0
    %2788 = vmatmul.mubr.bf16.gmra.mrb[0].mxu0 %v2553
    %v2789 = vpop.f32.mrb[0].mxu0
    %v2790 = vadd.f32 %v268, %v2789
    %v2791 = vpop.f32.mrb[0].mxu0
    %v2792 = vpop.f32.mrb[0].mxu0
    %v2793 = vpop.f32.mrb[0].mxu0
    %2794 = vdwg.mxu0
    %v2797 = vunpack.c.l.s4 1966171168
    %v2798 = vunpack.c.0.s8 %v2797
    %v2799 = vlaneseq
    %v2800 = vshrl.u32 %v2799, 7
    %v2801 = vsub.s32 %v2798, %v2800
    %v2802 = vrot.slane %v2552, %v2801
    %v2803 = vcombine.high %v2802, %v2802
    %v2805 = vunpack.c.l.s4 1966171168
    %v2806 = vunpack.c.0.s8 %v2805
    %v2807 = vlaneseq
    %v2808 = vshrl.u32 %v2807, 7
    %v2809 = vsub.s32 %v2806, %v2808
    %v2810 = vrot.slane %v2802, %v2809
    %v2812 = vunpack.c.l.s4 1966171168
    %v2813 = vunpack.c.0.s8 %v2812
    %v2814 = vlaneseq
    %v2815 = vshrl.u32 %v2814, 7
    %v2816 = vsub.s32 %v2813, %v2815
    %v2817 = vrot.slane %v2803, %v2816
    %2820 = vst [vmem:[#allocation2 + $0x2] sm:$0x1] %v2810
    %2821 = vst [vmem:[#allocation2 + $0xa] sm:$0x1] %v2817
    %v2822 = vlaneseq
    %v2823 = vshrl.u32 %v2822, 7
    %v2824 = vsub.s32 3, %v2823
    %v2825 = vrot.slane %v147, %v2824
    %v2826 = vlaneseq
    %v2827 = vshrl.u32 %v2826, 7
    %v2828 = vsub.s32 3, %v2827
    %v2829 = vrot.slane %v149, %v2828
    %v2830 = vadd.f32 %v2825, %v2529
    %v2831 = vadd.f32 %v2829, %v2530
    %v2832 = vxor.u32 %v2830, 2147483648
    %v2833 = vxor.u32 %v2831, 2147483648
    %v2834 = vmul.f32 %v2832, 1.442695
    %v2835 = vpow.pop %v2834
    %v2836 = vmul.f32 %v2833, 1.442695
    %v2837 = vpow.pop %v2836
    %v2838 = vadd.f32 %v2835, 1.0
    %v2839 = vadd.f32 %v2837, 1.0
    %v2840 = vrcp.pop %v2838
    %v2841 = vmul.f32 1.0, %v2840
    %v2842 = vrcp.pop %v2839
    %v2843 = vmul.f32 1.0, %v2842
    %v2844 = vlaneseq
    %v2845 = vshrl.u32 %v2844, 7
    %v2846 = vsub.s32 3, %v2845
    %v2847 = vrot.slane %v218, %v2846
    %v2848 = vmul.f32 %v2841, %v2531
    %v2849 = vadd.f32 %v2847, %v2848
    %v2850 = vtanh.pop %v2849
    %v2851 = vsub.f32 1.0, %v2843
    %v2852 = vmul.f32 %v2851, %v2850
    %v2853 = vmul.f32 %v2843, %v2113
    %v2854 = vadd.f32 %v2852, %v2853
    %v2855 = vpack.c.bf16 %v2854, %v2854
    %v2856 = vld [vmem:[%s5] sm:$0xff]
    %v2857 = vld [vmem:[%s5 + $0x8] sm:$0xff]
    %v2858 = vld [vmem:[%s5 + $0x10] sm:$0xff]
    %v2859 = vld [vmem:[%s5 + $0x18] sm:$0xff]
    %v2860 = vld [vmem:[%s5 + $0x20] sm:$0xff]
    %v2861 = vld [vmem:[%s5 + $0x28] sm:$0xff]
    %v2862 = vld [vmem:[%s5 + $0x30] sm:$0xff]
    %v2863 = vld [vmem:[%s5 + $0x38] sm:$0xff]
    %v2864 = vld [vmem:[%s5 + $0x40] sm:$0xff]
    %v2865 = vld [vmem:[%s5 + $0x48] sm:$0xff]
    %v2866 = vld [vmem:[%s5 + $0x50] sm:$0xff]
    %v2867 = vld [vmem:[%s5 + $0x58] sm:$0xff]
    %v2868 = vld [vmem:[%s5 + $0x60] sm:$0xff]
    %v2869 = vld [vmem:[%s5 + $0x68] sm:$0xff]
    %v2870 = vld [vmem:[%s5 + $0x70] sm:$0xff]
    %v2871 = vld [vmem:[%s5 + $0x78] sm:$0xff]
    %v2872 = vld [vmem:[%s5 + $0x80] sm:$0xff]
    %v2873 = vld [vmem:[%s5 + $0x88] sm:$0xff]
    %v2874 = vld [vmem:[%s5 + $0x90] sm:$0xff]
    %v2875 = vld [vmem:[%s5 + $0x98] sm:$0xff]
    %v2876 = vld [vmem:[%s5 + $0xa0] sm:$0xff]
    %v2877 = vld [vmem:[%s5 + $0xa8] sm:$0xff]
    %v2878 = vld [vmem:[%s5 + $0xb0] sm:$0xff]
    %v2879 = vld [vmem:[%s5 + $0xb8] sm:$0xff]
    %v2880 = vld [vmem:[%s5 + $0xc0] sm:$0xff]
    %v2881 = vld [vmem:[%s5 + $0xc8] sm:$0xff]
    %v2882 = vld [vmem:[%s5 + $0xd0] sm:$0xff]
    %v2883 = vld [vmem:[%s5 + $0xd8] sm:$0xff]
    %v2884 = vld [vmem:[%s5 + $0xe0] sm:$0xff]
    %v2885 = vld [vmem:[%s5 + $0xe8] sm:$0xff]
    %v2886 = vld [vmem:[%s5 + $0xf0] sm:$0xff]
    %v2887 = vld [vmem:[%s5 + $0xf8] sm:$0xff]
    %v2888 = vld [vmem:[%s5 + $0x100] sm:$0xff]
    %v2889 = vld [vmem:[%s5 + $0x108] sm:$0xff]
    %v2890 = vld [vmem:[%s5 + $0x110] sm:$0xff]
    %v2891 = vld [vmem:[%s5 + $0x118] sm:$0xff]
    %v2892 = vld [vmem:[%s5 + $0x120] sm:$0xff]
    %v2893 = vld [vmem:[%s5 + $0x128] sm:$0xff]
    %v2894 = vld [vmem:[%s5 + $0x130] sm:$0xff]
    %v2895 = vld [vmem:[%s5 + $0x138] sm:$0xff]
    %v2896 = vld [vmem:[%s5 + $0x140] sm:$0xff]
    %v2897 = vld [vmem:[%s5 + $0x148] sm:$0xff]
    %v2898 = vld [vmem:[%s5 + $0x150] sm:$0xff]
    %v2899 = vld [vmem:[%s5 + $0x158] sm:$0xff]
    %v2900 = vld [vmem:[%s5 + $0x160] sm:$0xff]
    %v2901 = vld [vmem:[%s5 + $0x168] sm:$0xff]
    %v2902 = vld [vmem:[%s5 + $0x170] sm:$0xff]
    %v2903 = vld [vmem:[%s5 + $0x178] sm:$0xff]
    %v2952 = vunpack.c.l.b16 %v2856
    %v2953 = vunpack.c.h.b16 %v2856
    %v2954 = vunpack.c.l.b16 %v2857
    %v2955 = vunpack.c.h.b16 %v2857
    %v2956 = vunpack.c.l.b16 %v2858
    %v2957 = vunpack.c.h.b16 %v2858
    %v2958 = vunpack.c.l.b16 %v2859
    %v2959 = vunpack.c.h.b16 %v2859
    %v2960 = vunpack.c.l.b16 %v2860
    %v2961 = vunpack.c.h.b16 %v2860
    %v2962 = vunpack.c.l.b16 %v2861
    %v2963 = vunpack.c.h.b16 %v2861
    %v2964 = vunpack.c.l.b16 %v2862
    %v2965 = vunpack.c.h.b16 %v2862
    %v2966 = vunpack.c.l.b16 %v2863
    %v2967 = vunpack.c.h.b16 %v2863
    %v2968 = vunpack.c.l.b16 %v2864
    %v2969 = vunpack.c.h.b16 %v2864
    %v2970 = vunpack.c.l.b16 %v2865
    %v2971 = vunpack.c.h.b16 %v2865
    %v2972 = vunpack.c.l.b16 %v2866
    %v2973 = vunpack.c.h.b16 %v2866
    %v2974 = vunpack.c.l.b16 %v2867
    %v2975 = vunpack.c.h.b16 %v2867
    %v2976 = vunpack.c.l.b16 %v2868
    %v2977 = vunpack.c.h.b16 %v2868
    %v2978 = vunpack.c.l.b16 %v2869
    %v2979 = vunpack.c.h.b16 %v2869
    %v2980 = vunpack.c.l.b16 %v2870
    %v2981 = vunpack.c.h.b16 %v2870
    %v2982 = vunpack.c.l.b16 %v2871
    %v2983 = vunpack.c.h.b16 %v2871
    %v2984 = vunpack.c.l.b16 %v2872
    %v2985 = vunpack.c.h.b16 %v2872
    %v2986 = vunpack.c.l.b16 %v2873
    %v2987 = vunpack.c.h.b16 %v2873
    %v2988 = vunpack.c.l.b16 %v2874
    %v2989 = vunpack.c.h.b16 %v2874
    %v2990 = vunpack.c.l.b16 %v2875
    %v2991 = vunpack.c.h.b16 %v2875
    %v2992 = vunpack.c.l.b16 %v2876
    %v2993 = vunpack.c.h.b16 %v2876
    %v2994 = vunpack.c.l.b16 %v2877
    %v2995 = vunpack.c.h.b16 %v2877
    %v2996 = vunpack.c.l.b16 %v2878
    %v2997 = vunpack.c.h.b16 %v2878
    %v2998 = vunpack.c.l.b16 %v2879
    %v2999 = vunpack.c.h.b16 %v2879
    %v3000 = vunpack.c.l.b16 %v2880
    %v3001 = vunpack.c.h.b16 %v2880
    %v3002 = vunpack.c.l.b16 %v2881
    %v3003 = vunpack.c.h.b16 %v2881
    %v3004 = vunpack.c.l.b16 %v2882
    %v3005 = vunpack.c.h.b16 %v2882
    %v3006 = vunpack.c.l.b16 %v2883
    %v3007 = vunpack.c.h.b16 %v2883
    %v3008 = vunpack.c.l.b16 %v2884
    %v3009 = vunpack.c.h.b16 %v2884
    %v3010 = vunpack.c.l.b16 %v2885
    %v3011 = vunpack.c.h.b16 %v2885
    %v3012 = vunpack.c.l.b16 %v2886
    %v3013 = vunpack.c.h.b16 %v2886
    %v3014 = vunpack.c.l.b16 %v2887
    %v3015 = vunpack.c.h.b16 %v2887
    %v3016 = vunpack.c.l.b16 %v2888
    %v3017 = vunpack.c.h.b16 %v2888
    %v3018 = vunpack.c.l.b16 %v2889
    %v3019 = vunpack.c.h.b16 %v2889
    %v3020 = vunpack.c.l.b16 %v2890
    %v3021 = vunpack.c.h.b16 %v2890
    %v3022 = vunpack.c.l.b16 %v2891
    %v3023 = vunpack.c.h.b16 %v2891
    %v3024 = vunpack.c.l.b16 %v2892
    %v3025 = vunpack.c.h.b16 %v2892
    %v3026 = vunpack.c.l.b16 %v2893
    %v3027 = vunpack.c.h.b16 %v2893
    %v3028 = vunpack.c.l.b16 %v2894
    %v3029 = vunpack.c.h.b16 %v2894
    %v3030 = vunpack.c.l.b16 %v2895
    %v3031 = vunpack.c.h.b16 %v2895
    %v3032 = vunpack.c.l.b16 %v2896
    %v3033 = vunpack.c.h.b16 %v2896
    %v3034 = vunpack.c.l.b16 %v2897
    %v3035 = vunpack.c.h.b16 %v2897
    %v3036 = vunpack.c.l.b16 %v2898
    %v3037 = vunpack.c.h.b16 %v2898
    %v3038 = vunpack.c.l.b16 %v2899
    %v3039 = vunpack.c.h.b16 %v2899
    %v3040 = vunpack.c.l.b16 %v2900
    %v3041 = vunpack.c.h.b16 %v2900
    %v3042 = vunpack.c.l.b16 %v2901
    %v3043 = vunpack.c.h.b16 %v2901
    %v3044 = vunpack.c.l.b16 %v2902
    %v3045 = vunpack.c.h.b16 %v2902
    %v3046 = vunpack.c.l.b16 %v2903
    %v3047 = vunpack.c.h.b16 %v2903
    %v3048 = vpack.c.b16 %v2958, %v2952
    %v3049 = vpack.c.b16 %v2959, %v2953
    %v3050 = vpack.c.b16 %v2960, %v2954
    %v3051 = vpack.c.b16 %v2961, %v2955
    %v3052 = vpack.c.b16 %v2962, %v2956
    %v3053 = vpack.c.b16 %v2963, %v2957
    %v3054 = vpack.c.b16 %v2970, %v2964
    %v3055 = vpack.c.b16 %v2971, %v2965
    %v3056 = vpack.c.b16 %v2972, %v2966
    %v3057 = vpack.c.b16 %v2973, %v2967
    %v3058 = vpack.c.b16 %v2974, %v2968
    %v3059 = vpack.c.b16 %v2975, %v2969
    %v3060 = vpack.c.b16 %v2982, %v2976
    %v3061 = vpack.c.b16 %v2983, %v2977
    %v3062 = vpack.c.b16 %v2984, %v2978
    %v3063 = vpack.c.b16 %v2985, %v2979
    %v3064 = vpack.c.b16 %v2986, %v2980
    %v3065 = vpack.c.b16 %v2987, %v2981
    %v3066 = vpack.c.b16 %v2994, %v2988
    %v3067 = vpack.c.b16 %v2995, %v2989
    %v3068 = vpack.c.b16 %v2996, %v2990
    %v3069 = vpack.c.b16 %v2997, %v2991
    %v3070 = vpack.c.b16 %v2998, %v2992
    %v3071 = vpack.c.b16 %v2999, %v2993
    %v3072 = vpack.c.b16 %v3006, %v3000
    %v3073 = vpack.c.b16 %v3007, %v3001
    %v3074 = vpack.c.b16 %v3008, %v3002
    %v3075 = vpack.c.b16 %v3009, %v3003
    %v3076 = vpack.c.b16 %v3010, %v3004
    %v3077 = vpack.c.b16 %v3011, %v3005
    %v3078 = vpack.c.b16 %v3018, %v3012
    %v3079 = vpack.c.b16 %v3019, %v3013
    %v3080 = vpack.c.b16 %v3020, %v3014
    %v3081 = vpack.c.b16 %v3021, %v3015
    %v3082 = vpack.c.b16 %v3022, %v3016
    %v3083 = vpack.c.b16 %v3023, %v3017
    %v3084 = vpack.c.b16 %v3030, %v3024
    %v3085 = vpack.c.b16 %v3031, %v3025
    %v3086 = vpack.c.b16 %v3032, %v3026
    %v3087 = vpack.c.b16 %v3033, %v3027
    %v3088 = vpack.c.b16 %v3034, %v3028
    %v3089 = vpack.c.b16 %v3035, %v3029
    %v3090 = vpack.c.b16 %v3042, %v3036
    %v3091 = vpack.c.b16 %v3043, %v3037
    %v3092 = vpack.c.b16 %v3044, %v3038
    %v3093 = vpack.c.b16 %v3045, %v3039
    %v3094 = vpack.c.b16 %v3046, %v3040
    %v3095 = vpack.c.b16 %v3047, %v3041
    %3144 = vmatprep.subr.bf16.mxu0 %v3049
    %3145 = vmatpush1.bf16.msra.mxu0 %v3048
    %3146 = vmatprep.subr.bf16.mxu0 %v3055
    %3147 = vmatpush1.bf16.msra.mxu0 %v3054
    %3148 = vmatprep.subr.bf16.mxu0 %v3061
    %3149 = vmatpush1.bf16.msra.mxu0 %v3060
    %3150 = vmatprep.subr.bf16.mxu0 %v3067
    %3151 = vmatpush1.bf16.msra.mxu0 %v3066
    %3152 = vmatprep.subr.bf16.mxu0 %v3073
    %3153 = vmatpush1.bf16.msra.mxu0 %v3072
    %3154 = vmatprep.subr.bf16.mxu0 %v3079
    %3155 = vmatpush1.bf16.msra.mxu0 %v3078
    %3156 = vmatprep.subr.bf16.mxu0 %v3085
    %3157 = vmatpush1.bf16.msra.mxu0 %v3084
    %3158 = vmatprep.subr.bf16.mxu0 %v3091
    %3159 = vmatpush1.bf16.msra.mxu0 %v3090
    %3160 = vmatprep.subr.bf16.mxu0 0
    %3161 = vmatpush1.bf16.msra.mxu0 0
    %3162 = vmatprep.subr.bf16.mxu0 0
    %3163 = vmatpush1.bf16.msra.mxu0 0
    %3164 = vmatprep.subr.bf16.mxu0 0
    %3165 = vmatpush1.bf16.msra.mxu0 0
    %3166 = vmatprep.subr.bf16.mxu0 0
    %3167 = vmatpush1.bf16.msra.mxu0 0
    %3168 = vmatprep.subr.bf16.mxu0 0
    %3169 = vmatpush1.bf16.msra.mxu0 0
    %3170 = vmatprep.subr.bf16.mxu0 0
    %3171 = vmatpush1.bf16.msra.mxu0 0
    %3172 = vmatprep.subr.bf16.mxu0 0
    %3173 = vmatpush1.bf16.msra.mxu0 0
    %3174 = vmatprep.subr.bf16.mxu0 0
    %3175 = vmatpush1.bf16.msra.mxu0 0
    %3176 = vmatprep.mubr.bf16.mxu0 0
    %3177 = vmatmul.mubr.bf16.gmra.mrb[0].mxu0 %v2855
    %v3178 = vpop.f32.mrb[0].mxu0
    %v3179 = vadd.f32 0.0, %v3178
    %v3180 = vpop.f32.mrb[0].mxu0
    %v3181 = vadd.f32 0.0, %v3180
    %v3182 = vpop.f32.mrb[0].mxu0
    %v3183 = vpop.f32.mrb[0].mxu0
    %3184 = vdwg.mxu0
    %3185 = vmatprep.subr.bf16.mxu0 %v3051
    %3186 = vmatpush1.bf16.msra.mxu0 %v3050
    %3187 = vmatprep.subr.bf16.mxu0 %v3057
    %3188 = vmatpush1.bf16.msra.mxu0 %v3056
    %3189 = vmatprep.subr.bf16.mxu0 %v3063
    %3190 = vmatpush1.bf16.msra.mxu0 %v3062
    %3191 = vmatprep.subr.bf16.mxu0 %v3069
    %3192 = vmatpush1.bf16.msra.mxu0 %v3068
    %3193 = vmatprep.subr.bf16.mxu0 %v3075
    %3194 = vmatpush1.bf16.msra.mxu0 %v3074
    %3195 = vmatprep.subr.bf16.mxu0 %v3081
    %3196 = vmatpush1.bf16.msra.mxu0 %v3080
    %3197 = vmatprep.subr.bf16.mxu0 %v3087
    %3198 = vmatpush1.bf16.msra.mxu0 %v3086
    %3199 = vmatprep.subr.bf16.mxu0 %v3093
    %3200 = vmatpush1.bf16.msra.mxu0 %v3092
    %3201 = vmatprep.subr.bf16.mxu0 0
    %3202 = vmatpush1.bf16.msra.mxu0 0
    %3203 = vmatprep.subr.bf16.mxu0 0
    %3204 = vmatpush1.bf16.msra.mxu0 0
    %3205 = vmatprep.subr.bf16.mxu0 0
    %3206 = vmatpush1.bf16.msra.mxu0 0
    %3207 = vmatprep.subr.bf16.mxu0 0
    %3208 = vmatpush1.bf16.msra.mxu0 0
    %3209 = vmatprep.subr.bf16.mxu0 0
    %3210 = vmatpush1.bf16.msra.mxu0 0
    %3211 = vmatprep.subr.bf16.mxu0 0
    %3212 = vmatpush1.bf16.msra.mxu0 0
    %3213 = vmatprep.subr.bf16.mxu0 0
    %3214 = vmatpush1.bf16.msra.mxu0 0
    %3215 = vmatprep.subr.bf16.mxu0 0
    %3216 = vmatpush1.bf16.msra.mxu0 0
    %3217 = vmatprep.mubr.bf16.mxu0 0
    %3218 = vmatmul.mubr.bf16.gmra.mrb[0].mxu0 %v2855
    %v3219 = vpop.f32.mrb[0].mxu0
    %v3220 = vadd.f32 0.0, %v3219
    %v3221 = vpop.f32.mrb[0].mxu0
    %v3222 = vadd.f32 0.0, %v3221
    %v3223 = vpop.f32.mrb[0].mxu0
    %v3224 = vpop.f32.mrb[0].mxu0
    %3225 = vdwg.mxu0
    %3226 = vmatprep.subr.bf16.mxu0 %v3053
    %3227 = vmatpush1.bf16.msra.mxu0 %v3052
    %3228 = vmatprep.subr.bf16.mxu0 %v3059
    %3229 = vmatpush1.bf16.msra.mxu0 %v3058
    %3230 = vmatprep.subr.bf16.mxu0 %v3065
    %3231 = vmatpush1.bf16.msra.mxu0 %v3064
    %3232 = vmatprep.subr.bf16.mxu0 %v3071
    %3233 = vmatpush1.bf16.msra.mxu0 %v3070
    %3234 = vmatprep.subr.bf16.mxu0 %v3077
    %3235 = vmatpush1.bf16.msra.mxu0 %v3076
    %3236 = vmatprep.subr.bf16.mxu0 %v3083
    %3237 = vmatpush1.bf16.msra.mxu0 %v3082
    %3238 = vmatprep.subr.bf16.mxu0 %v3089
    %3239 = vmatpush1.bf16.msra.mxu0 %v3088
    %3240 = vmatprep.subr.bf16.mxu0 %v3095
    %3241 = vmatpush1.bf16.msra.mxu0 %v3094
    %3242 = vmatprep.subr.bf16.mxu0 0
    %3243 = vmatpush1.bf16.msra.mxu0 0
    %3244 = vmatprep.subr.bf16.mxu0 0
    %3245 = vmatpush1.bf16.msra.mxu0 0
    %3246 = vmatprep.subr.bf16.mxu0 0
    %3247 = vmatpush1.bf16.msra.mxu0 0
    %3248 = vmatprep.subr.bf16.mxu0 0
    %3249 = vmatpush1.bf16.msra.mxu0 0
    %3250 = vmatprep.subr.bf16.mxu0 0
    %3251 = vmatpush1.bf16.msra.mxu0 0
    %3252 = vmatprep.subr.bf16.mxu0 0
    %3253 = vmatpush1.bf16.msra.mxu0 0
    %3254 = vmatprep.subr.bf16.mxu0 0
    %3255 = vmatpush1.bf16.msra.mxu0 0
    %3256 = vmatprep.subr.bf16.mxu0 0
    %3257 = vmatpush1.bf16.msra.mxu0 0
    %3258 = vmatprep.mubr.bf16.mxu0 0
    %3259 = vmatmul.mubr.bf16.gmra.mrb[0].mxu0 %v2855
    %v3260 = vpop.f32.mrb[0].mxu0
    %v3261 = vadd.f32 0.0, %v3260
    %v3262 = vpop.f32.mrb[0].mxu0
    %v3263 = vadd.f32 0.0, %v3262
    %v3264 = vpop.f32.mrb[0].mxu0
    %v3265 = vpop.f32.mrb[0].mxu0
    %3266 = vdwg.mxu0
    %v3267 = vadd.f32 %v3179, %v243
    %v3268 = vadd.f32 %v3181, %v247
    %v3269 = vadd.f32 %v3220, %v251
    %v3270 = vadd.f32 %v3222, %v226
    %v3271 = vadd.f32 %v3261, %v230
    %v3272 = vadd.f32 %v3263, %v234
    %v3273 = vadd.f32 %v3267, %v2749
    %v3274 = vadd.f32 %v3268, %v2751
    %v3275 = vxor.u32 %v3273, 2147483648
    %v3276 = vxor.u32 %v3274, 2147483648
    %v3277 = vmul.f32 %v3275, 1.442695
    %v3278 = vpow.pop %v3277
    %v3279 = vmul.f32 %v3276, 1.442695
    %v3280 = vpow.pop %v3279
    %v3281 = vadd.f32 %v3278, 1.0
    %v3282 = vadd.f32 %v3280, 1.0
    %v3283 = vrcp.pop %v3281
    %v3284 = vmul.f32 1.0, %v3283
    %v3285 = vrcp.pop %v3282
    %v3286 = vmul.f32 1.0, %v3285
    %v3287 = vmul.f32 %v3284, %v2790
    %v3288 = vadd.f32 %v3269, %v3287
    %v3289 = vtanh.pop %v3288
    %v3290 = vsub.f32 1.0, %v3286
    %v3291 = vmul.f32 %v3290, %v3289
    %v3292 = vmul.f32 %v3286, %v2552
    %v3293 = vadd.f32 %v3291, %v3292
    %v3294 = vpack.c.bf16 %v3293, %v3293
    %v3295 = vld [vmem:[%s8] sm:$0xff]
    %v3296 = vld [vmem:[%s8 + $0x8] sm:$0xf]
    %v3297 = vld [vmem:[%s8 + $0xc] sm:$0xff]
    %v3298 = vld [vmem:[%s8 + $0x14] sm:$0xf]
    %v3299 = vld [vmem:[%s8 + $0x18] sm:$0xff]
    %v3300 = vld [vmem:[%s8 + $0x20] sm:$0xf]
    %v3301 = vld [vmem:[%s8 + $0x24] sm:$0xff]
    %v3302 = vld [vmem:[%s8 + $0x2c] sm:$0xf]
    %v3303 = vld [vmem:[%s8 + $0x30] sm:$0xff]
    %v3304 = vld [vmem:[%s8 + $0x38] sm:$0xf]
    %v3305 = vld [vmem:[%s8 + $0x3c] sm:$0xff]
    %v3306 = vld [vmem:[%s8 + $0x44] sm:$0xf]
    %v3307 = vld [vmem:[%s8 + $0x48] sm:$0xff]
    %v3308 = vld [vmem:[%s8 + $0x50] sm:$0xf]
    %v3309 = vld [vmem:[%s8 + $0x54] sm:$0xff]
    %v3310 = vld [vmem:[%s8 + $0x5c] sm:$0xf]
    %v3311 = vld [vmem:[%s8 + $0x60] sm:$0xff]
    %v3312 = vld [vmem:[%s8 + $0x68] sm:$0xf]
    %v3313 = vld [vmem:[%s8 + $0x6c] sm:$0xff]
    %v3314 = vld [vmem:[%s8 + $0x74] sm:$0xf]
    %v3315 = vld [vmem:[%s8 + $0x78] sm:$0xff]
    %v3316 = vld [vmem:[%s8 + $0x80] sm:$0xf]
    %v3317 = vld [vmem:[%s8 + $0x84] sm:$0xff]
    %v3318 = vld [vmem:[%s8 + $0x8c] sm:$0xf]
    %v3319 = vld [vmem:[%s8 + $0x90] sm:$0xff]
    %v3320 = vld [vmem:[%s8 + $0x98] sm:$0xf]
    %v3321 = vld [vmem:[%s8 + $0x9c] sm:$0xff]
    %v3322 = vld [vmem:[%s8 + $0xa4] sm:$0xf]
    %v3323 = vld [vmem:[%s8 + $0xa8] sm:$0xff]
    %v3324 = vld [vmem:[%s8 + $0xb0] sm:$0xf]
    %v3325 = vld [vmem:[%s8 + $0xb4] sm:$0xff]
    %v3326 = vld [vmem:[%s8 + $0xbc] sm:$0xf]
    %v3359 = vunpack.c.l.b16 %v3295
    %v3360 = vunpack.c.h.b16 %v3295
    %v3361 = vunpack.c.l.b16 %v3296
    %v3362 = vunpack.c.l.b16 %v3297
    %v3363 = vunpack.c.h.b16 %v3297
    %v3364 = vunpack.c.l.b16 %v3298
    %v3365 = vunpack.c.l.b16 %v3299
    %v3366 = vunpack.c.h.b16 %v3299
    %v3367 = vunpack.c.l.b16 %v3300
    %v3368 = vunpack.c.l.b16 %v3301
    %v3369 = vunpack.c.h.b16 %v3301
    %v3370 = vunpack.c.l.b16 %v3302
    %v3371 = vunpack.c.l.b16 %v3303
    %v3372 = vunpack.c.h.b16 %v3303
    %v3373 = vunpack.c.l.b16 %v3304
    %v3374 = vunpack.c.l.b16 %v3305
    %v3375 = vunpack.c.h.b16 %v3305
    %v3376 = vunpack.c.l.b16 %v3306
    %v3377 = vunpack.c.l.b16 %v3307
    %v3378 = vunpack.c.h.b16 %v3307
    %v3379 = vunpack.c.l.b16 %v3308
    %v3380 = vunpack.c.l.b16 %v3309
    %v3381 = vunpack.c.h.b16 %v3309
    %v3382 = vunpack.c.l.b16 %v3310
    %v3383 = vunpack.c.l.b16 %v3311
    %v3384 = vunpack.c.h.b16 %v3311
    %v3385 = vunpack.c.l.b16 %v3312
    %v3386 = vunpack.c.l.b16 %v3313
    %v3387 = vunpack.c.h.b16 %v3313
    %v3388 = vunpack.c.l.b16 %v3314
    %v3389 = vunpack.c.l.b16 %v3315
    %v3390 = vunpack.c.h.b16 %v3315
    %v3391 = vunpack.c.l.b16 %v3316
    %v3392 = vunpack.c.l.b16 %v3317
    %v3393 = vunpack.c.h.b16 %v3317
    %v3394 = vunpack.c.l.b16 %v3318
    %v3395 = vunpack.c.l.b16 %v3319
    %v3396 = vunpack.c.h.b16 %v3319
    %v3397 = vunpack.c.l.b16 %v3320
    %v3398 = vunpack.c.l.b16 %v3321
    %v3399 = vunpack.c.h.b16 %v3321
    %v3400 = vunpack.c.l.b16 %v3322
    %v3401 = vunpack.c.l.b16 %v3323
    %v3402 = vunpack.c.h.b16 %v3323
    %v3403 = vunpack.c.l.b16 %v3324
    %v3404 = vunpack.c.l.b16 %v3325
    %v3405 = vunpack.c.h.b16 %v3325
    %v3406 = vunpack.c.l.b16 %v3326
    %v3407 = vpack.c.b16 %v3362, %v3359
    %v3408 = vpack.c.b16 %v3363, %v3360
    %v3409 = vpack.c.b16 %v3364, %v3361
    %v3410 = vpack.c.b16 %v3368, %v3365
    %v3411 = vpack.c.b16 %v3369, %v3366
    %v3412 = vpack.c.b16 %v3370, %v3367
    %v3413 = vpack.c.b16 %v3374, %v3371
    %v3414 = vpack.c.b16 %v3375, %v3372
    %v3415 = vpack.c.b16 %v3376, %v3373
    %v3416 = vpack.c.b16 %v3380, %v3377
    %v3417 = vpack.c.b16 %v3381, %v3378
    %v3418 = vpack.c.b16 %v3382, %v3379
    %v3419 = vpack.c.b16 %v3386, %v3383
    %v3420 = vpack.c.b16 %v3387, %v3384
    %v3421 = vpack.c.b16 %v3388, %v3385
    %v3422 = vpack.c.b16 %v3392, %v3389
    %v3423 = vpack.c.b16 %v3393, %v3390
    %v3424 = vpack.c.b16 %v3394, %v3391
    %v3425 = vpack.c.b16 %v3398, %v3395
    %v3426 = vpack.c.b16 %v3399, %v3396
    %v3427 = vpack.c.b16 %v3400, %v3397
    %v3428 = vpack.c.b16 %v3404, %v3401
    %v3429 = vpack.c.b16 %v3405, %v3402
    %v3430 = vpack.c.b16 %v3406, %v3403
    %3455 = vmatprep.subr.bf16.mxu0 %v3408
    %3456 = vmatpush1.bf16.msra.mxu0 %v3407
    %3457 = vmatprep.subr.bf16.mxu0 %v3411
    %3458 = vmatpush1.bf16.msra.mxu0 %v3410
    %3459 = vmatprep.subr.bf16.mxu0 %v3414
    %3460 = vmatpush1.bf16.msra.mxu0 %v3413
    %3461 = vmatprep.subr.bf16.mxu0 %v3417
    %3462 = vmatpush1.bf16.msra.mxu0 %v3416
    %3463 = vmatprep.subr.bf16.mxu0 %v3420
    %3464 = vmatpush1.bf16.msra.mxu0 %v3419
    %3465 = vmatprep.subr.bf16.mxu0 %v3423
    %3466 = vmatpush1.bf16.msra.mxu0 %v3422
    %3467 = vmatprep.subr.bf16.mxu0 %v3426
    %3468 = vmatpush1.bf16.msra.mxu0 %v3425
    %3469 = vmatprep.subr.bf16.mxu0 %v3429
    %3470 = vmatpush1.bf16.msra.mxu0 %v3428
    %3471 = vmatprep.subr.bf16.mxu0 0
    %3472 = vmatpush1.bf16.msra.mxu0 0
    %3473 = vmatprep.subr.bf16.mxu0 0
    %3474 = vmatpush1.bf16.msra.mxu0 0
    %3475 = vmatprep.subr.bf16.mxu0 0
    %3476 = vmatpush1.bf16.msra.mxu0 0
    %3477 = vmatprep.subr.bf16.mxu0 0
    %3478 = vmatpush1.bf16.msra.mxu0 0
    %3479 = vmatprep.subr.bf16.mxu0 0
    %3480 = vmatpush1.bf16.msra.mxu0 0
    %3481 = vmatprep.subr.bf16.mxu0 0
    %3482 = vmatpush1.bf16.msra.mxu0 0
    %3483 = vmatprep.subr.bf16.mxu0 0
    %3484 = vmatpush1.bf16.msra.mxu0 0
    %3485 = vmatprep.subr.bf16.mxu0 0
    %3486 = vmatpush1.bf16.msra.mxu0 0
    %3487 = vmatprep.mubr.bf16.mxu0 0
    %3488 = vmatmul.mubr.bf16.gmra.mrb[0].mxu0 %v3294
    %v3489 = vpop.f32.mrb[0].mxu0
    %v3490 = vadd.f32 %v260, %v3489
    %v3491 = vpop.f32.mrb[0].mxu0
    %v3492 = vadd.f32 %v264, %v3491
    %v3493 = vpop.f32.mrb[0].mxu0
    %v3494 = vpop.f32.mrb[0].mxu0
    %3495 = vdwg.mxu0
    %3496 = vmatprep.subr.bf16.mxu0 0
    %3497 = vmatpush1.bf16.msra.mxu0 %v3409
    %3498 = vmatprep.subr.bf16.mxu0 0
    %3499 = vmatpush1.bf16.msra.mxu0 %v3412
    %3500 = vmatprep.subr.bf16.mxu0 0
    %3501 = vmatpush1.bf16.msra.mxu0 %v3415
    %3502 = vmatprep.subr.bf16.mxu0 0
    %3503 = vmatpush1.bf16.msra.mxu0 %v3418
    %3504 = vmatprep.subr.bf16.mxu0 0
    %3505 = vmatpush1.bf16.msra.mxu0 %v3421
    %3506 = vmatprep.subr.bf16.mxu0 0
    %3507 = vmatpush1.bf16.msra.mxu0 %v3424
    %3508 = vmatprep.subr.bf16.mxu0 0
    %3509 = vmatpush1.bf16.msra.mxu0 %v3427
    %3510 = vmatprep.subr.bf16.mxu0 0
    %3511 = vmatpush1.bf16.msra.mxu0 %v3430
    %3512 = vmatprep.subr.bf16.mxu0 0
    %3513 = vmatpush1.bf16.msra.mxu0 0
    %3514 = vmatprep.subr.bf16.mxu0 0
    %3515 = vmatpush1.bf16.msra.mxu0 0
    %3516 = vmatprep.subr.bf16.mxu0 0
    %3517 = vmatpush1.bf16.msra.mxu0 0
    %3518 = vmatprep.subr.bf16.mxu0 0
    %3519 = vmatpush1.bf16.msra.mxu0 0
    %3520 = vmatprep.subr.bf16.mxu0 0
    %3521 = vmatpush1.bf16.msra.mxu0 0
    %3522 = vmatprep.subr.bf16.mxu0 0
    %3523 = vmatpush1.bf16.msra.mxu0 0
    %3524 = vmatprep.subr.bf16.mxu0 0
    %3525 = vmatpush1.bf16.msra.mxu0 0
    %3526 = vmatprep.subr.bf16.mxu0 0
    %3527 = vmatpush1.bf16.msra.mxu0 0
    %3528 = vmatprep.mubr.bf16.mxu0 0
    %3529 = vmatmul.mubr.bf16.gmra.mrb[0].mxu0 %v3294
    %v3530 = vpop.f32.mrb[0].mxu0
    %v3531 = vadd.f32 %v268, %v3530
    %v3532 = vpop.f32.mrb[0].mxu0
    %v3533 = vpop.f32.mrb[0].mxu0
    %v3534 = vpop.f32.mrb[0].mxu0
    %3535 = vdwg.mxu0
    %v3538 = vunpack.c.l.s4 1966171168
    %v3539 = vunpack.c.0.s8 %v3538
    %v3540 = vlaneseq
    %v3541 = vshrl.u32 %v3540, 7
    %v3542 = vsub.s32 %v3539, %v3541
    %v3543 = vrot.slane %v3293, %v3542
    %v3544 = vcombine.high %v3543, %v3543
    %v3546 = vunpack.c.l.s4 1966171168
    %v3547 = vunpack.c.0.s8 %v3546
    %v3548 = vlaneseq
    %v3549 = vshrl.u32 %v3548, 7
    %v3550 = vsub.s32 %v3547, %v3549
    %v3551 = vrot.slane %v3543, %v3550
    %v3553 = vunpack.c.l.s4 1966171168
    %v3554 = vunpack.c.0.s8 %v3553
    %v3555 = vlaneseq
    %v3556 = vshrl.u32 %v3555, 7
    %v3557 = vsub.s32 %v3554, %v3556
    %v3558 = vrot.slane %v3544, %v3557
    %3561 = vst [vmem:[#allocation2 + $0x3] sm:$0x1] %v3551
    %3562 = vst [vmem:[#allocation2 + $0xb] sm:$0x1] %v3558
    %v3563 = vlaneseq
    %v3564 = vshrl.u32 %v3563, 7
    %v3565 = vsub.s32 4, %v3564
    %v3566 = vrot.slane %v147, %v3565
    %v3567 = vlaneseq
    %v3568 = vshrl.u32 %v3567, 7
    %v3569 = vsub.s32 4, %v3568
    %v3570 = vrot.slane %v149, %v3569
    %v3571 = vadd.f32 %v3566, %v3270
    %v3572 = vadd.f32 %v3570, %v3271
    %v3573 = vxor.u32 %v3571, 2147483648
    %v3574 = vxor.u32 %v3572, 2147483648
    %v3575 = vmul.f32 %v3573, 1.442695
    %v3576 = vpow.pop %v3575
    %v3577 = vmul.f32 %v3574, 1.442695
    %v3578 = vpow.pop %v3577
    %v3579 = vadd.f32 %v3576, 1.0
    %v3580 = vadd.f32 %v3578, 1.0
    %v3581 = vrcp.pop %v3579
    %v3582 = vmul.f32 1.0, %v3581
    %v3583 = vrcp.pop %v3580
    %v3584 = vmul.f32 1.0, %v3583
    %v3585 = vlaneseq
    %v3586 = vshrl.u32 %v3585, 7
    %v3587 = vsub.s32 4, %v3586
    %v3588 = vrot.slane %v218, %v3587
    %v3589 = vmul.f32 %v3582, %v3272
    %v3590 = vadd.f32 %v3588, %v3589
    %v3591 = vtanh.pop %v3590
    %v3592 = vsub.f32 1.0, %v3584
    %v3593 = vmul.f32 %v3592, %v3591
    %v3594 = vmul.f32 %v3584, %v2854
    %v3595 = vadd.f32 %v3593, %v3594
    %v3596 = vpack.c.bf16 %v3595, %v3595
    %v3597 = vld [vmem:[%s5] sm:$0xff]
    %v3598 = vld [vmem:[%s5 + $0x8] sm:$0xff]
    %v3599 = vld [vmem:[%s5 + $0x10] sm:$0xff]
    %v3600 = vld [vmem:[%s5 + $0x18] sm:$0xff]
    %v3601 = vld [vmem:[%s5 + $0x20] sm:$0xff]
    %v3602 = vld [vmem:[%s5 + $0x28] sm:$0xff]
    %v3603 = vld [vmem:[%s5 + $0x30] sm:$0xff]
    %v3604 = vld [vmem:[%s5 + $0x38] sm:$0xff]
    %v3605 = vld [vmem:[%s5 + $0x40] sm:$0xff]
    %v3606 = vld [vmem:[%s5 + $0x48] sm:$0xff]
    %v3607 = vld [vmem:[%s5 + $0x50] sm:$0xff]
    %v3608 = vld [vmem:[%s5 + $0x58] sm:$0xff]
    %v3609 = vld [vmem:[%s5 + $0x60] sm:$0xff]
    %v3610 = vld [vmem:[%s5 + $0x68] sm:$0xff]
    %v3611 = vld [vmem:[%s5 + $0x70] sm:$0xff]
    %v3612 = vld [vmem:[%s5 + $0x78] sm:$0xff]
    %v3613 = vld [vmem:[%s5 + $0x80] sm:$0xff]
    %v3614 = vld [vmem:[%s5 + $0x88] sm:$0xff]
    %v3615 = vld [vmem:[%s5 + $0x90] sm:$0xff]
    %v3616 = vld [vmem:[%s5 + $0x98] sm:$0xff]
    %v3617 = vld [vmem:[%s5 + $0xa0] sm:$0xff]
    %v3618 = vld [vmem:[%s5 + $0xa8] sm:$0xff]
    %v3619 = vld [vmem:[%s5 + $0xb0] sm:$0xff]
    %v3620 = vld [vmem:[%s5 + $0xb8] sm:$0xff]
    %v3621 = vld [vmem:[%s5 + $0xc0] sm:$0xff]
    %v3622 = vld [vmem:[%s5 + $0xc8] sm:$0xff]
    %v3623 = vld [vmem:[%s5 + $0xd0] sm:$0xff]
    %v3624 = vld [vmem:[%s5 + $0xd8] sm:$0xff]
    %v3625 = vld [vmem:[%s5 + $0xe0] sm:$0xff]
    %v3626 = vld [vmem:[%s5 + $0xe8] sm:$0xff]
    %v3627 = vld [vmem:[%s5 + $0xf0] sm:$0xff]
    %v3628 = vld [vmem:[%s5 + $0xf8] sm:$0xff]
    %v3629 = vld [vmem:[%s5 + $0x100] sm:$0xff]
    %v3630 = vld [vmem:[%s5 + $0x108] sm:$0xff]
    %v3631 = vld [vmem:[%s5 + $0x110] sm:$0xff]
    %v3632 = vld [vmem:[%s5 + $0x118] sm:$0xff]
    %v3633 = vld [vmem:[%s5 + $0x120] sm:$0xff]
    %v3634 = vld [vmem:[%s5 + $0x128] sm:$0xff]
    %v3635 = vld [vmem:[%s5 + $0x130] sm:$0xff]
    %v3636 = vld [vmem:[%s5 + $0x138] sm:$0xff]
    %v3637 = vld [vmem:[%s5 + $0x140] sm:$0xff]
    %v3638 = vld [vmem:[%s5 + $0x148] sm:$0xff]
    %v3639 = vld [vmem:[%s5 + $0x150] sm:$0xff]
    %v3640 = vld [vmem:[%s5 + $0x158] sm:$0xff]
    %v3641 = vld [vmem:[%s5 + $0x160] sm:$0xff]
    %v3642 = vld [vmem:[%s5 + $0x168] sm:$0xff]
    %v3643 = vld [vmem:[%s5 + $0x170] sm:$0xff]
    %v3644 = vld [vmem:[%s5 + $0x178] sm:$0xff]
    %v3693 = vunpack.c.l.b16 %v3597
    %v3694 = vunpack.c.h.b16 %v3597
    %v3695 = vunpack.c.l.b16 %v3598
    %v3696 = vunpack.c.h.b16 %v3598
    %v3697 = vunpack.c.l.b16 %v3599
    %v3698 = vunpack.c.h.b16 %v3599
    %v3699 = vunpack.c.l.b16 %v3600
    %v3700 = vunpack.c.h.b16 %v3600
    %v3701 = vunpack.c.l.b16 %v3601
    %v3702 = vunpack.c.h.b16 %v3601
    %v3703 = vunpack.c.l.b16 %v3602
    %v3704 = vunpack.c.h.b16 %v3602
    %v3705 = vunpack.c.l.b16 %v3603
    %v3706 = vunpack.c.h.b16 %v3603
    %v3707 = vunpack.c.l.b16 %v3604
    %v3708 = vunpack.c.h.b16 %v3604
    %v3709 = vunpack.c.l.b16 %v3605
    %v3710 = vunpack.c.h.b16 %v3605
    %v3711 = vunpack.c.l.b16 %v3606
    %v3712 = vunpack.c.h.b16 %v3606
    %v3713 = vunpack.c.l.b16 %v3607
    %v3714 = vunpack.c.h.b16 %v3607
    %v3715 = vunpack.c.l.b16 %v3608
    %v3716 = vunpack.c.h.b16 %v3608
    %v3717 = vunpack.c.l.b16 %v3609
    %v3718 = vunpack.c.h.b16 %v3609
    %v3719 = vunpack.c.l.b16 %v3610
    %v3720 = vunpack.c.h.b16 %v3610
    %v3721 = vunpack.c.l.b16 %v3611
    %v3722 = vunpack.c.h.b16 %v3611
    %v3723 = vunpack.c.l.b16 %v3612
    %v3724 = vunpack.c.h.b16 %v3612
    %v3725 = vunpack.c.l.b16 %v3613
    %v3726 = vunpack.c.h.b16 %v3613
    %v3727 = vunpack.c.l.b16 %v3614
    %v3728 = vunpack.c.h.b16 %v3614
    %v3729 = vunpack.c.l.b16 %v3615
    %v3730 = vunpack.c.h.b16 %v3615
    %v3731 = vunpack.c.l.b16 %v3616
    %v3732 = vunpack.c.h.b16 %v3616
    %v3733 = vunpack.c.l.b16 %v3617
    %v3734 = vunpack.c.h.b16 %v3617
    %v3735 = vunpack.c.l.b16 %v3618
    %v3736 = vunpack.c.h.b16 %v3618
    %v3737 = vunpack.c.l.b16 %v3619
    %v3738 = vunpack.c.h.b16 %v3619
    %v3739 = vunpack.c.l.b16 %v3620
    %v3740 = vunpack.c.h.b16 %v3620
    %v3741 = vunpack.c.l.b16 %v3621
    %v3742 = vunpack.c.h.b16 %v3621
    %v3743 = vunpack.c.l.b16 %v3622
    %v3744 = vunpack.c.h.b16 %v3622
    %v3745 = vunpack.c.l.b16 %v3623
    %v3746 = vunpack.c.h.b16 %v3623
    %v3747 = vunpack.c.l.b16 %v3624
    %v3748 = vunpack.c.h.b16 %v3624
    %v3749 = vunpack.c.l.b16 %v3625
    %v3750 = vunpack.c.h.b16 %v3625
    %v3751 = vunpack.c.l.b16 %v3626
    %v3752 = vunpack.c.h.b16 %v3626
    %v3753 = vunpack.c.l.b16 %v3627
    %v3754 = vunpack.c.h.b16 %v3627
    %v3755 = vunpack.c.l.b16 %v3628
    %v3756 = vunpack.c.h.b16 %v3628
    %v3757 = vunpack.c.l.b16 %v3629
    %v3758 = vunpack.c.h.b16 %v3629
    %v3759 = vunpack.c.l.b16 %v3630
    %v3760 = vunpack.c.h.b16 %v3630
    %v3761 = vunpack.c.l.b16 %v3631
    %v3762 = vunpack.c.h.b16 %v3631
    %v3763 = vunpack.c.l.b16 %v3632
    %v3764 = vunpack.c.h.b16 %v3632
    %v3765 = vunpack.c.l.b16 %v3633
    %v3766 = vunpack.c.h.b16 %v3633
    %v3767 = vunpack.c.l.b16 %v3634
    %v3768 = vunpack.c.h.b16 %v3634
    %v3769 = vunpack.c.l.b16 %v3635
    %v3770 = vunpack.c.h.b16 %v3635
    %v3771 = vunpack.c.l.b16 %v3636
    %v3772 = vunpack.c.h.b16 %v3636
    %v3773 = vunpack.c.l.b16 %v3637
    %v3774 = vunpack.c.h.b16 %v3637
    %v3775 = vunpack.c.l.b16 %v3638
    %v3776 = vunpack.c.h.b16 %v3638
    %v3777 = vunpack.c.l.b16 %v3639
    %v3778 = vunpack.c.h.b16 %v3639
    %v3779 = vunpack.c.l.b16 %v3640
    %v3780 = vunpack.c.h.b16 %v3640
    %v3781 = vunpack.c.l.b16 %v3641
    %v3782 = vunpack.c.h.b16 %v3641
    %v3783 = vunpack.c.l.b16 %v3642
    %v3784 = vunpack.c.h.b16 %v3642
    %v3785 = vunpack.c.l.b16 %v3643
    %v3786 = vunpack.c.h.b16 %v3643
    %v3787 = vunpack.c.l.b16 %v3644
    %v3788 = vunpack.c.h.b16 %v3644
    %v3789 = vpack.c.b16 %v3699, %v3693
    %v3790 = vpack.c.b16 %v3700, %v3694
    %v3791 = vpack.c.b16 %v3701, %v3695
    %v3792 = vpack.c.b16 %v3702, %v3696
    %v3793 = vpack.c.b16 %v3703, %v3697
    %v3794 = vpack.c.b16 %v3704, %v3698
    %v3795 = vpack.c.b16 %v3711, %v3705
    %v3796 = vpack.c.b16 %v3712, %v3706
    %v3797 = vpack.c.b16 %v3713, %v3707
    %v3798 = vpack.c.b16 %v3714, %v3708
    %v3799 = vpack.c.b16 %v3715, %v3709
    %v3800 = vpack.c.b16 %v3716, %v3710
    %v3801 = vpack.c.b16 %v3723, %v3717
    %v3802 = vpack.c.b16 %v3724, %v3718
    %v3803 = vpack.c.b16 %v3725, %v3719
    %v3804 = vpack.c.b16 %v3726, %v3720
    %v3805 = vpack.c.b16 %v3727, %v3721
    %v3806 = vpack.c.b16 %v3728, %v3722
    %v3807 = vpack.c.b16 %v3735, %v3729
    %v3808 = vpack.c.b16 %v3736, %v3730
    %v3809 = vpack.c.b16 %v3737, %v3731
    %v3810 = vpack.c.b16 %v3738, %v3732
    %v3811 = vpack.c.b16 %v3739, %v3733
    %v3812 = vpack.c.b16 %v3740, %v3734
    %v3813 = vpack.c.b16 %v3747, %v3741
    %v3814 = vpack.c.b16 %v3748, %v3742
    %v3815 = vpack.c.b16 %v3749, %v3743
    %v3816 = vpack.c.b16 %v3750, %v3744
    %v3817 = vpack.c.b16 %v3751, %v3745
    %v3818 = vpack.c.b16 %v3752, %v3746
    %v3819 = vpack.c.b16 %v3759, %v3753
    %v3820 = vpack.c.b16 %v3760, %v3754
    %v3821 = vpack.c.b16 %v3761, %v3755
    %v3822 = vpack.c.b16 %v3762, %v3756
    %v3823 = vpack.c.b16 %v3763, %v3757
    %v3824 = vpack.c.b16 %v3764, %v3758
    %v3825 = vpack.c.b16 %v3771, %v3765
    %v3826 = vpack.c.b16 %v3772, %v3766
    %v3827 = vpack.c.b16 %v3773, %v3767
    %v3828 = vpack.c.b16 %v3774, %v3768
    %v3829 = vpack.c.b16 %v3775, %v3769
    %v3830 = vpack.c.b16 %v3776, %v3770
    %v3831 = vpack.c.b16 %v3783, %v3777
    %v3832 = vpack.c.b16 %v3784, %v3778
    %v3833 = vpack.c.b16 %v3785, %v3779
    %v3834 = vpack.c.b16 %v3786, %v3780
    %v3835 = vpack.c.b16 %v3787, %v3781
    %v3836 = vpack.c.b16 %v3788, %v3782
    %3885 = vmatprep.subr.bf16.mxu0 %v3790
    %3886 = vmatpush1.bf16.msra.mxu0 %v3789
    %3887 = vmatprep.subr.bf16.mxu0 %v3796
    %3888 = vmatpush1.bf16.msra.mxu0 %v3795
    %3889 = vmatprep.subr.bf16.mxu0 %v3802
    %3890 = vmatpush1.bf16.msra.mxu0 %v3801
    %3891 = vmatprep.subr.bf16.mxu0 %v3808
    %3892 = vmatpush1.bf16.msra.mxu0 %v3807
    %3893 = vmatprep.subr.bf16.mxu0 %v3814
    %3894 = vmatpush1.bf16.msra.mxu0 %v3813
    %3895 = vmatprep.subr.bf16.mxu0 %v3820
    %3896 = vmatpush1.bf16.msra.mxu0 %v3819
    %3897 = vmatprep.subr.bf16.mxu0 %v3826
    %3898 = vmatpush1.bf16.msra.mxu0 %v3825
    %3899 = vmatprep.subr.bf16.mxu0 %v3832
    %3900 = vmatpush1.bf16.msra.mxu0 %v3831
    %3901 = vmatprep.subr.bf16.mxu0 0
    %3902 = vmatpush1.bf16.msra.mxu0 0
    %3903 = vmatprep.subr.bf16.mxu0 0
    %3904 = vmatpush1.bf16.msra.mxu0 0
    %3905 = vmatprep.subr.bf16.mxu0 0
    %3906 = vmatpush1.bf16.msra.mxu0 0
    %3907 = vmatprep.subr.bf16.mxu0 0
    %3908 = vmatpush1.bf16.msra.mxu0 0
    %3909 = vmatprep.subr.bf16.mxu0 0
    %3910 = vmatpush1.bf16.msra.mxu0 0
    %3911 = vmatprep.subr.bf16.mxu0 0
    %3912 = vmatpush1.bf16.msra.mxu0 0
    %3913 = vmatprep.subr.bf16.mxu0 0
    %3914 = vmatpush1.bf16.msra.mxu0 0
    %3915 = vmatprep.subr.bf16.mxu0 0
    %3916 = vmatpush1.bf16.msra.mxu0 0
    %3917 = vmatprep.mubr.bf16.mxu0 0
    %3918 = vmatmul.mubr.bf16.gmra.mrb[0].mxu0 %v3596
    %v3919 = vpop.f32.mrb[0].mxu0
    %v3920 = vadd.f32 0.0, %v3919
    %v3921 = vpop.f32.mrb[0].mxu0
    %v3922 = vadd.f32 0.0, %v3921
    %v3923 = vpop.f32.mrb[0].mxu0
    %v3924 = vpop.f32.mrb[0].mxu0
    %3925 = vdwg.mxu0
    %3926 = vmatprep.subr.bf16.mxu0 %v3792
    %3927 = vmatpush1.bf16.msra.mxu0 %v3791
    %3928 = vmatprep.subr.bf16.mxu0 %v3798
    %3929 = vmatpush1.bf16.msra.mxu0 %v3797
    %3930 = vmatprep.subr.bf16.mxu0 %v3804
    %3931 = vmatpush1.bf16.msra.mxu0 %v3803
    %3932 = vmatprep.subr.bf16.mxu0 %v3810
    %3933 = vmatpush1.bf16.msra.mxu0 %v3809
    %3934 = vmatprep.subr.bf16.mxu0 %v3816
    %3935 = vmatpush1.bf16.msra.mxu0 %v3815
    %3936 = vmatprep.subr.bf16.mxu0 %v3822
    %3937 = vmatpush1.bf16.msra.mxu0 %v3821
    %3938 = vmatprep.subr.bf16.mxu0 %v3828
    %3939 = vmatpush1.bf16.msra.mxu0 %v3827
    %3940 = vmatprep.subr.bf16.mxu0 %v3834
    %3941 = vmatpush1.bf16.msra.mxu0 %v3833
    %3942 = vmatprep.subr.bf16.mxu0 0
    %3943 = vmatpush1.bf16.msra.mxu0 0
    %3944 = vmatprep.subr.bf16.mxu0 0
    %3945 = vmatpush1.bf16.msra.mxu0 0
    %3946 = vmatprep.subr.bf16.mxu0 0
    %3947 = vmatpush1.bf16.msra.mxu0 0
    %3948 = vmatprep.subr.bf16.mxu0 0
    %3949 = vmatpush1.bf16.msra.mxu0 0
    %3950 = vmatprep.subr.bf16.mxu0 0
    %3951 = vmatpush1.bf16.msra.mxu0 0
    %3952 = vmatprep.subr.bf16.mxu0 0
    %3953 = vmatpush1.bf16.msra.mxu0 0
    %3954 = vmatprep.subr.bf16.mxu0 0
    %3955 = vmatpush1.bf16.msra.mxu0 0
    %3956 = vmatprep.subr.bf16.mxu0 0
    %3957 = vmatpush1.bf16.msra.mxu0 0
    %3958 = vmatprep.mubr.bf16.mxu0 0
    %3959 = vmatmul.mubr.bf16.gmra.mrb[0].mxu0 %v3596
    %v3960 = vpop.f32.mrb[0].mxu0
    %v3961 = vadd.f32 0.0, %v3960
    %v3962 = vpop.f32.mrb[0].mxu0
    %v3963 = vadd.f32 0.0, %v3962
    %v3964 = vpop.f32.mrb[0].mxu0
    %v3965 = vpop.f32.mrb[0].mxu0
    %3966 = vdwg.mxu0
    %3967 = vmatprep.subr.bf16.mxu0 %v3794
    %3968 = vmatpush1.bf16.msra.mxu0 %v3793
    %3969 = vmatprep.subr.bf16.mxu0 %v3800
    %3970 = vmatpush1.bf16.msra.mxu0 %v3799
    %3971 = vmatprep.subr.bf16.mxu0 %v3806
    %3972 = vmatpush1.bf16.msra.mxu0 %v3805
    %3973 = vmatprep.subr.bf16.mxu0 %v3812
    %3974 = vmatpush1.bf16.msra.mxu0 %v3811
    %3975 = vmatprep.subr.bf16.mxu0 %v3818
    %3976 = vmatpush1.bf16.msra.mxu0 %v3817
    %3977 = vmatprep.subr.bf16.mxu0 %v3824
    %3978 = vmatpush1.bf16.msra.mxu0 %v3823
    %3979 = vmatprep.subr.bf16.mxu0 %v3830
    %3980 = vmatpush1.bf16.msra.mxu0 %v3829
    %3981 = vmatprep.subr.bf16.mxu0 %v3836
    %3982 = vmatpush1.bf16.msra.mxu0 %v3835
    %3983 = vmatprep.subr.bf16.mxu0 0
    %3984 = vmatpush1.bf16.msra.mxu0 0
    %3985 = vmatprep.subr.bf16.mxu0 0
    %3986 = vmatpush1.bf16.msra.mxu0 0
    %3987 = vmatprep.subr.bf16.mxu0 0
    %3988 = vmatpush1.bf16.msra.mxu0 0
    %3989 = vmatprep.subr.bf16.mxu0 0
    %3990 = vmatpush1.bf16.msra.mxu0 0
    %3991 = vmatprep.subr.bf16.mxu0 0
    %3992 = vmatpush1.bf16.msra.mxu0 0
    %3993 = vmatprep.subr.bf16.mxu0 0
    %3994 = vmatpush1.bf16.msra.mxu0 0
    %3995 = vmatprep.subr.bf16.mxu0 0
    %3996 = vmatpush1.bf16.msra.mxu0 0
    %3997 = vmatprep.subr.bf16.mxu0 0
    %3998 = vmatpush1.bf16.msra.mxu0 0
    %3999 = vmatprep.mubr.bf16.mxu0 0
    %4000 = vmatmul.mubr.bf16.gmra.mrb[0].mxu0 %v3596
    %v4001 = vpop.f32.mrb[0].mxu0
    %v4002 = vadd.f32 0.0, %v4001
    %v4003 = vpop.f32.mrb[0].mxu0
    %v4004 = vadd.f32 0.0, %v4003
    %v4005 = vpop.f32.mrb[0].mxu0
    %v4006 = vpop.f32.mrb[0].mxu0
    %4007 = vdwg.mxu0
    %v4008 = vadd.f32 %v3920, %v243
    %v4009 = vadd.f32 %v3922, %v247
    %v4010 = vadd.f32 %v3961, %v251
    %v4011 = vadd.f32 %v3963, %v226
    %v4012 = vadd.f32 %v4002, %v230
    %v4013 = vadd.f32 %v4004, %v234
    %v4014 = vadd.f32 %v4008, %v3490
    %v4015 = vadd.f32 %v4009, %v3492
    %v4016 = vxor.u32 %v4014, 2147483648
    %v4017 = vxor.u32 %v4015, 2147483648
    %v4018 = vmul.f32 %v4016, 1.442695
    %v4019 = vpow.pop %v4018
    %v4020 = vmul.f32 %v4017, 1.442695
    %v4021 = vpow.pop %v4020
    %v4022 = vadd.f32 %v4019, 1.0
    %v4023 = vadd.f32 %v4021, 1.0
    %v4024 = vrcp.pop %v4022
    %v4025 = vmul.f32 1.0, %v4024
    %v4026 = vrcp.pop %v4023
    %v4027 = vmul.f32 1.0, %v4026
    %v4028 = vmul.f32 %v4025, %v3531
    %v4029 = vadd.f32 %v4010, %v4028
    %v4030 = vtanh.pop %v4029
    %v4031 = vsub.f32 1.0, %v4027
    %v4032 = vmul.f32 %v4031, %v4030
    %v4033 = vmul.f32 %v4027, %v3293
    %v4034 = vadd.f32 %v4032, %v4033
    %v4035 = vpack.c.bf16 %v4034, %v4034
    %v4036 = vld [vmem:[%s8] sm:$0xff]
    %v4037 = vld [vmem:[%s8 + $0x8] sm:$0xf]
    %v4038 = vld [vmem:[%s8 + $0xc] sm:$0xff]
    %v4039 = vld [vmem:[%s8 + $0x14] sm:$0xf]
    %v4040 = vld [vmem:[%s8 + $0x18] sm:$0xff]
    %v4041 = vld [vmem:[%s8 + $0x20] sm:$0xf]
    %v4042 = vld [vmem:[%s8 + $0x24] sm:$0xff]
    %v4043 = vld [vmem:[%s8 + $0x2c] sm:$0xf]
    %v4044 = vld [vmem:[%s8 + $0x30] sm:$0xff]
    %v4045 = vld [vmem:[%s8 + $0x38] sm:$0xf]
    %v4046 = vld [vmem:[%s8 + $0x3c] sm:$0xff]
    %v4047 = vld [vmem:[%s8 + $0x44] sm:$0xf]
    %v4048 = vld [vmem:[%s8 + $0x48] sm:$0xff]
    %v4049 = vld [vmem:[%s8 + $0x50] sm:$0xf]
    %v4050 = vld [vmem:[%s8 + $0x54] sm:$0xff]
    %v4051 = vld [vmem:[%s8 + $0x5c] sm:$0xf]
    %v4052 = vld [vmem:[%s8 + $0x60] sm:$0xff]
    %v4053 = vld [vmem:[%s8 + $0x68] sm:$0xf]
    %v4054 = vld [vmem:[%s8 + $0x6c] sm:$0xff]
    %v4055 = vld [vmem:[%s8 + $0x74] sm:$0xf]
    %v4056 = vld [vmem:[%s8 + $0x78] sm:$0xff]
    %v4057 = vld [vmem:[%s8 + $0x80] sm:$0xf]
    %v4058 = vld [vmem:[%s8 + $0x84] sm:$0xff]
    %v4059 = vld [vmem:[%s8 + $0x8c] sm:$0xf]
    %v4060 = vld [vmem:[%s8 + $0x90] sm:$0xff]
    %v4061 = vld [vmem:[%s8 + $0x98] sm:$0xf]
    %v4062 = vld [vmem:[%s8 + $0x9c] sm:$0xff]
    %v4063 = vld [vmem:[%s8 + $0xa4] sm:$0xf]
    %v4064 = vld [vmem:[%s8 + $0xa8] sm:$0xff]
    %v4065 = vld [vmem:[%s8 + $0xb0] sm:$0xf]
    %v4066 = vld [vmem:[%s8 + $0xb4] sm:$0xff]
    %v4067 = vld [vmem:[%s8 + $0xbc] sm:$0xf]
    %v4100 = vunpack.c.l.b16 %v4036
    %v4101 = vunpack.c.h.b16 %v4036
    %v4102 = vunpack.c.l.b16 %v4037
    %v4103 = vunpack.c.l.b16 %v4038
    %v4104 = vunpack.c.h.b16 %v4038
    %v4105 = vunpack.c.l.b16 %v4039
    %v4106 = vunpack.c.l.b16 %v4040
    %v4107 = vunpack.c.h.b16 %v4040
    %v4108 = vunpack.c.l.b16 %v4041
    %v4109 = vunpack.c.l.b16 %v4042
    %v4110 = vunpack.c.h.b16 %v4042
    %v4111 = vunpack.c.l.b16 %v4043
    %v4112 = vunpack.c.l.b16 %v4044
    %v4113 = vunpack.c.h.b16 %v4044
    %v4114 = vunpack.c.l.b16 %v4045
    %v4115 = vunpack.c.l.b16 %v4046
    %v4116 = vunpack.c.h.b16 %v4046
    %v4117 = vunpack.c.l.b16 %v4047
    %v4118 = vunpack.c.l.b16 %v4048
    %v4119 = vunpack.c.h.b16 %v4048
    %v4120 = vunpack.c.l.b16 %v4049
    %v4121 = vunpack.c.l.b16 %v4050
    %v4122 = vunpack.c.h.b16 %v4050
    %v4123 = vunpack.c.l.b16 %v4051
    %v4124 = vunpack.c.l.b16 %v4052
    %v4125 = vunpack.c.h.b16 %v4052
    %v4126 = vunpack.c.l.b16 %v4053
    %v4127 = vunpack.c.l.b16 %v4054
    %v4128 = vunpack.c.h.b16 %v4054
    %v4129 = vunpack.c.l.b16 %v4055
    %v4130 = vunpack.c.l.b16 %v4056
    %v4131 = vunpack.c.h.b16 %v4056
    %v4132 = vunpack.c.l.b16 %v4057
    %v4133 = vunpack.c.l.b16 %v4058
    %v4134 = vunpack.c.h.b16 %v4058
    %v4135 = vunpack.c.l.b16 %v4059
    %v4136 = vunpack.c.l.b16 %v4060
    %v4137 = vunpack.c.h.b16 %v4060
    %v4138 = vunpack.c.l.b16 %v4061
    %v4139 = vunpack.c.l.b16 %v4062
    %v4140 = vunpack.c.h.b16 %v4062
    %v4141 = vunpack.c.l.b16 %v4063
    %v4142 = vunpack.c.l.b16 %v4064
    %v4143 = vunpack.c.h.b16 %v4064
    %v4144 = vunpack.c.l.b16 %v4065
    %v4145 = vunpack.c.l.b16 %v4066
    %v4146 = vunpack.c.h.b16 %v4066
    %v4147 = vunpack.c.l.b16 %v4067
    %v4148 = vpack.c.b16 %v4103, %v4100
    %v4149 = vpack.c.b16 %v4104, %v4101
    %v4150 = vpack.c.b16 %v4105, %v4102
    %v4151 = vpack.c.b16 %v4109, %v4106
    %v4152 = vpack.c.b16 %v4110, %v4107
    %v4153 = vpack.c.b16 %v4111, %v4108
    %v4154 = vpack.c.b16 %v4115, %v4112
    %v4155 = vpack.c.b16 %v4116, %v4113
    %v4156 = vpack.c.b16 %v4117, %v4114
    %v4157 = vpack.c.b16 %v4121, %v4118
    %v4158 = vpack.c.b16 %v4122, %v4119
    %v4159 = vpack.c.b16 %v4123, %v4120
    %v4160 = vpack.c.b16 %v4127, %v4124
    %v4161 = vpack.c.b16 %v4128, %v4125
    %v4162 = vpack.c.b16 %v4129, %v4126
    %v4163 = vpack.c.b16 %v4133, %v4130
    %v4164 = vpack.c.b16 %v4134, %v4131
    %v4165 = vpack.c.b16 %v4135, %v4132
    %v4166 = vpack.c.b16 %v4139, %v4136
    %v4167 = vpack.c.b16 %v4140, %v4137
    %v4168 = vpack.c.b16 %v4141, %v4138
    %v4169 = vpack.c.b16 %v4145, %v4142
    %v4170 = vpack.c.b16 %v4146, %v4143
    %v4171 = vpack.c.b16 %v4147, %v4144
    %4196 = vmatprep.subr.bf16.mxu0 %v4149
    %4197 = vmatpush1.bf16.msra.mxu0 %v4148
    %4198 = vmatprep.subr.bf16.mxu0 %v4152
    %4199 = vmatpush1.bf16.msra.mxu0 %v4151
    %4200 = vmatprep.subr.bf16.mxu0 %v4155
    %4201 = vmatpush1.bf16.msra.mxu0 %v4154
    %4202 = vmatprep.subr.bf16.mxu0 %v4158
    %4203 = vmatpush1.bf16.msra.mxu0 %v4157
    %4204 = vmatprep.subr.bf16.mxu0 %v4161
    %4205 = vmatpush1.bf16.msra.mxu0 %v4160
    %4206 = vmatprep.subr.bf16.mxu0 %v4164
    %4207 = vmatpush1.bf16.msra.mxu0 %v4163
    %4208 = vmatprep.subr.bf16.mxu0 %v4167
    %4209 = vmatpush1.bf16.msra.mxu0 %v4166
    %4210 = vmatprep.subr.bf16.mxu0 %v4170
    %4211 = vmatpush1.bf16.msra.mxu0 %v4169
    %4212 = vmatprep.subr.bf16.mxu0 0
    %4213 = vmatpush1.bf16.msra.mxu0 0
    %4214 = vmatprep.subr.bf16.mxu0 0
    %4215 = vmatpush1.bf16.msra.mxu0 0
    %4216 = vmatprep.subr.bf16.mxu0 0
    %4217 = vmatpush1.bf16.msra.mxu0 0
    %4218 = vmatprep.subr.bf16.mxu0 0
    %4219 = vmatpush1.bf16.msra.mxu0 0
    %4220 = vmatprep.subr.bf16.mxu0 0
    %4221 = vmatpush1.bf16.msra.mxu0 0
    %4222 = vmatprep.subr.bf16.mxu0 0
    %4223 = vmatpush1.bf16.msra.mxu0 0
    %4224 = vmatprep.subr.bf16.mxu0 0
    %4225 = vmatpush1.bf16.msra.mxu0 0
    %4226 = vmatprep.subr.bf16.mxu0 0
    %4227 = vmatpush1.bf16.msra.mxu0 0
    %4228 = vmatprep.mubr.bf16.mxu0 0
    %4229 = vmatmul.mubr.bf16.gmra.mrb[0].mxu0 %v4035
    %v4230 = vpop.f32.mrb[0].mxu0
    %v4231 = vadd.f32 %v260, %v4230
    %v4232 = vpop.f32.mrb[0].mxu0
    %v4233 = vadd.f32 %v264, %v4232
    %v4234 = vpop.f32.mrb[0].mxu0
    %v4235 = vpop.f32.mrb[0].mxu0
    %4236 = vdwg.mxu0
    %4237 = vmatprep.subr.bf16.mxu0 0
    %4238 = vmatpush1.bf16.msra.mxu0 %v4150
    %4239 = vmatprep.subr.bf16.mxu0 0
    %4240 = vmatpush1.bf16.msra.mxu0 %v4153
    %4241 = vmatprep.subr.bf16.mxu0 0
    %4242 = vmatpush1.bf16.msra.mxu0 %v4156
    %4243 = vmatprep.subr.bf16.mxu0 0
    %4244 = vmatpush1.bf16.msra.mxu0 %v4159
    %4245 = vmatprep.subr.bf16.mxu0 0
    %4246 = vmatpush1.bf16.msra.mxu0 %v4162
    %4247 = vmatprep.subr.bf16.mxu0 0
    %4248 = vmatpush1.bf16.msra.mxu0 %v4165
    %4249 = vmatprep.subr.bf16.mxu0 0
    %4250 = vmatpush1.bf16.msra.mxu0 %v4168
    %4251 = vmatprep.subr.bf16.mxu0 0
    %4252 = vmatpush1.bf16.msra.mxu0 %v4171
    %4253 = vmatprep.subr.bf16.mxu0 0
    %4254 = vmatpush1.bf16.msra.mxu0 0
    %4255 = vmatprep.subr.bf16.mxu0 0
    %4256 = vmatpush1.bf16.msra.mxu0 0
    %4257 = vmatprep.subr.bf16.mxu0 0
    %4258 = vmatpush1.bf16.msra.mxu0 0
    %4259 = vmatprep.subr.bf16.mxu0 0
    %4260 = vmatpush1.bf16.msra.mxu0 0
    %4261 = vmatprep.subr.bf16.mxu0 0
    %4262 = vmatpush1.bf16.msra.mxu0 0
    %4263 = vmatprep.subr.bf16.mxu0 0
    %4264 = vmatpush1.bf16.msra.mxu0 0
    %4265 = vmatprep.subr.bf16.mxu0 0
    %4266 = vmatpush1.bf16.msra.mxu0 0
    %4267 = vmatprep.subr.bf16.mxu0 0
    %4268 = vmatpush1.bf16.msra.mxu0 0
    %4269 = vmatprep.mubr.bf16.mxu0 0
    %4270 = vmatmul.mubr.bf16.gmra.mrb[0].mxu0 %v4035
    %v4271 = vpop.f32.mrb[0].mxu0
    %v4272 = vadd.f32 %v268, %v4271
    %v4273 = vpop.f32.mrb[0].mxu0
    %v4274 = vpop.f32.mrb[0].mxu0
    %v4275 = vpop.f32.mrb[0].mxu0
    %4276 = vdwg.mxu0
    %v4279 = vunpack.c.l.s4 1966171168
    %v4280 = vunpack.c.0.s8 %v4279
    %v4281 = vlaneseq
    %v4282 = vshrl.u32 %v4281, 7
    %v4283 = vsub.s32 %v4280, %v4282
    %v4284 = vrot.slane %v4034, %v4283
    %v4285 = vcombine.high %v4284, %v4284
    %v4287 = vunpack.c.l.s4 1966171168
    %v4288 = vunpack.c.0.s8 %v4287
    %v4289 = vlaneseq
    %v4290 = vshrl.u32 %v4289, 7
    %v4291 = vsub.s32 %v4288, %v4290
    %v4292 = vrot.slane %v4284, %v4291
    %v4294 = vunpack.c.l.s4 1966171168
    %v4295 = vunpack.c.0.s8 %v4294
    %v4296 = vlaneseq
    %v4297 = vshrl.u32 %v4296, 7
    %v4298 = vsub.s32 %v4295, %v4297
    %v4299 = vrot.slane %v4285, %v4298
    %4302 = vst [vmem:[#allocation2 + $0x4] sm:$0x1] %v4292
    %4303 = vst [vmem:[#allocation2 + $0xc] sm:$0x1] %v4299
    %v4304 = vlaneseq
    %v4305 = vshrl.u32 %v4304, 7
    %v4306 = vsub.s32 5, %v4305
    %v4307 = vrot.slane %v147, %v4306
    %v4308 = vlaneseq
    %v4309 = vshrl.u32 %v4308, 7
    %v4310 = vsub.s32 5, %v4309
    %v4311 = vrot.slane %v149, %v4310
    %v4312 = vadd.f32 %v4307, %v4011
    %v4313 = vadd.f32 %v4311, %v4012
    %v4314 = vxor.u32 %v4312, 2147483648
    %v4315 = vxor.u32 %v4313, 2147483648
    %v4316 = vmul.f32 %v4314, 1.442695
    %v4317 = vpow.pop %v4316
    %v4318 = vmul.f32 %v4315, 1.442695
    %v4319 = vpow.pop %v4318
    %v4320 = vadd.f32 %v4317, 1.0
    %v4321 = vadd.f32 %v4319, 1.0
    %v4322 = vrcp.pop %v4320
    %v4323 = vmul.f32 1.0, %v4322
    %v4324 = vrcp.pop %v4321
    %v4325 = vmul.f32 1.0, %v4324
    %v4326 = vlaneseq
    %v4327 = vshrl.u32 %v4326, 7
    %v4328 = vsub.s32 5, %v4327
    %v4329 = vrot.slane %v218, %v4328
    %v4330 = vmul.f32 %v4323, %v4013
    %v4331 = vadd.f32 %v4329, %v4330
    %v4332 = vtanh.pop %v4331
    %v4333 = vsub.f32 1.0, %v4325
    %v4334 = vmul.f32 %v4333, %v4332
    %v4335 = vmul.f32 %v4325, %v3595
    %v4336 = vadd.f32 %v4334, %v4335
    %v4337 = vpack.c.bf16 %v4336, %v4336
    %v4338 = vld [vmem:[%s5] sm:$0xff]
    %v4339 = vld [vmem:[%s5 + $0x8] sm:$0xff]
    %v4340 = vld [vmem:[%s5 + $0x10] sm:$0xff]
    %v4341 = vld [vmem:[%s5 + $0x18] sm:$0xff]
    %v4342 = vld [vmem:[%s5 + $0x20] sm:$0xff]
    %v4343 = vld [vmem:[%s5 + $0x28] sm:$0xff]
    %v4344 = vld [vmem:[%s5 + $0x30] sm:$0xff]
    %v4345 = vld [vmem:[%s5 + $0x38] sm:$0xff]
    %v4346 = vld [vmem:[%s5 + $0x40] sm:$0xff]
    %v4347 = vld [vmem:[%s5 + $0x48] sm:$0xff]
    %v4348 = vld [vmem:[%s5 + $0x50] sm:$0xff]
    %v4349 = vld [vmem:[%s5 + $0x58] sm:$0xff]
    %v4350 = vld [vmem:[%s5 + $0x60] sm:$0xff]
    %v4351 = vld [vmem:[%s5 + $0x68] sm:$0xff]
    %v4352 = vld [vmem:[%s5 + $0x70] sm:$0xff]
    %v4353 = vld [vmem:[%s5 + $0x78] sm:$0xff]
    %v4354 = vld [vmem:[%s5 + $0x80] sm:$0xff]
    %v4355 = vld [vmem:[%s5 + $0x88] sm:$0xff]
    %v4356 = vld [vmem:[%s5 + $0x90] sm:$0xff]
    %v4357 = vld [vmem:[%s5 + $0x98] sm:$0xff]
    %v4358 = vld [vmem:[%s5 + $0xa0] sm:$0xff]
    %v4359 = vld [vmem:[%s5 + $0xa8] sm:$0xff]
    %v4360 = vld [vmem:[%s5 + $0xb0] sm:$0xff]
    %v4361 = vld [vmem:[%s5 + $0xb8] sm:$0xff]
    %v4362 = vld [vmem:[%s5 + $0xc0] sm:$0xff]
    %v4363 = vld [vmem:[%s5 + $0xc8] sm:$0xff]
    %v4364 = vld [vmem:[%s5 + $0xd0] sm:$0xff]
    %v4365 = vld [vmem:[%s5 + $0xd8] sm:$0xff]
    %v4366 = vld [vmem:[%s5 + $0xe0] sm:$0xff]
    %v4367 = vld [vmem:[%s5 + $0xe8] sm:$0xff]
    %v4368 = vld [vmem:[%s5 + $0xf0] sm:$0xff]
    %v4369 = vld [vmem:[%s5 + $0xf8] sm:$0xff]
    %v4370 = vld [vmem:[%s5 + $0x100] sm:$0xff]
    %v4371 = vld [vmem:[%s5 + $0x108] sm:$0xff]
    %v4372 = vld [vmem:[%s5 + $0x110] sm:$0xff]
    %v4373 = vld [vmem:[%s5 + $0x118] sm:$0xff]
    %v4374 = vld [vmem:[%s5 + $0x120] sm:$0xff]
    %v4375 = vld [vmem:[%s5 + $0x128] sm:$0xff]
    %v4376 = vld [vmem:[%s5 + $0x130] sm:$0xff]
    %v4377 = vld [vmem:[%s5 + $0x138] sm:$0xff]
    %v4378 = vld [vmem:[%s5 + $0x140] sm:$0xff]
    %v4379 = vld [vmem:[%s5 + $0x148] sm:$0xff]
    %v4380 = vld [vmem:[%s5 + $0x150] sm:$0xff]
    %v4381 = vld [vmem:[%s5 + $0x158] sm:$0xff]
    %v4382 = vld [vmem:[%s5 + $0x160] sm:$0xff]
    %v4383 = vld [vmem:[%s5 + $0x168] sm:$0xff]
    %v4384 = vld [vmem:[%s5 + $0x170] sm:$0xff]
    %v4385 = vld [vmem:[%s5 + $0x178] sm:$0xff]
    %v4434 = vunpack.c.l.b16 %v4338
    %v4435 = vunpack.c.h.b16 %v4338
    %v4436 = vunpack.c.l.b16 %v4339
    %v4437 = vunpack.c.h.b16 %v4339
    %v4438 = vunpack.c.l.b16 %v4340
    %v4439 = vunpack.c.h.b16 %v4340
    %v4440 = vunpack.c.l.b16 %v4341
    %v4441 = vunpack.c.h.b16 %v4341
    %v4442 = vunpack.c.l.b16 %v4342
    %v4443 = vunpack.c.h.b16 %v4342
    %v4444 = vunpack.c.l.b16 %v4343
    %v4445 = vunpack.c.h.b16 %v4343
    %v4446 = vunpack.c.l.b16 %v4344
    %v4447 = vunpack.c.h.b16 %v4344
    %v4448 = vunpack.c.l.b16 %v4345
    %v4449 = vunpack.c.h.b16 %v4345
    %v4450 = vunpack.c.l.b16 %v4346
    %v4451 = vunpack.c.h.b16 %v4346
    %v4452 = vunpack.c.l.b16 %v4347
    %v4453 = vunpack.c.h.b16 %v4347
    %v4454 = vunpack.c.l.b16 %v4348
    %v4455 = vunpack.c.h.b16 %v4348
    %v4456 = vunpack.c.l.b16 %v4349
    %v4457 = vunpack.c.h.b16 %v4349
    %v4458 = vunpack.c.l.b16 %v4350
    %v4459 = vunpack.c.h.b16 %v4350
    %v4460 = vunpack.c.l.b16 %v4351
    %v4461 = vunpack.c.h.b16 %v4351
    %v4462 = vunpack.c.l.b16 %v4352
    %v4463 = vunpack.c.h.b16 %v4352
    %v4464 = vunpack.c.l.b16 %v4353
    %v4465 = vunpack.c.h.b16 %v4353
    %v4466 = vunpack.c.l.b16 %v4354
    %v4467 = vunpack.c.h.b16 %v4354
    %v4468 = vunpack.c.l.b16 %v4355
    %v4469 = vunpack.c.h.b16 %v4355
    %v4470 = vunpack.c.l.b16 %v4356
    %v4471 = vunpack.c.h.b16 %v4356
    %v4472 = vunpack.c.l.b16 %v4357
    %v4473 = vunpack.c.h.b16 %v4357
    %v4474 = vunpack.c.l.b16 %v4358
    %v4475 = vunpack.c.h.b16 %v4358
    %v4476 = vunpack.c.l.b16 %v4359
    %v4477 = vunpack.c.h.b16 %v4359
    %v4478 = vunpack.c.l.b16 %v4360
    %v4479 = vunpack.c.h.b16 %v4360
    %v4480 = vunpack.c.l.b16 %v4361
    %v4481 = vunpack.c.h.b16 %v4361
    %v4482 = vunpack.c.l.b16 %v4362
    %v4483 = vunpack.c.h.b16 %v4362
    %v4484 = vunpack.c.l.b16 %v4363
    %v4485 = vunpack.c.h.b16 %v4363
    %v4486 = vunpack.c.l.b16 %v4364
    %v4487 = vunpack.c.h.b16 %v4364
    %v4488 = vunpack.c.l.b16 %v4365
    %v4489 = vunpack.c.h.b16 %v4365
    %v4490 = vunpack.c.l.b16 %v4366
    %v4491 = vunpack.c.h.b16 %v4366
    %v4492 = vunpack.c.l.b16 %v4367
    %v4493 = vunpack.c.h.b16 %v4367
    %v4494 = vunpack.c.l.b16 %v4368
    %v4495 = vunpack.c.h.b16 %v4368
    %v4496 = vunpack.c.l.b16 %v4369
    %v4497 = vunpack.c.h.b16 %v4369
    %v4498 = vunpack.c.l.b16 %v4370
    %v4499 = vunpack.c.h.b16 %v4370
    %v4500 = vunpack.c.l.b16 %v4371
    %v4501 = vunpack.c.h.b16 %v4371
    %v4502 = vunpack.c.l.b16 %v4372
    %v4503 = vunpack.c.h.b16 %v4372
    %v4504 = vunpack.c.l.b16 %v4373
    %v4505 = vunpack.c.h.b16 %v4373
    %v4506 = vunpack.c.l.b16 %v4374
    %v4507 = vunpack.c.h.b16 %v4374
    %v4508 = vunpack.c.l.b16 %v4375
    %v4509 = vunpack.c.h.b16 %v4375
    %v4510 = vunpack.c.l.b16 %v4376
    %v4511 = vunpack.c.h.b16 %v4376
    %v4512 = vunpack.c.l.b16 %v4377
    %v4513 = vunpack.c.h.b16 %v4377
    %v4514 = vunpack.c.l.b16 %v4378
    %v4515 = vunpack.c.h.b16 %v4378
    %v4516 = vunpack.c.l.b16 %v4379
    %v4517 = vunpack.c.h.b16 %v4379
    %v4518 = vunpack.c.l.b16 %v4380
    %v4519 = vunpack.c.h.b16 %v4380
    %v4520 = vunpack.c.l.b16 %v4381
    %v4521 = vunpack.c.h.b16 %v4381
    %v4522 = vunpack.c.l.b16 %v4382
    %v4523 = vunpack.c.h.b16 %v4382
    %v4524 = vunpack.c.l.b16 %v4383
    %v4525 = vunpack.c.h.b16 %v4383
    %v4526 = vunpack.c.l.b16 %v4384
    %v4527 = vunpack.c.h.b16 %v4384
    %v4528 = vunpack.c.l.b16 %v4385
    %v4529 = vunpack.c.h.b16 %v4385
    %v4530 = vpack.c.b16 %v4440, %v4434
    %v4531 = vpack.c.b16 %v4441, %v4435
    %v4532 = vpack.c.b16 %v4442, %v4436
    %v4533 = vpack.c.b16 %v4443, %v4437
    %v4534 = vpack.c.b16 %v4444, %v4438
    %v4535 = vpack.c.b16 %v4445, %v4439
    %v4536 = vpack.c.b16 %v4452, %v4446
    %v4537 = vpack.c.b16 %v4453, %v4447
    %v4538 = vpack.c.b16 %v4454, %v4448
    %v4539 = vpack.c.b16 %v4455, %v4449
    %v4540 = vpack.c.b16 %v4456, %v4450
    %v4541 = vpack.c.b16 %v4457, %v4451
    %v4542 = vpack.c.b16 %v4464, %v4458
    %v4543 = vpack.c.b16 %v4465, %v4459
    %v4544 = vpack.c.b16 %v4466, %v4460
    %v4545 = vpack.c.b16 %v4467, %v4461
    %v4546 = vpack.c.b16 %v4468, %v4462
    %v4547 = vpack.c.b16 %v4469, %v4463
    %v4548 = vpack.c.b16 %v4476, %v4470
    %v4549 = vpack.c.b16 %v4477, %v4471
    %v4550 = vpack.c.b16 %v4478, %v4472
    %v4551 = vpack.c.b16 %v4479, %v4473
    %v4552 = vpack.c.b16 %v4480, %v4474
    %v4553 = vpack.c.b16 %v4481, %v4475
    %v4554 = vpack.c.b16 %v4488, %v4482
    %v4555 = vpack.c.b16 %v4489, %v4483
    %v4556 = vpack.c.b16 %v4490, %v4484
    %v4557 = vpack.c.b16 %v4491, %v4485
    %v4558 = vpack.c.b16 %v4492, %v4486
    %v4559 = vpack.c.b16 %v4493, %v4487
    %v4560 = vpack.c.b16 %v4500, %v4494
    %v4561 = vpack.c.b16 %v4501, %v4495
    %v4562 = vpack.c.b16 %v4502, %v4496
    %v4563 = vpack.c.b16 %v4503, %v4497
    %v4564 = vpack.c.b16 %v4504, %v4498
    %v4565 = vpack.c.b16 %v4505, %v4499
    %v4566 = vpack.c.b16 %v4512, %v4506
    %v4567 = vpack.c.b16 %v4513, %v4507
    %v4568 = vpack.c.b16 %v4514, %v4508
    %v4569 = vpack.c.b16 %v4515, %v4509
    %v4570 = vpack.c.b16 %v4516, %v4510
    %v4571 = vpack.c.b16 %v4517, %v4511
    %v4572 = vpack.c.b16 %v4524, %v4518
    %v4573 = vpack.c.b16 %v4525, %v4519
    %v4574 = vpack.c.b16 %v4526, %v4520
    %v4575 = vpack.c.b16 %v4527, %v4521
    %v4576 = vpack.c.b16 %v4528, %v4522
    %v4577 = vpack.c.b16 %v4529, %v4523
    %4626 = vmatprep.subr.bf16.mxu0 %v4531
    %4627 = vmatpush1.bf16.msra.mxu0 %v4530
    %4628 = vmatprep.subr.bf16.mxu0 %v4537
    %4629 = vmatpush1.bf16.msra.mxu0 %v4536
    %4630 = vmatprep.subr.bf16.mxu0 %v4543
    %4631 = vmatpush1.bf16.msra.mxu0 %v4542
    %4632 = vmatprep.subr.bf16.mxu0 %v4549
    %4633 = vmatpush1.bf16.msra.mxu0 %v4548
    %4634 = vmatprep.subr.bf16.mxu0 %v4555
    %4635 = vmatpush1.bf16.msra.mxu0 %v4554
    %4636 = vmatprep.subr.bf16.mxu0 %v4561
    %4637 = vmatpush1.bf16.msra.mxu0 %v4560
    %4638 = vmatprep.subr.bf16.mxu0 %v4567
    %4639 = vmatpush1.bf16.msra.mxu0 %v4566
    %4640 = vmatprep.subr.bf16.mxu0 %v4573
    %4641 = vmatpush1.bf16.msra.mxu0 %v4572
    %4642 = vmatprep.subr.bf16.mxu0 0
    %4643 = vmatpush1.bf16.msra.mxu0 0
    %4644 = vmatprep.subr.bf16.mxu0 0
    %4645 = vmatpush1.bf16.msra.mxu0 0
    %4646 = vmatprep.subr.bf16.mxu0 0
    %4647 = vmatpush1.bf16.msra.mxu0 0
    %4648 = vmatprep.subr.bf16.mxu0 0
    %4649 = vmatpush1.bf16.msra.mxu0 0
    %4650 = vmatprep.subr.bf16.mxu0 0
    %4651 = vmatpush1.bf16.msra.mxu0 0
    %4652 = vmatprep.subr.bf16.mxu0 0
    %4653 = vmatpush1.bf16.msra.mxu0 0
    %4654 = vmatprep.subr.bf16.mxu0 0
    %4655 = vmatpush1.bf16.msra.mxu0 0
    %4656 = vmatprep.subr.bf16.mxu0 0
    %4657 = vmatpush1.bf16.msra.mxu0 0
    %4658 = vmatprep.mubr.bf16.mxu0 0
    %4659 = vmatmul.mubr.bf16.gmra.mrb[0].mxu0 %v4337
    %v4660 = vpop.f32.mrb[0].mxu0
    %v4661 = vadd.f32 0.0, %v4660
    %v4662 = vpop.f32.mrb[0].mxu0
    %v4663 = vadd.f32 0.0, %v4662
    %v4664 = vpop.f32.mrb[0].mxu0
    %v4665 = vpop.f32.mrb[0].mxu0
    %4666 = vdwg.mxu0
    %4667 = vmatprep.subr.bf16.mxu0 %v4533
    %4668 = vmatpush1.bf16.msra.mxu0 %v4532
    %4669 = vmatprep.subr.bf16.mxu0 %v4539
    %4670 = vmatpush1.bf16.msra.mxu0 %v4538
    %4671 = vmatprep.subr.bf16.mxu0 %v4545
    %4672 = vmatpush1.bf16.msra.mxu0 %v4544
    %4673 = vmatprep.subr.bf16.mxu0 %v4551
    %4674 = vmatpush1.bf16.msra.mxu0 %v4550
    %4675 = vmatprep.subr.bf16.mxu0 %v4557
    %4676 = vmatpush1.bf16.msra.mxu0 %v4556
    %4677 = vmatprep.subr.bf16.mxu0 %v4563
    %4678 = vmatpush1.bf16.msra.mxu0 %v4562
    %4679 = vmatprep.subr.bf16.mxu0 %v4569
    %4680 = vmatpush1.bf16.msra.mxu0 %v4568
    %4681 = vmatprep.subr.bf16.mxu0 %v4575
    %4682 = vmatpush1.bf16.msra.mxu0 %v4574
    %4683 = vmatprep.subr.bf16.mxu0 0
    %4684 = vmatpush1.bf16.msra.mxu0 0
    %4685 = vmatprep.subr.bf16.mxu0 0
    %4686 = vmatpush1.bf16.msra.mxu0 0
    %4687 = vmatprep.subr.bf16.mxu0 0
    %4688 = vmatpush1.bf16.msra.mxu0 0
    %4689 = vmatprep.subr.bf16.mxu0 0
    %4690 = vmatpush1.bf16.msra.mxu0 0
    %4691 = vmatprep.subr.bf16.mxu0 0
    %4692 = vmatpush1.bf16.msra.mxu0 0
    %4693 = vmatprep.subr.bf16.mxu0 0
    %4694 = vmatpush1.bf16.msra.mxu0 0
    %4695 = vmatprep.subr.bf16.mxu0 0
    %4696 = vmatpush1.bf16.msra.mxu0 0
    %4697 = vmatprep.subr.bf16.mxu0 0
    %4698 = vmatpush1.bf16.msra.mxu0 0
    %4699 = vmatprep.mubr.bf16.mxu0 0
    %4700 = vmatmul.mubr.bf16.gmra.mrb[0].mxu0 %v4337
    %v4701 = vpop.f32.mrb[0].mxu0
    %v4702 = vadd.f32 0.0, %v4701
    %v4703 = vpop.f32.mrb[0].mxu0
    %v4704 = vadd.f32 0.0, %v4703
    %v4705 = vpop.f32.mrb[0].mxu0
    %v4706 = vpop.f32.mrb[0].mxu0
    %4707 = vdwg.mxu0
    %4708 = vmatprep.subr.bf16.mxu0 %v4535
    %4709 = vmatpush1.bf16.msra.mxu0 %v4534
    %4710 = vmatprep.subr.bf16.mxu0 %v4541
    %4711 = vmatpush1.bf16.msra.mxu0 %v4540
    %4712 = vmatprep.subr.bf16.mxu0 %v4547
    %4713 = vmatpush1.bf16.msra.mxu0 %v4546
    %4714 = vmatprep.subr.bf16.mxu0 %v4553
    %4715 = vmatpush1.bf16.msra.mxu0 %v4552
    %4716 = vmatprep.subr.bf16.mxu0 %v4559
    %4717 = vmatpush1.bf16.msra.mxu0 %v4558
    %4718 = vmatprep.subr.bf16.mxu0 %v4565
    %4719 = vmatpush1.bf16.msra.mxu0 %v4564
    %4720 = vmatprep.subr.bf16.mxu0 %v4571
    %4721 = vmatpush1.bf16.msra.mxu0 %v4570
    %4722 = vmatprep.subr.bf16.mxu0 %v4577
    %4723 = vmatpush1.bf16.msra.mxu0 %v4576
    %4724 = vmatprep.subr.bf16.mxu0 0
    %4725 = vmatpush1.bf16.msra.mxu0 0
    %4726 = vmatprep.subr.bf16.mxu0 0
    %4727 = vmatpush1.bf16.msra.mxu0 0
    %4728 = vmatprep.subr.bf16.mxu0 0
    %4729 = vmatpush1.bf16.msra.mxu0 0
    %4730 = vmatprep.subr.bf16.mxu0 0
    %4731 = vmatpush1.bf16.msra.mxu0 0
    %4732 = vmatprep.subr.bf16.mxu0 0
    %4733 = vmatpush1.bf16.msra.mxu0 0
    %4734 = vmatprep.subr.bf16.mxu0 0
    %4735 = vmatpush1.bf16.msra.mxu0 0
    %4736 = vmatprep.subr.bf16.mxu0 0
    %4737 = vmatpush1.bf16.msra.mxu0 0
    %4738 = vmatprep.subr.bf16.mxu0 0
    %4739 = vmatpush1.bf16.msra.mxu0 0
    %4740 = vmatprep.mubr.bf16.mxu0 0
    %4741 = vmatmul.mubr.bf16.gmra.mrb[0].mxu0 %v4337
    %v4742 = vpop.f32.mrb[0].mxu0
    %v4743 = vadd.f32 0.0, %v4742
    %v4744 = vpop.f32.mrb[0].mxu0
    %v4745 = vadd.f32 0.0, %v4744
    %v4746 = vpop.f32.mrb[0].mxu0
    %v4747 = vpop.f32.mrb[0].mxu0
    %4748 = vdwg.mxu0
    %v4749 = vadd.f32 %v4661, %v243
    %v4750 = vadd.f32 %v4663, %v247
    %v4751 = vadd.f32 %v4702, %v251
    %v4752 = vadd.f32 %v4704, %v226
    %v4753 = vadd.f32 %v4743, %v230
    %v4754 = vadd.f32 %v4745, %v234
    %v4755 = vadd.f32 %v4749, %v4231
    %v4756 = vadd.f32 %v4750, %v4233
    %v4757 = vxor.u32 %v4755, 2147483648
    %v4758 = vxor.u32 %v4756, 2147483648
    %v4759 = vmul.f32 %v4757, 1.442695
    %v4760 = vpow.pop %v4759
    %v4761 = vmul.f32 %v4758, 1.442695
    %v4762 = vpow.pop %v4761
    %v4763 = vadd.f32 %v4760, 1.0
    %v4764 = vadd.f32 %v4762, 1.0
    %v4765 = vrcp.pop %v4763
    %v4766 = vmul.f32 1.0, %v4765
    %v4767 = vrcp.pop %v4764
    %v4768 = vmul.f32 1.0, %v4767
    %v4769 = vmul.f32 %v4766, %v4272
    %v4770 = vadd.f32 %v4751, %v4769
    %v4771 = vtanh.pop %v4770
    %v4772 = vsub.f32 1.0, %v4768
    %v4773 = vmul.f32 %v4772, %v4771
    %v4774 = vmul.f32 %v4768, %v4034
    %v4775 = vadd.f32 %v4773, %v4774
    %v4776 = vpack.c.bf16 %v4775, %v4775
    %v4777 = vld [vmem:[%s8] sm:$0xff]
    %v4778 = vld [vmem:[%s8 + $0x8] sm:$0xf]
    %v4779 = vld [vmem:[%s8 + $0xc] sm:$0xff]
    %v4780 = vld [vmem:[%s8 + $0x14] sm:$0xf]
    %v4781 = vld [vmem:[%s8 + $0x18] sm:$0xff]
    %v4782 = vld [vmem:[%s8 + $0x20] sm:$0xf]
    %v4783 = vld [vmem:[%s8 + $0x24] sm:$0xff]
    %v4784 = vld [vmem:[%s8 + $0x2c] sm:$0xf]
    %v4785 = vld [vmem:[%s8 + $0x30] sm:$0xff]
    %v4786 = vld [vmem:[%s8 + $0x38] sm:$0xf]
    %v4787 = vld [vmem:[%s8 + $0x3c] sm:$0xff]
    %v4788 = vld [vmem:[%s8 + $0x44] sm:$0xf]
    %v4789 = vld [vmem:[%s8 + $0x48] sm:$0xff]
    %v4790 = vld [vmem:[%s8 + $0x50] sm:$0xf]
    %v4791 = vld [vmem:[%s8 + $0x54] sm:$0xff]
    %v4792 = vld [vmem:[%s8 + $0x5c] sm:$0xf]
    %v4793 = vld [vmem:[%s8 + $0x60] sm:$0xff]
    %v4794 = vld [vmem:[%s8 + $0x68] sm:$0xf]
    %v4795 = vld [vmem:[%s8 + $0x6c] sm:$0xff]
    %v4796 = vld [vmem:[%s8 + $0x74] sm:$0xf]
    %v4797 = vld [vmem:[%s8 + $0x78] sm:$0xff]
    %v4798 = vld [vmem:[%s8 + $0x80] sm:$0xf]
    %v4799 = vld [vmem:[%s8 + $0x84] sm:$0xff]
    %v4800 = vld [vmem:[%s8 + $0x8c] sm:$0xf]
    %v4801 = vld [vmem:[%s8 + $0x90] sm:$0xff]
    %v4802 = vld [vmem:[%s8 + $0x98] sm:$0xf]
    %v4803 = vld [vmem:[%s8 + $0x9c] sm:$0xff]
    %v4804 = vld [vmem:[%s8 + $0xa4] sm:$0xf]
    %v4805 = vld [vmem:[%s8 + $0xa8] sm:$0xff]
    %v4806 = vld [vmem:[%s8 + $0xb0] sm:$0xf]
    %v4807 = vld [vmem:[%s8 + $0xb4] sm:$0xff]
    %v4808 = vld [vmem:[%s8 + $0xbc] sm:$0xf]
    %v4841 = vunpack.c.l.b16 %v4777
    %v4842 = vunpack.c.h.b16 %v4777
    %v4843 = vunpack.c.l.b16 %v4778
    %v4844 = vunpack.c.l.b16 %v4779
    %v4845 = vunpack.c.h.b16 %v4779
    %v4846 = vunpack.c.l.b16 %v4780
    %v4847 = vunpack.c.l.b16 %v4781
    %v4848 = vunpack.c.h.b16 %v4781
    %v4849 = vunpack.c.l.b16 %v4782
    %v4850 = vunpack.c.l.b16 %v4783
    %v4851 = vunpack.c.h.b16 %v4783
    %v4852 = vunpack.c.l.b16 %v4784
    %v4853 = vunpack.c.l.b16 %v4785
    %v4854 = vunpack.c.h.b16 %v4785
    %v4855 = vunpack.c.l.b16 %v4786
    %v4856 = vunpack.c.l.b16 %v4787
    %v4857 = vunpack.c.h.b16 %v4787
    %v4858 = vunpack.c.l.b16 %v4788
    %v4859 = vunpack.c.l.b16 %v4789
    %v4860 = vunpack.c.h.b16 %v4789
    %v4861 = vunpack.c.l.b16 %v4790
    %v4862 = vunpack.c.l.b16 %v4791
    %v4863 = vunpack.c.h.b16 %v4791
    %v4864 = vunpack.c.l.b16 %v4792
    %v4865 = vunpack.c.l.b16 %v4793
    %v4866 = vunpack.c.h.b16 %v4793
    %v4867 = vunpack.c.l.b16 %v4794
    %v4868 = vunpack.c.l.b16 %v4795
    %v4869 = vunpack.c.h.b16 %v4795
    %v4870 = vunpack.c.l.b16 %v4796
    %v4871 = vunpack.c.l.b16 %v4797
    %v4872 = vunpack.c.h.b16 %v4797
    %v4873 = vunpack.c.l.b16 %v4798
    %v4874 = vunpack.c.l.b16 %v4799
    %v4875 = vunpack.c.h.b16 %v4799
    %v4876 = vunpack.c.l.b16 %v4800
    %v4877 = vunpack.c.l.b16 %v4801
    %v4878 = vunpack.c.h.b16 %v4801
    %v4879 = vunpack.c.l.b16 %v4802
    %v4880 = vunpack.c.l.b16 %v4803
    %v4881 = vunpack.c.h.b16 %v4803
    %v4882 = vunpack.c.l.b16 %v4804
    %v4883 = vunpack.c.l.b16 %v4805
    %v4884 = vunpack.c.h.b16 %v4805
    %v4885 = vunpack.c.l.b16 %v4806
    %v4886 = vunpack.c.l.b16 %v4807
    %v4887 = vunpack.c.h.b16 %v4807
    %v4888 = vunpack.c.l.b16 %v4808
    %v4889 = vpack.c.b16 %v4844, %v4841
    %v4890 = vpack.c.b16 %v4845, %v4842
    %v4891 = vpack.c.b16 %v4846, %v4843
    %v4892 = vpack.c.b16 %v4850, %v4847
    %v4893 = vpack.c.b16 %v4851, %v4848
    %v4894 = vpack.c.b16 %v4852, %v4849
    %v4895 = vpack.c.b16 %v4856, %v4853
    %v4896 = vpack.c.b16 %v4857, %v4854
    %v4897 = vpack.c.b16 %v4858, %v4855
    %v4898 = vpack.c.b16 %v4862, %v4859
    %v4899 = vpack.c.b16 %v4863, %v4860
    %v4900 = vpack.c.b16 %v4864, %v4861
    %v4901 = vpack.c.b16 %v4868, %v4865
    %v4902 = vpack.c.b16 %v4869, %v4866
    %v4903 = vpack.c.b16 %v4870, %v4867
    %v4904 = vpack.c.b16 %v4874, %v4871
    %v4905 = vpack.c.b16 %v4875, %v4872
    %v4906 = vpack.c.b16 %v4876, %v4873
    %v4907 = vpack.c.b16 %v4880, %v4877
    %v4908 = vpack.c.b16 %v4881, %v4878
    %v4909 = vpack.c.b16 %v4882, %v4879
    %v4910 = vpack.c.b16 %v4886, %v4883
    %v4911 = vpack.c.b16 %v4887, %v4884
    %v4912 = vpack.c.b16 %v4888, %v4885
    %4937 = vmatprep.subr.bf16.mxu0 %v4890
    %4938 = vmatpush1.bf16.msra.mxu0 %v4889
    %4939 = vmatprep.subr.bf16.mxu0 %v4893
    %4940 = vmatpush1.bf16.msra.mxu0 %v4892
    %4941 = vmatprep.subr.bf16.mxu0 %v4896
    %4942 = vmatpush1.bf16.msra.mxu0 %v4895
    %4943 = vmatprep.subr.bf16.mxu0 %v4899
    %4944 = vmatpush1.bf16.msra.mxu0 %v4898
    %4945 = vmatprep.subr.bf16.mxu0 %v4902
    %4946 = vmatpush1.bf16.msra.mxu0 %v4901
    %4947 = vmatprep.subr.bf16.mxu0 %v4905
    %4948 = vmatpush1.bf16.msra.mxu0 %v4904
    %4949 = vmatprep.subr.bf16.mxu0 %v4908
    %4950 = vmatpush1.bf16.msra.mxu0 %v4907
    %4951 = vmatprep.subr.bf16.mxu0 %v4911
    %4952 = vmatpush1.bf16.msra.mxu0 %v4910
    %4953 = vmatprep.subr.bf16.mxu0 0
    %4954 = vmatpush1.bf16.msra.mxu0 0
    %4955 = vmatprep.subr.bf16.mxu0 0
    %4956 = vmatpush1.bf16.msra.mxu0 0
    %4957 = vmatprep.subr.bf16.mxu0 0
    %4958 = vmatpush1.bf16.msra.mxu0 0
    %4959 = vmatprep.subr.bf16.mxu0 0
    %4960 = vmatpush1.bf16.msra.mxu0 0
    %4961 = vmatprep.subr.bf16.mxu0 0
    %4962 = vmatpush1.bf16.msra.mxu0 0
    %4963 = vmatprep.subr.bf16.mxu0 0
    %4964 = vmatpush1.bf16.msra.mxu0 0
    %4965 = vmatprep.subr.bf16.mxu0 0
    %4966 = vmatpush1.bf16.msra.mxu0 0
    %4967 = vmatprep.subr.bf16.mxu0 0
    %4968 = vmatpush1.bf16.msra.mxu0 0
    %4969 = vmatprep.mubr.bf16.mxu0 0
    %4970 = vmatmul.mubr.bf16.gmra.mrb[0].mxu0 %v4776
    %v4971 = vpop.f32.mrb[0].mxu0
    %v4972 = vadd.f32 %v260, %v4971
    %v4973 = vpop.f32.mrb[0].mxu0
    %v4974 = vadd.f32 %v264, %v4973
    %v4975 = vpop.f32.mrb[0].mxu0
    %v4976 = vpop.f32.mrb[0].mxu0
    %4977 = vdwg.mxu0
    %4978 = vmatprep.subr.bf16.mxu0 0
    %4979 = vmatpush1.bf16.msra.mxu0 %v4891
    %4980 = vmatprep.subr.bf16.mxu0 0
    %4981 = vmatpush1.bf16.msra.mxu0 %v4894
    %4982 = vmatprep.subr.bf16.mxu0 0
    %4983 = vmatpush1.bf16.msra.mxu0 %v4897
    %4984 = vmatprep.subr.bf16.mxu0 0
    %4985 = vmatpush1.bf16.msra.mxu0 %v4900
    %4986 = vmatprep.subr.bf16.mxu0 0
    %4987 = vmatpush1.bf16.msra.mxu0 %v4903
    %4988 = vmatprep.subr.bf16.mxu0 0
    %4989 = vmatpush1.bf16.msra.mxu0 %v4906
    %4990 = vmatprep.subr.bf16.mxu0 0
    %4991 = vmatpush1.bf16.msra.mxu0 %v4909
    %4992 = vmatprep.subr.bf16.mxu0 0
    %4993 = vmatpush1.bf16.msra.mxu0 %v4912
    %4994 = vmatprep.subr.bf16.mxu0 0
    %4995 = vmatpush1.bf16.msra.mxu0 0
    %4996 = vmatprep.subr.bf16.mxu0 0
    %4997 = vmatpush1.bf16.msra.mxu0 0
    %4998 = vmatprep.subr.bf16.mxu0 0
    %4999 = vmatpush1.bf16.msra.mxu0 0
    %5000 = vmatprep.subr.bf16.mxu0 0
    %5001 = vmatpush1.bf16.msra.mxu0 0
    %5002 = vmatprep.subr.bf16.mxu0 0
    %5003 = vmatpush1.bf16.msra.mxu0 0
    %5004 = vmatprep.subr.bf16.mxu0 0
    %5005 = vmatpush1.bf16.msra.mxu0 0
    %5006 = vmatprep.subr.bf16.mxu0 0
    %5007 = vmatpush1.bf16.msra.mxu0 0
    %5008 = vmatprep.subr.bf16.mxu0 0
    %5009 = vmatpush1.bf16.msra.mxu0 0
    %5010 = vmatprep.mubr.bf16.mxu0 0
    %5011 = vmatmul.mubr.bf16.gmra.mrb[0].mxu0 %v4776
    %v5012 = vpop.f32.mrb[0].mxu0
    %v5013 = vadd.f32 %v268, %v5012
    %v5014 = vpop.f32.mrb[0].mxu0
    %v5015 = vpop.f32.mrb[0].mxu0
    %v5016 = vpop.f32.mrb[0].mxu0
    %5017 = vdwg.mxu0
    %v5020 = vunpack.c.l.s4 1966171168
    %v5021 = vunpack.c.0.s8 %v5020
    %v5022 = vlaneseq
    %v5023 = vshrl.u32 %v5022, 7
    %v5024 = vsub.s32 %v5021, %v5023
    %v5025 = vrot.slane %v4775, %v5024
    %v5026 = vcombine.high %v5025, %v5025
    %v5028 = vunpack.c.l.s4 1966171168
    %v5029 = vunpack.c.0.s8 %v5028
    %v5030 = vlaneseq
    %v5031 = vshrl.u32 %v5030, 7
    %v5032 = vsub.s32 %v5029, %v5031
    %v5033 = vrot.slane %v5025, %v5032
    %v5035 = vunpack.c.l.s4 1966171168
    %v5036 = vunpack.c.0.s8 %v5035
    %v5037 = vlaneseq
    %v5038 = vshrl.u32 %v5037, 7
    %v5039 = vsub.s32 %v5036, %v5038
    %v5040 = vrot.slane %v5026, %v5039
    %5043 = vst [vmem:[#allocation2 + $0x5] sm:$0x1] %v5033
    %5044 = vst [vmem:[#allocation2 + $0xd] sm:$0x1] %v5040
    %v5045 = vlaneseq
    %v5046 = vshrl.u32 %v5045, 7
    %v5047 = vsub.s32 6, %v5046
    %v5048 = vrot.slane %v147, %v5047
    %v5049 = vlaneseq
    %v5050 = vshrl.u32 %v5049, 7
    %v5051 = vsub.s32 6, %v5050
    %v5052 = vrot.slane %v149, %v5051
    %v5053 = vadd.f32 %v5048, %v4752
    %v5054 = vadd.f32 %v5052, %v4753
    %v5055 = vxor.u32 %v5053, 2147483648
    %v5056 = vxor.u32 %v5054, 2147483648
    %v5057 = vmul.f32 %v5055, 1.442695
    %v5058 = vpow.pop %v5057
    %v5059 = vmul.f32 %v5056, 1.442695
    %v5060 = vpow.pop %v5059
    %v5061 = vadd.f32 %v5058, 1.0
    %v5062 = vadd.f32 %v5060, 1.0
    %v5063 = vrcp.pop %v5061
    %v5064 = vmul.f32 1.0, %v5063
    %v5065 = vrcp.pop %v5062
    %v5066 = vmul.f32 1.0, %v5065
    %v5067 = vlaneseq
    %v5068 = vshrl.u32 %v5067, 7
    %v5069 = vsub.s32 6, %v5068
    %v5070 = vrot.slane %v218, %v5069
    %v5071 = vmul.f32 %v5064, %v4754
    %v5072 = vadd.f32 %v5070, %v5071
    %v5073 = vtanh.pop %v5072
    %v5074 = vsub.f32 1.0, %v5066
    %v5075 = vmul.f32 %v5074, %v5073
    %v5076 = vmul.f32 %v5066, %v4336
    %v5077 = vadd.f32 %v5075, %v5076
    %v5078 = vpack.c.bf16 %v5077, %v5077
    %v5079 = vld [vmem:[%s5] sm:$0xff]
    %v5080 = vld [vmem:[%s5 + $0x8] sm:$0xff]
    %v5081 = vld [vmem:[%s5 + $0x10] sm:$0xff]
    %v5082 = vld [vmem:[%s5 + $0x18] sm:$0xff]
    %v5083 = vld [vmem:[%s5 + $0x20] sm:$0xff]
    %v5084 = vld [vmem:[%s5 + $0x28] sm:$0xff]
    %v5085 = vld [vmem:[%s5 + $0x30] sm:$0xff]
    %v5086 = vld [vmem:[%s5 + $0x38] sm:$0xff]
    %v5087 = vld [vmem:[%s5 + $0x40] sm:$0xff]
    %v5088 = vld [vmem:[%s5 + $0x48] sm:$0xff]
    %v5089 = vld [vmem:[%s5 + $0x50] sm:$0xff]
    %v5090 = vld [vmem:[%s5 + $0x58] sm:$0xff]
    %v5091 = vld [vmem:[%s5 + $0x60] sm:$0xff]
    %v5092 = vld [vmem:[%s5 + $0x68] sm:$0xff]
    %v5093 = vld [vmem:[%s5 + $0x70] sm:$0xff]
    %v5094 = vld [vmem:[%s5 + $0x78] sm:$0xff]
    %v5095 = vld [vmem:[%s5 + $0x80] sm:$0xff]
    %v5096 = vld [vmem:[%s5 + $0x88] sm:$0xff]
    %v5097 = vld [vmem:[%s5 + $0x90] sm:$0xff]
    %v5098 = vld [vmem:[%s5 + $0x98] sm:$0xff]
    %v5099 = vld [vmem:[%s5 + $0xa0] sm:$0xff]
    %v5100 = vld [vmem:[%s5 + $0xa8] sm:$0xff]
    %v5101 = vld [vmem:[%s5 + $0xb0] sm:$0xff]
    %v5102 = vld [vmem:[%s5 + $0xb8] sm:$0xff]
    %v5103 = vld [vmem:[%s5 + $0xc0] sm:$0xff]
    %v5104 = vld [vmem:[%s5 + $0xc8] sm:$0xff]
    %v5105 = vld [vmem:[%s5 + $0xd0] sm:$0xff]
    %v5106 = vld [vmem:[%s5 + $0xd8] sm:$0xff]
    %v5107 = vld [vmem:[%s5 + $0xe0] sm:$0xff]
    %v5108 = vld [vmem:[%s5 + $0xe8] sm:$0xff]
    %v5109 = vld [vmem:[%s5 + $0xf0] sm:$0xff]
    %v5110 = vld [vmem:[%s5 + $0xf8] sm:$0xff]
    %v5111 = vld [vmem:[%s5 + $0x100] sm:$0xff]
    %v5112 = vld [vmem:[%s5 + $0x108] sm:$0xff]
    %v5113 = vld [vmem:[%s5 + $0x110] sm:$0xff]
    %v5114 = vld [vmem:[%s5 + $0x118] sm:$0xff]
    %v5115 = vld [vmem:[%s5 + $0x120] sm:$0xff]
    %v5116 = vld [vmem:[%s5 + $0x128] sm:$0xff]
    %v5117 = vld [vmem:[%s5 + $0x130] sm:$0xff]
    %v5118 = vld [vmem:[%s5 + $0x138] sm:$0xff]
    %v5119 = vld [vmem:[%s5 + $0x140] sm:$0xff]
    %v5120 = vld [vmem:[%s5 + $0x148] sm:$0xff]
    %v5121 = vld [vmem:[%s5 + $0x150] sm:$0xff]
    %v5122 = vld [vmem:[%s5 + $0x158] sm:$0xff]
    %v5123 = vld [vmem:[%s5 + $0x160] sm:$0xff]
    %v5124 = vld [vmem:[%s5 + $0x168] sm:$0xff]
    %v5125 = vld [vmem:[%s5 + $0x170] sm:$0xff]
    %v5126 = vld [vmem:[%s5 + $0x178] sm:$0xff]
    %v5175 = vunpack.c.l.b16 %v5079
    %v5176 = vunpack.c.h.b16 %v5079
    %v5177 = vunpack.c.l.b16 %v5080
    %v5178 = vunpack.c.h.b16 %v5080
    %v5179 = vunpack.c.l.b16 %v5081
    %v5180 = vunpack.c.h.b16 %v5081
    %v5181 = vunpack.c.l.b16 %v5082
    %v5182 = vunpack.c.h.b16 %v5082
    %v5183 = vunpack.c.l.b16 %v5083
    %v5184 = vunpack.c.h.b16 %v5083
    %v5185 = vunpack.c.l.b16 %v5084
    %v5186 = vunpack.c.h.b16 %v5084
    %v5187 = vunpack.c.l.b16 %v5085
    %v5188 = vunpack.c.h.b16 %v5085
    %v5189 = vunpack.c.l.b16 %v5086
    %v5190 = vunpack.c.h.b16 %v5086
    %v5191 = vunpack.c.l.b16 %v5087
    %v5192 = vunpack.c.h.b16 %v5087
    %v5193 = vunpack.c.l.b16 %v5088
    %v5194 = vunpack.c.h.b16 %v5088
    %v5195 = vunpack.c.l.b16 %v5089
    %v5196 = vunpack.c.h.b16 %v5089
    %v5197 = vunpack.c.l.b16 %v5090
    %v5198 = vunpack.c.h.b16 %v5090
    %v5199 = vunpack.c.l.b16 %v5091
    %v5200 = vunpack.c.h.b16 %v5091
    %v5201 = vunpack.c.l.b16 %v5092
    %v5202 = vunpack.c.h.b16 %v5092
    %v5203 = vunpack.c.l.b16 %v5093
    %v5204 = vunpack.c.h.b16 %v5093
    %v5205 = vunpack.c.l.b16 %v5094
    %v5206 = vunpack.c.h.b16 %v5094
    %v5207 = vunpack.c.l.b16 %v5095
    %v5208 = vunpack.c.h.b16 %v5095
    %v5209 = vunpack.c.l.b16 %v5096
    %v5210 = vunpack.c.h.b16 %v5096
    %v5211 = vunpack.c.l.b16 %v5097
    %v5212 = vunpack.c.h.b16 %v5097
    %v5213 = vunpack.c.l.b16 %v5098
    %v5214 = vunpack.c.h.b16 %v5098
    %v5215 = vunpack.c.l.b16 %v5099
    %v5216 = vunpack.c.h.b16 %v5099
    %v5217 = vunpack.c.l.b16 %v5100
    %v5218 = vunpack.c.h.b16 %v5100
    %v5219 = vunpack.c.l.b16 %v5101
    %v5220 = vunpack.c.h.b16 %v5101
    %v5221 = vunpack.c.l.b16 %v5102
    %v5222 = vunpack.c.h.b16 %v5102
    %v5223 = vunpack.c.l.b16 %v5103
    %v5224 = vunpack.c.h.b16 %v5103
    %v5225 = vunpack.c.l.b16 %v5104
    %v5226 = vunpack.c.h.b16 %v5104
    %v5227 = vunpack.c.l.b16 %v5105
    %v5228 = vunpack.c.h.b16 %v5105
    %v5229 = vunpack.c.l.b16 %v5106
    %v5230 = vunpack.c.h.b16 %v5106
    %v5231 = vunpack.c.l.b16 %v5107
    %v5232 = vunpack.c.h.b16 %v5107
    %v5233 = vunpack.c.l.b16 %v5108
    %v5234 = vunpack.c.h.b16 %v5108
    %v5235 = vunpack.c.l.b16 %v5109
    %v5236 = vunpack.c.h.b16 %v5109
    %v5237 = vunpack.c.l.b16 %v5110
    %v5238 = vunpack.c.h.b16 %v5110
    %v5239 = vunpack.c.l.b16 %v5111
    %v5240 = vunpack.c.h.b16 %v5111
    %v5241 = vunpack.c.l.b16 %v5112
    %v5242 = vunpack.c.h.b16 %v5112
    %v5243 = vunpack.c.l.b16 %v5113
    %v5244 = vunpack.c.h.b16 %v5113
    %v5245 = vunpack.c.l.b16 %v5114
    %v5246 = vunpack.c.h.b16 %v5114
    %v5247 = vunpack.c.l.b16 %v5115
    %v5248 = vunpack.c.h.b16 %v5115
    %v5249 = vunpack.c.l.b16 %v5116
    %v5250 = vunpack.c.h.b16 %v5116
    %v5251 = vunpack.c.l.b16 %v5117
    %v5252 = vunpack.c.h.b16 %v5117
    %v5253 = vunpack.c.l.b16 %v5118
    %v5254 = vunpack.c.h.b16 %v5118
    %v5255 = vunpack.c.l.b16 %v5119
    %v5256 = vunpack.c.h.b16 %v5119
    %v5257 = vunpack.c.l.b16 %v5120
    %v5258 = vunpack.c.h.b16 %v5120
    %v5259 = vunpack.c.l.b16 %v5121
    %v5260 = vunpack.c.h.b16 %v5121
    %v5261 = vunpack.c.l.b16 %v5122
    %v5262 = vunpack.c.h.b16 %v5122
    %v5263 = vunpack.c.l.b16 %v5123
    %v5264 = vunpack.c.h.b16 %v5123
    %v5265 = vunpack.c.l.b16 %v5124
    %v5266 = vunpack.c.h.b16 %v5124
    %v5267 = vunpack.c.l.b16 %v5125
    %v5268 = vunpack.c.h.b16 %v5125
    %v5269 = vunpack.c.l.b16 %v5126
    %v5270 = vunpack.c.h.b16 %v5126
    %v5271 = vpack.c.b16 %v5181, %v5175
    %v5272 = vpack.c.b16 %v5182, %v5176
    %v5273 = vpack.c.b16 %v5183, %v5177
    %v5274 = vpack.c.b16 %v5184, %v5178
    %v5275 = vpack.c.b16 %v5185, %v5179
    %v5276 = vpack.c.b16 %v5186, %v5180
    %v5277 = vpack.c.b16 %v5193, %v5187
    %v5278 = vpack.c.b16 %v5194, %v5188
    %v5279 = vpack.c.b16 %v5195, %v5189
    %v5280 = vpack.c.b16 %v5196, %v5190
    %v5281 = vpack.c.b16 %v5197, %v5191
    %v5282 = vpack.c.b16 %v5198, %v5192
    %v5283 = vpack.c.b16 %v5205, %v5199
    %v5284 = vpack.c.b16 %v5206, %v5200
    %v5285 = vpack.c.b16 %v5207, %v5201
    %v5286 = vpack.c.b16 %v5208, %v5202
    %v5287 = vpack.c.b16 %v5209, %v5203
    %v5288 = vpack.c.b16 %v5210, %v5204
    %v5289 = vpack.c.b16 %v5217, %v5211
    %v5290 = vpack.c.b16 %v5218, %v5212
    %v5291 = vpack.c.b16 %v5219, %v5213
    %v5292 = vpack.c.b16 %v5220, %v5214
    %v5293 = vpack.c.b16 %v5221, %v5215
    %v5294 = vpack.c.b16 %v5222, %v5216
    %v5295 = vpack.c.b16 %v5229, %v5223
    %v5296 = vpack.c.b16 %v5230, %v5224
    %v5297 = vpack.c.b16 %v5231, %v5225
    %v5298 = vpack.c.b16 %v5232, %v5226
    %v5299 = vpack.c.b16 %v5233, %v5227
    %v5300 = vpack.c.b16 %v5234, %v5228
    %v5301 = vpack.c.b16 %v5241, %v5235
    %v5302 = vpack.c.b16 %v5242, %v5236
    %v5303 = vpack.c.b16 %v5243, %v5237
    %v5304 = vpack.c.b16 %v5244, %v5238
    %v5305 = vpack.c.b16 %v5245, %v5239
    %v5306 = vpack.c.b16 %v5246, %v5240
    %v5307 = vpack.c.b16 %v5253, %v5247
    %v5308 = vpack.c.b16 %v5254, %v5248
    %v5309 = vpack.c.b16 %v5255, %v5249
    %v5310 = vpack.c.b16 %v5256, %v5250
    %v5311 = vpack.c.b16 %v5257, %v5251
    %v5312 = vpack.c.b16 %v5258, %v5252
    %v5313 = vpack.c.b16 %v5265, %v5259
    %v5314 = vpack.c.b16 %v5266, %v5260
    %v5315 = vpack.c.b16 %v5267, %v5261
    %v5316 = vpack.c.b16 %v5268, %v5262
    %v5317 = vpack.c.b16 %v5269, %v5263
    %v5318 = vpack.c.b16 %v5270, %v5264
    %5367 = vmatprep.subr.bf16.mxu0 %v5272
    %5368 = vmatpush1.bf16.msra.mxu0 %v5271
    %5369 = vmatprep.subr.bf16.mxu0 %v5278
    %5370 = vmatpush1.bf16.msra.mxu0 %v5277
    %5371 = vmatprep.subr.bf16.mxu0 %v5284
    %5372 = vmatpush1.bf16.msra.mxu0 %v5283
    %5373 = vmatprep.subr.bf16.mxu0 %v5290
    %5374 = vmatpush1.bf16.msra.mxu0 %v5289
    %5375 = vmatprep.subr.bf16.mxu0 %v5296
    %5376 = vmatpush1.bf16.msra.mxu0 %v5295
    %5377 = vmatprep.subr.bf16.mxu0 %v5302
    %5378 = vmatpush1.bf16.msra.mxu0 %v5301
    %5379 = vmatprep.subr.bf16.mxu0 %v5308
    %5380 = vmatpush1.bf16.msra.mxu0 %v5307
    %5381 = vmatprep.subr.bf16.mxu0 %v5314
    %5382 = vmatpush1.bf16.msra.mxu0 %v5313
    %5383 = vmatprep.subr.bf16.mxu0 0
    %5384 = vmatpush1.bf16.msra.mxu0 0
    %5385 = vmatprep.subr.bf16.mxu0 0
    %5386 = vmatpush1.bf16.msra.mxu0 0
    %5387 = vmatprep.subr.bf16.mxu0 0
    %5388 = vmatpush1.bf16.msra.mxu0 0
    %5389 = vmatprep.subr.bf16.mxu0 0
    %5390 = vmatpush1.bf16.msra.mxu0 0
    %5391 = vmatprep.subr.bf16.mxu0 0
    %5392 = vmatpush1.bf16.msra.mxu0 0
    %5393 = vmatprep.subr.bf16.mxu0 0
    %5394 = vmatpush1.bf16.msra.mxu0 0
    %5395 = vmatprep.subr.bf16.mxu0 0
    %5396 = vmatpush1.bf16.msra.mxu0 0
    %5397 = vmatprep.subr.bf16.mxu0 0
    %5398 = vmatpush1.bf16.msra.mxu0 0
    %5399 = vmatprep.mubr.bf16.mxu0 0
    %5400 = vmatmul.mubr.bf16.gmra.mrb[0].mxu0 %v5078
    %v5401 = vpop.f32.mrb[0].mxu0
    %v5402 = vadd.f32 0.0, %v5401
    %v5403 = vpop.f32.mrb[0].mxu0
    %v5404 = vadd.f32 0.0, %v5403
    %v5405 = vpop.f32.mrb[0].mxu0
    %v5406 = vpop.f32.mrb[0].mxu0
    %5407 = vdwg.mxu0
    %5408 = vmatprep.subr.bf16.mxu0 %v5274
    %5409 = vmatpush1.bf16.msra.mxu0 %v5273
    %5410 = vmatprep.subr.bf16.mxu0 %v5280
    %5411 = vmatpush1.bf16.msra.mxu0 %v5279
    %5412 = vmatprep.subr.bf16.mxu0 %v5286
    %5413 = vmatpush1.bf16.msra.mxu0 %v5285
    %5414 = vmatprep.subr.bf16.mxu0 %v5292
    %5415 = vmatpush1.bf16.msra.mxu0 %v5291
    %5416 = vmatprep.subr.bf16.mxu0 %v5298
    %5417 = vmatpush1.bf16.msra.mxu0 %v5297
    %5418 = vmatprep.subr.bf16.mxu0 %v5304
    %5419 = vmatpush1.bf16.msra.mxu0 %v5303
    %5420 = vmatprep.subr.bf16.mxu0 %v5310
    %5421 = vmatpush1.bf16.msra.mxu0 %v5309
    %5422 = vmatprep.subr.bf16.mxu0 %v5316
    %5423 = vmatpush1.bf16.msra.mxu0 %v5315
    %5424 = vmatprep.subr.bf16.mxu0 0
    %5425 = vmatpush1.bf16.msra.mxu0 0
    %5426 = vmatprep.subr.bf16.mxu0 0
    %5427 = vmatpush1.bf16.msra.mxu0 0
    %5428 = vmatprep.subr.bf16.mxu0 0
    %5429 = vmatpush1.bf16.msra.mxu0 0
    %5430 = vmatprep.subr.bf16.mxu0 0
    %5431 = vmatpush1.bf16.msra.mxu0 0
    %5432 = vmatprep.subr.bf16.mxu0 0
    %5433 = vmatpush1.bf16.msra.mxu0 0
    %5434 = vmatprep.subr.bf16.mxu0 0
    %5435 = vmatpush1.bf16.msra.mxu0 0
    %5436 = vmatprep.subr.bf16.mxu0 0
    %5437 = vmatpush1.bf16.msra.mxu0 0
    %5438 = vmatprep.subr.bf16.mxu0 0
    %5439 = vmatpush1.bf16.msra.mxu0 0
    %5440 = vmatprep.mubr.bf16.mxu0 0
    %5441 = vmatmul.mubr.bf16.gmra.mrb[0].mxu0 %v5078
    %v5442 = vpop.f32.mrb[0].mxu0
    %v5443 = vadd.f32 0.0, %v5442
    %v5444 = vpop.f32.mrb[0].mxu0
    %v5445 = vadd.f32 0.0, %v5444
    %v5446 = vpop.f32.mrb[0].mxu0
    %v5447 = vpop.f32.mrb[0].mxu0
    %5448 = vdwg.mxu0
    %5449 = vmatprep.subr.bf16.mxu0 %v5276
    %5450 = vmatpush1.bf16.msra.mxu0 %v5275
    %5451 = vmatprep.subr.bf16.mxu0 %v5282
    %5452 = vmatpush1.bf16.msra.mxu0 %v5281
    %5453 = vmatprep.subr.bf16.mxu0 %v5288
    %5454 = vmatpush1.bf16.msra.mxu0 %v5287
    %5455 = vmatprep.subr.bf16.mxu0 %v5294
    %5456 = vmatpush1.bf16.msra.mxu0 %v5293
    %5457 = vmatprep.subr.bf16.mxu0 %v5300
    %5458 = vmatpush1.bf16.msra.mxu0 %v5299
    %5459 = vmatprep.subr.bf16.mxu0 %v5306
    %5460 = vmatpush1.bf16.msra.mxu0 %v5305
    %5461 = vmatprep.subr.bf16.mxu0 %v5312
    %5462 = vmatpush1.bf16.msra.mxu0 %v5311
    %5463 = vmatprep.subr.bf16.mxu0 %v5318
    %5464 = vmatpush1.bf16.msra.mxu0 %v5317
    %5465 = vmatprep.subr.bf16.mxu0 0
    %5466 = vmatpush1.bf16.msra.mxu0 0
    %5467 = vmatprep.subr.bf16.mxu0 0
    %5468 = vmatpush1.bf16.msra.mxu0 0
    %5469 = vmatprep.subr.bf16.mxu0 0
    %5470 = vmatpush1.bf16.msra.mxu0 0
    %5471 = vmatprep.subr.bf16.mxu0 0
    %5472 = vmatpush1.bf16.msra.mxu0 0
    %5473 = vmatprep.subr.bf16.mxu0 0
    %5474 = vmatpush1.bf16.msra.mxu0 0
    %5475 = vmatprep.subr.bf16.mxu0 0
    %5476 = vmatpush1.bf16.msra.mxu0 0
    %5477 = vmatprep.subr.bf16.mxu0 0
    %5478 = vmatpush1.bf16.msra.mxu0 0
    %5479 = vmatprep.subr.bf16.mxu0 0
    %5480 = vmatpush1.bf16.msra.mxu0 0
    %5481 = vmatprep.mubr.bf16.mxu0 0
    %5482 = vmatmul.mubr.bf16.gmra.mrb[0].mxu0 %v5078
    %v5483 = vpop.f32.mrb[0].mxu0
    %v5484 = vadd.f32 0.0, %v5483
    %v5485 = vpop.f32.mrb[0].mxu0
    %v5486 = vadd.f32 0.0, %v5485
    %v5487 = vpop.f32.mrb[0].mxu0
    %v5488 = vpop.f32.mrb[0].mxu0
    %5489 = vdwg.mxu0
    %v5490 = vadd.f32 %v5402, %v243
    %v5491 = vadd.f32 %v5404, %v247
    %v5492 = vadd.f32 %v5443, %v251
    %v5493 = vadd.f32 %v5445, %v226
    %v5494 = vadd.f32 %v5484, %v230
    %v5495 = vadd.f32 %v5486, %v234
    %v5496 = vadd.f32 %v5490, %v4972
    %v5497 = vadd.f32 %v5491, %v4974
    %v5498 = vxor.u32 %v5496, 2147483648
    %v5499 = vxor.u32 %v5497, 2147483648
    %v5500 = vmul.f32 %v5498, 1.442695
    %v5501 = vpow.pop %v5500
    %v5502 = vmul.f32 %v5499, 1.442695
    %v5503 = vpow.pop %v5502
    %v5504 = vadd.f32 %v5501, 1.0
    %v5505 = vadd.f32 %v5503, 1.0
    %v5506 = vrcp.pop %v5504
    %v5507 = vmul.f32 1.0, %v5506
    %v5508 = vrcp.pop %v5505
    %v5509 = vmul.f32 1.0, %v5508
    %v5510 = vmul.f32 %v5507, %v5013
    %v5511 = vadd.f32 %v5492, %v5510
    %v5512 = vtanh.pop %v5511
    %v5513 = vsub.f32 1.0, %v5509
    %v5514 = vmul.f32 %v5513, %v5512
    %v5515 = vmul.f32 %v5509, %v4775
    %v5516 = vadd.f32 %v5514, %v5515
    %v5517 = vpack.c.bf16 %v5516, %v5516
    %v5518 = vld [vmem:[%s8] sm:$0xff]
    %v5519 = vld [vmem:[%s8 + $0x8] sm:$0xf]
    %v5520 = vld [vmem:[%s8 + $0xc] sm:$0xff]
    %v5521 = vld [vmem:[%s8 + $0x14] sm:$0xf]
    %v5522 = vld [vmem:[%s8 + $0x18] sm:$0xff]
    %v5523 = vld [vmem:[%s8 + $0x20] sm:$0xf]
    %v5524 = vld [vmem:[%s8 + $0x24] sm:$0xff]
    %v5525 = vld [vmem:[%s8 + $0x2c] sm:$0xf]
    %v5526 = vld [vmem:[%s8 + $0x30] sm:$0xff]
    %v5527 = vld [vmem:[%s8 + $0x38] sm:$0xf]
    %v5528 = vld [vmem:[%s8 + $0x3c] sm:$0xff]
    %v5529 = vld [vmem:[%s8 + $0x44] sm:$0xf]
    %v5530 = vld [vmem:[%s8 + $0x48] sm:$0xff]
    %v5531 = vld [vmem:[%s8 + $0x50] sm:$0xf]
    %v5532 = vld [vmem:[%s8 + $0x54] sm:$0xff]
    %v5533 = vld [vmem:[%s8 + $0x5c] sm:$0xf]
    %v5534 = vld [vmem:[%s8 + $0x60] sm:$0xff]
    %v5535 = vld [vmem:[%s8 + $0x68] sm:$0xf]
    %v5536 = vld [vmem:[%s8 + $0x6c] sm:$0xff]
    %v5537 = vld [vmem:[%s8 + $0x74] sm:$0xf]
    %v5538 = vld [vmem:[%s8 + $0x78] sm:$0xff]
    %v5539 = vld [vmem:[%s8 + $0x80] sm:$0xf]
    %v5540 = vld [vmem:[%s8 + $0x84] sm:$0xff]
    %v5541 = vld [vmem:[%s8 + $0x8c] sm:$0xf]
    %v5542 = vld [vmem:[%s8 + $0x90] sm:$0xff]
    %v5543 = vld [vmem:[%s8 + $0x98] sm:$0xf]
    %v5544 = vld [vmem:[%s8 + $0x9c] sm:$0xff]
    %v5545 = vld [vmem:[%s8 + $0xa4] sm:$0xf]
    %v5546 = vld [vmem:[%s8 + $0xa8] sm:$0xff]
    %v5547 = vld [vmem:[%s8 + $0xb0] sm:$0xf]
    %v5548 = vld [vmem:[%s8 + $0xb4] sm:$0xff]
    %v5549 = vld [vmem:[%s8 + $0xbc] sm:$0xf]
    %v5582 = vunpack.c.l.b16 %v5518
    %v5583 = vunpack.c.h.b16 %v5518
    %v5584 = vunpack.c.l.b16 %v5519
    %v5585 = vunpack.c.l.b16 %v5520
    %v5586 = vunpack.c.h.b16 %v5520
    %v5587 = vunpack.c.l.b16 %v5521
    %v5588 = vunpack.c.l.b16 %v5522
    %v5589 = vunpack.c.h.b16 %v5522
    %v5590 = vunpack.c.l.b16 %v5523
    %v5591 = vunpack.c.l.b16 %v5524
    %v5592 = vunpack.c.h.b16 %v5524
    %v5593 = vunpack.c.l.b16 %v5525
    %v5594 = vunpack.c.l.b16 %v5526
    %v5595 = vunpack.c.h.b16 %v5526
    %v5596 = vunpack.c.l.b16 %v5527
    %v5597 = vunpack.c.l.b16 %v5528
    %v5598 = vunpack.c.h.b16 %v5528
    %v5599 = vunpack.c.l.b16 %v5529
    %v5600 = vunpack.c.l.b16 %v5530
    %v5601 = vunpack.c.h.b16 %v5530
    %v5602 = vunpack.c.l.b16 %v5531
    %v5603 = vunpack.c.l.b16 %v5532
    %v5604 = vunpack.c.h.b16 %v5532
    %v5605 = vunpack.c.l.b16 %v5533
    %v5606 = vunpack.c.l.b16 %v5534
    %v5607 = vunpack.c.h.b16 %v5534
    %v5608 = vunpack.c.l.b16 %v5535
    %v5609 = vunpack.c.l.b16 %v5536
    %v5610 = vunpack.c.h.b16 %v5536
    %v5611 = vunpack.c.l.b16 %v5537
    %v5612 = vunpack.c.l.b16 %v5538
    %v5613 = vunpack.c.h.b16 %v5538
    %v5614 = vunpack.c.l.b16 %v5539
    %v5615 = vunpack.c.l.b16 %v5540
    %v5616 = vunpack.c.h.b16 %v5540
    %v5617 = vunpack.c.l.b16 %v5541
    %v5618 = vunpack.c.l.b16 %v5542
    %v5619 = vunpack.c.h.b16 %v5542
    %v5620 = vunpack.c.l.b16 %v5543
    %v5621 = vunpack.c.l.b16 %v5544
    %v5622 = vunpack.c.h.b16 %v5544
    %v5623 = vunpack.c.l.b16 %v5545
    %v5624 = vunpack.c.l.b16 %v5546
    %v5625 = vunpack.c.h.b16 %v5546
    %v5626 = vunpack.c.l.b16 %v5547
    %v5627 = vunpack.c.l.b16 %v5548
    %v5628 = vunpack.c.h.b16 %v5548
    %v5629 = vunpack.c.l.b16 %v5549
    %v5630 = vpack.c.b16 %v5585, %v5582
    %v5631 = vpack.c.b16 %v5586, %v5583
    %v5632 = vpack.c.b16 %v5587, %v5584
    %v5633 = vpack.c.b16 %v5591, %v5588
    %v5634 = vpack.c.b16 %v5592, %v5589
    %v5635 = vpack.c.b16 %v5593, %v5590
    %v5636 = vpack.c.b16 %v5597, %v5594
    %v5637 = vpack.c.b16 %v5598, %v5595
    %v5638 = vpack.c.b16 %v5599, %v5596
    %v5639 = vpack.c.b16 %v5603, %v5600
    %v5640 = vpack.c.b16 %v5604, %v5601
    %v5641 = vpack.c.b16 %v5605, %v5602
    %v5642 = vpack.c.b16 %v5609, %v5606
    %v5643 = vpack.c.b16 %v5610, %v5607
    %v5644 = vpack.c.b16 %v5611, %v5608
    %v5645 = vpack.c.b16 %v5615, %v5612
    %v5646 = vpack.c.b16 %v5616, %v5613
    %v5647 = vpack.c.b16 %v5617, %v5614
    %v5648 = vpack.c.b16 %v5621, %v5618
    %v5649 = vpack.c.b16 %v5622, %v5619
    %v5650 = vpack.c.b16 %v5623, %v5620
    %v5651 = vpack.c.b16 %v5627, %v5624
    %v5652 = vpack.c.b16 %v5628, %v5625
    %v5653 = vpack.c.b16 %v5629, %v5626
    %5678 = vmatprep.subr.bf16.mxu0 %v5631
    %5679 = vmatpush1.bf16.msra.mxu0 %v5630
    %5680 = vmatprep.subr.bf16.mxu0 %v5634
    %5681 = vmatpush1.bf16.msra.mxu0 %v5633
    %5682 = vmatprep.subr.bf16.mxu0 %v5637
    %5683 = vmatpush1.bf16.msra.mxu0 %v5636
    %5684 = vmatprep.subr.bf16.mxu0 %v5640
    %5685 = vmatpush1.bf16.msra.mxu0 %v5639
    %5686 = vmatprep.subr.bf16.mxu0 %v5643
    %5687 = vmatpush1.bf16.msra.mxu0 %v5642
    %5688 = vmatprep.subr.bf16.mxu0 %v5646
    %5689 = vmatpush1.bf16.msra.mxu0 %v5645
    %5690 = vmatprep.subr.bf16.mxu0 %v5649
    %5691 = vmatpush1.bf16.msra.mxu0 %v5648
    %5692 = vmatprep.subr.bf16.mxu0 %v5652
    %5693 = vmatpush1.bf16.msra.mxu0 %v5651
    %5694 = vmatprep.subr.bf16.mxu0 0
    %5695 = vmatpush1.bf16.msra.mxu0 0
    %5696 = vmatprep.subr.bf16.mxu0 0
    %5697 = vmatpush1.bf16.msra.mxu0 0
    %5698 = vmatprep.subr.bf16.mxu0 0
    %5699 = vmatpush1.bf16.msra.mxu0 0
    %5700 = vmatprep.subr.bf16.mxu0 0
    %5701 = vmatpush1.bf16.msra.mxu0 0
    %5702 = vmatprep.subr.bf16.mxu0 0
    %5703 = vmatpush1.bf16.msra.mxu0 0
    %5704 = vmatprep.subr.bf16.mxu0 0
    %5705 = vmatpush1.bf16.msra.mxu0 0
    %5706 = vmatprep.subr.bf16.mxu0 0
    %5707 = vmatpush1.bf16.msra.mxu0 0
    %5708 = vmatprep.subr.bf16.mxu0 0
    %5709 = vmatpush1.bf16.msra.mxu0 0
    %5710 = vmatprep.mubr.bf16.mxu0 0
    %5711 = vmatmul.mubr.bf16.gmra.mrb[0].mxu0 %v5517
    %v5712 = vpop.f32.mrb[0].mxu0
    %v5713 = vadd.f32 %v260, %v5712
    %v5714 = vpop.f32.mrb[0].mxu0
    %v5715 = vadd.f32 %v264, %v5714
    %v5716 = vpop.f32.mrb[0].mxu0
    %v5717 = vpop.f32.mrb[0].mxu0
    %5718 = vdwg.mxu0
    %5719 = vmatprep.subr.bf16.mxu0 0
    %5720 = vmatpush1.bf16.msra.mxu0 %v5632
    %5721 = vmatprep.subr.bf16.mxu0 0
    %5722 = vmatpush1.bf16.msra.mxu0 %v5635
    %5723 = vmatprep.subr.bf16.mxu0 0
    %5724 = vmatpush1.bf16.msra.mxu0 %v5638
    %5725 = vmatprep.subr.bf16.mxu0 0
    %5726 = vmatpush1.bf16.msra.mxu0 %v5641
    %5727 = vmatprep.subr.bf16.mxu0 0
    %5728 = vmatpush1.bf16.msra.mxu0 %v5644
    %5729 = vmatprep.subr.bf16.mxu0 0
    %5730 = vmatpush1.bf16.msra.mxu0 %v5647
    %5731 = vmatprep.subr.bf16.mxu0 0
    %5732 = vmatpush1.bf16.msra.mxu0 %v5650
    %5733 = vmatprep.subr.bf16.mxu0 0
    %5734 = vmatpush1.bf16.msra.mxu0 %v5653
    %5735 = vmatprep.subr.bf16.mxu0 0
    %5736 = vmatpush1.bf16.msra.mxu0 0
    %5737 = vmatprep.subr.bf16.mxu0 0
    %5738 = vmatpush1.bf16.msra.mxu0 0
    %5739 = vmatprep.subr.bf16.mxu0 0
    %5740 = vmatpush1.bf16.msra.mxu0 0
    %5741 = vmatprep.subr.bf16.mxu0 0
    %5742 = vmatpush1.bf16.msra.mxu0 0
    %5743 = vmatprep.subr.bf16.mxu0 0
    %5744 = vmatpush1.bf16.msra.mxu0 0
    %5745 = vmatprep.subr.bf16.mxu0 0
    %5746 = vmatpush1.bf16.msra.mxu0 0
    %5747 = vmatprep.subr.bf16.mxu0 0
    %5748 = vmatpush1.bf16.msra.mxu0 0
    %5749 = vmatprep.subr.bf16.mxu0 0
    %5750 = vmatpush1.bf16.msra.mxu0 0
    %5751 = vmatprep.mubr.bf16.mxu0 0
    %5752 = vmatmul.mubr.bf16.gmra.mrb[0].mxu0 %v5517
    %v5753 = vpop.f32.mrb[0].mxu0
    %v5754 = vadd.f32 %v268, %v5753
    %v5755 = vpop.f32.mrb[0].mxu0
    %v5756 = vpop.f32.mrb[0].mxu0
    %v5757 = vpop.f32.mrb[0].mxu0
    %5758 = vdwg.mxu0
    %v5761 = vunpack.c.l.s4 1966171168
    %v5762 = vunpack.c.0.s8 %v5761
    %v5763 = vlaneseq
    %v5764 = vshrl.u32 %v5763, 7
    %v5765 = vsub.s32 %v5762, %v5764
    %v5766 = vrot.slane %v5516, %v5765
    %v5767 = vcombine.high %v5766, %v5766
    %v5769 = vunpack.c.l.s4 1966171168
    %v5770 = vunpack.c.0.s8 %v5769
    %v5771 = vlaneseq
    %v5772 = vshrl.u32 %v5771, 7
    %v5773 = vsub.s32 %v5770, %v5772
    %v5774 = vrot.slane %v5766, %v5773
    %v5776 = vunpack.c.l.s4 1966171168
    %v5777 = vunpack.c.0.s8 %v5776
    %v5778 = vlaneseq
    %v5779 = vshrl.u32 %v5778, 7
    %v5780 = vsub.s32 %v5777, %v5779
    %v5781 = vrot.slane %v5767, %v5780
    %5784 = vst [vmem:[#allocation2 + $0x6] sm:$0x1] %v5774
    %5785 = vst [vmem:[#allocation2 + $0xe] sm:$0x1] %v5781
    %v5786 = vlaneseq
    %v5787 = vshrl.u32 %v5786, 7
    %v5788 = vsub.s32 7, %v5787
    %v5789 = vrot.slane %v147, %v5788
    %v5790 = vlaneseq
    %v5791 = vshrl.u32 %v5790, 7
    %v5792 = vsub.s32 7, %v5791
    %v5793 = vrot.slane %v149, %v5792
    %v5794 = vadd.f32 %v5789, %v5493
    %v5795 = vadd.f32 %v5793, %v5494
    %v5796 = vxor.u32 %v5794, 2147483648
    %v5797 = vxor.u32 %v5795, 2147483648
    %v5798 = vmul.f32 %v5796, 1.442695
    %v5799 = vpow.pop %v5798
    %v5800 = vmul.f32 %v5797, 1.442695
    %v5801 = vpow.pop %v5800
    %v5802 = vadd.f32 %v5799, 1.0
    %v5803 = vadd.f32 %v5801, 1.0
    %v5804 = vrcp.pop %v5802
    %v5805 = vmul.f32 1.0, %v5804
    %v5806 = vrcp.pop %v5803
    %v5807 = vmul.f32 1.0, %v5806
    %v5808 = vlaneseq
    %v5809 = vshrl.u32 %v5808, 7
    %v5810 = vsub.s32 7, %v5809
    %v5811 = vrot.slane %v218, %v5810
    %v5812 = vmul.f32 %v5805, %v5495
    %v5813 = vadd.f32 %v5811, %v5812
    %v5814 = vtanh.pop %v5813
    %v5815 = vsub.f32 1.0, %v5807
    %v5816 = vmul.f32 %v5815, %v5814
    %v5817 = vmul.f32 %v5807, %v5077
    %v5818 = vadd.f32 %v5816, %v5817
    %v5819 = vpack.c.bf16 %v5818, %v5818
    %v5820 = vld [vmem:[%s5] sm:$0xff]
    %v5821 = vld [vmem:[%s5 + $0x8] sm:$0xff]
    %v5822 = vld [vmem:[%s5 + $0x18] sm:$0xff]
    %v5823 = vld [vmem:[%s5 + $0x20] sm:$0xff]
    %v5824 = vld [vmem:[%s5 + $0x30] sm:$0xff]
    %v5825 = vld [vmem:[%s5 + $0x38] sm:$0xff]
    %v5826 = vld [vmem:[%s5 + $0x48] sm:$0xff]
    %v5827 = vld [vmem:[%s5 + $0x50] sm:$0xff]
    %v5828 = vld [vmem:[%s5 + $0x60] sm:$0xff]
    %v5829 = vld [vmem:[%s5 + $0x68] sm:$0xff]
    %v5830 = vld [vmem:[%s5 + $0x78] sm:$0xff]
    %v5831 = vld [vmem:[%s5 + $0x80] sm:$0xff]
    %v5832 = vld [vmem:[%s5 + $0x90] sm:$0xff]
    %v5833 = vld [vmem:[%s5 + $0x98] sm:$0xff]
    %v5834 = vld [vmem:[%s5 + $0xa8] sm:$0xff]
    %v5835 = vld [vmem:[%s5 + $0xb0] sm:$0xff]
    %v5836 = vld [vmem:[%s5 + $0xc0] sm:$0xff]
    %v5837 = vld [vmem:[%s5 + $0xc8] sm:$0xff]
    %v5838 = vld [vmem:[%s5 + $0xd8] sm:$0xff]
    %v5839 = vld [vmem:[%s5 + $0xe0] sm:$0xff]
    %v5840 = vld [vmem:[%s5 + $0xf0] sm:$0xff]
    %v5841 = vld [vmem:[%s5 + $0xf8] sm:$0xff]
    %v5842 = vld [vmem:[%s5 + $0x108] sm:$0xff]
    %v5843 = vld [vmem:[%s5 + $0x110] sm:$0xff]
    %v5844 = vld [vmem:[%s5 + $0x120] sm:$0xff]
    %v5845 = vld [vmem:[%s5 + $0x128] sm:$0xff]
    %v5846 = vld [vmem:[%s5 + $0x138] sm:$0xff]
    %v5847 = vld [vmem:[%s5 + $0x140] sm:$0xff]
    %v5848 = vld [vmem:[%s5 + $0x150] sm:$0xff]
    %v5849 = vld [vmem:[%s5 + $0x158] sm:$0xff]
    %v5850 = vld [vmem:[%s5 + $0x168] sm:$0xff]
    %v5851 = vld [vmem:[%s5 + $0x170] sm:$0xff]
    %v5884 = vunpack.c.l.b16 %v5820
    %v5885 = vunpack.c.h.b16 %v5820
    %v5886 = vunpack.c.l.b16 %v5821
    %v5887 = vunpack.c.h.b16 %v5821
    %v5888 = vunpack.c.l.b16 %v5822
    %v5889 = vunpack.c.h.b16 %v5822
    %v5890 = vunpack.c.l.b16 %v5823
    %v5891 = vunpack.c.h.b16 %v5823
    %v5892 = vunpack.c.l.b16 %v5824
    %v5893 = vunpack.c.h.b16 %v5824
    %v5894 = vunpack.c.l.b16 %v5825
    %v5895 = vunpack.c.h.b16 %v5825
    %v5896 = vunpack.c.l.b16 %v5826
    %v5897 = vunpack.c.h.b16 %v5826
    %v5898 = vunpack.c.l.b16 %v5827
    %v5899 = vunpack.c.h.b16 %v5827
    %v5900 = vunpack.c.l.b16 %v5828
    %v5901 = vunpack.c.h.b16 %v5828
    %v5902 = vunpack.c.l.b16 %v5829
    %v5903 = vunpack.c.h.b16 %v5829
    %v5904 = vunpack.c.l.b16 %v5830
    %v5905 = vunpack.c.h.b16 %v5830
    %v5906 = vunpack.c.l.b16 %v5831
    %v5907 = vunpack.c.h.b16 %v5831
    %v5908 = vunpack.c.l.b16 %v5832
    %v5909 = vunpack.c.h.b16 %v5832
    %v5910 = vunpack.c.l.b16 %v5833
    %v5911 = vunpack.c.h.b16 %v5833
    %v5912 = vunpack.c.l.b16 %v5834
    %v5913 = vunpack.c.h.b16 %v5834
    %v5914 = vunpack.c.l.b16 %v5835
    %v5915 = vunpack.c.h.b16 %v5835
    %v5916 = vunpack.c.l.b16 %v5836
    %v5917 = vunpack.c.h.b16 %v5836
    %v5918 = vunpack.c.l.b16 %v5837
    %v5919 = vunpack.c.h.b16 %v5837
    %v5920 = vunpack.c.l.b16 %v5838
    %v5921 = vunpack.c.h.b16 %v5838
    %v5922 = vunpack.c.l.b16 %v5839
    %v5923 = vunpack.c.h.b16 %v5839
    %v5924 = vunpack.c.l.b16 %v5840
    %v5925 = vunpack.c.h.b16 %v5840
    %v5926 = vunpack.c.l.b16 %v5841
    %v5927 = vunpack.c.h.b16 %v5841
    %v5928 = vunpack.c.l.b16 %v5842
    %v5929 = vunpack.c.h.b16 %v5842
    %v5930 = vunpack.c.l.b16 %v5843
    %v5931 = vunpack.c.h.b16 %v5843
    %v5932 = vunpack.c.l.b16 %v5844
    %v5933 = vunpack.c.h.b16 %v5844
    %v5934 = vunpack.c.l.b16 %v5845
    %v5935 = vunpack.c.h.b16 %v5845
    %v5936 = vunpack.c.l.b16 %v5846
    %v5937 = vunpack.c.h.b16 %v5846
    %v5938 = vunpack.c.l.b16 %v5847
    %v5939 = vunpack.c.h.b16 %v5847
    %v5940 = vunpack.c.l.b16 %v5848
    %v5941 = vunpack.c.h.b16 %v5848
    %v5942 = vunpack.c.l.b16 %v5849
    %v5943 = vunpack.c.h.b16 %v5849
    %v5944 = vunpack.c.l.b16 %v5850
    %v5945 = vunpack.c.h.b16 %v5850
    %v5946 = vunpack.c.l.b16 %v5851
    %v5947 = vunpack.c.h.b16 %v5851
    %v5948 = vpack.c.b16 %v5888, %v5884
    %v5949 = vpack.c.b16 %v5889, %v5885
    %v5950 = vpack.c.b16 %v5890, %v5886
    %v5951 = vpack.c.b16 %v5891, %v5887
    %v5952 = vpack.c.b16 %v5896, %v5892
    %v5953 = vpack.c.b16 %v5897, %v5893
    %v5954 = vpack.c.b16 %v5898, %v5894
    %v5955 = vpack.c.b16 %v5899, %v5895
    %v5956 = vpack.c.b16 %v5904, %v5900
    %v5957 = vpack.c.b16 %v5905, %v5901
    %v5958 = vpack.c.b16 %v5906, %v5902
    %v5959 = vpack.c.b16 %v5907, %v5903
    %v5960 = vpack.c.b16 %v5912, %v5908
    %v5961 = vpack.c.b16 %v5913, %v5909
    %v5962 = vpack.c.b16 %v5914, %v5910
    %v5963 = vpack.c.b16 %v5915, %v5911
    %v5964 = vpack.c.b16 %v5920, %v5916
    %v5965 = vpack.c.b16 %v5921, %v5917
    %v5966 = vpack.c.b16 %v5922, %v5918
    %v5967 = vpack.c.b16 %v5923, %v5919
    %v5968 = vpack.c.b16 %v5928, %v5924
    %v5969 = vpack.c.b16 %v5929, %v5925
    %v5970 = vpack.c.b16 %v5930, %v5926
    %v5971 = vpack.c.b16 %v5931, %v5927
    %v5972 = vpack.c.b16 %v5936, %v5932
    %v5973 = vpack.c.b16 %v5937, %v5933
    %v5974 = vpack.c.b16 %v5938, %v5934
    %v5975 = vpack.c.b16 %v5939, %v5935
    %v5976 = vpack.c.b16 %v5944, %v5940
    %v5977 = vpack.c.b16 %v5945, %v5941
    %v5978 = vpack.c.b16 %v5946, %v5942
    %v5979 = vpack.c.b16 %v5947, %v5943
    %6012 = vmatprep.subr.bf16.mxu0 %v5949
    %6013 = vmatpush1.bf16.msra.mxu0 %v5948
    %6014 = vmatprep.subr.bf16.mxu0 %v5953
    %6015 = vmatpush1.bf16.msra.mxu0 %v5952
    %6016 = vmatprep.subr.bf16.mxu0 %v5957
    %6017 = vmatpush1.bf16.msra.mxu0 %v5956
    %6018 = vmatprep.subr.bf16.mxu0 %v5961
    %6019 = vmatpush1.bf16.msra.mxu0 %v5960
    %6020 = vmatprep.subr.bf16.mxu0 %v5965
    %6021 = vmatpush1.bf16.msra.mxu0 %v5964
    %6022 = vmatprep.subr.bf16.mxu0 %v5969
    %6023 = vmatpush1.bf16.msra.mxu0 %v5968
    %6024 = vmatprep.subr.bf16.mxu0 %v5973
    %6025 = vmatpush1.bf16.msra.mxu0 %v5972
    %6026 = vmatprep.subr.bf16.mxu0 %v5977
    %6027 = vmatpush1.bf16.msra.mxu0 %v5976
    %6028 = vmatprep.subr.bf16.mxu0 0
    %6029 = vmatpush1.bf16.msra.mxu0 0
    %6030 = vmatprep.subr.bf16.mxu0 0
    %6031 = vmatpush1.bf16.msra.mxu0 0
    %6032 = vmatprep.subr.bf16.mxu0 0
    %6033 = vmatpush1.bf16.msra.mxu0 0
    %6034 = vmatprep.subr.bf16.mxu0 0
    %6035 = vmatpush1.bf16.msra.mxu0 0
    %6036 = vmatprep.subr.bf16.mxu0 0
    %6037 = vmatpush1.bf16.msra.mxu0 0
    %6038 = vmatprep.subr.bf16.mxu0 0
    %6039 = vmatpush1.bf16.msra.mxu0 0
    %6040 = vmatprep.subr.bf16.mxu0 0
    %6041 = vmatpush1.bf16.msra.mxu0 0
    %6042 = vmatprep.subr.bf16.mxu0 0
    %6043 = vmatpush1.bf16.msra.mxu0 0
    %6044 = vmatprep.mubr.bf16.mxu0 0
    %6045 = vmatmul.mubr.bf16.gmra.mrb[0].mxu0 %v5819
    %v6046 = vpop.f32.mrb[0].mxu0
    %v6047 = vadd.f32 0.0, %v6046
    %v6048 = vpop.f32.mrb[0].mxu0
    %v6049 = vadd.f32 0.0, %v6048
    %v6050 = vpop.f32.mrb[0].mxu0
    %v6051 = vpop.f32.mrb[0].mxu0
    %6052 = vdwg.mxu0
    %6053 = vmatprep.subr.bf16.mxu0 %v5951
    %6054 = vmatpush1.bf16.msra.mxu0 %v5950
    %6055 = vmatprep.subr.bf16.mxu0 %v5955
    %6056 = vmatpush1.bf16.msra.mxu0 %v5954
    %6057 = vmatprep.subr.bf16.mxu0 %v5959
    %6058 = vmatpush1.bf16.msra.mxu0 %v5958
    %6059 = vmatprep.subr.bf16.mxu0 %v5963
    %6060 = vmatpush1.bf16.msra.mxu0 %v5962
    %6061 = vmatprep.subr.bf16.mxu0 %v5967
    %6062 = vmatpush1.bf16.msra.mxu0 %v5966
    %6063 = vmatprep.subr.bf16.mxu0 %v5971
    %6064 = vmatpush1.bf16.msra.mxu0 %v5970
    %6065 = vmatprep.subr.bf16.mxu0 %v5975
    %6066 = vmatpush1.bf16.msra.mxu0 %v5974
    %6067 = vmatprep.subr.bf16.mxu0 %v5979
    %6068 = vmatpush1.bf16.msra.mxu0 %v5978
    %6069 = vmatprep.subr.bf16.mxu0 0
    %6070 = vmatpush1.bf16.msra.mxu0 0
    %6071 = vmatprep.subr.bf16.mxu0 0
    %6072 = vmatpush1.bf16.msra.mxu0 0
    %6073 = vmatprep.subr.bf16.mxu0 0
    %6074 = vmatpush1.bf16.msra.mxu0 0
    %6075 = vmatprep.subr.bf16.mxu0 0
    %6076 = vmatpush1.bf16.msra.mxu0 0
    %6077 = vmatprep.subr.bf16.mxu0 0
    %6078 = vmatpush1.bf16.msra.mxu0 0
    %6079 = vmatprep.subr.bf16.mxu0 0
    %6080 = vmatpush1.bf16.msra.mxu0 0
    %6081 = vmatprep.subr.bf16.mxu0 0
    %6082 = vmatpush1.bf16.msra.mxu0 0
    %6083 = vmatprep.subr.bf16.mxu0 0
    %6084 = vmatpush1.bf16.msra.mxu0 0
    %6085 = vmatprep.mubr.bf16.mxu0 0
    %6086 = vmatmul.mubr.bf16.gmra.mrb[0].mxu0 %v5819
    %v6087 = vpop.f32.mrb[0].mxu0
    %v6088 = vadd.f32 0.0, %v6087
    %v6089 = vpop.f32.mrb[0].mxu0
    %v6090 = vpop.f32.mrb[0].mxu0
    %v6091 = vpop.f32.mrb[0].mxu0
    %6092 = vdwg.mxu0
    %v6093 = vadd.f32 %v6047, %v243
    %v6094 = vadd.f32 %v6049, %v247
    %v6095 = vadd.f32 %v6088, %v251
    %v6096 = vadd.f32 %v6093, %v5713
    %v6097 = vadd.f32 %v6094, %v5715
    %v6098 = vxor.u32 %v6096, 2147483648
    %v6099 = vxor.u32 %v6097, 2147483648
    %v6100 = vmul.f32 %v6098, 1.442695
    %v6101 = vpow.pop %v6100
    %v6102 = vmul.f32 %v6099, 1.442695
    %v6103 = vpow.pop %v6102
    %v6104 = vadd.f32 %v6101, 1.0
    %v6105 = vadd.f32 %v6103, 1.0
    %v6106 = vrcp.pop %v6104
    %v6107 = vmul.f32 1.0, %v6106
    %v6108 = vrcp.pop %v6105
    %v6109 = vmul.f32 1.0, %v6108
    %v6110 = vmul.f32 %v6107, %v5754
    %v6111 = vadd.f32 %v6095, %v6110
    %v6112 = vtanh.pop %v6111
    %v6113 = vsub.f32 1.0, %v6109
    %v6114 = vmul.f32 %v6113, %v6112
    %v6115 = vmul.f32 %v6109, %v5516
    %v6116 = vadd.f32 %v6114, %v6115
    %v6119 = vunpack.c.l.s4 1966171168
    %v6120 = vunpack.c.0.s8 %v6119
    %v6121 = vlaneseq
    %v6122 = vshrl.u32 %v6121, 7
    %v6123 = vsub.s32 %v6120, %v6122
    %v6124 = vrot.slane %v6116, %v6123
    %v6125 = vcombine.high %v6124, %v6124
    %v6127 = vunpack.c.l.s4 1966171168
    %v6128 = vunpack.c.0.s8 %v6127
    %v6129 = vlaneseq
    %v6130 = vshrl.u32 %v6129, 7
    %v6131 = vsub.s32 %v6128, %v6130
    %v6132 = vrot.slane %v6124, %v6131
    %v6134 = vunpack.c.l.s4 1966171168
    %v6135 = vunpack.c.0.s8 %v6134
    %v6136 = vlaneseq
    %v6137 = vshrl.u32 %v6136, 7
    %v6138 = vsub.s32 %v6135, %v6137
    %v6139 = vrot.slane %v6125, %v6138
    %6142 = vst [vmem:[#allocation2 + $0x7] sm:$0x1] %v6132
    %6143 = vst [vmem:[#allocation2 + $0xf] sm:$0x1] %v6139
    %v6144 = vld [vmem:[#allocation2] sm:$0xff]
    %v6145 = vld [vmem:[#allocation2 + $0x8] sm:$0xff]
    %v6146 = vpack.c.bf16 %v6145, %v6144
    %v6147 = vld [vmem:[%s10] sm:$0xf]
    %v6148 = vld [vmem:[%s10 + $0x4] sm:$0xf]
    %v6149 = vld [vmem:[%s10 + $0x8] sm:$0xf]
    %v6150 = vld [vmem:[%s10 + $0xc] sm:$0xf]
    %v6151 = vld [vmem:[%s10 + $0x10] sm:$0xf]
    %v6152 = vld [vmem:[%s10 + $0x14] sm:$0xf]
    %v6153 = vld [vmem:[%s10 + $0x18] sm:$0xf]
    %v6154 = vld [vmem:[%s10 + $0x1c] sm:$0xf]
    %v6155 = vld [vmem:[%s10 + $0x20] sm:$0xf]
    %v6156 = vld [vmem:[%s10 + $0x24] sm:$0xf]
    %v6157 = vld [vmem:[%s10 + $0x28] sm:$0xf]
    %v6158 = vld [vmem:[%s10 + $0x2c] sm:$0xf]
    %v6159 = vld [vmem:[%s10 + $0x30] sm:$0xf]
    %v6160 = vld [vmem:[%s10 + $0x34] sm:$0xf]
    %v6161 = vld [vmem:[%s10 + $0x38] sm:$0xf]
    %v6162 = vld [vmem:[%s10 + $0x3c] sm:$0xf]
    %v6163 = vld [vmem:[%s11] sm:$0x1]
    %v6165 = vlaneseq
    %v6166 = vshrl.u32 %v6165, 7
    %v6167 = vsub.s32 0, %v6166
    %v6168 = vrot.slane %v6163, %v6167
    %v6186 = vunpack.c.l.b16 %v6147
    %v6187 = vunpack.c.l.b16 %v6148
    %v6188 = vunpack.c.l.b16 %v6149
    %v6189 = vunpack.c.l.b16 %v6150
    %v6190 = vunpack.c.l.b16 %v6151
    %v6191 = vunpack.c.l.b16 %v6152
    %v6192 = vunpack.c.l.b16 %v6153
    %v6193 = vunpack.c.l.b16 %v6154
    %v6194 = vunpack.c.l.b16 %v6155
    %v6195 = vunpack.c.l.b16 %v6156
    %v6196 = vunpack.c.l.b16 %v6157
    %v6197 = vunpack.c.l.b16 %v6158
    %v6198 = vunpack.c.l.b16 %v6159
    %v6199 = vunpack.c.l.b16 %v6160
    %v6200 = vunpack.c.l.b16 %v6161
    %v6201 = vunpack.c.l.b16 %v6162
    %v6202 = vpack.c.b16 %v6187, %v6186
    %v6203 = vpack.c.b16 %v6189, %v6188
    %v6204 = vpack.c.b16 %v6191, %v6190
    %v6205 = vpack.c.b16 %v6193, %v6192
    %v6206 = vpack.c.b16 %v6195, %v6194
    %v6207 = vpack.c.b16 %v6197, %v6196
    %v6208 = vpack.c.b16 %v6199, %v6198
    %v6209 = vpack.c.b16 %v6201, %v6200
    %6218 = vmatprep.subr.bf16.mxu0 0
    %6219 = vmatpush1.bf16.msra.mxu0 %v6202
    %6220 = vmatprep.subr.bf16.mxu0 0
    %6221 = vmatpush1.bf16.msra.mxu0 %v6203
    %6222 = vmatprep.subr.bf16.mxu0 0
    %6223 = vmatpush1.bf16.msra.mxu0 %v6204
    %6224 = vmatprep.subr.bf16.mxu0 0
    %6225 = vmatpush1.bf16.msra.mxu0 %v6205
    %6226 = vmatprep.subr.bf16.mxu0 0
    %6227 = vmatpush1.bf16.msra.mxu0 %v6206
    %6228 = vmatprep.subr.bf16.mxu0 0
    %6229 = vmatpush1.bf16.msra.mxu0 %v6207
    %6230 = vmatprep.subr.bf16.mxu0 0
    %6231 = vmatpush1.bf16.msra.mxu0 %v6208
    %6232 = vmatprep.subr.bf16.mxu0 0
    %6233 = vmatpush1.bf16.msra.mxu0 %v6209
    %6234 = vmatprep.subr.bf16.mxu0 0
    %6235 = vmatpush1.bf16.msra.mxu0 0
    %6236 = vmatprep.subr.bf16.mxu0 0
    %6237 = vmatpush1.bf16.msra.mxu0 0
    %6238 = vmatprep.subr.bf16.mxu0 0
    %6239 = vmatpush1.bf16.msra.mxu0 0
    %6240 = vmatprep.subr.bf16.mxu0 0
    %6241 = vmatpush1.bf16.msra.mxu0 0
    %6242 = vmatprep.subr.bf16.mxu0 0
    %6243 = vmatpush1.bf16.msra.mxu0 0
    %6244 = vmatprep.subr.bf16.mxu0 0
    %6245 = vmatpush1.bf16.msra.mxu0 0
    %6246 = vmatprep.subr.bf16.mxu0 0
    %6247 = vmatpush1.bf16.msra.mxu0 0
    %6248 = vmatprep.subr.bf16.mxu0 0
    %6249 = vmatpush1.bf16.msra.mxu0 0
    %6250 = vmatprep.mubr.bf16.mxu0 0
    %6251 = vmatmul.mubr.bf16.gmra.mrb[0].mxu0 %v6146
    %v6252 = vpop.f32.mrb[0].mxu0
    %v6253 = vadd.f32 %v6168, %v6252
    %v6254 = vpop.f32.mrb[0].mxu0
    %v6255 = vpop.f32.mrb[0].mxu0
    %v6256 = vadd.f32 %v6168, %v6255
    %v6257 = vpop.f32.mrb[0].mxu0
    %6258 = vdwg.mxu0
    %v6259 = vld [vmem:[%s1] sm:$0xff]
    %v6260 = vld [vmem:[%s1 + $0x8] sm:$0xff]
    %6263 = vrot.lane.b32.xlu0 %v6253, 32
    %v6264 = vpop.permute.xlu0 %6263
    %6265 = vrot.lane.b32.xlu0 %v6256, 32
    %v6266 = vpop.permute.xlu0 %6265
    %v6269 = vsel %vm76, %v6259, %v6264
    %v6270 = vsel %vm76, %v6260, %v6266
    %vm6271 = vcmask 523264
    %6272 = vst.msk [vmem:[#allocation3] sm:$0xff] %vm6271, %v6269
    %6273 = vst.msk [vmem:[#allocation3 + $0x8] sm:$0xff] %vm6271, %v6270
    %6274 = vst [vmem:[#allocation5] sm:$0x3] %v5818
    %s6275 = scalar_lea.vmem [#allocation5], 2
    %6276 = vst [vmem:[%s6275] sm:$0x3] %v6116
    // Predicated region
    $region50: #{forward.1} parent=1 // pred_check
      _
    $region51: #{forward.1} parent=1 // pred_check_branch
      %6278 = sbr.rel (0) target = $region53
    $region52: #{forward.1} parent=1 // pred_region
      %s6280 = ssub.s32 256, 256
      %6281 = vsyncadd [#allocation4], %s6280
      %s6282 = sshll.u32 [#allocation3], 4
      %s6283 = int_to_ptr.vmem [resolvable:$true] %s6282
      %6288 = dma.vmem_to_hbm [thread:$0]  %s6283, 256, %s12, [#allocation4], 128, 128, 8
    $region53: #{forward.1} parent=1 // pred_fallthru
      _
    // Predicated region
    $region54: #{forward.1} parent=1 // pred_check
      _
    $region55: #{forward.1} parent=1 // pred_check_branch
      %6290 = sbr.rel (0) target = $region57
    $region56: #{forward.1} parent=1 // pred_region
      %s6292 = ssub.s32 64, 64
      %6293 = vsyncadd [#allocation6], %s6292
      %s6294 = sshll.u32 [#allocation5], 4
      %s6295 = int_to_ptr.vmem [resolvable:$true] %s6294
      %6300 = dma.vmem_to_hbm [thread:$0]  %s6295, 64, %s13, [#allocation6], 32, 32, 2
    $region57: #{forward.1} parent=1 // pred_fallthru
      _
    // Predicated region
    $region58: #{forward.1} parent=1 // pred_check
      _
    $region59: #{forward.1} parent=1 // pred_check_branch
      %6302 = sbr.rel (0) target = $region61
    $region60: #{forward.1} parent=1 // pred_region
      %6303 = dma.done [#allocation4], 256
    $region61: #{forward.1} parent=1 // pred_fallthru
      _
    // Predicated region
    $region62: #{forward.1} parent=1 // pred_check
      _
    $region63: #{forward.1} parent=1 // pred_check_branch
      %6305 = sbr.rel (0) target = $region65
    $region64: #{forward.1} parent=1 // pred_region
      %6306 = dma.done [#allocation6], 64
    $region65: #{forward.1} parent=1 // pred_fallthru
      _
    %6307 = vsyncpa [#allocation4], 1
    %6308 = vsyncpa [#allocation6], 1

</llo_original>
